<compile_context>
chip_gen: v7x
topology: tpu7x:2x2x1
jax: 0.10.0
libtpu: 0.0.40
codegen_flags: <defaults>
</compile_context>

<pallas_src>
import jax
import jax.numpy as jnp
from jax.experimental import pallas as pl
from jax.experimental.pallas import tpu as pltpu

NEG_SLOPE = 0.01                 # F.leaky_relu default negative_slope
COMPUTE_DTYPE = jnp.float32      # set jnp.bfloat16 on v6e/v7x for ~2x HBM bw / MXU
                                 # rate (accumulation stays f32; relax test tol)

_SUBLANE = 8 if jnp.dtype(COMPUTE_DTYPE).itemsize == 4 else 16


# ----------------------------- hardware-aware knobs --------------------------

def _query_vmem_capacity():
    try:
        info = pltpu.get_tpu_info()
        cap = getattr(info, "vmem_capacity_bytes", None)
        return int(cap) if cap else None
    except Exception:
        return None


_VMEM_CAP = _query_vmem_capacity()
if _VMEM_CAP is not None and _VMEM_CAP <= 64 * 1024 * 1024:
    _BLOCK_BUDGET = 2 * 1024 * 1024      # v7x: 64 MiB physical VMEM -> small blocks
else:
    _BLOCK_BUDGET = 6 * 1024 * 1024      # v5e/v6e: 128 MiB VMEM -> bigger blocks
_VMEM_LIMIT = None if _VMEM_CAP is None else min(_VMEM_CAP * 3 // 4,
                                                 100 * 1024 * 1024)


def _cparams(dims):
    return pltpu.CompilerParams(dimension_semantics=dims,
                                vmem_limit_bytes=_VMEM_LIMIT)


def _round_up(x, m):
    return ((x + m - 1) // m) * m


def _largest_divisor_at_most(n, cap):
    cap = max(1, min(n, cap))
    for d in range(cap, 0, -1):
        if n % d == 0:
            return d
    return 1


def _pick_d_tile(d_pad, bytes_per_plane, n_parallel, max_td=4):
    """Planes per grid step: small static unroll, VMEM-budgeted, divides d_pad."""
    cap = max(1, min(d_pad, max_td, _BLOCK_BUDGET // max(bytes_per_plane, 1)))
    td = _largest_divisor_at_most(d_pad, cap)
    # v7x has 2 TensorCores: make sure the parallel axes have >=2 grid steps.
    if n_parallel <= 1 and d_pad // td < 2 and d_pad >= 2:
        td = _largest_divisor_at_most(d_pad, max(1, d_pad // 2))
    return td


# ----------------------- canonical padded activation layout ------------------

def to_canonical(x, cp):
    """(N, C, D, H, W) -> canonical (N, D+2, cp, (H+2)*(W+2)); zero halos and
    zero sublane-padding channels; cast to COMPUTE_DTYPE in the same pass."""
    n, c, d, h, w = x.shape
    x = jnp.transpose(x, (0, 2, 1, 3, 4))                       # (N, D, C, H, W)
    x = jnp.pad(x, ((0, 0), (1, 1), (0, cp - c), (1, 1), (1, 1)))
    return x.reshape(n, d + 2, cp, (h + 2) * (w + 2)).astype(COMPUTE_DTYPE)


def from_canonical(xc, spatial, channels):
    """canonical (N, D+2, Cp, Lp) -> (N, channels, D, H, W) NCDHW float32."""
    d, h, w = spatial
    n = xc.shape[0]
    x = xc.reshape(n, d + 2, xc.shape[2], h + 2, w + 2)
    x = x[:, 1:d + 1, :channels, 1:h + 1, 1:w + 1]
    return jnp.transpose(x, (0, 2, 1, 3, 4)).astype(jnp.float32)


# ------------------- ConvTranspose3d(k=2, s=2) + LeakyReLU -------------------

def _make_deconv_kernel(tdp):
    def kernel(x_ref, w_ref, b_ref, o_ref):
        # x_ref: (1, tdp, Cp, Lp)   w_ref: (8*Coutp, Cp)   b_ref: (8*Coutp, 1) f32
        # o_ref: (1, tdp, 8*Coutp, Lp): all 8 taps per plane in one matmul.
        wmat = w_ref[...]
        bias = b_ref[...]
        for j in range(tdp):
            y = jnp.dot(wmat, x_ref[0, j],
                        preferred_element_type=jnp.float32) + bias
            o_ref[0, j] = jnp.where(y >= 0, y, NEG_SLOPE * y).astype(o_ref.dtype)
    return kernel


def deconv3d_k2s2_leakyrelu_canonical(x_can, cin, w, b, spatial):
    """ConvTranspose3d(cin->cout, k=2, s=2, bias) + LeakyReLU on canonical input.

    x_can: (N, D+2, Cp, (H+2)*(W+2)), true channels = cin (rest zero padding)
    w: (cin, cout, 2, 2, 2) [PyTorch layout]   b: (cout,)
    returns canonical (N, 2D+2, Coutp, (2H+2)*(2W+2)) ready for the next conv.
    """
    n, d_pad, cp, lp = x_can.shape
    d, h, w_sp = spatial
    assert d_pad == d + 2 and lp == (h + 2) * (w_sp + 2)
    cout = w.shape[1]
    coutp = _round_up(cout, _SUBLANE)

    # Rows ordered (kd, kh, kw, coutp); zero rows/cols for padded channels.
    wt = jnp.transpose(w, (2, 3, 4, 1, 0))                       # (2,2,2,cout,cin)
    wt = jnp.pad(wt, ((0, 0), (0, 0), (0, 0),
                      (0, coutp - cout), (0, cp - cin)))
    w8 = wt.reshape(8 * coutp, cp).astype(COMPUTE_DTYPE)
    b8 = jnp.tile(jnp.pad(b, (0, coutp - cout)), 8)
    b8 = b8.reshape(8 * coutp, 1).astype(jnp.float32)

    itemsize = jnp.dtype(COMPUTE_DTYPE).itemsize
    bytes_per_plane = (cp + 8 * coutp) * lp * itemsize
    tdp = _pick_d_tile(d_pad, bytes_per_plane, n)

    y = pl.pallas_call(
        _make_deconv_kernel(tdp),
        out_shape=jax.ShapeDtypeStruct((n, d_pad, 8 * coutp, lp), COMPUTE_DTYPE),
        grid=(n, d_pad // tdp),
        in_specs=[
            pl.BlockSpec((1, tdp, cp, lp), lambda i, j: (i, j, 0, 0)),
            pl.BlockSpec((8 * coutp, cp), lambda i, j: (0, 0)),
            pl.BlockSpec((8 * coutp, 1), lambda i, j: (0, 0)),
        ],
        out_specs=pl.BlockSpec((1, tdp, 8 * coutp, lp), lambda i, j: (i, j, 0, 0)),
        compiler_params=_cparams(("parallel", "parallel")),
    )(x_can, w8, b8)

    # (kd,kh,kw) tap interleave + canonical re-pad: one fused XLA copy kept in
    # COMPUTE_DTYPE (the halo planes/lanes computed above are sliced away here).
    # TODO(synk): fold the tap interleave into the kernel with strided lane stores
    # to remove this extra pass over the 8x-upsampled tensor entirely.
    y = y.reshape(n, d_pad, 2, 2, 2, coutp, h + 2, w_sp + 2)
    y = y[:, 1:d + 1, :, :, :, :, 1:h + 1, 1:w_sp + 1]
    y = jnp.transpose(y, (0, 1, 2, 5, 6, 3, 7, 4))   # (n,d,kd,co,h,kh,w,kw)
    y = y.reshape(n, 2 * d, coutp, 2 * h, 2 * w_sp)
    y = jnp.pad(y, ((0, 0), (1, 1), (0, 0), (1, 1), (1, 1)))
    return y.reshape(n, 2 * d + 2, coutp, (2 * h + 2) * (2 * w_sp + 2))


# -------------------- Conv3d(k=3, padding='same') on canonical ---------------

def _make_conv_kernel(n_inputs, td, h, w, d_pad):
    wp2 = w + 2
    lp = (h + 2) * wp2
    lc = h * wp2 - 2              # contiguous flat range covering all valid outputs
    off0 = w + 3                  # its start offset inside a padded plane
    shifts = [(kh - 1) * wp2 + (kw - 1) for kh in range(3) for kw in range(3)]

    def kernel(*refs):
        xrefs = refs[:3 * n_inputs]
        mask_ref = refs[3 * n_inputs]
        w_ref = refs[3 * n_inputs + 1]
        b_ref = refs[3 * n_inputs + 2]
        o_ref = refs[3 * n_inputs + 3]

        dt = pl.program_id(1)
        bias = b_ref[...]                         # (Coutp, 1) f32
        mask = mask_ref[...]                      # (1, Lc)   f32
        coutp = o_ref.shape[2]
        zpad = jnp.zeros((coutp, off0), jnp.float32)
        zrow = jnp.zeros((coutp, lp), o_ref.dtype)
        w_kd = [w_ref[0], w_ref[1], w_ref[2]]     # each (Coutp, 9*cp_tot)

        def load_plane(i, l):
            # local plane index l in [0, td+1]; 0 / td+1 are the D halos.
            if l == 0:
                return xrefs[3 * i + 1][0, 0]
            if l == td + 1:
                return xrefs[3 * i + 2][0, 0]
            return xrefs[3 * i][0, l - 1]

        def build_block(l):
            # (9*cp_tot, Lc): the 9 in-plane shifted views of every input's plane,
            # built ONCE per plane and reused by the three kd consumers.
            planes = [load_plane(i, l) for i in range(n_inputs)]
            pieces = []
            for s in shifts:
                lo = off0 + s
                for i in range(n_inputs):
                    pieces.append(planes[i][:, lo:lo + lc])
            return jnp.concatenate(pieces, axis=0)

        blk_a = build_block(0)      # rolling 3-plane window
        blk_b = build_block(1)
        for j in range(td):         # short static unroll (td <= 4)
            blk_c = build_block(j + 2)
            p = dt * td + j         # absolute (padded) output plane index
            interior = jnp.logical_and(p >= 1, p <= d_pad - 2)

            @pl.when(interior)
            def _(j=j, a=blk_a, b=blk_b, c=blk_c):
                acc = jnp.dot(w_kd[0], a, preferred_element_type=jnp.float32)
                acc = acc + jnp.dot(w_kd[1], b, preferred_element_type=jnp.float32)
                acc = acc + jnp.dot(w_kd[2], c, preferred_element_type=jnp.float32)
                val = (acc + bias) * mask                      # (Coutp, Lc) f32
                o_ref[0, j, :, :] = jnp.concatenate(
                    [zpad, val, zpad], axis=1).astype(o_ref.dtype)

            @pl.when(jnp.logical_not(interior))
            def _(j=j):
                o_ref[0, j, :, :] = zrow    # zero canonical halo plane, no matmuls

            blk_a, blk_b = blk_b, blk_c

    return kernel


def conv3d_same_canonical(xs, cin_list, w, b, spatial):
    """3x3x3 'same' Conv3d (+bias) over canonical inputs; channel concat fused.

    xs:       list of canonical activations (N, D+2, Cp_i, Lp) (concat order)
    cin_list: true channel count of each input (rest of Cp_i is zero padding)
    w: (Cout, sum(cin_list), 3, 3, 3) [PyTorch]    b: (Cout,)
    returns canonical (N, D+2, Coutp, Lp) in COMPUTE_DTYPE (Cout padded to Coutp).
    """
    d, h, w_sp = spatial
    n = xs[0].shape[0]
    d_pad = d + 2
    wp2 = w_sp + 2
    lp = (h + 2) * wp2
    lc = h * wp2 - 2
    off0 = w_sp + 3
    cout = w.shape[0]
    coutp = _round_up(cout, _SUBLANE)
    cp_list = [x.shape[2] for x in xs]
    cp_tot = sum(cp_list)
    assert w.shape[1] == sum(cin_list)
    assert all(x.shape[1] == d_pad and x.shape[3] == lp for x in xs)

    # Weights (3[kd], Coutp, 9*cp_tot); K order = (kh, kw, input, channel) with
    # zero rows/cols aligned to the sublane-padded channels.
    parts, off = [], 0
    for cin_i, cp_i in zip(cin_list, cp_list):
        wi = w[:, off:off + cin_i]                               # (cout,cin_i,3,3,3)
        wi = jnp.pad(wi, ((0, coutp - cout), (0, cp_i - cin_i),
                          (0, 0), (0, 0), (0, 0)))
        parts.append(jnp.transpose(wi, (2, 3, 4, 0, 1)))         # (3,3,3,coutp,cp_i)
        off += cin_i
    wcat = jnp.concatenate(parts, axis=-1)                       # (3,3,3,coutp,cp_tot)
    wk = jnp.transpose(wcat, (0, 3, 1, 2, 4)).reshape(3, coutp, 9 * cp_tot)
    wk = wk.astype(COMPUTE_DTYPE)
    b2 = jnp.pad(b, (0, coutp - cout)).reshape(coutp, 1).astype(jnp.float32)

    q = jnp.arange(lc, dtype=jnp.int32) + off0
    qh, qw = q // wp2, q % wp2
    mask = (((qh >= 1) & (qh <= h) & (qw >= 1) & (qw <= w_sp))
            .astype(jnp.float32).reshape(1, lc))

    itemsize = jnp.dtype(COMPUTE_DTYPE).itemsize
    bytes_per_plane = (cp_tot + coutp) * lp * itemsize
    td = _pick_d_tile(d_pad, bytes_per_plane, n)

    in_specs, args = [], []
    for x in xs:
        cp_i = x.shape[2]
        in_specs += [
            pl.BlockSpec((1, td, cp_i, lp), lambda i, j: (i, j, 0, 0)),
            pl.BlockSpec((1, 1, cp_i, lp),
                         lambda i, j: (i, jnp.maximum(j * td - 1, 0), 0, 0)),
            pl.BlockSpec((1, 1, cp_i, lp),
                         lambda i, j: (i, jnp.minimum(j * td + td, d_pad - 1), 0, 0)),
        ]
        args += [x, x, x]            # inputs already in COMPUTE_DTYPE: no casts
    in_specs += [
        pl.BlockSpec((1, lc), lambda i, j: (0, 0)),
        pl.BlockSpec((3, coutp, 9 * cp_tot), lambda i, j: (0, 0, 0)),
        pl.BlockSpec((coutp, 1), lambda i, j: (0, 0)),
    ]
    args += [mask, wk, b2]

    return pl.pallas_call(
        _make_conv_kernel(len(xs), td, h, w_sp, d_pad),
        out_shape=jax.ShapeDtypeStruct((n, d_pad, coutp, lp), COMPUTE_DTYPE),
        grid=(n, d_pad // td),
        in_specs=in_specs,
        out_specs=pl.BlockSpec((1, td, coutp, lp), lambda i, j: (i, j, 0, 0)),
        compiler_params=_cparams(("parallel", "parallel")),
    )(*args)


# ------------------------------- DecLayer -------------------------------------

class DecLayerPallas:
    """JAX/Pallas port of snmi.nets.net_reg_3D.DecLayer (forward pass)."""

    def __init__(self, n_channel, int_step, up=True, key=None):
        if key is None:
            key = jax.random.PRNGKey(0)
        self.n_channel = n_channel
        self.cp = _round_up(n_channel, _SUBLANE)
        self.int_step = int_step
        self.up = up
        ks = jax.random.split(key, 6)
        s = 0.1
        if up:
            # nn.ConvTranspose3d(C, C, 2, 2): weight (Cin, Cout, 2, 2, 2)
            self.w_deconv = s * jax.random.normal(ks[0], (n_channel, n_channel, 2, 2, 2), jnp.float32)
            self.b_deconv = s * jax.random.normal(ks[1], (n_channel,), jnp.float32)
            conv_in = n_channel * 2
        else:
            self.w_deconv = None
            self.b_deconv = None
            conv_in = n_channel
        # nn.Conv3d(conv_in, C, 3, padding='same'): weight (Cout, Cin, 3, 3, 3)
        self.w_conv = s * jax.random.normal(ks[2], (n_channel, conv_in, 3, 3, 3), jnp.float32)
        self.b_conv = s * jax.random.normal(ks[3], (n_channel,), jnp.float32)
        # nn.Conv3d(C, 3, 3, padding='same')
        self.w_flow = s * jax.random.normal(ks[4], (3, n_channel, 3, 3, 3), jnp.float32)
        self.b_flow = s * jax.random.normal(ks[5], (3,), jnp.float32)

    def __call__(self, x, x_enc, x_can=None, spatial=None, return_can=False):
        # x: NCDHW float32, OR x_can: canonical (N, D+2, cp, Lp) from the previous
        # DecLayer (chained Decoder path -> no NCDHW<->canonical round trip).
        if x_can is None:
            d, h, w = x.shape[2:]
            spatial = (d, h, w)
            x_can = to_canonical(x, self.cp)
        d, h, w = spatial
        if self.up:
            x_can = deconv3d_k2s2_leakyrelu_canonical(
                x_can, self.n_channel, self.w_deconv, self.b_deconv, spatial)
            d, h, w = 2 * d, 2 * h, 2 * w
            spatial = (d, h, w)

        xs, cin_list = [x_can], [self.n_channel]
        if x_enc is not None:       # torch.concat([x, x_enc], 1) fused into the conv
            xs.append(to_canonical(x_enc, _round_up(x_enc.shape[1], _SUBLANE)))
            cin_list.append(x_enc.shape[1])

        x_can_out = conv3d_same_canonical(xs, cin_list, self.w_conv, self.b_conv, spatial)
        fp_can = conv3d_same_canonical([x_can_out], [self.n_channel],
                                       self.w_flow, self.b_flow, spatial)

        x_out = from_canonical(x_can_out, spatial, self.n_channel)
        fp = from_canonical(fp_can, spatial, 3)     # flow Cout padded 3->8 in-kernel
        fn = -fp                                     # negation fuses with the copy

        if self.int_step > 0:
            # TODO(synk): VecInt (scaling-and-squaring integration via trilinear
            # grid_sample) is defined outside this module; not implemented here.
            raise NotImplementedError("VecInt (int_step > 0) not implemented")

        if return_can:
            return x_out, fp, fn, (x_can_out, spatial)
        return x_out, fp, fn


# ------------------------ pure-JAX reference (for checking) -------------------

def _ref_conv3d_same(x, w, b):
    out = jax.lax.conv_general_dilated(
        x, w, window_strides=(1, 1, 1), padding='SAME',
        dimension_numbers=('NCDHW', 'OIDHW', 'NCDHW'),
        precision=jax.lax.Precision.HIGHEST)
    return out + b[None, :, None, None, None]


def _ref_declayer(layer, x, x_enc):
    if layer.up:
        n, ci, d, h, w = x.shape
        co = layer.w_deconv.shape[1]
        y = jnp.einsum('nidhw,iojkl->nodjhkwl', x, layer.w_deconv,
                       precision=jax.lax.Precision.HIGHEST)
        y = y.reshape(n, co, 2 * d, 2 * h, 2 * w) + layer.b_deconv[None, :, None, None, None]
        x = jnp.where(y >= 0, y, NEG_SLOPE * y)
    if x_enc is not None:
        x = jnp.concatenate([x, x_enc], axis=1)
    x = _ref_conv3d_same(x, layer.w_conv, layer.b_conv)
    fp = _ref_conv3d_same(x, layer.w_flow, layer.b_flow)
    return x, fp, -fp


# ---------------------------------- main ---------------------------------------

if __name__ == "__main__":
    key = jax.random.PRNGKey(0)
    kp0, kp1, kx, ke = jax.random.split(key, 4)

    N, C, D, H, W = 2, 4, 4, 4, 4
    # Mimics Decoder: first layer up=False (no skip), second layer up=True with skip.
    layer0 = DecLayerPallas(n_channel=C, int_step=0, up=False, key=kp0)
    layer1 = DecLayerPallas(n_channel=C, int_step=0, up=True, key=kp1)

    x = jax.random.normal(kx, (N, C, D, H, W), jnp.float32)                 # NCDHW
    x_enc = jax.random.normal(ke, (N, C, 2 * D, 2 * H, 2 * W), jnp.float32)

    @jax.jit
    def run(x, x_enc):
        # Chained through the canonical layout: layer1 consumes layer0's canonical
        # output directly (no NCDHW<->canonical round trip between layers).
        x0, f0p, f0n, (x0c, sp0) = layer0(x, None, return_can=True)
        x1, f1p, f1n = layer1(None, x_enc, x_can=x0c, spatial=sp0)
        return x0, f0p, f0n, x1, f1p, f1n

    x0, f0p, f0n, x1, f1p, f1n = jax.block_until_ready(run(x, x_enc))

    # shape checks (match PyTorch module semantics)
    assert x0.shape == (N, C, D, H, W)
    assert f0p.shape == (N, 3, D, H, W) and f0n.shape == (N, 3, D, H, W)
    assert x1.shape == (N, C, 2 * D, 2 * H, 2 * W)
    assert f1p.shape == (N, 3, 2 * D, 2 * H, 2 * W)
    assert f1n.shape == (N, 3, 2 * D, 2 * H, 2 * W)

    # numerical check against a pure-JAX reference
    r0x, r0p, r0n = _ref_declayer(layer0, x, None)
    r1x, r1p, r1n = _ref_declayer(layer1, r0x, x_enc)
    tol = 2e-3 if COMPUTE_DTYPE == jnp.float32 else 5e-2
    for got, ref in [(x0, r0x), (f0p, r0p), (f0n, r0n),
                     (x1, r1x), (f1p, r1p), (f1n, r1n)]:
        assert jnp.allclose(got, ref, rtol=tol, atol=tol), \
            float(jnp.max(jnp.abs(got - ref)))

    print("KERNEL_OK")
</pallas_src>

<mosaic_0001>
module attributes {stable_mosaic.version = 11 : i64} {
  func.func @kernel(%arg0: i32, %arg1: i32, %arg2: memref<1x3x8x36xf32, #tpu.memory_space<vmem>>, %arg3: memref<64x8xf32, #tpu.memory_space<vmem>>, %arg4: memref<64x1xf32, #tpu.memory_space<vmem>>, %arg5: memref<1x3x64x36xf32, #tpu.memory_space<vmem>>) attributes {dimension_semantics = [#tpu.dimension_semantics<parallel>, #tpu.dimension_semantics<parallel>], iteration_bounds = array<i64: 2, 2>, scalar_prefetch = 0 : i64, scratch_operands = 0 : i64, tpu.core_type = #tpu.core_type<tc>, window_params = [{transform_indices = @transform_0, window_bounds = array<i64: 1, 3, 8, 36>}, {pipeline_mode = #tpu.pipeline_mode<synchronous>, transform_indices = @transform_1, window_bounds = array<i64: 64, 8>}, {pipeline_mode = #tpu.pipeline_mode<synchronous>, transform_indices = @transform_2, window_bounds = array<i64: 64, 1>}, {transform_indices = @transform_3, window_bounds = array<i64: 1, 3, 64, 36>}]} {
    %c0 = arith.constant 0 : index
    %c0_0 = arith.constant 0 : index
    %0 = vector.load %arg3[%c0, %c0_0] : memref<64x8xf32, #tpu.memory_space<vmem>>, vector<64x8xf32>
    %c0_1 = arith.constant 0 : index
    %c0_2 = arith.constant 0 : index
    %1 = vector.load %arg4[%c0_1, %c0_2] : memref<64x1xf32, #tpu.memory_space<vmem>>, vector<64x1xf32>
    %c0_3 = arith.constant 0 : index
    %c0_4 = arith.constant 0 : index
    %c0_5 = arith.constant 0 : index
    %c0_6 = arith.constant 0 : index
    %2 = vector.load %arg2[%c0_3, %c0_4, %c0_5, %c0_6] : memref<1x3x8x36xf32, #tpu.memory_space<vmem>>, vector<1x1x8x36xf32>
    %3 = vector.shape_cast %2 : vector<1x1x8x36xf32> to vector<8x36xf32>
    %cst = arith.constant dense<0.000000e+00> : vector<64x36xf32>
    %4 = tpu.matmul %0, %3, %cst {dimension_numbers = #tpu.dot_dimension_numbers<[1], [0], [0], [1], [0, 0, 1, 1], [], []>} : vector<64x8xf32>, vector<8x36xf32>, vector<64x36xf32> -> vector<64x36xf32>
    %5 = vector.broadcast %1 : vector<64x1xf32> to vector<64x36xf32>
    %6 = arith.addf %4, %5 : vector<64x36xf32>
    %cst_7 = arith.constant 0.000000e+00 : f32
    %7 = vector.broadcast %cst_7 : f32 to vector<64x36xf32>
    %8 = arith.cmpf oge, %6, %7 : vector<64x36xf32>
    %cst_8 = arith.constant 0.00999999977 : f32
    %9 = vector.broadcast %cst_8 : f32 to vector<64x36xf32>
    %10 = arith.mulf %9, %6 : vector<64x36xf32>
    %11 = arith.select %8, %6, %10 : vector<64x36xi1>, vector<64x36xf32>
    %c0_9 = arith.constant 0 : index
    %c0_10 = arith.constant 0 : index
    %c0_11 = arith.constant 0 : index
    %c0_12 = arith.constant 0 : index
    %12 = vector.load %arg5[%c0_9, %c0_10, %c0_11, %c0_12] : memref<1x3x64x36xf32, #tpu.memory_space<vmem>>, vector<1x1x64x36xf32>
    %13 = vector.shape_cast %12 : vector<1x1x64x36xf32> to vector<64x36xf32>
    %14 = vector.shape_cast %11 : vector<64x36xf32> to vector<1x1x64x36xf32>
    tpu.vector_store %arg5[%c0_9, %c0_10, %c0_11, %c0_12], %14 {strides = array<i32>} : memref<1x3x64x36xf32, #tpu.memory_space<vmem>>, vector<1x1x64x36xf32>,
    %c0_13 = arith.constant 0 : index
    %c1 = arith.constant 1 : index
    %c0_14 = arith.constant 0 : index
    %c0_15 = arith.constant 0 : index
    %15 = vector.load %arg2[%c0_13, %c1, %c0_14, %c0_15] : memref<1x3x8x36xf32, #tpu.memory_space<vmem>>, vector<1x1x8x36xf32>
    %16 = vector.shape_cast %15 : vector<1x1x8x36xf32> to vector<8x36xf32>
    %cst_16 = arith.constant dense<0.000000e+00> : vector<64x36xf32>
    %17 = tpu.matmul %0, %16, %cst_16 {dimension_numbers = #tpu.dot_dimension_numbers<[1], [0], [0], [1], [0, 0, 1, 1], [], []>} : vector<64x8xf32>, vector<8x36xf32>, vector<64x36xf32> -> vector<64x36xf32>
    %18 = vector.broadcast %1 : vector<64x1xf32> to vector<64x36xf32>
    %19 = arith.addf %17, %18 : vector<64x36xf32>
    %cst_17 = arith.constant 0.000000e+00 : f32
    %20 = vector.broadcast %cst_17 : f32 to vector<64x36xf32>
    %21 = arith.cmpf oge, %19, %20 : vector<64x36xf32>
    %cst_18 = arith.constant 0.00999999977 : f32
    %22 = vector.broadcast %cst_18 : f32 to vector<64x36xf32>
    %23 = arith.mulf %22, %19 : vector<64x36xf32>
    %24 = arith.select %21, %19, %23 : vector<64x36xi1>, vector<64x36xf32>
    %c0_19 = arith.constant 0 : index
    %c1_20 = arith.constant 1 : index
    %c0_21 = arith.constant 0 : index
    %c0_22 = arith.constant 0 : index
    %25 = vector.load %arg5[%c0_19, %c1_20, %c0_21, %c0_22] : memref<1x3x64x36xf32, #tpu.memory_space<vmem>>, vector<1x1x64x36xf32>
    %26 = vector.shape_cast %25 : vector<1x1x64x36xf32> to vector<64x36xf32>
    %27 = vector.shape_cast %24 : vector<64x36xf32> to vector<1x1x64x36xf32>
    tpu.vector_store %arg5[%c0_19, %c1_20, %c0_21, %c0_22], %27 {strides = array<i32>} : memref<1x3x64x36xf32, #tpu.memory_space<vmem>>, vector<1x1x64x36xf32>,
    %c0_23 = arith.constant 0 : index
    %c2 = arith.constant 2 : index
    %c0_24 = arith.constant 0 : index
    %c0_25 = arith.constant 0 : index
    %28 = vector.load %arg2[%c0_23, %c2, %c0_24, %c0_25] : memref<1x3x8x36xf32, #tpu.memory_space<vmem>>, vector<1x1x8x36xf32>
    %29 = vector.shape_cast %28 : vector<1x1x8x36xf32> to vector<8x36xf32>
    %cst_26 = arith.constant dense<0.000000e+00> : vector<64x36xf32>
    %30 = tpu.matmul %0, %29, %cst_26 {dimension_numbers = #tpu.dot_dimension_numbers<[1], [0], [0], [1], [0, 0, 1, 1], [], []>} : vector<64x8xf32>, vector<8x36xf32>, vector<64x36xf32> -> vector<64x36xf32>
    %31 = vector.broadcast %1 : vector<64x1xf32> to vector<64x36xf32>
    %32 = arith.addf %30, %31 : vector<64x36xf32>
    %cst_27 = arith.constant 0.000000e+00 : f32
    %33 = vector.broadcast %cst_27 : f32 to vector<64x36xf32>
    %34 = arith.cmpf oge, %32, %33 : vector<64x36xf32>
    %cst_28 = arith.constant 0.00999999977 : f32
    %35 = vector.broadcast %cst_28 : f32 to vector<64x36xf32>
    %36 = arith.mulf %35, %32 : vector<64x36xf32>
    %37 = arith.select %34, %32, %36 : vector<64x36xi1>, vector<64x36xf32>
    %c0_29 = arith.constant 0 : index
    %c2_30 = arith.constant 2 : index
    %c0_31 = arith.constant 0 : index
    %c0_32 = arith.constant 0 : index
    %38 = vector.load %arg5[%c0_29, %c2_30, %c0_31, %c0_32] : memref<1x3x64x36xf32, #tpu.memory_space<vmem>>, vector<1x1x64x36xf32>
    %39 = vector.shape_cast %38 : vector<1x1x64x36xf32> to vector<64x36xf32>
    %40 = vector.shape_cast %37 : vector<64x36xf32> to vector<1x1x64x36xf32>
    tpu.vector_store %arg5[%c0_29, %c2_30, %c0_31, %c0_32], %40 {strides = array<i32>} : memref<1x3x64x36xf32, #tpu.memory_space<vmem>>, vector<1x1x64x36xf32>,
    return
  }
  func.func @transform_0(%arg0: i32, %arg1: i32) -> (i32, i32, i32, i32) {
    %c0_i32 = arith.constant 0 : i32
    %c0_i32_0 = arith.constant 0 : i32
    %c0_i32_1 = arith.constant 0 : i32
    return %arg0, %arg1, %c0_i32, %c0_i32_0 : i32, i32, i32, i32
  }
  func.func @transform_1(%arg0: i32, %arg1: i32) -> (i32, i32) {
    %c0_i32 = arith.constant 0 : i32
    %c0_i32_0 = arith.constant 0 : i32
    %c0_i32_1 = arith.constant 0 : i32
    return %c0_i32, %c0_i32_0 : i32, i32
  }
  func.func @transform_2(%arg0: i32, %arg1: i32) -> (i32, i32) {
    %c0_i32 = arith.constant 0 : i32
    %c0_i32_0 = arith.constant 0 : i32
    %c0_i32_1 = arith.constant 0 : i32
    return %c0_i32, %c0_i32_0 : i32, i32
  }
  func.func @transform_3(%arg0: i32, %arg1: i32) -> (i32, i32, i32, i32) {
    %c0_i32 = arith.constant 0 : i32
    %c0_i32_0 = arith.constant 0 : i32
    %c0_i32_1 = arith.constant 0 : i32
    return %arg0, %arg1, %c0_i32, %c0_i32_0 : i32, i32, i32, i32
  }
}

module attributes {stable_mosaic.version = 11 : i64} {
  func.func @kernel(%arg0: i32, %arg1: i32, %arg2: memref<1x3x8x36xf32, #tpu.memory_space<vmem>>, %arg3: memref<1x1x8x36xf32, #tpu.memory_space<vmem>>, %arg4: memref<1x1x8x36xf32, #tpu.memory_space<vmem>>, %arg5: memref<1x22xf32, #tpu.memory_space<vmem>>, %arg6: memref<3x8x72xf32, #tpu.memory_space<vmem>>, %arg7: memref<8x1xf32, #tpu.memory_space<vmem>>, %arg8: memref<1x3x8x36xf32, #tpu.memory_space<vmem>>) attributes {dimension_semantics = [#tpu.dimension_semantics<parallel>, #tpu.dimension_semantics<parallel>], iteration_bounds = array<i64: 2, 2>, scalar_prefetch = 0 : i64, scratch_operands = 0 : i64, tpu.core_type = #tpu.core_type<tc>, window_params = [{transform_indices = @transform_0, window_bounds = array<i64: 1, 3, 8, 36>}, {transform_indices = @transform_1, window_bounds = array<i64: 1, 1, 8, 36>}, {transform_indices = @transform_2, window_bounds = array<i64: 1, 1, 8, 36>}, {pipeline_mode = #tpu.pipeline_mode<synchronous>, transform_indices = @transform_3, window_bounds = array<i64: 1, 22>}, {pipeline_mode = #tpu.pipeline_mode<synchronous>, transform_indices = @transform_4, window_bounds = array<i64: 3, 8, 72>}, {pipeline_mode = #tpu.pipeline_mode<synchronous>, transform_indices = @transform_5, window_bounds = array<i64: 8, 1>}, {transform_indices = @transform_6, window_bounds = array<i64: 1, 3, 8, 36>}]} {
    %c0 = arith.constant 0 : index
    %c0_0 = arith.constant 0 : index
    %0 = vector.load %arg7[%c0, %c0_0] : memref<8x1xf32, #tpu.memory_space<vmem>>, vector<8x1xf32>
    %c0_1 = arith.constant 0 : index
    %c0_2 = arith.constant 0 : index
    %1 = vector.load %arg5[%c0_1, %c0_2] : memref<1x22xf32, #tpu.memory_space<vmem>>, vector<1x22xf32>
    %cst = arith.constant 0.000000e+00 : f32
    %2 = vector.broadcast %cst : f32 to vector<8x7xf32>
    %cst_3 = arith.constant 0.000000e+00 : f32
    %3 = vector.broadcast %cst_3 : f32 to vector<8x36xf32>
    %c0_4 = arith.constant 0 : index
    %c0_5 = arith.constant 0 : index
    %c0_6 = arith.constant 0 : index
    %4 = vector.load %arg6[%c0_4, %c0_5, %c0_6] : memref<3x8x72xf32, #tpu.memory_space<vmem>>, vector<1x8x72xf32>
    %5 = vector.shape_cast %4 : vector<1x8x72xf32> to vector<8x72xf32>
    %c1 = arith.constant 1 : index
    %c0_7 = arith.constant 0 : index
    %c0_8 = arith.constant 0 : index
    %6 = vector.load %arg6[%c1, %c0_7, %c0_8] : memref<3x8x72xf32, #tpu.memory_space<vmem>>, vector<1x8x72xf32>
    %7 = vector.shape_cast %6 : vector<1x8x72xf32> to vector<8x72xf32>
    %c2 = arith.constant 2 : index
    %c0_9 = arith.constant 0 : index
    %c0_10 = arith.constant 0 : index
    %8 = vector.load %arg6[%c2, %c0_9, %c0_10] : memref<3x8x72xf32, #tpu.memory_space<vmem>>, vector<1x8x72xf32>
    %9 = vector.shape_cast %8 : vector<1x8x72xf32> to vector<8x72xf32>
    %c0_11 = arith.constant 0 : index
    %c0_12 = arith.constant 0 : index
    %c0_13 = arith.constant 0 : index
    %c0_14 = arith.constant 0 : index
    %10 = vector.load %arg3[%c0_11, %c0_12, %c0_13, %c0_14] : memref<1x1x8x36xf32, #tpu.memory_space<vmem>>, vector<1x1x8x36xf32>
    %11 = vector.shape_cast %10 : vector<1x1x8x36xf32> to vector<8x36xf32>
    %12 = vector.extract_strided_slice %11 {offsets = [0, 0], sizes = [8, 22], strides = [1, 1]} : vector<8x36xf32> to vector<8x22xf32>
    %13 = vector.extract_strided_slice %11 {offsets = [0, 1], sizes = [8, 22], strides = [1, 1]} : vector<8x36xf32> to vector<8x22xf32>
    %14 = vector.extract_strided_slice %11 {offsets = [0, 2], sizes = [8, 22], strides = [1, 1]} : vector<8x36xf32> to vector<8x22xf32>
    %15 = vector.extract_strided_slice %11 {offsets = [0, 6], sizes = [8, 22], strides = [1, 1]} : vector<8x36xf32> to vector<8x22xf32>
    %16 = vector.extract_strided_slice %11 {offsets = [0, 7], sizes = [8, 22], strides = [1, 1]} : vector<8x36xf32> to vector<8x22xf32>
    %17 = vector.extract_strided_slice %11 {offsets = [0, 8], sizes = [8, 22], strides = [1, 1]} : vector<8x36xf32> to vector<8x22xf32>
    %18 = vector.extract_strided_slice %11 {offsets = [0, 12], sizes = [8, 22], strides = [1, 1]} : vector<8x36xf32> to vector<8x22xf32>
    %19 = vector.extract_strided_slice %11 {offsets = [0, 13], sizes = [8, 22], strides = [1, 1]} : vector<8x36xf32> to vector<8x22xf32>
    %20 = vector.extract_strided_slice %11 {offsets = [0, 14], sizes = [8, 22], strides = [1, 1]} : vector<8x36xf32> to vector<8x22xf32>
    %21 = tpu.concatenate %12, %13, %14, %15, %16, %17, %18, %19, %20 in 0 : vector<8x22xf32>, vector<8x22xf32>, vector<8x22xf32>, vector<8x22xf32>, vector<8x22xf32>, vector<8x22xf32>, vector<8x22xf32>, vector<8x22xf32>, vector<8x22xf32> -> vector<72x22xf32>
    %c0_15 = arith.constant 0 : index
    %c0_16 = arith.constant 0 : index
    %c0_17 = arith.constant 0 : index
    %c0_18 = arith.constant 0 : index
    %22 = vector.load %arg2[%c0_15, %c0_16, %c0_17, %c0_18] : memref<1x3x8x36xf32, #tpu.memory_space<vmem>>, vector<1x1x8x36xf32>
    %23 = vector.shape_cast %22 : vector<1x1x8x36xf32> to vector<8x36xf32>
    %24 = vector.extract_strided_slice %23 {offsets = [0, 0], sizes = [8, 22], strides = [1, 1]} : vector<8x36xf32> to vector<8x22xf32>
    %25 = vector.extract_strided_slice %23 {offsets = [0, 1], sizes = [8, 22], strides = [1, 1]} : vector<8x36xf32> to vector<8x22xf32>
    %26 = vector.extract_strided_slice %23 {offsets = [0, 2], sizes = [8, 22], strides = [1, 1]} : vector<8x36xf32> to vector<8x22xf32>
    %27 = vector.extract_strided_slice %23 {offsets = [0, 6], sizes = [8, 22], strides = [1, 1]} : vector<8x36xf32> to vector<8x22xf32>
    %28 = vector.extract_strided_slice %23 {offsets = [0, 7], sizes = [8, 22], strides = [1, 1]} : vector<8x36xf32> to vector<8x22xf32>
    %29 = vector.extract_strided_slice %23 {offsets = [0, 8], sizes = [8, 22], strides = [1, 1]} : vector<8x36xf32> to vector<8x22xf32>
    %30 = vector.extract_strided_slice %23 {offsets = [0, 12], sizes = [8, 22], strides = [1, 1]} : vector<8x36xf32> to vector<8x22xf32>
    %31 = vector.extract_strided_slice %23 {offsets = [0, 13], sizes = [8, 22], strides = [1, 1]} : vector<8x36xf32> to vector<8x22xf32>
    %32 = vector.extract_strided_slice %23 {offsets = [0, 14], sizes = [8, 22], strides = [1, 1]} : vector<8x36xf32> to vector<8x22xf32>
    %33 = tpu.concatenate %24, %25, %26, %27, %28, %29, %30, %31, %32 in 0 : vector<8x22xf32>, vector<8x22xf32>, vector<8x22xf32>, vector<8x22xf32>, vector<8x22xf32>, vector<8x22xf32>, vector<8x22xf32>, vector<8x22xf32>, vector<8x22xf32> -> vector<72x22xf32>
    %c0_19 = arith.constant 0 : index
    %c1_20 = arith.constant 1 : index
    %c0_21 = arith.constant 0 : index
    %c0_22 = arith.constant 0 : index
    %34 = vector.load %arg2[%c0_19, %c1_20, %c0_21, %c0_22] : memref<1x3x8x36xf32, #tpu.memory_space<vmem>>, vector<1x1x8x36xf32>
    %35 = vector.shape_cast %34 : vector<1x1x8x36xf32> to vector<8x36xf32>
    %36 = vector.extract_strided_slice %35 {offsets = [0, 0], sizes = [8, 22], strides = [1, 1]} : vector<8x36xf32> to vector<8x22xf32>
    %37 = vector.extract_strided_slice %35 {offsets = [0, 1], sizes = [8, 22], strides = [1, 1]} : vector<8x36xf32> to vector<8x22xf32>
    %38 = vector.extract_strided_slice %35 {offsets = [0, 2], sizes = [8, 22], strides = [1, 1]} : vector<8x36xf32> to vector<8x22xf32>
    %39 = vector.extract_strided_slice %35 {offsets = [0, 6], sizes = [8, 22], strides = [1, 1]} : vector<8x36xf32> to vector<8x22xf32>
    %40 = vector.extract_strided_slice %35 {offsets = [0, 7], sizes = [8, 22], strides = [1, 1]} : vector<8x36xf32> to vector<8x22xf32>
    %41 = vector.extract_strided_slice %35 {offsets = [0, 8], sizes = [8, 22], strides = [1, 1]} : vector<8x36xf32> to vector<8x22xf32>
    %42 = vector.extract_strided_slice %35 {offsets = [0, 12], sizes = [8, 22], strides = [1, 1]} : vector<8x36xf32> to vector<8x22xf32>
    %43 = vector.extract_strided_slice %35 {offsets = [0, 13], sizes = [8, 22], strides = [1, 1]} : vector<8x36xf32> to vector<8x22xf32>
    %44 = vector.extract_strided_slice %35 {offsets = [0, 14], sizes = [8, 22], strides = [1, 1]} : vector<8x36xf32> to vector<8x22xf32>
    %45 = tpu.concatenate %36, %37, %38, %39, %40, %41, %42, %43, %44 in 0 : vector<8x22xf32>, vector<8x22xf32>, vector<8x22xf32>, vector<8x22xf32>, vector<8x22xf32>, vector<8x22xf32>, vector<8x22xf32>, vector<8x22xf32>, vector<8x22xf32> -> vector<72x22xf32>
    %c3_i32 = arith.constant 3 : i32
    %46 = arith.muli %arg1, %c3_i32 : i32
    %c0_i32 = arith.constant 0 : i32
    %47 = arith.addi %46, %c0_i32 : i32
    %c1_i32 = arith.constant 1 : i32
    %48 = arith.cmpi sge, %47, %c1_i32 : i32
    %c4_i32 = arith.constant 4 : i32
    %49 = arith.cmpi sle, %47, %c4_i32 : i32
    %50 = arith.andi %48, %49 : i1
    %51 = arith.extui %50 : i1 to i32
    %c0_i32_23 = arith.constant 0 : i32
    %52 = arith.cmpi ne, %51, %c0_i32_23 : i32
    scf.if %52 {
      %cst_46 = arith.constant dense<0.000000e+00> : vector<8x22xf32>
      %100 = tpu.matmul %5, %21, %cst_46 {dimension_numbers = #tpu.dot_dimension_numbers<[1], [0], [0], [1], [0, 0, 1, 1], [], []>} : vector<8x72xf32>, vector<72x22xf32>, vector<8x22xf32> -> vector<8x22xf32>
      %cst_47 = arith.constant dense<0.000000e+00> : vector<8x22xf32>
      %101 = tpu.matmul %7, %33, %cst_47 {dimension_numbers = #tpu.dot_dimension_numbers<[1], [0], [0], [1], [0, 0, 1, 1], [], []>} : vector<8x72xf32>, vector<72x22xf32>, vector<8x22xf32> -> vector<8x22xf32>
      %102 = arith.addf %100, %101 : vector<8x22xf32>
      %cst_48 = arith.constant dense<0.000000e+00> : vector<8x22xf32>
      %103 = tpu.matmul %9, %45, %cst_48 {dimension_numbers = #tpu.dot_dimension_numbers<[1], [0], [0], [1], [0, 0, 1, 1], [], []>} : vector<8x72xf32>, vector<72x22xf32>, vector<8x22xf32> -> vector<8x22xf32>
      %104 = arith.addf %102, %103 : vector<8x22xf32>
      %105 = vector.broadcast %0 : vector<8x1xf32> to vector<8x22xf32>
      %106 = arith.addf %104, %105 : vector<8x22xf32>
      %107 = vector.broadcast %1 : vector<1x22xf32> to vector<8x22xf32>
      %108 = arith.mulf %106, %107 : vector<8x22xf32>
      %109 = tpu.concatenate %2, %108, %2 in 1 : vector<8x7xf32>, vector<8x22xf32>, vector<8x7xf32> -> vector<8x36xf32>
      %c0_49 = arith.constant 0 : index
      %c0_50 = arith.constant 0 : index
      %c0_51 = arith.constant 0 : index
      %c0_52 = arith.constant 0 : index
      %110 = vector.load %arg8[%c0_49, %c0_50, %c0_51, %c0_52] : memref<1x3x8x36xf32, #tpu.memory_space<vmem>>, vector<1x1x8x36xf32>
      %111 = vector.shape_cast %110 : vector<1x1x8x36xf32> to vector<8x36xf32>
      %112 = vector.shape_cast %109 : vector<8x36xf32> to vector<1x1x8x36xf32>
      tpu.vector_store %arg8[%c0_49, %c0_50, %c0_51, %c0_52], %112 {strides = array<i32>} : memref<1x3x8x36xf32, #tpu.memory_space<vmem>>, vector<1x1x8x36xf32>,
    } else {
    }
    %true = arith.constant true
    %53 = arith.xori %50, %true : i1
    %54 = arith.extui %53 : i1 to i32
    %c0_i32_24 = arith.constant 0 : i32
    %55 = arith.cmpi ne, %54, %c0_i32_24 : i32
    scf.if %55 {
      %c0_46 = arith.constant 0 : index
      %c0_47 = arith.constant 0 : index
      %c0_48 = arith.constant 0 : index
      %c0_49 = arith.constant 0 : index
      %100 = vector.load %arg8[%c0_46, %c0_47, %c0_48, %c0_49] : memref<1x3x8x36xf32, #tpu.memory_space<vmem>>, vector<1x1x8x36xf32>
      %101 = vector.shape_cast %100 : vector<1x1x8x36xf32> to vector<8x36xf32>
      %102 = vector.shape_cast %3 : vector<8x36xf32> to vector<1x1x8x36xf32>
      tpu.vector_store %arg8[%c0_46, %c0_47, %c0_48, %c0_49], %102 {strides = array<i32>} : memref<1x3x8x36xf32, #tpu.memory_space<vmem>>, vector<1x1x8x36xf32>,
    } else {
    }
    %c0_25 = arith.constant 0 : index
    %c2_26 = arith.constant 2 : index
    %c0_27 = arith.constant 0 : index
    %c0_28 = arith.constant 0 : index
    %56 = vector.load %arg2[%c0_25, %c2_26, %c0_27, %c0_28] : memref<1x3x8x36xf32, #tpu.memory_space<vmem>>, vector<1x1x8x36xf32>
    %57 = vector.shape_cast %56 : vector<1x1x8x36xf32> to vector<8x36xf32>
    %58 = vector.extract_strided_slice %57 {offsets = [0, 0], sizes = [8, 22], strides = [1, 1]} : vector<8x36xf32> to vector<8x22xf32>
    %59 = vector.extract_strided_slice %57 {offsets = [0, 1], sizes = [8, 22], strides = [1, 1]} : vector<8x36xf32> to vector<8x22xf32>
    %60 = vector.extract_strided_slice %57 {offsets = [0, 2], sizes = [8, 22], strides = [1, 1]} : vector<8x36xf32> to vector<8x22xf32>
    %61 = vector.extract_strided_slice %57 {offsets = [0, 6], sizes = [8, 22], strides = [1, 1]} : vector<8x36xf32> to vector<8x22xf32>
    %62 = vector.extract_strided_slice %57 {offsets = [0, 7], sizes = [8, 22], strides = [1, 1]} : vector<8x36xf32> to vector<8x22xf32>
    %63 = vector.extract_strided_slice %57 {offsets = [0, 8], sizes = [8, 22], strides = [1, 1]} : vector<8x36xf32> to vector<8x22xf32>
    %64 = vector.extract_strided_slice %57 {offsets = [0, 12], sizes = [8, 22], strides = [1, 1]} : vector<8x36xf32> to vector<8x22xf32>
    %65 = vector.extract_strided_slice %57 {offsets = [0, 13], sizes = [8, 22], strides = [1, 1]} : vector<8x36xf32> to vector<8x22xf32>
    %66 = vector.extract_strided_slice %57 {offsets = [0, 14], sizes = [8, 22], strides = [1, 1]} : vector<8x36xf32> to vector<8x22xf32>
    %67 = tpu.concatenate %58, %59, %60, %61, %62, %63, %64, %65, %66 in 0 : vector<8x22xf32>, vector<8x22xf32>, vector<8x22xf32>, vector<8x22xf32>, vector<8x22xf32>, vector<8x22xf32>, vector<8x22xf32>, vector<8x22xf32>, vector<8x22xf32> -> vector<72x22xf32>
    %c3_i32_29 = arith.constant 3 : i32
    %68 = arith.muli %arg1, %c3_i32_29 : i32
    %c1_i32_30 = arith.constant 1 : i32
    %69 = arith.addi %68, %c1_i32_30 : i32
    %c1_i32_31 = arith.constant 1 : i32
    %70 = arith.cmpi sge, %69, %c1_i32_31 : i32
    %c4_i32_32 = arith.constant 4 : i32
    %71 = arith.cmpi sle, %69, %c4_i32_32 : i32
    %72 = arith.andi %70, %71 : i1
    %73 = arith.extui %72 : i1 to i32
    %c0_i32_33 = arith.constant 0 : i32
    %74 = arith.cmpi ne, %73, %c0_i32_33 : i32
    scf.if %74 {
      %cst_46 = arith.constant dense<0.000000e+00> : vector<8x22xf32>
      %100 = tpu.matmul %5, %33, %cst_46 {dimension_numbers = #tpu.dot_dimension_numbers<[1], [0], [0], [1], [0, 0, 1, 1], [], []>} : vector<8x72xf32>, vector<72x22xf32>, vector<8x22xf32> -> vector<8x22xf32>
      %cst_47 = arith.constant dense<0.000000e+00> : vector<8x22xf32>
      %101 = tpu.matmul %7, %45, %cst_47 {dimension_numbers = #tpu.dot_dimension_numbers<[1], [0], [0], [1], [0, 0, 1, 1], [], []>} : vector<8x72xf32>, vector<72x22xf32>, vector<8x22xf32> -> vector<8x22xf32>
      %102 = arith.addf %100, %101 : vector<8x22xf32>
      %cst_48 = arith.constant dense<0.000000e+00> : vector<8x22xf32>
      %103 = tpu.matmul %9, %67, %cst_48 {dimension_numbers = #tpu.dot_dimension_numbers<[1], [0], [0], [1], [0, 0, 1, 1], [], []>} : vector<8x72xf32>, vector<72x22xf32>, vector<8x22xf32> -> vector<8x22xf32>
      %104 = arith.addf %102, %103 : vector<8x22xf32>
      %105 = vector.broadcast %0 : vector<8x1xf32> to vector<8x22xf32>
      %106 = arith.addf %104, %105 : vector<8x22xf32>
      %107 = vector.broadcast %1 : vector<1x22xf32> to vector<8x22xf32>
      %108 = arith.mulf %106, %107 : vector<8x22xf32>
      %109 = tpu.concatenate %2, %108, %2 in 1 : vector<8x7xf32>, vector<8x22xf32>, vector<8x7xf32> -> vector<8x36xf32>
      %c0_49 = arith.constant 0 : index
      %c1_50 = arith.constant 1 : index
      %c0_51 = arith.constant 0 : index
      %c0_52 = arith.constant 0 : index
      %110 = vector.load %arg8[%c0_49, %c1_50, %c0_51, %c0_52] : memref<1x3x8x36xf32, #tpu.memory_space<vmem>>, vector<1x1x8x36xf32>
      %111 = vector.shape_cast %110 : vector<1x1x8x36xf32> to vector<8x36xf32>
      %112 = vector.shape_cast %109 : vector<8x36xf32> to vector<1x1x8x36xf32>
      tpu.vector_store %arg8[%c0_49, %c1_50, %c0_51, %c0_52], %112 {strides = array<i32>} : memref<1x3x8x36xf32, #tpu.memory_space<vmem>>, vector<1x1x8x36xf32>,
    } else {
    }
    %true_34 = arith.constant true
    %75 = arith.xori %72, %true_34 : i1
    %76 = arith.extui %75 : i1 to i32
    %c0_i32_35 = arith.constant 0 : i32
    %77 = arith.cmpi ne, %76, %c0_i32_35 : i32
    scf.if %77 {
      %c0_46 = arith.constant 0 : index
      %c1_47 = arith.constant 1 : index
      %c0_48 = arith.constant 0 : index
      %c0_49 = arith.constant 0 : index
      %100 = vector.load %arg8[%c0_46, %c1_47, %c0_48, %c0_49] : memref<1x3x8x36xf32, #tpu.memory_space<vmem>>, vector<1x1x8x36xf32>
      %101 = vector.shape_cast %100 : vector<1x1x8x36xf32> to vector<8x36xf32>
      %102 = vector.shape_cast %3 : vector<8x36xf32> to vector<1x1x8x36xf32>
      tpu.vector_store %arg8[%c0_46, %c1_47, %c0_48, %c0_49], %102 {strides = array<i32>} : memref<1x3x8x36xf32, #tpu.memory_space<vmem>>, vector<1x1x8x36xf32>,
    } else {
    }
    %c0_36 = arith.constant 0 : index
    %c0_37 = arith.constant 0 : index
    %c0_38 = arith.constant 0 : index
    %c0_39 = arith.constant 0 : index
    %78 = vector.load %arg4[%c0_36, %c0_37, %c0_38, %c0_39] : memref<1x1x8x36xf32, #tpu.memory_space<vmem>>, vector<1x1x8x36xf32>
    %79 = vector.shape_cast %78 : vector<1x1x8x36xf32> to vector<8x36xf32>
    %80 = vector.extract_strided_slice %79 {offsets = [0, 0], sizes = [8, 22], strides = [1, 1]} : vector<8x36xf32> to vector<8x22xf32>
    %81 = vector.extract_strided_slice %79 {offsets = [0, 1], sizes = [8, 22], strides = [1, 1]} : vector<8x36xf32> to vector<8x22xf32>
    %82 = vector.extract_strided_slice %79 {offsets = [0, 2], sizes = [8, 22], strides = [1, 1]} : vector<8x36xf32> to vector<8x22xf32>
    %83 = vector.extract_strided_slice %79 {offsets = [0, 6], sizes = [8, 22], strides = [1, 1]} : vector<8x36xf32> to vector<8x22xf32>
    %84 = vector.extract_strided_slice %79 {offsets = [0, 7], sizes = [8, 22], strides = [1, 1]} : vector<8x36xf32> to vector<8x22xf32>
    %85 = vector.extract_strided_slice %79 {offsets = [0, 8], sizes = [8, 22], strides = [1, 1]} : vector<8x36xf32> to vector<8x22xf32>
    %86 = vector.extract_strided_slice %79 {offsets = [0, 12], sizes = [8, 22], strides = [1, 1]} : vector<8x36xf32> to vector<8x22xf32>
    %87 = vector.extract_strided_slice %79 {offsets = [0, 13], sizes = [8, 22], strides = [1, 1]} : vector<8x36xf32> to vector<8x22xf32>
    %88 = vector.extract_strided_slice %79 {offsets = [0, 14], sizes = [8, 22], strides = [1, 1]} : vector<8x36xf32> to vector<8x22xf32>
    %89 = tpu.concatenate %80, %81, %82, %83, %84, %85, %86, %87, %88 in 0 : vector<8x22xf32>, vector<8x22xf32>, vector<8x22xf32>, vector<8x22xf32>, vector<8x22xf32>, vector<8x22xf32>, vector<8x22xf32>, vector<8x22xf32>, vector<8x22xf32> -> vector<72x22xf32>
    %c3_i32_40 = arith.constant 3 : i32
    %90 = arith.muli %arg1, %c3_i32_40 : i32
    %c2_i32 = arith.constant 2 : i32
    %91 = arith.addi %90, %c2_i32 : i32
    %c1_i32_41 = arith.constant 1 : i32
    %92 = arith.cmpi sge, %91, %c1_i32_41 : i32
    %c4_i32_42 = arith.constant 4 : i32
    %93 = arith.cmpi sle, %91, %c4_i32_42 : i32
    %94 = arith.andi %92, %93 : i1
    %95 = arith.extui %94 : i1 to i32
    %c0_i32_43 = arith.constant 0 : i32
    %96 = arith.cmpi ne, %95, %c0_i32_43 : i32
    scf.if %96 {
      %cst_46 = arith.constant dense<0.000000e+00> : vector<8x22xf32>
      %100 = tpu.matmul %5, %45, %cst_46 {dimension_numbers = #tpu.dot_dimension_numbers<[1], [0], [0], [1], [0, 0, 1, 1], [], []>} : vector<8x72xf32>, vector<72x22xf32>, vector<8x22xf32> -> vector<8x22xf32>
      %cst_47 = arith.constant dense<0.000000e+00> : vector<8x22xf32>
      %101 = tpu.matmul %7, %67, %cst_47 {dimension_numbers = #tpu.dot_dimension_numbers<[1], [0], [0], [1], [0, 0, 1, 1], [], []>} : vector<8x72xf32>, vector<72x22xf32>, vector<8x22xf32> -> vector<8x22xf32>
      %102 = arith.addf %100, %101 : vector<8x22xf32>
      %cst_48 = arith.constant dense<0.000000e+00> : vector<8x22xf32>
      %103 = tpu.matmul %9, %89, %cst_48 {dimension_numbers = #tpu.dot_dimension_numbers<[1], [0], [0], [1], [0, 0, 1, 1], [], []>} : vector<8x72xf32>, vector<72x22xf32>, vector<8x22xf32> -> vector<8x22xf32>
      %104 = arith.addf %102, %103 : vector<8x22xf32>
      %105 = vector.broadcast %0 : vector<8x1xf32> to vector<8x22xf32>
      %106 = arith.addf %104, %105 : vector<8x22xf32>
      %107 = vector.broadcast %1 : vector<1x22xf32> to vector<8x22xf32>
      %108 = arith.mulf %106, %107 : vector<8x22xf32>
      %109 = tpu.concatenate %2, %108, %2 in 1 : vector<8x7xf32>, vector<8x22xf32>, vector<8x7xf32> -> vector<8x36xf32>
      %c0_49 = arith.constant 0 : index
      %c2_50 = arith.constant 2 : index
      %c0_51 = arith.constant 0 : index
      %c0_52 = arith.constant 0 : index
      %110 = vector.load %arg8[%c0_49, %c2_50, %c0_51, %c0_52] : memref<1x3x8x36xf32, #tpu.memory_space<vmem>>, vector<1x1x8x36xf32>
      %111 = vector.shape_cast %110 : vector<1x1x8x36xf32> to vector<8x36xf32>
      %112 = vector.shape_cast %109 : vector<8x36xf32> to vector<1x1x8x36xf32>
      tpu.vector_store %arg8[%c0_49, %c2_50, %c0_51, %c0_52], %112 {strides = array<i32>} : memref<1x3x8x36xf32, #tpu.memory_space<vmem>>, vector<1x1x8x36xf32>,
    } else {
    }
    %true_44 = arith.constant true
    %97 = arith.xori %94, %true_44 : i1
    %98 = arith.extui %97 : i1 to i32
    %c0_i32_45 = arith.constant 0 : i32
    %99 = arith.cmpi ne, %98, %c0_i32_45 : i32
    scf.if %99 {
      %c0_46 = arith.constant 0 : index
      %c2_47 = arith.constant 2 : index
      %c0_48 = arith.constant 0 : index
      %c0_49 = arith.constant 0 : index
      %100 = vector.load %arg8[%c0_46, %c2_47, %c0_48, %c0_49] : memref<1x3x8x36xf32, #tpu.memory_space<vmem>>, vector<1x1x8x36xf32>
      %101 = vector.shape_cast %100 : vector<1x1x8x36xf32> to vector<8x36xf32>
      %102 = vector.shape_cast %3 : vector<8x36xf32> to vector<1x1x8x36xf32>
      tpu.vector_store %arg8[%c0_46, %c2_47, %c0_48, %c0_49], %102 {strides = array<i32>} : memref<1x3x8x36xf32, #tpu.memory_space<vmem>>, vector<1x1x8x36xf32>,
    } else {
    }
    return
  }
  func.func @transform_0(%arg0: i32, %arg1: i32) -> (i32, i32, i32, i32) {
    %c0_i32 = arith.constant 0 : i32
    %c0_i32_0 = arith.constant 0 : i32
    %c0_i32_1 = arith.constant 0 : i32
    return %arg0, %arg1, %c0_i32, %c0_i32_0 : i32, i32, i32, i32
  }
  func.func @transform_1(%arg0: i32, %arg1: i32) -> (i32, i32, i32, i32) {
    %c3_i32 = arith.constant 3 : i32
    %0 = arith.muli %arg1, %c3_i32 : i32
    %c1_i32 = arith.constant 1 : i32
    %1 = arith.subi %0, %c1_i32 : i32
    %c0_i32 = arith.constant 0 : i32
    %2 = arith.maxsi %1, %c0_i32 : i32
    %c0_i32_0 = arith.constant 0 : i32
    %c0_i32_1 = arith.constant 0 : i32
    %c0_i32_2 = arith.constant 0 : i32
    return %arg0, %2, %c0_i32_0, %c0_i32_1 : i32, i32, i32, i32
  }
  func.func @transform_2(%arg0: i32, %arg1: i32) -> (i32, i32, i32, i32) {
    %c3_i32 = arith.constant 3 : i32
    %0 = arith.muli %arg1, %c3_i32 : i32
    %c3_i32_0 = arith.constant 3 : i32
    %1 = arith.addi %0, %c3_i32_0 : i32
    %c5_i32 = arith.constant 5 : i32
    %2 = arith.minsi %1, %c5_i32 : i32
    %c0_i32 = arith.constant 0 : i32
    %c0_i32_1 = arith.constant 0 : i32
    %c0_i32_2 = arith.constant 0 : i32
    return %arg0, %2, %c0_i32, %c0_i32_1 : i32, i32, i32, i32
  }
  func.func @transform_3(%arg0: i32, %arg1: i32) -> (i32, i32) {
    %c0_i32 = arith.constant 0 : i32
    %c0_i32_0 = arith.constant 0 : i32
    %c0_i32_1 = arith.constant 0 : i32
    return %c0_i32, %c0_i32_0 : i32, i32
  }
  func.func @transform_4(%arg0: i32, %arg1: i32) -> (i32, i32, i32) {
    %c0_i32 = arith.constant 0 : i32
    %c0_i32_0 = arith.constant 0 : i32
    %c0_i32_1 = arith.constant 0 : i32
    %c0_i32_2 = arith.constant 0 : i32
    return %c0_i32, %c0_i32_0, %c0_i32_1 : i32, i32, i32
  }
  func.func @transform_5(%arg0: i32, %arg1: i32) -> (i32, i32) {
    %c0_i32 = arith.constant 0 : i32
    %c0_i32_0 = arith.constant 0 : i32
    %c0_i32_1 = arith.constant 0 : i32
    return %c0_i32, %c0_i32_0 : i32, i32
  }
  func.func @transform_6(%arg0: i32, %arg1: i32) -> (i32, i32, i32, i32) {
    %c0_i32 = arith.constant 0 : i32
    %c0_i32_0 = arith.constant 0 : i32
    %c0_i32_1 = arith.constant 0 : i32
    return %arg0, %arg1, %c0_i32, %c0_i32_0 : i32, i32, i32, i32
  }
}

module attributes {stable_mosaic.version = 11 : i64} {
  func.func @kernel(%arg0: i32, %arg1: i32, %arg2: memref<1x2x8x100xf32, #tpu.memory_space<vmem>>, %arg3: memref<1x1x8x100xf32, #tpu.memory_space<vmem>>, %arg4: memref<1x1x8x100xf32, #tpu.memory_space<vmem>>, %arg5: memref<1x2x8x100xf32, #tpu.memory_space<vmem>>, %arg6: memref<1x1x8x100xf32, #tpu.memory_space<vmem>>, %arg7: memref<1x1x8x100xf32, #tpu.memory_space<vmem>>, %arg8: memref<1x78xf32, #tpu.memory_space<vmem>>, %arg9: memref<3x8x144xf32, #tpu.memory_space<vmem>>, %arg10: memref<8x1xf32, #tpu.memory_space<vmem>>, %arg11: memref<1x2x8x100xf32, #tpu.memory_space<vmem>>) attributes {dimension_semantics = [#tpu.dimension_semantics<parallel>, #tpu.dimension_semantics<parallel>], iteration_bounds = array<i64: 2, 5>, scalar_prefetch = 0 : i64, scratch_operands = 0 : i64, tpu.core_type = #tpu.core_type<tc>, window_params = [{transform_indices = @transform_0, window_bounds = array<i64: 1, 2, 8, 100>}, {transform_indices = @transform_1, window_bounds = array<i64: 1, 1, 8, 100>}, {transform_indices = @transform_2, window_bounds = array<i64: 1, 1, 8, 100>}, {transform_indices = @transform_3, window_bounds = array<i64: 1, 2, 8, 100>}, {transform_indices = @transform_4, window_bounds = array<i64: 1, 1, 8, 100>}, {transform_indices = @transform_5, window_bounds = array<i64: 1, 1, 8, 100>}, {pipeline_mode = #tpu.pipeline_mode<synchronous>, transform_indices = @transform_6, window_bounds = array<i64: 1, 78>}, {pipeline_mode = #tpu.pipeline_mode<synchronous>, transform_indices = @transform_7, window_bounds = array<i64: 3, 8, 144>}, {pipeline_mode = #tpu.pipeline_mode<synchronous>, transform_indices = @transform_8, window_bounds = array<i64: 8, 1>}, {transform_indices = @transform_9, window_bounds = array<i64: 1, 2, 8, 100>}]} {
    %c0 = arith.constant 0 : index
    %c0_0 = arith.constant 0 : index
    %0 = vector.load %arg10[%c0, %c0_0] : memref<8x1xf32, #tpu.memory_space<vmem>>, vector<8x1xf32>
    %c0_1 = arith.constant 0 : index
    %c0_2 = arith.constant 0 : index
    %1 = vector.load %arg8[%c0_1, %c0_2] : memref<1x78xf32, #tpu.memory_space<vmem>>, vector<1x78xf32>
    %cst = arith.constant 0.000000e+00 : f32
    %2 = vector.broadcast %cst : f32 to vector<8x11xf32>
    %cst_3 = arith.constant 0.000000e+00 : f32
    %3 = vector.broadcast %cst_3 : f32 to vector<8x100xf32>
    %c0_4 = arith.constant 0 : index
    %c0_5 = arith.constant 0 : index
    %c0_6 = arith.constant 0 : index
    %4 = vector.load %arg9[%c0_4, %c0_5, %c0_6] : memref<3x8x144xf32, #tpu.memory_space<vmem>>, vector<1x8x144xf32>
    %5 = vector.shape_cast %4 : vector<1x8x144xf32> to vector<8x144xf32>
    %c1 = arith.constant 1 : index
    %c0_7 = arith.constant 0 : index
    %c0_8 = arith.constant 0 : index
    %6 = vector.load %arg9[%c1, %c0_7, %c0_8] : memref<3x8x144xf32, #tpu.memory_space<vmem>>, vector<1x8x144xf32>
    %7 = vector.shape_cast %6 : vector<1x8x144xf32> to vector<8x144xf32>
    %c2 = arith.constant 2 : index
    %c0_9 = arith.constant 0 : index
    %c0_10 = arith.constant 0 : index
    %8 = vector.load %arg9[%c2, %c0_9, %c0_10] : memref<3x8x144xf32, #tpu.memory_space<vmem>>, vector<1x8x144xf32>
    %9 = vector.shape_cast %8 : vector<1x8x144xf32> to vector<8x144xf32>
    %c0_11 = arith.constant 0 : index
    %c0_12 = arith.constant 0 : index
    %c0_13 = arith.constant 0 : index
    %c0_14 = arith.constant 0 : index
    %10 = vector.load %arg3[%c0_11, %c0_12, %c0_13, %c0_14] : memref<1x1x8x100xf32, #tpu.memory_space<vmem>>, vector<1x1x8x100xf32>
    %11 = vector.shape_cast %10 : vector<1x1x8x100xf32> to vector<8x100xf32>
    %c0_15 = arith.constant 0 : index
    %c0_16 = arith.constant 0 : index
    %c0_17 = arith.constant 0 : index
    %c0_18 = arith.constant 0 : index
    %12 = vector.load %arg6[%c0_15, %c0_16, %c0_17, %c0_18] : memref<1x1x8x100xf32, #tpu.memory_space<vmem>>, vector<1x1x8x100xf32>
    %13 = vector.shape_cast %12 : vector<1x1x8x100xf32> to vector<8x100xf32>
    %14 = vector.extract_strided_slice %11 {offsets = [0, 0], sizes = [8, 78], strides = [1, 1]} : vector<8x100xf32> to vector<8x78xf32>
    %15 = vector.extract_strided_slice %13 {offsets = [0, 0], sizes = [8, 78], strides = [1, 1]} : vector<8x100xf32> to vector<8x78xf32>
    %16 = vector.extract_strided_slice %11 {offsets = [0, 1], sizes = [8, 78], strides = [1, 1]} : vector<8x100xf32> to vector<8x78xf32>
    %17 = vector.extract_strided_slice %13 {offsets = [0, 1], sizes = [8, 78], strides = [1, 1]} : vector<8x100xf32> to vector<8x78xf32>
    %18 = vector.extract_strided_slice %11 {offsets = [0, 2], sizes = [8, 78], strides = [1, 1]} : vector<8x100xf32> to vector<8x78xf32>
    %19 = vector.extract_strided_slice %13 {offsets = [0, 2], sizes = [8, 78], strides = [1, 1]} : vector<8x100xf32> to vector<8x78xf32>
    %20 = vector.extract_strided_slice %11 {offsets = [0, 10], sizes = [8, 78], strides = [1, 1]} : vector<8x100xf32> to vector<8x78xf32>
    %21 = vector.extract_strided_slice %13 {offsets = [0, 10], sizes = [8, 78], strides = [1, 1]} : vector<8x100xf32> to vector<8x78xf32>
    %22 = vector.extract_strided_slice %11 {offsets = [0, 11], sizes = [8, 78], strides = [1, 1]} : vector<8x100xf32> to vector<8x78xf32>
    %23 = vector.extract_strided_slice %13 {offsets = [0, 11], sizes = [8, 78], strides = [1, 1]} : vector<8x100xf32> to vector<8x78xf32>
    %24 = vector.extract_strided_slice %11 {offsets = [0, 12], sizes = [8, 78], strides = [1, 1]} : vector<8x100xf32> to vector<8x78xf32>
    %25 = vector.extract_strided_slice %13 {offsets = [0, 12], sizes = [8, 78], strides = [1, 1]} : vector<8x100xf32> to vector<8x78xf32>
    %26 = vector.extract_strided_slice %11 {offsets = [0, 20], sizes = [8, 78], strides = [1, 1]} : vector<8x100xf32> to vector<8x78xf32>
    %27 = vector.extract_strided_slice %13 {offsets = [0, 20], sizes = [8, 78], strides = [1, 1]} : vector<8x100xf32> to vector<8x78xf32>
    %28 = vector.extract_strided_slice %11 {offsets = [0, 21], sizes = [8, 78], strides = [1, 1]} : vector<8x100xf32> to vector<8x78xf32>
    %29 = vector.extract_strided_slice %13 {offsets = [0, 21], sizes = [8, 78], strides = [1, 1]} : vector<8x100xf32> to vector<8x78xf32>
    %30 = vector.extract_strided_slice %11 {offsets = [0, 22], sizes = [8, 78], strides = [1, 1]} : vector<8x100xf32> to vector<8x78xf32>
    %31 = vector.extract_strided_slice %13 {offsets = [0, 22], sizes = [8, 78], strides = [1, 1]} : vector<8x100xf32> to vector<8x78xf32>
    %32 = tpu.concatenate %14, %15, %16, %17, %18, %19, %20, %21, %22, %23, %24, %25, %26, %27, %28, %29 in 0 : vector<8x78xf32>, vector<8x78xf32>, vector<8x78xf32>, vector<8x78xf32>, vector<8x78xf32>, vector<8x78xf32>, vector<8x78xf32>, vector<8x78xf32>, vector<8x78xf32>, vector<8x78xf32>, vector<8x78xf32>, vector<8x78xf32>, vector<8x78xf32>, vector<8x78xf32>, vector<8x78xf32>, vector<8x78xf32> -> vector<128x78xf32>
    %33 = tpu.concatenate %30, %31 in 0 : vector<8x78xf32>, vector<8x78xf32> -> vector<16x78xf32>
    %34 = tpu.concatenate %32, %33 in 0 : vector<128x78xf32>, vector<16x78xf32> -> vector<144x78xf32>
    %c0_19 = arith.constant 0 : index
    %c0_20 = arith.constant 0 : index
    %c0_21 = arith.constant 0 : index
    %c0_22 = arith.constant 0 : index
    %35 = vector.load %arg2[%c0_19, %c0_20, %c0_21, %c0_22] : memref<1x2x8x100xf32, #tpu.memory_space<vmem>>, vector<1x1x8x100xf32>
    %36 = vector.shape_cast %35 : vector<1x1x8x100xf32> to vector<8x100xf32>
    %c0_23 = arith.constant 0 : index
    %c0_24 = arith.constant 0 : index
    %c0_25 = arith.constant 0 : index
    %c0_26 = arith.constant 0 : index
    %37 = vector.load %arg5[%c0_23, %c0_24, %c0_25, %c0_26] : memref<1x2x8x100xf32, #tpu.memory_space<vmem>>, vector<1x1x8x100xf32>
    %38 = vector.shape_cast %37 : vector<1x1x8x100xf32> to vector<8x100xf32>
    %39 = vector.extract_strided_slice %36 {offsets = [0, 0], sizes = [8, 78], strides = [1, 1]} : vector<8x100xf32> to vector<8x78xf32>
    %40 = vector.extract_strided_slice %38 {offsets = [0, 0], sizes = [8, 78], strides = [1, 1]} : vector<8x100xf32> to vector<8x78xf32>
    %41 = vector.extract_strided_slice %36 {offsets = [0, 1], sizes = [8, 78], strides = [1, 1]} : vector<8x100xf32> to vector<8x78xf32>
    %42 = vector.extract_strided_slice %38 {offsets = [0, 1], sizes = [8, 78], strides = [1, 1]} : vector<8x100xf32> to vector<8x78xf32>
    %43 = vector.extract_strided_slice %36 {offsets = [0, 2], sizes = [8, 78], strides = [1, 1]} : vector<8x100xf32> to vector<8x78xf32>
    %44 = vector.extract_strided_slice %38 {offsets = [0, 2], sizes = [8, 78], strides = [1, 1]} : vector<8x100xf32> to vector<8x78xf32>
    %45 = vector.extract_strided_slice %36 {offsets = [0, 10], sizes = [8, 78], strides = [1, 1]} : vector<8x100xf32> to vector<8x78xf32>
    %46 = vector.extract_strided_slice %38 {offsets = [0, 10], sizes = [8, 78], strides = [1, 1]} : vector<8x100xf32> to vector<8x78xf32>
    %47 = vector.extract_strided_slice %36 {offsets = [0, 11], sizes = [8, 78], strides = [1, 1]} : vector<8x100xf32> to vector<8x78xf32>
    %48 = vector.extract_strided_slice %38 {offsets = [0, 11], sizes = [8, 78], strides = [1, 1]} : vector<8x100xf32> to vector<8x78xf32>
    %49 = vector.extract_strided_slice %36 {offsets = [0, 12], sizes = [8, 78], strides = [1, 1]} : vector<8x100xf32> to vector<8x78xf32>
    %50 = vector.extract_strided_slice %38 {offsets = [0, 12], sizes = [8, 78], strides = [1, 1]} : vector<8x100xf32> to vector<8x78xf32>
    %51 = vector.extract_strided_slice %36 {offsets = [0, 20], sizes = [8, 78], strides = [1, 1]} : vector<8x100xf32> to vector<8x78xf32>
    %52 = vector.extract_strided_slice %38 {offsets = [0, 20], sizes = [8, 78], strides = [1, 1]} : vector<8x100xf32> to vector<8x78xf32>
    %53 = vector.extract_strided_slice %36 {offsets = [0, 21], sizes = [8, 78], strides = [1, 1]} : vector<8x100xf32> to vector<8x78xf32>
    %54 = vector.extract_strided_slice %38 {offsets = [0, 21], sizes = [8, 78], strides = [1, 1]} : vector<8x100xf32> to vector<8x78xf32>
    %55 = vector.extract_strided_slice %36 {offsets = [0, 22], sizes = [8, 78], strides = [1, 1]} : vector<8x100xf32> to vector<8x78xf32>
    %56 = vector.extract_strided_slice %38 {offsets = [0, 22], sizes = [8, 78], strides = [1, 1]} : vector<8x100xf32> to vector<8x78xf32>
    %57 = tpu.concatenate %39, %40, %41, %42, %43, %44, %45, %46, %47, %48, %49, %50, %51, %52, %53, %54 in 0 : vector<8x78xf32>, vector<8x78xf32>, vector<8x78xf32>, vector<8x78xf32>, vector<8x78xf32>, vector<8x78xf32>, vector<8x78xf32>, vector<8x78xf32>, vector<8x78xf32>, vector<8x78xf32>, vector<8x78xf32>, vector<8x78xf32>, vector<8x78xf32>, vector<8x78xf32>, vector<8x78xf32>, vector<8x78xf32> -> vector<128x78xf32>
    %58 = tpu.concatenate %55, %56 in 0 : vector<8x78xf32>, vector<8x78xf32> -> vector<16x78xf32>
    %59 = tpu.concatenate %57, %58 in 0 : vector<128x78xf32>, vector<16x78xf32> -> vector<144x78xf32>
    %c0_27 = arith.constant 0 : index
    %c1_28 = arith.constant 1 : index
    %c0_29 = arith.constant 0 : index
    %c0_30 = arith.constant 0 : index
    %60 = vector.load %arg2[%c0_27, %c1_28, %c0_29, %c0_30] : memref<1x2x8x100xf32, #tpu.memory_space<vmem>>, vector<1x1x8x100xf32>
    %61 = vector.shape_cast %60 : vector<1x1x8x100xf32> to vector<8x100xf32>
    %c0_31 = arith.constant 0 : index
    %c1_32 = arith.constant 1 : index
    %c0_33 = arith.constant 0 : index
    %c0_34 = arith.constant 0 : index
    %62 = vector.load %arg5[%c0_31, %c1_32, %c0_33, %c0_34] : memref<1x2x8x100xf32, #tpu.memory_space<vmem>>, vector<1x1x8x100xf32>
    %63 = vector.shape_cast %62 : vector<1x1x8x100xf32> to vector<8x100xf32>
    %64 = vector.extract_strided_slice %61 {offsets = [0, 0], sizes = [8, 78], strides = [1, 1]} : vector<8x100xf32> to vector<8x78xf32>
    %65 = vector.extract_strided_slice %63 {offsets = [0, 0], sizes = [8, 78], strides = [1, 1]} : vector<8x100xf32> to vector<8x78xf32>
    %66 = vector.extract_strided_slice %61 {offsets = [0, 1], sizes = [8, 78], strides = [1, 1]} : vector<8x100xf32> to vector<8x78xf32>
    %67 = vector.extract_strided_slice %63 {offsets = [0, 1], sizes = [8, 78], strides = [1, 1]} : vector<8x100xf32> to vector<8x78xf32>
    %68 = vector.extract_strided_slice %61 {offsets = [0, 2], sizes = [8, 78], strides = [1, 1]} : vector<8x100xf32> to vector<8x78xf32>
    %69 = vector.extract_strided_slice %63 {offsets = [0, 2], sizes = [8, 78], strides = [1, 1]} : vector<8x100xf32> to vector<8x78xf32>
    %70 = vector.extract_strided_slice %61 {offsets = [0, 10], sizes = [8, 78], strides = [1, 1]} : vector<8x100xf32> to vector<8x78xf32>
    %71 = vector.extract_strided_slice %63 {offsets = [0, 10], sizes = [8, 78], strides = [1, 1]} : vector<8x100xf32> to vector<8x78xf32>
    %72 = vector.extract_strided_slice %61 {offsets = [0, 11], sizes = [8, 78], strides = [1, 1]} : vector<8x100xf32> to vector<8x78xf32>
    %73 = vector.extract_strided_slice %63 {offsets = [0, 11], sizes = [8, 78], strides = [1, 1]} : vector<8x100xf32> to vector<8x78xf32>
    %74 = vector.extract_strided_slice %61 {offsets = [0, 12], sizes = [8, 78], strides = [1, 1]} : vector<8x100xf32> to vector<8x78xf32>
    %75 = vector.extract_strided_slice %63 {offsets = [0, 12], sizes = [8, 78], strides = [1, 1]} : vector<8x100xf32> to vector<8x78xf32>
    %76 = vector.extract_strided_slice %61 {offsets = [0, 20], sizes = [8, 78], strides = [1, 1]} : vector<8x100xf32> to vector<8x78xf32>
    %77 = vector.extract_strided_slice %63 {offsets = [0, 20], sizes = [8, 78], strides = [1, 1]} : vector<8x100xf32> to vector<8x78xf32>
    %78 = vector.extract_strided_slice %61 {offsets = [0, 21], sizes = [8, 78], strides = [1, 1]} : vector<8x100xf32> to vector<8x78xf32>
    %79 = vector.extract_strided_slice %63 {offsets = [0, 21], sizes = [8, 78], strides = [1, 1]} : vector<8x100xf32> to vector<8x78xf32>
    %80 = vector.extract_strided_slice %61 {offsets = [0, 22], sizes = [8, 78], strides = [1, 1]} : vector<8x100xf32> to vector<8x78xf32>
    %81 = vector.extract_strided_slice %63 {offsets = [0, 22], sizes = [8, 78], strides = [1, 1]} : vector<8x100xf32> to vector<8x78xf32>
    %82 = tpu.concatenate %64, %65, %66, %67, %68, %69, %70, %71, %72, %73, %74, %75, %76, %77, %78, %79 in 0 : vector<8x78xf32>, vector<8x78xf32>, vector<8x78xf32>, vector<8x78xf32>, vector<8x78xf32>, vector<8x78xf32>, vector<8x78xf32>, vector<8x78xf32>, vector<8x78xf32>, vector<8x78xf32>, vector<8x78xf32>, vector<8x78xf32>, vector<8x78xf32>, vector<8x78xf32>, vector<8x78xf32>, vector<8x78xf32> -> vector<128x78xf32>
    %83 = tpu.concatenate %80, %81 in 0 : vector<8x78xf32>, vector<8x78xf32> -> vector<16x78xf32>
    %84 = tpu.concatenate %82, %83 in 0 : vector<128x78xf32>, vector<16x78xf32> -> vector<144x78xf32>
    %c2_i32 = arith.constant 2 : i32
    %85 = arith.muli %arg1, %c2_i32 : i32
    %c0_i32 = arith.constant 0 : i32
    %86 = arith.addi %85, %c0_i32 : i32
    %c1_i32 = arith.constant 1 : i32
    %87 = arith.cmpi sge, %86, %c1_i32 : i32
    %c8_i32 = arith.constant 8 : i32
    %88 = arith.cmpi sle, %86, %c8_i32 : i32
    %89 = arith.andi %87, %88 : i1
    %90 = arith.extui %89 : i1 to i32
    %c0_i32_35 = arith.constant 0 : i32
    %91 = arith.cmpi ne, %90, %c0_i32_35 : i32
    scf.if %91 {
      %cst_52 = arith.constant dense<0.000000e+00> : vector<8x78xf32>
      %130 = tpu.matmul %5, %34, %cst_52 {dimension_numbers = #tpu.dot_dimension_numbers<[1], [0], [0], [1], [0, 0, 1, 1], [], []>} : vector<8x144xf32>, vector<144x78xf32>, vector<8x78xf32> -> vector<8x78xf32>
      %cst_53 = arith.constant dense<0.000000e+00> : vector<8x78xf32>
      %131 = tpu.matmul %7, %59, %cst_53 {dimension_numbers = #tpu.dot_dimension_numbers<[1], [0], [0], [1], [0, 0, 1, 1], [], []>} : vector<8x144xf32>, vector<144x78xf32>, vector<8x78xf32> -> vector<8x78xf32>
      %132 = arith.addf %130, %131 : vector<8x78xf32>
      %cst_54 = arith.constant dense<0.000000e+00> : vector<8x78xf32>
      %133 = tpu.matmul %9, %84, %cst_54 {dimension_numbers = #tpu.dot_dimension_numbers<[1], [0], [0], [1], [0, 0, 1, 1], [], []>} : vector<8x144xf32>, vector<144x78xf32>, vector<8x78xf32> -> vector<8x78xf32>
      %134 = arith.addf %132, %133 : vector<8x78xf32>
      %135 = vector.broadcast %0 : vector<8x1xf32> to vector<8x78xf32>
      %136 = arith.addf %134, %135 : vector<8x78xf32>
      %137 = vector.broadcast %1 : vector<1x78xf32> to vector<8x78xf32>
      %138 = arith.mulf %136, %137 : vector<8x78xf32>
      %139 = tpu.concatenate %2, %138, %2 in 1 : vector<8x11xf32>, vector<8x78xf32>, vector<8x11xf32> -> vector<8x100xf32>
      %c0_55 = arith.constant 0 : index
      %c0_56 = arith.constant 0 : index
      %c0_57 = arith.constant 0 : index
      %c0_58 = arith.constant 0 : index
      %140 = vector.load %arg11[%c0_55, %c0_56, %c0_57, %c0_58] : memref<1x2x8x100xf32, #tpu.memory_space<vmem>>, vector<1x1x8x100xf32>
      %141 = vector.shape_cast %140 : vector<1x1x8x100xf32> to vector<8x100xf32>
      %142 = vector.shape_cast %139 : vector<8x100xf32> to vector<1x1x8x100xf32>
      tpu.vector_store %arg11[%c0_55, %c0_56, %c0_57, %c0_58], %142 {strides = array<i32>} : memref<1x2x8x100xf32, #tpu.memory_space<vmem>>, vector<1x1x8x100xf32>,
    } else {
    }
    %true = arith.constant true
    %92 = arith.xori %89, %true : i1
    %93 = arith.extui %92 : i1 to i32
    %c0_i32_36 = arith.constant 0 : i32
    %94 = arith.cmpi ne, %93, %c0_i32_36 : i32
    scf.if %94 {
      %c0_52 = arith.constant 0 : index
      %c0_53 = arith.constant 0 : index
      %c0_54 = arith.constant 0 : index
      %c0_55 = arith.constant 0 : index
      %130 = vector.load %arg11[%c0_52, %c0_53, %c0_54, %c0_55] : memref<1x2x8x100xf32, #tpu.memory_space<vmem>>, vector<1x1x8x100xf32>
      %131 = vector.shape_cast %130 : vector<1x1x8x100xf32> to vector<8x100xf32>
      %132 = vector.shape_cast %3 : vector<8x100xf32> to vector<1x1x8x100xf32>
      tpu.vector_store %arg11[%c0_52, %c0_53, %c0_54, %c0_55], %132 {strides = array<i32>} : memref<1x2x8x100xf32, #tpu.memory_space<vmem>>, vector<1x1x8x100xf32>,
    } else {
    }
    %c0_37 = arith.constant 0 : index
    %c0_38 = arith.constant 0 : index
    %c0_39 = arith.constant 0 : index
    %c0_40 = arith.constant 0 : index
    %95 = vector.load %arg4[%c0_37, %c0_38, %c0_39, %c0_40] : memref<1x1x8x100xf32, #tpu.memory_space<vmem>>, vector<1x1x8x100xf32>
    %96 = vector.shape_cast %95 : vector<1x1x8x100xf32> to vector<8x100xf32>
    %c0_41 = arith.constant 0 : index
    %c0_42 = arith.constant 0 : index
    %c0_43 = arith.constant 0 : index
    %c0_44 = arith.constant 0 : index
    %97 = vector.load %arg7[%c0_41, %c0_42, %c0_43, %c0_44] : memref<1x1x8x100xf32, #tpu.memory_space<vmem>>, vector<1x1x8x100xf32>
    %98 = vector.shape_cast %97 : vector<1x1x8x100xf32> to vector<8x100xf32>
    %99 = vector.extract_strided_slice %96 {offsets = [0, 0], sizes = [8, 78], strides = [1, 1]} : vector<8x100xf32> to vector<8x78xf32>
    %100 = vector.extract_strided_slice %98 {offsets = [0, 0], sizes = [8, 78], strides = [1, 1]} : vector<8x100xf32> to vector<8x78xf32>
    %101 = vector.extract_strided_slice %96 {offsets = [0, 1], sizes = [8, 78], strides = [1, 1]} : vector<8x100xf32> to vector<8x78xf32>
    %102 = vector.extract_strided_slice %98 {offsets = [0, 1], sizes = [8, 78], strides = [1, 1]} : vector<8x100xf32> to vector<8x78xf32>
    %103 = vector.extract_strided_slice %96 {offsets = [0, 2], sizes = [8, 78], strides = [1, 1]} : vector<8x100xf32> to vector<8x78xf32>
    %104 = vector.extract_strided_slice %98 {offsets = [0, 2], sizes = [8, 78], strides = [1, 1]} : vector<8x100xf32> to vector<8x78xf32>
    %105 = vector.extract_strided_slice %96 {offsets = [0, 10], sizes = [8, 78], strides = [1, 1]} : vector<8x100xf32> to vector<8x78xf32>
    %106 = vector.extract_strided_slice %98 {offsets = [0, 10], sizes = [8, 78], strides = [1, 1]} : vector<8x100xf32> to vector<8x78xf32>
    %107 = vector.extract_strided_slice %96 {offsets = [0, 11], sizes = [8, 78], strides = [1, 1]} : vector<8x100xf32> to vector<8x78xf32>
    %108 = vector.extract_strided_slice %98 {offsets = [0, 11], sizes = [8, 78], strides = [1, 1]} : vector<8x100xf32> to vector<8x78xf32>
    %109 = vector.extract_strided_slice %96 {offsets = [0, 12], sizes = [8, 78], strides = [1, 1]} : vector<8x100xf32> to vector<8x78xf32>
    %110 = vector.extract_strided_slice %98 {offsets = [0, 12], sizes = [8, 78], strides = [1, 1]} : vector<8x100xf32> to vector<8x78xf32>
    %111 = vector.extract_strided_slice %96 {offsets = [0, 20], sizes = [8, 78], strides = [1, 1]} : vector<8x100xf32> to vector<8x78xf32>
    %112 = vector.extract_strided_slice %98 {offsets = [0, 20], sizes = [8, 78], strides = [1, 1]} : vector<8x100xf32> to vector<8x78xf32>
    %113 = vector.extract_strided_slice %96 {offsets = [0, 21], sizes = [8, 78], strides = [1, 1]} : vector<8x100xf32> to vector<8x78xf32>
    %114 = vector.extract_strided_slice %98 {offsets = [0, 21], sizes = [8, 78], strides = [1, 1]} : vector<8x100xf32> to vector<8x78xf32>
    %115 = vector.extract_strided_slice %96 {offsets = [0, 22], sizes = [8, 78], strides = [1, 1]} : vector<8x100xf32> to vector<8x78xf32>
    %116 = vector.extract_strided_slice %98 {offsets = [0, 22], sizes = [8, 78], strides = [1, 1]} : vector<8x100xf32> to vector<8x78xf32>
    %117 = tpu.concatenate %99, %100, %101, %102, %103, %104, %105, %106, %107, %108, %109, %110, %111, %112, %113, %114 in 0 : vector<8x78xf32>, vector<8x78xf32>, vector<8x78xf32>, vector<8x78xf32>, vector<8x78xf32>, vector<8x78xf32>, vector<8x78xf32>, vector<8x78xf32>, vector<8x78xf32>, vector<8x78xf32>, vector<8x78xf32>, vector<8x78xf32>, vector<8x78xf32>, vector<8x78xf32>, vector<8x78xf32>, vector<8x78xf32> -> vector<128x78xf32>
    %118 = tpu.concatenate %115, %116 in 0 : vector<8x78xf32>, vector<8x78xf32> -> vector<16x78xf32>
    %119 = tpu.concatenate %117, %118 in 0 : vector<128x78xf32>, vector<16x78xf32> -> vector<144x78xf32>
    %c2_i32_45 = arith.constant 2 : i32
    %120 = arith.muli %arg1, %c2_i32_45 : i32
    %c1_i32_46 = arith.constant 1 : i32
    %121 = arith.addi %120, %c1_i32_46 : i32
    %c1_i32_47 = arith.constant 1 : i32
    %122 = arith.cmpi sge, %121, %c1_i32_47 : i32
    %c8_i32_48 = arith.constant 8 : i32
    %123 = arith.cmpi sle, %121, %c8_i32_48 : i32
    %124 = arith.andi %122, %123 : i1
    %125 = arith.extui %124 : i1 to i32
    %c0_i32_49 = arith.constant 0 : i32
    %126 = arith.cmpi ne, %125, %c0_i32_49 : i32
    scf.if %126 {
      %cst_52 = arith.constant dense<0.000000e+00> : vector<8x78xf32>
      %130 = tpu.matmul %5, %59, %cst_52 {dimension_numbers = #tpu.dot_dimension_numbers<[1], [0], [0], [1], [0, 0, 1, 1], [], []>} : vector<8x144xf32>, vector<144x78xf32>, vector<8x78xf32> -> vector<8x78xf32>
      %cst_53 = arith.constant dense<0.000000e+00> : vector<8x78xf32>
      %131 = tpu.matmul %7, %84, %cst_53 {dimension_numbers = #tpu.dot_dimension_numbers<[1], [0], [0], [1], [0, 0, 1, 1], [], []>} : vector<8x144xf32>, vector<144x78xf32>, vector<8x78xf32> -> vector<8x78xf32>
      %132 = arith.addf %130, %131 : vector<8x78xf32>
      %cst_54 = arith.constant dense<0.000000e+00> : vector<8x78xf32>
      %133 = tpu.matmul %9, %119, %cst_54 {dimension_numbers = #tpu.dot_dimension_numbers<[1], [0], [0], [1], [0, 0, 1, 1], [], []>} : vector<8x144xf32>, vector<144x78xf32>, vector<8x78xf32> -> vector<8x78xf32>
      %134 = arith.addf %132, %133 : vector<8x78xf32>
      %135 = vector.broadcast %0 : vector<8x1xf32> to vector<8x78xf32>
      %136 = arith.addf %134, %135 : vector<8x78xf32>
      %137 = vector.broadcast %1 : vector<1x78xf32> to vector<8x78xf32>
      %138 = arith.mulf %136, %137 : vector<8x78xf32>
      %139 = tpu.concatenate %2, %138, %2 in 1 : vector<8x11xf32>, vector<8x78xf32>, vector<8x11xf32> -> vector<8x100xf32>
      %c0_55 = arith.constant 0 : index
      %c1_56 = arith.constant 1 : index
      %c0_57 = arith.constant 0 : index
      %c0_58 = arith.constant 0 : index
      %140 = vector.load %arg11[%c0_55, %c1_56, %c0_57, %c0_58] : memref<1x2x8x100xf32, #tpu.memory_space<vmem>>, vector<1x1x8x100xf32>
      %141 = vector.shape_cast %140 : vector<1x1x8x100xf32> to vector<8x100xf32>
      %142 = vector.shape_cast %139 : vector<8x100xf32> to vector<1x1x8x100xf32>
      tpu.vector_store %arg11[%c0_55, %c1_56, %c0_57, %c0_58], %142 {strides = array<i32>} : memref<1x2x8x100xf32, #tpu.memory_space<vmem>>, vector<1x1x8x100xf32>,
    } else {
    }
    %true_50 = arith.constant true
    %127 = arith.xori %124, %true_50 : i1
    %128 = arith.extui %127 : i1 to i32
    %c0_i32_51 = arith.constant 0 : i32
    %129 = arith.cmpi ne, %128, %c0_i32_51 : i32
    scf.if %129 {
      %c0_52 = arith.constant 0 : index
      %c1_53 = arith.constant 1 : index
      %c0_54 = arith.constant 0 : index
      %c0_55 = arith.constant 0 : index
      %130 = vector.load %arg11[%c0_52, %c1_53, %c0_54, %c0_55] : memref<1x2x8x100xf32, #tpu.memory_space<vmem>>, vector<1x1x8x100xf32>
      %131 = vector.shape_cast %130 : vector<1x1x8x100xf32> to vector<8x100xf32>
      %132 = vector.shape_cast %3 : vector<8x100xf32> to vector<1x1x8x100xf32>
      tpu.vector_store %arg11[%c0_52, %c1_53, %c0_54, %c0_55], %132 {strides = array<i32>} : memref<1x2x8x100xf32, #tpu.memory_space<vmem>>, vector<1x1x8x100xf32>,
    } else {
    }
    return
  }
  func.func @transform_0(%arg0: i32, %arg1: i32) -> (i32, i32, i32, i32) {
    %c0_i32 = arith.constant 0 : i32
    %c0_i32_0 = arith.constant 0 : i32
    %c0_i32_1 = arith.constant 0 : i32
    return %arg0, %arg1, %c0_i32, %c0_i32_0 : i32, i32, i32, i32
  }
  func.func @transform_1(%arg0: i32, %arg1: i32) -> (i32, i32, i32, i32) {
    %c2_i32 = arith.constant 2 : i32
    %0 = arith.muli %arg1, %c2_i32 : i32
    %c1_i32 = arith.constant 1 : i32
    %1 = arith.subi %0, %c1_i32 : i32
    %c0_i32 = arith.constant 0 : i32
    %2 = arith.maxsi %1, %c0_i32 : i32
    %c0_i32_0 = arith.constant 0 : i32
    %c0_i32_1 = arith.constant 0 : i32
    %c0_i32_2 = arith.constant 0 : i32
    return %arg0, %2, %c0_i32_0, %c0_i32_1 : i32, i32, i32, i32
  }
  func.func @transform_2(%arg0: i32, %arg1: i32) -> (i32, i32, i32, i32) {
    %c2_i32 = arith.constant 2 : i32
    %0 = arith.muli %arg1, %c2_i32 : i32
    %c2_i32_0 = arith.constant 2 : i32
    %1 = arith.addi %0, %c2_i32_0 : i32
    %c9_i32 = arith.constant 9 : i32
    %2 = arith.minsi %1, %c9_i32 : i32
    %c0_i32 = arith.constant 0 : i32
    %c0_i32_1 = arith.constant 0 : i32
    %c0_i32_2 = arith.constant 0 : i32
    return %arg0, %2, %c0_i32, %c0_i32_1 : i32, i32, i32, i32
  }
  func.func @transform_3(%arg0: i32, %arg1: i32) -> (i32, i32, i32, i32) {
    %c0_i32 = arith.constant 0 : i32
    %c0_i32_0 = arith.constant 0 : i32
    %c0_i32_1 = arith.constant 0 : i32
    return %arg0, %arg1, %c0_i32, %c0_i32_0 : i32, i32, i32, i32
  }
  func.func @transform_4(%arg0: i32, %arg1: i32) -> (i32, i32, i32, i32) {
    %c2_i32 = arith.constant 2 : i32
    %0 = arith.muli %arg1, %c2_i32 : i32
    %c1_i32 = arith.constant 1 : i32
    %1 = arith.subi %0, %c1_i32 : i32
    %c0_i32 = arith.constant 0 : i32
    %2 = arith.maxsi %1, %c0_i32 : i32
    %c0_i32_0 = arith.constant 0 : i32
    %c0_i32_1 = arith.constant 0 : i32
    %c0_i32_2 = arith.constant 0 : i32
    return %arg0, %2, %c0_i32_0, %c0_i32_1 : i32, i32, i32, i32
  }
  func.func @transform_5(%arg0: i32, %arg1: i32) -> (i32, i32, i32, i32) {
    %c2_i32 = arith.constant 2 : i32
    %0 = arith.muli %arg1, %c2_i32 : i32
    %c2_i32_0 = arith.constant 2 : i32
    %1 = arith.addi %0, %c2_i32_0 : i32
    %c9_i32 = arith.constant 9 : i32
    %2 = arith.minsi %1, %c9_i32 : i32
    %c0_i32 = arith.constant 0 : i32
    %c0_i32_1 = arith.constant 0 : i32
    %c0_i32_2 = arith.constant 0 : i32
    return %arg0, %2, %c0_i32, %c0_i32_1 : i32, i32, i32, i32
  }
  func.func @transform_6(%arg0: i32, %arg1: i32) -> (i32, i32) {
    %c0_i32 = arith.constant 0 : i32
    %c0_i32_0 = arith.constant 0 : i32
    %c0_i32_1 = arith.constant 0 : i32
    return %c0_i32, %c0_i32_0 : i32, i32
  }
  func.func @transform_7(%arg0: i32, %arg1: i32) -> (i32, i32, i32) {
    %c0_i32 = arith.constant 0 : i32
    %c0_i32_0 = arith.constant 0 : i32
    %c0_i32_1 = arith.constant 0 : i32
    %c0_i32_2 = arith.constant 0 : i32
    return %c0_i32, %c0_i32_0, %c0_i32_1 : i32, i32, i32
  }
  func.func @transform_8(%arg0: i32, %arg1: i32) -> (i32, i32) {
    %c0_i32 = arith.constant 0 : i32
    %c0_i32_0 = arith.constant 0 : i32
    %c0_i32_1 = arith.constant 0 : i32
    return %c0_i32, %c0_i32_0 : i32, i32
  }
  func.func @transform_9(%arg0: i32, %arg1: i32) -> (i32, i32, i32, i32) {
    %c0_i32 = arith.constant 0 : i32
    %c0_i32_0 = arith.constant 0 : i32
    %c0_i32_1 = arith.constant 0 : i32
    return %arg0, %arg1, %c0_i32, %c0_i32_0 : i32, i32, i32, i32
  }
}

module attributes {stable_mosaic.version = 11 : i64} {
  func.func @kernel(%arg0: i32, %arg1: i32, %arg2: memref<1x2x8x100xf32, #tpu.memory_space<vmem>>, %arg3: memref<1x1x8x100xf32, #tpu.memory_space<vmem>>, %arg4: memref<1x1x8x100xf32, #tpu.memory_space<vmem>>, %arg5: memref<1x78xf32, #tpu.memory_space<vmem>>, %arg6: memref<3x8x72xf32, #tpu.memory_space<vmem>>, %arg7: memref<8x1xf32, #tpu.memory_space<vmem>>, %arg8: memref<1x2x8x100xf32, #tpu.memory_space<vmem>>) attributes {dimension_semantics = [#tpu.dimension_semantics<parallel>, #tpu.dimension_semantics<parallel>], iteration_bounds = array<i64: 2, 5>, scalar_prefetch = 0 : i64, scratch_operands = 0 : i64, tpu.core_type = #tpu.core_type<tc>, window_params = [{transform_indices = @transform_0, window_bounds = array<i64: 1, 2, 8, 100>}, {transform_indices = @transform_1, window_bounds = array<i64: 1, 1, 8, 100>}, {transform_indices = @transform_2, window_bounds = array<i64: 1, 1, 8, 100>}, {pipeline_mode = #tpu.pipeline_mode<synchronous>, transform_indices = @transform_3, window_bounds = array<i64: 1, 78>}, {pipeline_mode = #tpu.pipeline_mode<synchronous>, transform_indices = @transform_4, window_bounds = array<i64: 3, 8, 72>}, {pipeline_mode = #tpu.pipeline_mode<synchronous>, transform_indices = @transform_5, window_bounds = array<i64: 8, 1>}, {transform_indices = @transform_6, window_bounds = array<i64: 1, 2, 8, 100>}]} {
    %c0 = arith.constant 0 : index
    %c0_0 = arith.constant 0 : index
    %0 = vector.load %arg7[%c0, %c0_0] : memref<8x1xf32, #tpu.memory_space<vmem>>, vector<8x1xf32>
    %c0_1 = arith.constant 0 : index
    %c0_2 = arith.constant 0 : index
    %1 = vector.load %arg5[%c0_1, %c0_2] : memref<1x78xf32, #tpu.memory_space<vmem>>, vector<1x78xf32>
    %cst = arith.constant 0.000000e+00 : f32
    %2 = vector.broadcast %cst : f32 to vector<8x11xf32>
    %cst_3 = arith.constant 0.000000e+00 : f32
    %3 = vector.broadcast %cst_3 : f32 to vector<8x100xf32>
    %c0_4 = arith.constant 0 : index
    %c0_5 = arith.constant 0 : index
    %c0_6 = arith.constant 0 : index
    %4 = vector.load %arg6[%c0_4, %c0_5, %c0_6] : memref<3x8x72xf32, #tpu.memory_space<vmem>>, vector<1x8x72xf32>
    %5 = vector.shape_cast %4 : vector<1x8x72xf32> to vector<8x72xf32>
    %c1 = arith.constant 1 : index
    %c0_7 = arith.constant 0 : index
    %c0_8 = arith.constant 0 : index
    %6 = vector.load %arg6[%c1, %c0_7, %c0_8] : memref<3x8x72xf32, #tpu.memory_space<vmem>>, vector<1x8x72xf32>
    %7 = vector.shape_cast %6 : vector<1x8x72xf32> to vector<8x72xf32>
    %c2 = arith.constant 2 : index
    %c0_9 = arith.constant 0 : index
    %c0_10 = arith.constant 0 : index
    %8 = vector.load %arg6[%c2, %c0_9, %c0_10] : memref<3x8x72xf32, #tpu.memory_space<vmem>>, vector<1x8x72xf32>
    %9 = vector.shape_cast %8 : vector<1x8x72xf32> to vector<8x72xf32>
    %c0_11 = arith.constant 0 : index
    %c0_12 = arith.constant 0 : index
    %c0_13 = arith.constant 0 : index
    %c0_14 = arith.constant 0 : index
    %10 = vector.load %arg3[%c0_11, %c0_12, %c0_13, %c0_14] : memref<1x1x8x100xf32, #tpu.memory_space<vmem>>, vector<1x1x8x100xf32>
    %11 = vector.shape_cast %10 : vector<1x1x8x100xf32> to vector<8x100xf32>
    %12 = vector.extract_strided_slice %11 {offsets = [0, 0], sizes = [8, 78], strides = [1, 1]} : vector<8x100xf32> to vector<8x78xf32>
    %13 = vector.extract_strided_slice %11 {offsets = [0, 1], sizes = [8, 78], strides = [1, 1]} : vector<8x100xf32> to vector<8x78xf32>
    %14 = vector.extract_strided_slice %11 {offsets = [0, 2], sizes = [8, 78], strides = [1, 1]} : vector<8x100xf32> to vector<8x78xf32>
    %15 = vector.extract_strided_slice %11 {offsets = [0, 10], sizes = [8, 78], strides = [1, 1]} : vector<8x100xf32> to vector<8x78xf32>
    %16 = vector.extract_strided_slice %11 {offsets = [0, 11], sizes = [8, 78], strides = [1, 1]} : vector<8x100xf32> to vector<8x78xf32>
    %17 = vector.extract_strided_slice %11 {offsets = [0, 12], sizes = [8, 78], strides = [1, 1]} : vector<8x100xf32> to vector<8x78xf32>
    %18 = vector.extract_strided_slice %11 {offsets = [0, 20], sizes = [8, 78], strides = [1, 1]} : vector<8x100xf32> to vector<8x78xf32>
    %19 = vector.extract_strided_slice %11 {offsets = [0, 21], sizes = [8, 78], strides = [1, 1]} : vector<8x100xf32> to vector<8x78xf32>
    %20 = vector.extract_strided_slice %11 {offsets = [0, 22], sizes = [8, 78], strides = [1, 1]} : vector<8x100xf32> to vector<8x78xf32>
    %21 = tpu.concatenate %12, %13, %14, %15, %16, %17, %18, %19, %20 in 0 : vector<8x78xf32>, vector<8x78xf32>, vector<8x78xf32>, vector<8x78xf32>, vector<8x78xf32>, vector<8x78xf32>, vector<8x78xf32>, vector<8x78xf32>, vector<8x78xf32> -> vector<72x78xf32>
    %c0_15 = arith.constant 0 : index
    %c0_16 = arith.constant 0 : index
    %c0_17 = arith.constant 0 : index
    %c0_18 = arith.constant 0 : index
    %22 = vector.load %arg2[%c0_15, %c0_16, %c0_17, %c0_18] : memref<1x2x8x100xf32, #tpu.memory_space<vmem>>, vector<1x1x8x100xf32>
    %23 = vector.shape_cast %22 : vector<1x1x8x100xf32> to vector<8x100xf32>
    %24 = vector.extract_strided_slice %23 {offsets = [0, 0], sizes = [8, 78], strides = [1, 1]} : vector<8x100xf32> to vector<8x78xf32>
    %25 = vector.extract_strided_slice %23 {offsets = [0, 1], sizes = [8, 78], strides = [1, 1]} : vector<8x100xf32> to vector<8x78xf32>
    %26 = vector.extract_strided_slice %23 {offsets = [0, 2], sizes = [8, 78], strides = [1, 1]} : vector<8x100xf32> to vector<8x78xf32>
    %27 = vector.extract_strided_slice %23 {offsets = [0, 10], sizes = [8, 78], strides = [1, 1]} : vector<8x100xf32> to vector<8x78xf32>
    %28 = vector.extract_strided_slice %23 {offsets = [0, 11], sizes = [8, 78], strides = [1, 1]} : vector<8x100xf32> to vector<8x78xf32>
    %29 = vector.extract_strided_slice %23 {offsets = [0, 12], sizes = [8, 78], strides = [1, 1]} : vector<8x100xf32> to vector<8x78xf32>
    %30 = vector.extract_strided_slice %23 {offsets = [0, 20], sizes = [8, 78], strides = [1, 1]} : vector<8x100xf32> to vector<8x78xf32>
    %31 = vector.extract_strided_slice %23 {offsets = [0, 21], sizes = [8, 78], strides = [1, 1]} : vector<8x100xf32> to vector<8x78xf32>
    %32 = vector.extract_strided_slice %23 {offsets = [0, 22], sizes = [8, 78], strides = [1, 1]} : vector<8x100xf32> to vector<8x78xf32>
    %33 = tpu.concatenate %24, %25, %26, %27, %28, %29, %30, %31, %32 in 0 : vector<8x78xf32>, vector<8x78xf32>, vector<8x78xf32>, vector<8x78xf32>, vector<8x78xf32>, vector<8x78xf32>, vector<8x78xf32>, vector<8x78xf32>, vector<8x78xf32> -> vector<72x78xf32>
    %c0_19 = arith.constant 0 : index
    %c1_20 = arith.constant 1 : index
    %c0_21 = arith.constant 0 : index
    %c0_22 = arith.constant 0 : index
    %34 = vector.load %arg2[%c0_19, %c1_20, %c0_21, %c0_22] : memref<1x2x8x100xf32, #tpu.memory_space<vmem>>, vector<1x1x8x100xf32>
    %35 = vector.shape_cast %34 : vector<1x1x8x100xf32> to vector<8x100xf32>
    %36 = vector.extract_strided_slice %35 {offsets = [0, 0], sizes = [8, 78], strides = [1, 1]} : vector<8x100xf32> to vector<8x78xf32>
    %37 = vector.extract_strided_slice %35 {offsets = [0, 1], sizes = [8, 78], strides = [1, 1]} : vector<8x100xf32> to vector<8x78xf32>
    %38 = vector.extract_strided_slice %35 {offsets = [0, 2], sizes = [8, 78], strides = [1, 1]} : vector<8x100xf32> to vector<8x78xf32>
    %39 = vector.extract_strided_slice %35 {offsets = [0, 10], sizes = [8, 78], strides = [1, 1]} : vector<8x100xf32> to vector<8x78xf32>
    %40 = vector.extract_strided_slice %35 {offsets = [0, 11], sizes = [8, 78], strides = [1, 1]} : vector<8x100xf32> to vector<8x78xf32>
    %41 = vector.extract_strided_slice %35 {offsets = [0, 12], sizes = [8, 78], strides = [1, 1]} : vector<8x100xf32> to vector<8x78xf32>
    %42 = vector.extract_strided_slice %35 {offsets = [0, 20], sizes = [8, 78], strides = [1, 1]} : vector<8x100xf32> to vector<8x78xf32>
    %43 = vector.extract_strided_slice %35 {offsets = [0, 21], sizes = [8, 78], strides = [1, 1]} : vector<8x100xf32> to vector<8x78xf32>
    %44 = vector.extract_strided_slice %35 {offsets = [0, 22], sizes = [8, 78], strides = [1, 1]} : vector<8x100xf32> to vector<8x78xf32>
    %45 = tpu.concatenate %36, %37, %38, %39, %40, %41, %42, %43, %44 in 0 : vector<8x78xf32>, vector<8x78xf32>, vector<8x78xf32>, vector<8x78xf32>, vector<8x78xf32>, vector<8x78xf32>, vector<8x78xf32>, vector<8x78xf32>, vector<8x78xf32> -> vector<72x78xf32>
    %c2_i32 = arith.constant 2 : i32
    %46 = arith.muli %arg1, %c2_i32 : i32
    %c0_i32 = arith.constant 0 : i32
    %47 = arith.addi %46, %c0_i32 : i32
    %c1_i32 = arith.constant 1 : i32
    %48 = arith.cmpi sge, %47, %c1_i32 : i32
    %c8_i32 = arith.constant 8 : i32
    %49 = arith.cmpi sle, %47, %c8_i32 : i32
    %50 = arith.andi %48, %49 : i1
    %51 = arith.extui %50 : i1 to i32
    %c0_i32_23 = arith.constant 0 : i32
    %52 = arith.cmpi ne, %51, %c0_i32_23 : i32
    scf.if %52 {
      %cst_36 = arith.constant dense<0.000000e+00> : vector<8x78xf32>
      %78 = tpu.matmul %5, %21, %cst_36 {dimension_numbers = #tpu.dot_dimension_numbers<[1], [0], [0], [1], [0, 0, 1, 1], [], []>} : vector<8x72xf32>, vector<72x78xf32>, vector<8x78xf32> -> vector<8x78xf32>
      %cst_37 = arith.constant dense<0.000000e+00> : vector<8x78xf32>
      %79 = tpu.matmul %7, %33, %cst_37 {dimension_numbers = #tpu.dot_dimension_numbers<[1], [0], [0], [1], [0, 0, 1, 1], [], []>} : vector<8x72xf32>, vector<72x78xf32>, vector<8x78xf32> -> vector<8x78xf32>
      %80 = arith.addf %78, %79 : vector<8x78xf32>
      %cst_38 = arith.constant dense<0.000000e+00> : vector<8x78xf32>
      %81 = tpu.matmul %9, %45, %cst_38 {dimension_numbers = #tpu.dot_dimension_numbers<[1], [0], [0], [1], [0, 0, 1, 1], [], []>} : vector<8x72xf32>, vector<72x78xf32>, vector<8x78xf32> -> vector<8x78xf32>
      %82 = arith.addf %80, %81 : vector<8x78xf32>
      %83 = vector.broadcast %0 : vector<8x1xf32> to vector<8x78xf32>
      %84 = arith.addf %82, %83 : vector<8x78xf32>
      %85 = vector.broadcast %1 : vector<1x78xf32> to vector<8x78xf32>
      %86 = arith.mulf %84, %85 : vector<8x78xf32>
      %87 = tpu.concatenate %2, %86, %2 in 1 : vector<8x11xf32>, vector<8x78xf32>, vector<8x11xf32> -> vector<8x100xf32>
      %c0_39 = arith.constant 0 : index
      %c0_40 = arith.constant 0 : index
      %c0_41 = arith.constant 0 : index
      %c0_42 = arith.constant 0 : index
      %88 = vector.load %arg8[%c0_39, %c0_40, %c0_41, %c0_42] : memref<1x2x8x100xf32, #tpu.memory_space<vmem>>, vector<1x1x8x100xf32>
      %89 = vector.shape_cast %88 : vector<1x1x8x100xf32> to vector<8x100xf32>
      %90 = vector.shape_cast %87 : vector<8x100xf32> to vector<1x1x8x100xf32>
      tpu.vector_store %arg8[%c0_39, %c0_40, %c0_41, %c0_42], %90 {strides = array<i32>} : memref<1x2x8x100xf32, #tpu.memory_space<vmem>>, vector<1x1x8x100xf32>,
    } else {
    }
    %true = arith.constant true
    %53 = arith.xori %50, %true : i1
    %54 = arith.extui %53 : i1 to i32
    %c0_i32_24 = arith.constant 0 : i32
    %55 = arith.cmpi ne, %54, %c0_i32_24 : i32
    scf.if %55 {
      %c0_36 = arith.constant 0 : index
      %c0_37 = arith.constant 0 : index
      %c0_38 = arith.constant 0 : index
      %c0_39 = arith.constant 0 : index
      %78 = vector.load %arg8[%c0_36, %c0_37, %c0_38, %c0_39] : memref<1x2x8x100xf32, #tpu.memory_space<vmem>>, vector<1x1x8x100xf32>
      %79 = vector.shape_cast %78 : vector<1x1x8x100xf32> to vector<8x100xf32>
      %80 = vector.shape_cast %3 : vector<8x100xf32> to vector<1x1x8x100xf32>
      tpu.vector_store %arg8[%c0_36, %c0_37, %c0_38, %c0_39], %80 {strides = array<i32>} : memref<1x2x8x100xf32, #tpu.memory_space<vmem>>, vector<1x1x8x100xf32>,
    } else {
    }
    %c0_25 = arith.constant 0 : index
    %c0_26 = arith.constant 0 : index
    %c0_27 = arith.constant 0 : index
    %c0_28 = arith.constant 0 : index
    %56 = vector.load %arg4[%c0_25, %c0_26, %c0_27, %c0_28] : memref<1x1x8x100xf32, #tpu.memory_space<vmem>>, vector<1x1x8x100xf32>
    %57 = vector.shape_cast %56 : vector<1x1x8x100xf32> to vector<8x100xf32>
    %58 = vector.extract_strided_slice %57 {offsets = [0, 0], sizes = [8, 78], strides = [1, 1]} : vector<8x100xf32> to vector<8x78xf32>
    %59 = vector.extract_strided_slice %57 {offsets = [0, 1], sizes = [8, 78], strides = [1, 1]} : vector<8x100xf32> to vector<8x78xf32>
    %60 = vector.extract_strided_slice %57 {offsets = [0, 2], sizes = [8, 78], strides = [1, 1]} : vector<8x100xf32> to vector<8x78xf32>
    %61 = vector.extract_strided_slice %57 {offsets = [0, 10], sizes = [8, 78], strides = [1, 1]} : vector<8x100xf32> to vector<8x78xf32>
    %62 = vector.extract_strided_slice %57 {offsets = [0, 11], sizes = [8, 78], strides = [1, 1]} : vector<8x100xf32> to vector<8x78xf32>
    %63 = vector.extract_strided_slice %57 {offsets = [0, 12], sizes = [8, 78], strides = [1, 1]} : vector<8x100xf32> to vector<8x78xf32>
    %64 = vector.extract_strided_slice %57 {offsets = [0, 20], sizes = [8, 78], strides = [1, 1]} : vector<8x100xf32> to vector<8x78xf32>
    %65 = vector.extract_strided_slice %57 {offsets = [0, 21], sizes = [8, 78], strides = [1, 1]} : vector<8x100xf32> to vector<8x78xf32>
    %66 = vector.extract_strided_slice %57 {offsets = [0, 22], sizes = [8, 78], strides = [1, 1]} : vector<8x100xf32> to vector<8x78xf32>
    %67 = tpu.concatenate %58, %59, %60, %61, %62, %63, %64, %65, %66 in 0 : vector<8x78xf32>, vector<8x78xf32>, vector<8x78xf32>, vector<8x78xf32>, vector<8x78xf32>, vector<8x78xf32>, vector<8x78xf32>, vector<8x78xf32>, vector<8x78xf32> -> vector<72x78xf32>
    %c2_i32_29 = arith.constant 2 : i32
    %68 = arith.muli %arg1, %c2_i32_29 : i32
    %c1_i32_30 = arith.constant 1 : i32
    %69 = arith.addi %68, %c1_i32_30 : i32
    %c1_i32_31 = arith.constant 1 : i32
    %70 = arith.cmpi sge, %69, %c1_i32_31 : i32
    %c8_i32_32 = arith.constant 8 : i32
    %71 = arith.cmpi sle, %69, %c8_i32_32 : i32
    %72 = arith.andi %70, %71 : i1
    %73 = arith.extui %72 : i1 to i32
    %c0_i32_33 = arith.constant 0 : i32
    %74 = arith.cmpi ne, %73, %c0_i32_33 : i32
    scf.if %74 {
      %cst_36 = arith.constant dense<0.000000e+00> : vector<8x78xf32>
      %78 = tpu.matmul %5, %33, %cst_36 {dimension_numbers = #tpu.dot_dimension_numbers<[1], [0], [0], [1], [0, 0, 1, 1], [], []>} : vector<8x72xf32>, vector<72x78xf32>, vector<8x78xf32> -> vector<8x78xf32>
      %cst_37 = arith.constant dense<0.000000e+00> : vector<8x78xf32>
      %79 = tpu.matmul %7, %45, %cst_37 {dimension_numbers = #tpu.dot_dimension_numbers<[1], [0], [0], [1], [0, 0, 1, 1], [], []>} : vector<8x72xf32>, vector<72x78xf32>, vector<8x78xf32> -> vector<8x78xf32>
      %80 = arith.addf %78, %79 : vector<8x78xf32>
      %cst_38 = arith.constant dense<0.000000e+00> : vector<8x78xf32>
      %81 = tpu.matmul %9, %67, %cst_38 {dimension_numbers = #tpu.dot_dimension_numbers<[1], [0], [0], [1], [0, 0, 1, 1], [], []>} : vector<8x72xf32>, vector<72x78xf32>, vector<8x78xf32> -> vector<8x78xf32>
      %82 = arith.addf %80, %81 : vector<8x78xf32>
      %83 = vector.broadcast %0 : vector<8x1xf32> to vector<8x78xf32>
      %84 = arith.addf %82, %83 : vector<8x78xf32>
      %85 = vector.broadcast %1 : vector<1x78xf32> to vector<8x78xf32>
      %86 = arith.mulf %84, %85 : vector<8x78xf32>
      %87 = tpu.concatenate %2, %86, %2 in 1 : vector<8x11xf32>, vector<8x78xf32>, vector<8x11xf32> -> vector<8x100xf32>
      %c0_39 = arith.constant 0 : index
      %c1_40 = arith.constant 1 : index
      %c0_41 = arith.constant 0 : index
      %c0_42 = arith.constant 0 : index
      %88 = vector.load %arg8[%c0_39, %c1_40, %c0_41, %c0_42] : memref<1x2x8x100xf32, #tpu.memory_space<vmem>>, vector<1x1x8x100xf32>
      %89 = vector.shape_cast %88 : vector<1x1x8x100xf32> to vector<8x100xf32>
      %90 = vector.shape_cast %87 : vector<8x100xf32> to vector<1x1x8x100xf32>
      tpu.vector_store %arg8[%c0_39, %c1_40, %c0_41, %c0_42], %90 {strides = array<i32>} : memref<1x2x8x100xf32, #tpu.memory_space<vmem>>, vector<1x1x8x100xf32>,
    } else {
    }
    %true_34 = arith.constant true
    %75 = arith.xori %72, %true_34 : i1
    %76 = arith.extui %75 : i1 to i32
    %c0_i32_35 = arith.constant 0 : i32
    %77 = arith.cmpi ne, %76, %c0_i32_35 : i32
    scf.if %77 {
      %c0_36 = arith.constant 0 : index
      %c1_37 = arith.constant 1 : index
      %c0_38 = arith.constant 0 : index
      %c0_39 = arith.constant 0 : index
      %78 = vector.load %arg8[%c0_36, %c1_37, %c0_38, %c0_39] : memref<1x2x8x100xf32, #tpu.memory_space<vmem>>, vector<1x1x8x100xf32>
      %79 = vector.shape_cast %78 : vector<1x1x8x100xf32> to vector<8x100xf32>
      %80 = vector.shape_cast %3 : vector<8x100xf32> to vector<1x1x8x100xf32>
      tpu.vector_store %arg8[%c0_36, %c1_37, %c0_38, %c0_39], %80 {strides = array<i32>} : memref<1x2x8x100xf32, #tpu.memory_space<vmem>>, vector<1x1x8x100xf32>,
    } else {
    }
    return
  }
  func.func @transform_0(%arg0: i32, %arg1: i32) -> (i32, i32, i32, i32) {
    %c0_i32 = arith.constant 0 : i32
    %c0_i32_0 = arith.constant 0 : i32
    %c0_i32_1 = arith.constant 0 : i32
    return %arg0, %arg1, %c0_i32, %c0_i32_0 : i32, i32, i32, i32
  }
  func.func @transform_1(%arg0: i32, %arg1: i32) -> (i32, i32, i32, i32) {
    %c2_i32 = arith.constant 2 : i32
    %0 = arith.muli %arg1, %c2_i32 : i32
    %c1_i32 = arith.constant 1 : i32
    %1 = arith.subi %0, %c1_i32 : i32
    %c0_i32 = arith.constant 0 : i32
    %2 = arith.maxsi %1, %c0_i32 : i32
    %c0_i32_0 = arith.constant 0 : i32
    %c0_i32_1 = arith.constant 0 : i32
    %c0_i32_2 = arith.constant 0 : i32
    return %arg0, %2, %c0_i32_0, %c0_i32_1 : i32, i32, i32, i32
  }
  func.func @transform_2(%arg0: i32, %arg1: i32) -> (i32, i32, i32, i32) {
    %c2_i32 = arith.constant 2 : i32
    %0 = arith.muli %arg1, %c2_i32 : i32
    %c2_i32_0 = arith.constant 2 : i32
    %1 = arith.addi %0, %c2_i32_0 : i32
    %c9_i32 = arith.constant 9 : i32
    %2 = arith.minsi %1, %c9_i32 : i32
    %c0_i32 = arith.constant 0 : i32
    %c0_i32_1 = arith.constant 0 : i32
    %c0_i32_2 = arith.constant 0 : i32
    return %arg0, %2, %c0_i32, %c0_i32_1 : i32, i32, i32, i32
  }
  func.func @transform_3(%arg0: i32, %arg1: i32) -> (i32, i32) {
    %c0_i32 = arith.constant 0 : i32
    %c0_i32_0 = arith.constant 0 : i32
    %c0_i32_1 = arith.constant 0 : i32
    return %c0_i32, %c0_i32_0 : i32, i32
  }
  func.func @transform_4(%arg0: i32, %arg1: i32) -> (i32, i32, i32) {
    %c0_i32 = arith.constant 0 : i32
    %c0_i32_0 = arith.constant 0 : i32
    %c0_i32_1 = arith.constant 0 : i32
    %c0_i32_2 = arith.constant 0 : i32
    return %c0_i32, %c0_i32_0, %c0_i32_1 : i32, i32, i32
  }
  func.func @transform_5(%arg0: i32, %arg1: i32) -> (i32, i32) {
    %c0_i32 = arith.constant 0 : i32
    %c0_i32_0 = arith.constant 0 : i32
    %c0_i32_1 = arith.constant 0 : i32
    return %c0_i32, %c0_i32_0 : i32, i32
  }
  func.func @transform_6(%arg0: i32, %arg1: i32) -> (i32, i32, i32, i32) {
    %c0_i32 = arith.constant 0 : i32
    %c0_i32_0 = arith.constant 0 : i32
    %c0_i32_1 = arith.constant 0 : i32
    return %arg0, %arg1, %c0_i32, %c0_i32_0 : i32, i32, i32, i32
  }
}

module attributes {stable_mosaic.version = 11 : i64} {
  func.func @kernel(%arg0: i32, %arg1: i32, %arg2: memref<1x3x8x36xf32, #tpu.memory_space<vmem>>, %arg3: memref<1x1x8x36xf32, #tpu.memory_space<vmem>>, %arg4: memref<1x1x8x36xf32, #tpu.memory_space<vmem>>, %arg5: memref<1x22xf32, #tpu.memory_space<vmem>>, %arg6: memref<3x8x72xf32, #tpu.memory_space<vmem>>, %arg7: memref<8x1xf32, #tpu.memory_space<vmem>>, %arg8: memref<1x3x8x36xf32, #tpu.memory_space<vmem>>) attributes {dimension_semantics = [#tpu.dimension_semantics<parallel>, #tpu.dimension_semantics<parallel>], iteration_bounds = array<i64: 2, 2>, scalar_prefetch = 0 : i64, scratch_operands = 0 : i64, tpu.core_type = #tpu.core_type<tc>, window_params = [{transform_indices = @transform_0, window_bounds = array<i64: 1, 3, 8, 36>}, {transform_indices = @transform_1, window_bounds = array<i64: 1, 1, 8, 36>}, {transform_indices = @transform_2, window_bounds = array<i64: 1, 1, 8, 36>}, {pipeline_mode = #tpu.pipeline_mode<synchronous>, transform_indices = @transform_3, window_bounds = array<i64: 1, 22>}, {pipeline_mode = #tpu.pipeline_mode<synchronous>, transform_indices = @transform_4, window_bounds = array<i64: 3, 8, 72>}, {pipeline_mode = #tpu.pipeline_mode<synchronous>, transform_indices = @transform_5, window_bounds = array<i64: 8, 1>}, {transform_indices = @transform_6, window_bounds = array<i64: 1, 3, 8, 36>}]} {
    %c0 = arith.constant 0 : index
    %c0_0 = arith.constant 0 : index
    %0 = vector.load %arg7[%c0, %c0_0] : memref<8x1xf32, #tpu.memory_space<vmem>>, vector<8x1xf32>
    %c0_1 = arith.constant 0 : index
    %c0_2 = arith.constant 0 : index
    %1 = vector.load %arg5[%c0_1, %c0_2] : memref<1x22xf32, #tpu.memory_space<vmem>>, vector<1x22xf32>
    %cst = arith.constant 0.000000e+00 : f32
    %2 = vector.broadcast %cst : f32 to vector<8x7xf32>
    %cst_3 = arith.constant 0.000000e+00 : f32
    %3 = vector.broadcast %cst_3 : f32 to vector<8x36xf32>
    %c0_4 = arith.constant 0 : index
    %c0_5 = arith.constant 0 : index
    %c0_6 = arith.constant 0 : index
    %4 = vector.load %arg6[%c0_4, %c0_5, %c0_6] : memref<3x8x72xf32, #tpu.memory_space<vmem>>, vector<1x8x72xf32>
    %5 = vector.shape_cast %4 : vector<1x8x72xf32> to vector<8x72xf32>
    %c1 = arith.constant 1 : index
    %c0_7 = arith.constant 0 : index
    %c0_8 = arith.constant 0 : index
    %6 = vector.load %arg6[%c1, %c0_7, %c0_8] : memref<3x8x72xf32, #tpu.memory_space<vmem>>, vector<1x8x72xf32>
    %7 = vector.shape_cast %6 : vector<1x8x72xf32> to vector<8x72xf32>
    %c2 = arith.constant 2 : index
    %c0_9 = arith.constant 0 : index
    %c0_10 = arith.constant 0 : index
    %8 = vector.load %arg6[%c2, %c0_9, %c0_10] : memref<3x8x72xf32, #tpu.memory_space<vmem>>, vector<1x8x72xf32>
    %9 = vector.shape_cast %8 : vector<1x8x72xf32> to vector<8x72xf32>
    %c0_11 = arith.constant 0 : index
    %c0_12 = arith.constant 0 : index
    %c0_13 = arith.constant 0 : index
    %c0_14 = arith.constant 0 : index
    %10 = vector.load %arg3[%c0_11, %c0_12, %c0_13, %c0_14] : memref<1x1x8x36xf32, #tpu.memory_space<vmem>>, vector<1x1x8x36xf32>
    %11 = vector.shape_cast %10 : vector<1x1x8x36xf32> to vector<8x36xf32>
    %12 = vector.extract_strided_slice %11 {offsets = [0, 0], sizes = [8, 22], strides = [1, 1]} : vector<8x36xf32> to vector<8x22xf32>
    %13 = vector.extract_strided_slice %11 {offsets = [0, 1], sizes = [8, 22], strides = [1, 1]} : vector<8x36xf32> to vector<8x22xf32>
    %14 = vector.extract_strided_slice %11 {offsets = [0, 2], sizes = [8, 22], strides = [1, 1]} : vector<8x36xf32> to vector<8x22xf32>
    %15 = vector.extract_strided_slice %11 {offsets = [0, 6], sizes = [8, 22], strides = [1, 1]} : vector<8x36xf32> to vector<8x22xf32>
    %16 = vector.extract_strided_slice %11 {offsets = [0, 7], sizes = [8, 22], strides = [1, 1]} : vector<8x36xf32> to vector<8x22xf32>
    %17 = vector.extract_strided_slice %11 {offsets = [0, 8], sizes = [8, 22], strides = [1, 1]} : vector<8x36xf32> to vector<8x22xf32>
    %18 = vector.extract_strided_slice %11 {offsets = [0, 12], sizes = [8, 22], strides = [1, 1]} : vector<8x36xf32> to vector<8x22xf32>
    %19 = vector.extract_strided_slice %11 {offsets = [0, 13], sizes = [8, 22], strides = [1, 1]} : vector<8x36xf32> to vector<8x22xf32>
    %20 = vector.extract_strided_slice %11 {offsets = [0, 14], sizes = [8, 22], strides = [1, 1]} : vector<8x36xf32> to vector<8x22xf32>
    %21 = tpu.concatenate %12, %13, %14, %15, %16, %17, %18, %19, %20 in 0 : vector<8x22xf32>, vector<8x22xf32>, vector<8x22xf32>, vector<8x22xf32>, vector<8x22xf32>, vector<8x22xf32>, vector<8x22xf32>, vector<8x22xf32>, vector<8x22xf32> -> vector<72x22xf32>
    %c0_15 = arith.constant 0 : index
    %c0_16 = arith.constant 0 : index
    %c0_17 = arith.constant 0 : index
    %c0_18 = arith.constant 0 : index
    %22 = vector.load %arg2[%c0_15, %c0_16, %c0_17, %c0_18] : memref<1x3x8x36xf32, #tpu.memory_space<vmem>>, vector<1x1x8x36xf32>
    %23 = vector.shape_cast %22 : vector<1x1x8x36xf32> to vector<8x36xf32>
    %24 = vector.extract_strided_slice %23 {offsets = [0, 0], sizes = [8, 22], strides = [1, 1]} : vector<8x36xf32> to vector<8x22xf32>
    %25 = vector.extract_strided_slice %23 {offsets = [0, 1], sizes = [8, 22], strides = [1, 1]} : vector<8x36xf32> to vector<8x22xf32>
    %26 = vector.extract_strided_slice %23 {offsets = [0, 2], sizes = [8, 22], strides = [1, 1]} : vector<8x36xf32> to vector<8x22xf32>
    %27 = vector.extract_strided_slice %23 {offsets = [0, 6], sizes = [8, 22], strides = [1, 1]} : vector<8x36xf32> to vector<8x22xf32>
    %28 = vector.extract_strided_slice %23 {offsets = [0, 7], sizes = [8, 22], strides = [1, 1]} : vector<8x36xf32> to vector<8x22xf32>
    %29 = vector.extract_strided_slice %23 {offsets = [0, 8], sizes = [8, 22], strides = [1, 1]} : vector<8x36xf32> to vector<8x22xf32>
    %30 = vector.extract_strided_slice %23 {offsets = [0, 12], sizes = [8, 22], strides = [1, 1]} : vector<8x36xf32> to vector<8x22xf32>
    %31 = vector.extract_strided_slice %23 {offsets = [0, 13], sizes = [8, 22], strides = [1, 1]} : vector<8x36xf32> to vector<8x22xf32>
    %32 = vector.extract_strided_slice %23 {offsets = [0, 14], sizes = [8, 22], strides = [1, 1]} : vector<8x36xf32> to vector<8x22xf32>
    %33 = tpu.concatenate %24, %25, %26, %27, %28, %29, %30, %31, %32 in 0 : vector<8x22xf32>, vector<8x22xf32>, vector<8x22xf32>, vector<8x22xf32>, vector<8x22xf32>, vector<8x22xf32>, vector<8x22xf32>, vector<8x22xf32>, vector<8x22xf32> -> vector<72x22xf32>
    %c0_19 = arith.constant 0 : index
    %c1_20 = arith.constant 1 : index
    %c0_21 = arith.constant 0 : index
    %c0_22 = arith.constant 0 : index
    %34 = vector.load %arg2[%c0_19, %c1_20, %c0_21, %c0_22] : memref<1x3x8x36xf32, #tpu.memory_space<vmem>>, vector<1x1x8x36xf32>
    %35 = vector.shape_cast %34 : vector<1x1x8x36xf32> to vector<8x36xf32>
    %36 = vector.extract_strided_slice %35 {offsets = [0, 0], sizes = [8, 22], strides = [1, 1]} : vector<8x36xf32> to vector<8x22xf32>
    %37 = vector.extract_strided_slice %35 {offsets = [0, 1], sizes = [8, 22], strides = [1, 1]} : vector<8x36xf32> to vector<8x22xf32>
    %38 = vector.extract_strided_slice %35 {offsets = [0, 2], sizes = [8, 22], strides = [1, 1]} : vector<8x36xf32> to vector<8x22xf32>
    %39 = vector.extract_strided_slice %35 {offsets = [0, 6], sizes = [8, 22], strides = [1, 1]} : vector<8x36xf32> to vector<8x22xf32>
    %40 = vector.extract_strided_slice %35 {offsets = [0, 7], sizes = [8, 22], strides = [1, 1]} : vector<8x36xf32> to vector<8x22xf32>
    %41 = vector.extract_strided_slice %35 {offsets = [0, 8], sizes = [8, 22], strides = [1, 1]} : vector<8x36xf32> to vector<8x22xf32>
    %42 = vector.extract_strided_slice %35 {offsets = [0, 12], sizes = [8, 22], strides = [1, 1]} : vector<8x36xf32> to vector<8x22xf32>
    %43 = vector.extract_strided_slice %35 {offsets = [0, 13], sizes = [8, 22], strides = [1, 1]} : vector<8x36xf32> to vector<8x22xf32>
    %44 = vector.extract_strided_slice %35 {offsets = [0, 14], sizes = [8, 22], strides = [1, 1]} : vector<8x36xf32> to vector<8x22xf32>
    %45 = tpu.concatenate %36, %37, %38, %39, %40, %41, %42, %43, %44 in 0 : vector<8x22xf32>, vector<8x22xf32>, vector<8x22xf32>, vector<8x22xf32>, vector<8x22xf32>, vector<8x22xf32>, vector<8x22xf32>, vector<8x22xf32>, vector<8x22xf32> -> vector<72x22xf32>
    %c3_i32 = arith.constant 3 : i32
    %46 = arith.muli %arg1, %c3_i32 : i32
    %c0_i32 = arith.constant 0 : i32
    %47 = arith.addi %46, %c0_i32 : i32
    %c1_i32 = arith.constant 1 : i32
    %48 = arith.cmpi sge, %47, %c1_i32 : i32
    %c4_i32 = arith.constant 4 : i32
    %49 = arith.cmpi sle, %47, %c4_i32 : i32
    %50 = arith.andi %48, %49 : i1
    %51 = arith.extui %50 : i1 to i32
    %c0_i32_23 = arith.constant 0 : i32
    %52 = arith.cmpi ne, %51, %c0_i32_23 : i32
    scf.if %52 {
      %cst_46 = arith.constant dense<0.000000e+00> : vector<8x22xf32>
      %100 = tpu.matmul %5, %21, %cst_46 {dimension_numbers = #tpu.dot_dimension_numbers<[1], [0], [0], [1], [0, 0, 1, 1], [], []>} : vector<8x72xf32>, vector<72x22xf32>, vector<8x22xf32> -> vector<8x22xf32>
      %cst_47 = arith.constant dense<0.000000e+00> : vector<8x22xf32>
      %101 = tpu.matmul %7, %33, %cst_47 {dimension_numbers = #tpu.dot_dimension_numbers<[1], [0], [0], [1], [0, 0, 1, 1], [], []>} : vector<8x72xf32>, vector<72x22xf32>, vector<8x22xf32> -> vector<8x22xf32>
      %102 = arith.addf %100, %101 : vector<8x22xf32>
      %cst_48 = arith.constant dense<0.000000e+00> : vector<8x22xf32>
      %103 = tpu.matmul %9, %45, %cst_48 {dimension_numbers = #tpu.dot_dimension_numbers<[1], [0], [0], [1], [0, 0, 1, 1], [], []>} : vector<8x72xf32>, vector<72x22xf32>, vector<8x22xf32> -> vector<8x22xf32>
      %104 = arith.addf %102, %103 : vector<8x22xf32>
      %105 = vector.broadcast %0 : vector<8x1xf32> to vector<8x22xf32>
      %106 = arith.addf %104, %105 : vector<8x22xf32>
      %107 = vector.broadcast %1 : vector<1x22xf32> to vector<8x22xf32>
      %108 = arith.mulf %106, %107 : vector<8x22xf32>
      %109 = tpu.concatenate %2, %108, %2 in 1 : vector<8x7xf32>, vector<8x22xf32>, vector<8x7xf32> -> vector<8x36xf32>
      %c0_49 = arith.constant 0 : index
      %c0_50 = arith.constant 0 : index
      %c0_51 = arith.constant 0 : index
      %c0_52 = arith.constant 0 : index
      %110 = vector.load %arg8[%c0_49, %c0_50, %c0_51, %c0_52] : memref<1x3x8x36xf32, #tpu.memory_space<vmem>>, vector<1x1x8x36xf32>
      %111 = vector.shape_cast %110 : vector<1x1x8x36xf32> to vector<8x36xf32>
      %112 = vector.shape_cast %109 : vector<8x36xf32> to vector<1x1x8x36xf32>
      tpu.vector_store %arg8[%c0_49, %c0_50, %c0_51, %c0_52], %112 {strides = array<i32>} : memref<1x3x8x36xf32, #tpu.memory_space<vmem>>, vector<1x1x8x36xf32>,
    } else {
    }
    %true = arith.constant true
    %53 = arith.xori %50, %true : i1
    %54 = arith.extui %53 : i1 to i32
    %c0_i32_24 = arith.constant 0 : i32
    %55 = arith.cmpi ne, %54, %c0_i32_24 : i32
    scf.if %55 {
      %c0_46 = arith.constant 0 : index
      %c0_47 = arith.constant 0 : index
      %c0_48 = arith.constant 0 : index
      %c0_49 = arith.constant 0 : index
      %100 = vector.load %arg8[%c0_46, %c0_47, %c0_48, %c0_49] : memref<1x3x8x36xf32, #tpu.memory_space<vmem>>, vector<1x1x8x36xf32>
      %101 = vector.shape_cast %100 : vector<1x1x8x36xf32> to vector<8x36xf32>
      %102 = vector.shape_cast %3 : vector<8x36xf32> to vector<1x1x8x36xf32>
      tpu.vector_store %arg8[%c0_46, %c0_47, %c0_48, %c0_49], %102 {strides = array<i32>} : memref<1x3x8x36xf32, #tpu.memory_space<vmem>>, vector<1x1x8x36xf32>,
    } else {
    }
    %c0_25 = arith.constant 0 : index
    %c2_26 = arith.constant 2 : index
    %c0_27 = arith.constant 0 : index
    %c0_28 = arith.constant 0 : index
    %56 = vector.load %arg2[%c0_25, %c2_26, %c0_27, %c0_28] : memref<1x3x8x36xf32, #tpu.memory_space<vmem>>, vector<1x1x8x36xf32>
    %57 = vector.shape_cast %56 : vector<1x1x8x36xf32> to vector<8x36xf32>
    %58 = vector.extract_strided_slice %57 {offsets = [0, 0], sizes = [8, 22], strides = [1, 1]} : vector<8x36xf32> to vector<8x22xf32>
    %59 = vector.extract_strided_slice %57 {offsets = [0, 1], sizes = [8, 22], strides = [1, 1]} : vector<8x36xf32> to vector<8x22xf32>
    %60 = vector.extract_strided_slice %57 {offsets = [0, 2], sizes = [8, 22], strides = [1, 1]} : vector<8x36xf32> to vector<8x22xf32>
    %61 = vector.extract_strided_slice %57 {offsets = [0, 6], sizes = [8, 22], strides = [1, 1]} : vector<8x36xf32> to vector<8x22xf32>
    %62 = vector.extract_strided_slice %57 {offsets = [0, 7], sizes = [8, 22], strides = [1, 1]} : vector<8x36xf32> to vector<8x22xf32>
    %63 = vector.extract_strided_slice %57 {offsets = [0, 8], sizes = [8, 22], strides = [1, 1]} : vector<8x36xf32> to vector<8x22xf32>
    %64 = vector.extract_strided_slice %57 {offsets = [0, 12], sizes = [8, 22], strides = [1, 1]} : vector<8x36xf32> to vector<8x22xf32>
    %65 = vector.extract_strided_slice %57 {offsets = [0, 13], sizes = [8, 22], strides = [1, 1]} : vector<8x36xf32> to vector<8x22xf32>
    %66 = vector.extract_strided_slice %57 {offsets = [0, 14], sizes = [8, 22], strides = [1, 1]} : vector<8x36xf32> to vector<8x22xf32>
    %67 = tpu.concatenate %58, %59, %60, %61, %62, %63, %64, %65, %66 in 0 : vector<8x22xf32>, vector<8x22xf32>, vector<8x22xf32>, vector<8x22xf32>, vector<8x22xf32>, vector<8x22xf32>, vector<8x22xf32>, vector<8x22xf32>, vector<8x22xf32> -> vector<72x22xf32>
    %c3_i32_29 = arith.constant 3 : i32
    %68 = arith.muli %arg1, %c3_i32_29 : i32
    %c1_i32_30 = arith.constant 1 : i32
    %69 = arith.addi %68, %c1_i32_30 : i32
    %c1_i32_31 = arith.constant 1 : i32
    %70 = arith.cmpi sge, %69, %c1_i32_31 : i32
    %c4_i32_32 = arith.constant 4 : i32
    %71 = arith.cmpi sle, %69, %c4_i32_32 : i32
    %72 = arith.andi %70, %71 : i1
    %73 = arith.extui %72 : i1 to i32
    %c0_i32_33 = arith.constant 0 : i32
    %74 = arith.cmpi ne, %73, %c0_i32_33 : i32
    scf.if %74 {
      %cst_46 = arith.constant dense<0.000000e+00> : vector<8x22xf32>
      %100 = tpu.matmul %5, %33, %cst_46 {dimension_numbers = #tpu.dot_dimension_numbers<[1], [0], [0], [1], [0, 0, 1, 1], [], []>} : vector<8x72xf32>, vector<72x22xf32>, vector<8x22xf32> -> vector<8x22xf32>
      %cst_47 = arith.constant dense<0.000000e+00> : vector<8x22xf32>
      %101 = tpu.matmul %7, %45, %cst_47 {dimension_numbers = #tpu.dot_dimension_numbers<[1], [0], [0], [1], [0, 0, 1, 1], [], []>} : vector<8x72xf32>, vector<72x22xf32>, vector<8x22xf32> -> vector<8x22xf32>
      %102 = arith.addf %100, %101 : vector<8x22xf32>
      %cst_48 = arith.constant dense<0.000000e+00> : vector<8x22xf32>
      %103 = tpu.matmul %9, %67, %cst_48 {dimension_numbers = #tpu.dot_dimension_numbers<[1], [0], [0], [1], [0, 0, 1, 1], [], []>} : vector<8x72xf32>, vector<72x22xf32>, vector<8x22xf32> -> vector<8x22xf32>
      %104 = arith.addf %102, %103 : vector<8x22xf32>
      %105 = vector.broadcast %0 : vector<8x1xf32> to vector<8x22xf32>
      %106 = arith.addf %104, %105 : vector<8x22xf32>
      %107 = vector.broadcast %1 : vector<1x22xf32> to vector<8x22xf32>
      %108 = arith.mulf %106, %107 : vector<8x22xf32>
      %109 = tpu.concatenate %2, %108, %2 in 1 : vector<8x7xf32>, vector<8x22xf32>, vector<8x7xf32> -> vector<8x36xf32>
      %c0_49 = arith.constant 0 : index
      %c1_50 = arith.constant 1 : index
      %c0_51 = arith.constant 0 : index
      %c0_52 = arith.constant 0 : index
      %110 = vector.load %arg8[%c0_49, %c1_50, %c0_51, %c0_52] : memref<1x3x8x36xf32, #tpu.memory_space<vmem>>, vector<1x1x8x36xf32>
      %111 = vector.shape_cast %110 : vector<1x1x8x36xf32> to vector<8x36xf32>
      %112 = vector.shape_cast %109 : vector<8x36xf32> to vector<1x1x8x36xf32>
      tpu.vector_store %arg8[%c0_49, %c1_50, %c0_51, %c0_52], %112 {strides = array<i32>} : memref<1x3x8x36xf32, #tpu.memory_space<vmem>>, vector<1x1x8x36xf32>,
    } else {
    }
    %true_34 = arith.constant true
    %75 = arith.xori %72, %true_34 : i1
    %76 = arith.extui %75 : i1 to i32
    %c0_i32_35 = arith.constant 0 : i32
    %77 = arith.cmpi ne, %76, %c0_i32_35 : i32
    scf.if %77 {
      %c0_46 = arith.constant 0 : index
      %c1_47 = arith.constant 1 : index
      %c0_48 = arith.constant 0 : index
      %c0_49 = arith.constant 0 : index
      %100 = vector.load %arg8[%c0_46, %c1_47, %c0_48, %c0_49] : memref<1x3x8x36xf32, #tpu.memory_space<vmem>>, vector<1x1x8x36xf32>
      %101 = vector.shape_cast %100 : vector<1x1x8x36xf32> to vector<8x36xf32>
      %102 = vector.shape_cast %3 : vector<8x36xf32> to vector<1x1x8x36xf32>
      tpu.vector_store %arg8[%c0_46, %c1_47, %c0_48, %c0_49], %102 {strides = array<i32>} : memref<1x3x8x36xf32, #tpu.memory_space<vmem>>, vector<1x1x8x36xf32>,
    } else {
    }
    %c0_36 = arith.constant 0 : index
    %c0_37 = arith.constant 0 : index
    %c0_38 = arith.constant 0 : index
    %c0_39 = arith.constant 0 : index
    %78 = vector.load %arg4[%c0_36, %c0_37, %c0_38, %c0_39] : memref<1x1x8x36xf32, #tpu.memory_space<vmem>>, vector<1x1x8x36xf32>
    %79 = vector.shape_cast %78 : vector<1x1x8x36xf32> to vector<8x36xf32>
    %80 = vector.extract_strided_slice %79 {offsets = [0, 0], sizes = [8, 22], strides = [1, 1]} : vector<8x36xf32> to vector<8x22xf32>
    %81 = vector.extract_strided_slice %79 {offsets = [0, 1], sizes = [8, 22], strides = [1, 1]} : vector<8x36xf32> to vector<8x22xf32>
    %82 = vector.extract_strided_slice %79 {offsets = [0, 2], sizes = [8, 22], strides = [1, 1]} : vector<8x36xf32> to vector<8x22xf32>
    %83 = vector.extract_strided_slice %79 {offsets = [0, 6], sizes = [8, 22], strides = [1, 1]} : vector<8x36xf32> to vector<8x22xf32>
    %84 = vector.extract_strided_slice %79 {offsets = [0, 7], sizes = [8, 22], strides = [1, 1]} : vector<8x36xf32> to vector<8x22xf32>
    %85 = vector.extract_strided_slice %79 {offsets = [0, 8], sizes = [8, 22], strides = [1, 1]} : vector<8x36xf32> to vector<8x22xf32>
    %86 = vector.extract_strided_slice %79 {offsets = [0, 12], sizes = [8, 22], strides = [1, 1]} : vector<8x36xf32> to vector<8x22xf32>
    %87 = vector.extract_strided_slice %79 {offsets = [0, 13], sizes = [8, 22], strides = [1, 1]} : vector<8x36xf32> to vector<8x22xf32>
    %88 = vector.extract_strided_slice %79 {offsets = [0, 14], sizes = [8, 22], strides = [1, 1]} : vector<8x36xf32> to vector<8x22xf32>
    %89 = tpu.concatenate %80, %81, %82, %83, %84, %85, %86, %87, %88 in 0 : vector<8x22xf32>, vector<8x22xf32>, vector<8x22xf32>, vector<8x22xf32>, vector<8x22xf32>, vector<8x22xf32>, vector<8x22xf32>, vector<8x22xf32>, vector<8x22xf32> -> vector<72x22xf32>
    %c3_i32_40 = arith.constant 3 : i32
    %90 = arith.muli %arg1, %c3_i32_40 : i32
    %c2_i32 = arith.constant 2 : i32
    %91 = arith.addi %90, %c2_i32 : i32
    %c1_i32_41 = arith.constant 1 : i32
    %92 = arith.cmpi sge, %91, %c1_i32_41 : i32
    %c4_i32_42 = arith.constant 4 : i32
    %93 = arith.cmpi sle, %91, %c4_i32_42 : i32
    %94 = arith.andi %92, %93 : i1
    %95 = arith.extui %94 : i1 to i32
    %c0_i32_43 = arith.constant 0 : i32
    %96 = arith.cmpi ne, %95, %c0_i32_43 : i32
    scf.if %96 {
      %cst_46 = arith.constant dense<0.000000e+00> : vector<8x22xf32>
      %100 = tpu.matmul %5, %45, %cst_46 {dimension_numbers = #tpu.dot_dimension_numbers<[1], [0], [0], [1], [0, 0, 1, 1], [], []>} : vector<8x72xf32>, vector<72x22xf32>, vector<8x22xf32> -> vector<8x22xf32>
      %cst_47 = arith.constant dense<0.000000e+00> : vector<8x22xf32>
      %101 = tpu.matmul %7, %67, %cst_47 {dimension_numbers = #tpu.dot_dimension_numbers<[1], [0], [0], [1], [0, 0, 1, 1], [], []>} : vector<8x72xf32>, vector<72x22xf32>, vector<8x22xf32> -> vector<8x22xf32>
      %102 = arith.addf %100, %101 : vector<8x22xf32>
      %cst_48 = arith.constant dense<0.000000e+00> : vector<8x22xf32>
      %103 = tpu.matmul %9, %89, %cst_48 {dimension_numbers = #tpu.dot_dimension_numbers<[1], [0], [0], [1], [0, 0, 1, 1], [], []>} : vector<8x72xf32>, vector<72x22xf32>, vector<8x22xf32> -> vector<8x22xf32>
      %104 = arith.addf %102, %103 : vector<8x22xf32>
      %105 = vector.broadcast %0 : vector<8x1xf32> to vector<8x22xf32>
      %106 = arith.addf %104, %105 : vector<8x22xf32>
      %107 = vector.broadcast %1 : vector<1x22xf32> to vector<8x22xf32>
      %108 = arith.mulf %106, %107 : vector<8x22xf32>
      %109 = tpu.concatenate %2, %108, %2 in 1 : vector<8x7xf32>, vector<8x22xf32>, vector<8x7xf32> -> vector<8x36xf32>
      %c0_49 = arith.constant 0 : index
      %c2_50 = arith.constant 2 : index
      %c0_51 = arith.constant 0 : index
      %c0_52 = arith.constant 0 : index
      %110 = vector.load %arg8[%c0_49, %c2_50, %c0_51, %c0_52] : memref<1x3x8x36xf32, #tpu.memory_space<vmem>>, vector<1x1x8x36xf32>
      %111 = vector.shape_cast %110 : vector<1x1x8x36xf32> to vector<8x36xf32>
      %112 = vector.shape_cast %109 : vector<8x36xf32> to vector<1x1x8x36xf32>
      tpu.vector_store %arg8[%c0_49, %c2_50, %c0_51, %c0_52], %112 {strides = array<i32>} : memref<1x3x8x36xf32, #tpu.memory_space<vmem>>, vector<1x1x8x36xf32>,
    } else {
    }
    %true_44 = arith.constant true
    %97 = arith.xori %94, %true_44 : i1
    %98 = arith.extui %97 : i1 to i32
    %c0_i32_45 = arith.constant 0 : i32
    %99 = arith.cmpi ne, %98, %c0_i32_45 : i32
    scf.if %99 {
      %c0_46 = arith.constant 0 : index
      %c2_47 = arith.constant 2 : index
      %c0_48 = arith.constant 0 : index
      %c0_49 = arith.constant 0 : index
      %100 = vector.load %arg8[%c0_46, %c2_47, %c0_48, %c0_49] : memref<1x3x8x36xf32, #tpu.memory_space<vmem>>, vector<1x1x8x36xf32>
      %101 = vector.shape_cast %100 : vector<1x1x8x36xf32> to vector<8x36xf32>
      %102 = vector.shape_cast %3 : vector<8x36xf32> to vector<1x1x8x36xf32>
      tpu.vector_store %arg8[%c0_46, %c2_47, %c0_48, %c0_49], %102 {strides = array<i32>} : memref<1x3x8x36xf32, #tpu.memory_space<vmem>>, vector<1x1x8x36xf32>,
    } else {
    }
    return
  }
  func.func @transform_0(%arg0: i32, %arg1: i32) -> (i32, i32, i32, i32) {
    %c0_i32 = arith.constant 0 : i32
    %c0_i32_0 = arith.constant 0 : i32
    %c0_i32_1 = arith.constant 0 : i32
    return %arg0, %arg1, %c0_i32, %c0_i32_0 : i32, i32, i32, i32
  }
  func.func @transform_1(%arg0: i32, %arg1: i32) -> (i32, i32, i32, i32) {
    %c3_i32 = arith.constant 3 : i32
    %0 = arith.muli %arg1, %c3_i32 : i32
    %c1_i32 = arith.constant 1 : i32
    %1 = arith.subi %0, %c1_i32 : i32
    %c0_i32 = arith.constant 0 : i32
    %2 = arith.maxsi %1, %c0_i32 : i32
    %c0_i32_0 = arith.constant 0 : i32
    %c0_i32_1 = arith.constant 0 : i32
    %c0_i32_2 = arith.constant 0 : i32
    return %arg0, %2, %c0_i32_0, %c0_i32_1 : i32, i32, i32, i32
  }
  func.func @transform_2(%arg0: i32, %arg1: i32) -> (i32, i32, i32, i32) {
    %c3_i32 = arith.constant 3 : i32
    %0 = arith.muli %arg1, %c3_i32 : i32
    %c3_i32_0 = arith.constant 3 : i32
    %1 = arith.addi %0, %c3_i32_0 : i32
    %c5_i32 = arith.constant 5 : i32
    %2 = arith.minsi %1, %c5_i32 : i32
    %c0_i32 = arith.constant 0 : i32
    %c0_i32_1 = arith.constant 0 : i32
    %c0_i32_2 = arith.constant 0 : i32
    return %arg0, %2, %c0_i32, %c0_i32_1 : i32, i32, i32, i32
  }
  func.func @transform_3(%arg0: i32, %arg1: i32) -> (i32, i32) {
    %c0_i32 = arith.constant 0 : i32
    %c0_i32_0 = arith.constant 0 : i32
    %c0_i32_1 = arith.constant 0 : i32
    return %c0_i32, %c0_i32_0 : i32, i32
  }
  func.func @transform_4(%arg0: i32, %arg1: i32) -> (i32, i32, i32) {
    %c0_i32 = arith.constant 0 : i32
    %c0_i32_0 = arith.constant 0 : i32
    %c0_i32_1 = arith.constant 0 : i32
    %c0_i32_2 = arith.constant 0 : i32
    return %c0_i32, %c0_i32_0, %c0_i32_1 : i32, i32, i32
  }
  func.func @transform_5(%arg0: i32, %arg1: i32) -> (i32, i32) {
    %c0_i32 = arith.constant 0 : i32
    %c0_i32_0 = arith.constant 0 : i32
    %c0_i32_1 = arith.constant 0 : i32
    return %c0_i32, %c0_i32_0 : i32, i32
  }
  func.func @transform_6(%arg0: i32, %arg1: i32) -> (i32, i32, i32, i32) {
    %c0_i32 = arith.constant 0 : i32
    %c0_i32_0 = arith.constant 0 : i32
    %c0_i32_1 = arith.constant 0 : i32
    return %arg0, %arg1, %c0_i32, %c0_i32_0 : i32, i32, i32, i32
  }
}

</mosaic_0001>

<llo_original>
// kernel: tile.8
$region0: #{tile.8}
  #allocation2 [shape = 's32[1]{0}', space=sflag, size = 0x4, scoped, tag = 'scoped memory for tile.8']
  %s0 = inlined_call_operand.hbm [shape: f32[8], index: 0, kind: input, shape index: {}]
  %s1 = inlined_call_operand.vmem [shape: f32[8,8], index: 1, kind: output, shape index: {}]
  $region1: #{tile.8} parent=0
    #allocation0 [shape = 'u8[512]{0}', space=vmem, size = 0x400, scoped, tag = 'operand span for operand 0']
    #allocation1 [shape = 's32[1]{0}', space=sflag, size = 0x4, scoped, tag = 'scoped memory for tile.8']
    %2 = vsyncpa [#allocation1], 0
    // Predicated region
    $region2: #{tile.8} parent=1 // pred_check
      _
    $region3: #{tile.8} parent=1 // pred_check_branch
      %4 = sbr.rel (0) target = $region5
    $region4: #{tile.8} parent=1 // pred_region
      %s6 = ssub.s32 16, 16
      %7 = vsyncadd [#allocation1], %s6
      %s9 = sshll.u32 [#allocation0], 4
      %s10 = int_to_ptr.vmem [resolvable:$true] %s9
      %12 = dma.hbm_to_vmem [thread:$0]  %s0, 16, %s10, [#allocation1]
    $region5: #{tile.8} parent=1 // pred_fallthru
      _
    // Predicated region
    $region6: #{tile.8} parent=1 // pred_check
      _
    $region7: #{tile.8} parent=1 // pred_check_branch
      %14 = sbr.rel (0) target = $region9
    $region8: #{tile.8} parent=1 // pred_region
      %15 = dma.done [#allocation1], 16
    $region9: #{tile.8} parent=1 // pred_fallthru
      _
    %v16 = vld [vmem:[#allocation0] ss:$0 sm:$0xff]
    %17 = vst [vmem:[%s1] sm:$0xff] %v16
    %18 = vsyncpa [#allocation1], 1

// kernel: tile.0
$region0: #{tile.0}
  %s0 = inlined_call_operand.vmem [shape: f32[8,8], index: 0, kind: input, shape index: {}]
  %s1 = inlined_call_operand.vmem [shape: f32[64,1], index: 1, kind: output, shape index: {}]
  %v2 = vld [vmem:[%s0] sm:$0xff]
  %vm3 = vcmask 7168
  %4 = vst.msk [vmem:[%s1] ss:$8 sm:$0xf] %vm3, %v2
  %5 = vst.msk [vmem:[%s1] ss:$8 sm:$0xf0] %vm3, %v2
  %v6 = vld [vmem:[%s0] sm:$0xff]
  %7 = vrot.lane.b32.xlu0 %v6, 127
  %v8 = vpop.permute.xlu0 %7
  %vm9 = vcmask 7168
  %s10 = scalar_lea.vmem %s1, 1
  %11 = vst.msk [vmem:[%s10] ss:$8 sm:$0xf] %vm9, %v8
  %s12 = scalar_lea.vmem %s1, 1
  %13 = vst.msk [vmem:[%s12] ss:$8 sm:$0xf0] %vm9, %v8
  %v14 = vld [vmem:[%s0] sm:$0xff]
  %15 = vrot.lane.b32.xlu0 %v14, 126
  %v16 = vpop.permute.xlu0 %15
  %vm17 = vcmask 7168
  %s18 = scalar_lea.vmem %s1, 2
  %19 = vst.msk [vmem:[%s18] ss:$8 sm:$0xf] %vm17, %v16
  %s20 = scalar_lea.vmem %s1, 2
  %21 = vst.msk [vmem:[%s20] ss:$8 sm:$0xf0] %vm17, %v16
  %v22 = vld [vmem:[%s0] sm:$0xff]
  %23 = vrot.lane.b32.xlu0 %v22, 125
  %v24 = vpop.permute.xlu0 %23
  %vm25 = vcmask 7168
  %s26 = scalar_lea.vmem %s1, 3
  %27 = vst.msk [vmem:[%s26] ss:$8 sm:$0xf] %vm25, %v24
  %s28 = scalar_lea.vmem %s1, 3
  %29 = vst.msk [vmem:[%s28] ss:$8 sm:$0xf0] %vm25, %v24
  %v30 = vld [vmem:[%s0] sm:$0xff]
  %31 = vrot.lane.b32.xlu0 %v30, 124
  %v32 = vpop.permute.xlu0 %31
  %vm33 = vcmask 7168
  %s34 = scalar_lea.vmem %s1, 4
  %35 = vst.msk [vmem:[%s34] ss:$8 sm:$0xf] %vm33, %v32
  %s36 = scalar_lea.vmem %s1, 4
  %37 = vst.msk [vmem:[%s36] ss:$8 sm:$0xf0] %vm33, %v32
  %v38 = vld [vmem:[%s0] sm:$0xff]
  %39 = vrot.lane.b32.xlu0 %v38, 123
  %v40 = vpop.permute.xlu0 %39
  %vm41 = vcmask 7168
  %s42 = scalar_lea.vmem %s1, 5
  %43 = vst.msk [vmem:[%s42] ss:$8 sm:$0xf] %vm41, %v40
  %s44 = scalar_lea.vmem %s1, 5
  %45 = vst.msk [vmem:[%s44] ss:$8 sm:$0xf0] %vm41, %v40
  %v46 = vld [vmem:[%s0] sm:$0xff]
  %47 = vrot.lane.b32.xlu0 %v46, 122
  %v48 = vpop.permute.xlu0 %47
  %vm49 = vcmask 7168
  %s50 = scalar_lea.vmem %s1, 6
  %51 = vst.msk [vmem:[%s50] ss:$8 sm:$0xf] %vm49, %v48
  %s52 = scalar_lea.vmem %s1, 6
  %53 = vst.msk [vmem:[%s52] ss:$8 sm:$0xf0] %vm49, %v48
  %v54 = vld [vmem:[%s0] sm:$0xff]
  %55 = vrot.lane.b32.xlu0 %v54, 121
  %v56 = vpop.permute.xlu0 %55
  %vm57 = vcmask 7168
  %s58 = scalar_lea.vmem %s1, 7
  %59 = vst.msk [vmem:[%s58] ss:$8 sm:$0xf] %vm57, %v56
  %s60 = scalar_lea.vmem %s1, 7
  %61 = vst.msk [vmem:[%s60] ss:$8 sm:$0xf0] %vm57, %v56

// kernel: run.7
$region0: #{run.7}
  #allocation0 [shape = 'u32[]', space=smem, size = 0x4, offset = 0x4, fixed_abs, tag = 'smem constant byte address 0x4 - core index']
  #allocation1 [shape = 'u32[144,128]{1,0:T(1,128)}', space=vmem, size = 0x12000, scoped, tag = 'internal scratch']
  %s0 = inlined_call_operand.vmem [shape: f32[2,6,8,36], index: 0, kind: input, shape index: {}]
  %s1 = inlined_call_operand.vmem [shape: f32[64,8], index: 1, kind: input, shape index: {}]
  %s2 = inlined_call_operand.vmem [shape: f32[64,1], index: 2, kind: input, shape index: {}]
  %s3 = inlined_call_operand.vmem [shape: f32[2,6,64,36], index: 3, kind: output, shape index: {}]
  %s4 = sld [smem:[#allocation0]]
  $region45: #{run.7} parent=0
    _
  %s6 = ssub.s32 1, %s4
  %s7 = scalar_select 0, %s6, %s4
  loop: start=0, step=1, limit=6
  $region2: #{run.7} parent=0 // loop_pre_header
    _
  $region3: #{run.7} parent=0 // loop_header
    %s9 = sphi 0, %s13
    %p10 = scmp.ge.s32.totalorder %s9, 6
    %s16 = sphi 0, %s28
    %s17 = sphi 0, %s24
    %s18 = sphi 0, %s16
    %s19 = sphi 0, %s17
    %s20 = sphi 0, %s18
    %s21 = sphi 0, %s19
    %s33 = sphi 0, %s35
    %s36 = sphi 0, %s33
    %s37 = sphi 0, %s36
    %s53 = sphi 0, %s37
    %s57 = sphi 0, %s57
    %s59 = sphi 0, %s57
    %s60 = sphi 0, %s59
    %s74 = sphi 0, %s60
    %s78 = sphi 0, %s78
    %s80 = sphi 0, %s78
    %s81 = sphi 0, %s80
    %s95 = sphi 0, %s81
    %s103 = sphi 0, %s105
    %s106 = sphi 0, %s103
    %s107 = sphi 0, %s106
    %s123 = sphi 0, %s107
  $region4: #{run.7} parent=0 // loop_header_branch
    %12 = sbr.rel (%p10) target = $region8
  $region5: #{run.7} parent=0 // loop_body
    %s14 = ssub.s32 %s9, 1
    %s15 = ssub.s32 %s9, 2
    %s22 = sadd.s32 1, %s17
    %p23 = scmp.ge.s32.totalorder %s22, 2
    %s24 = scalar_select %p23, 0, %s22
    %s25 = sadd.s32 1, %s16
    %s26 = scalar_select %p23, %s25, %s16
    %p27 = scmp.ge.s32.totalorder %s26, 2
    %s28 = scalar_select %p27, 0, %s26
    %s29 = ssub.s32 %s16, %s28
    %s30 = ssub.s32 %s17, %s24
    %s31 = sor.u32 %s29, %s30
    %p32 = scmp.eq.s32.totalorder %s31, 0
    %s34 = sadd.s32 %s33, 1
    %s35 = scalar_select %p32, %s33, %s34
    %p38 = pneg %p32
    %p39 = scmp.eq.s32.totalorder %s9, 3
    %p40 = por %p38, %p39
    %p41 = scmp.ne.s32.totalorder %s33, %s36
    %p42 = scmp.eq.s32.totalorder %s9, 0
    %p43 = por %p41, %p42
    %p44 = scmp.ne.s32.totalorder %s33, %s36
    %p45 = scmp.eq.s32.totalorder %s14, 3
    %p46 = por %p44, %p45
    %p47 = scmp.ne.s32.totalorder %s36, %s37
    %p48 = scmp.eq.s32.totalorder %s14, 0
    %p49 = por %p47, %p48
    %p50 = scmp.ne.s32.totalorder %s36, %s37
    %p51 = scmp.eq.s32.totalorder %s15, 3
    %p52 = por %p50, %p51
    %p54 = scmp.ne.s32.totalorder %s37, %s53
    %p55 = scmp.eq.s32.totalorder %s15, 0
    %p56 = por %p54, %p55
    %s58 = sadd.s32 %s57, 1
    %p61 = scmp.eq.s32.totalorder %s9, 3
    %p62 = scmp.ne.s32.totalorder %s57, %s59
    %p63 = scmp.eq.s32.totalorder %s9, 0
    %p64 = por %p62, %p63
    %p65 = scmp.ne.s32.totalorder %s57, %s59
    %p66 = scmp.eq.s32.totalorder %s14, 3
    %p67 = por %p65, %p66
    %p68 = scmp.ne.s32.totalorder %s59, %s60
    %p69 = scmp.eq.s32.totalorder %s14, 0
    %p70 = por %p68, %p69
    %p71 = scmp.ne.s32.totalorder %s59, %s60
    %p72 = scmp.eq.s32.totalorder %s15, 3
    %p73 = por %p71, %p72
    %p75 = scmp.ne.s32.totalorder %s60, %s74
    %p76 = scmp.eq.s32.totalorder %s15, 0
    %p77 = por %p75, %p76
    %s79 = sadd.s32 %s78, 1
    %p82 = scmp.eq.s32.totalorder %s9, 3
    %p83 = scmp.ne.s32.totalorder %s78, %s80
    %p84 = scmp.eq.s32.totalorder %s9, 0
    %p85 = por %p83, %p84
    %p86 = scmp.ne.s32.totalorder %s78, %s80
    %p87 = scmp.eq.s32.totalorder %s14, 3
    %p88 = por %p86, %p87
    %p89 = scmp.ne.s32.totalorder %s80, %s81
    %p90 = scmp.eq.s32.totalorder %s14, 0
    %p91 = por %p89, %p90
    %p92 = scmp.ne.s32.totalorder %s80, %s81
    %p93 = scmp.eq.s32.totalorder %s15, 3
    %p94 = por %p92, %p93
    %p96 = scmp.ne.s32.totalorder %s81, %s95
    %p97 = scmp.eq.s32.totalorder %s15, 0
    %p98 = por %p96, %p97
    %s99 = ssub.s32 %s16, %s28
    %s100 = ssub.s32 %s17, %s24
    %s101 = sor.u32 %s99, %s100
    %p102 = scmp.eq.s32.totalorder %s101, 0
    %s104 = sadd.s32 %s103, 1
    %s105 = scalar_select %p102, %s103, %s104
    %p108 = pneg %p102
    %p109 = scmp.eq.s32.totalorder %s9, 3
    %p110 = por %p108, %p109
    %p111 = scmp.ne.s32.totalorder %s103, %s106
    %p112 = scmp.eq.s32.totalorder %s9, 0
    %p113 = por %p111, %p112
    %p114 = scmp.ne.s32.totalorder %s103, %s106
    %p115 = scmp.eq.s32.totalorder %s14, 3
    %p116 = por %p114, %p115
    %p117 = scmp.ne.s32.totalorder %s106, %s107
    %p118 = scmp.eq.s32.totalorder %s14, 0
    %p119 = por %p117, %p118
    %p120 = scmp.ne.s32.totalorder %s106, %s107
    %p121 = scmp.eq.s32.totalorder %s15, 3
    %p122 = por %p120, %p121
    %p124 = scmp.ne.s32.totalorder %s107, %s123
    %p125 = scmp.eq.s32.totalorder %s15, 0
    %p126 = por %p124, %p125
    %p127 = scmp.le.s32.totalorder 1, %s9
    %p128 = scmp.lt.s32.totalorder %s9, 5
    %p129 = pnand %p127, %p128
    %p130 = pneg %p129
    // Predicated region
    $region9: #{run.7} parent=5 // pred_check
      _
    $region10: #{run.7} parent=5 // pred_check_branch
      %132 = sbr.rel (%p129) target = $region12
    $region11: #{run.7} parent=5 // pred_region
      %s133 = ssub.s32 %s9, 1
      // Predicated region
      $region13: #{run.7} parent=11 // pred_check
        %p134 = pneg %p70
      $region14: #{run.7} parent=11 // pred_check_branch
        %136 = sbr.rel (%p134) target = $region16
      $region15: #{run.7} parent=11 // pred_region
        _
      $region16: #{run.7} parent=11 // pred_fallthru
        _
      // Predicated region
      $region17: #{run.7} parent=11 // pred_check
        %p137 = pneg %p91
      $region18: #{run.7} parent=11 // pred_check_branch
        %139 = sbr.rel (%p137) target = $region20
      $region19: #{run.7} parent=11 // pred_region
        _
      $region20: #{run.7} parent=11 // pred_fallthru
        _
    $region12: #{run.7} parent=5 // pred_fallthru
      _
    %p140 = scmp.lt.s32.totalorder %s9, 4
    // Predicated region
    $region21: #{run.7} parent=5 // pred_check
      %p141 = pneg %p140
    $region22: #{run.7} parent=5 // pred_check_branch
      %143 = sbr.rel (%p141) target = $region24
    $region23: #{run.7} parent=5 // pred_region
      // Predicated region
      $region25: #{run.7} parent=23 // pred_check
        %p144 = pneg %p43
      $region26: #{run.7} parent=23 // pred_check_branch
        %146 = sbr.rel (%p144) target = $region28
      $region27: #{run.7} parent=23 // pred_region
        %s147 = smul.u32 3, %s17
        %p148 = scmp.lt.s32.totalorder %s16, 1
        %s149 = scalar_select %p148, %s16, 1
        %p150 = scmp.lt.s32.totalorder %s147, 5
        %s151 = scalar_select %p150, %s147, 5
        %s152 = smul.addr %s149, 6
        %s153 = sadd.s32 %s151, %s152
        %s154 = smul.addr %s153, 8
        %s155 = scalar_lea.vmem %s0, %s154
        %s156 = smul.u32 3, %s17
      $region28: #{run.7} parent=23 // pred_fallthru
        _
    $region24: #{run.7} parent=5 // pred_fallthru
      _
    %p157 = scmp.le.s32.totalorder 1, %s9
    %p158 = scmp.lt.s32.totalorder %s9, 5
    %p159 = pnand %p157, %p158
    %p160 = pneg %p159
    // Predicated region
    $region29: #{run.7} parent=5 // pred_check
      _
    $region30: #{run.7} parent=5 // pred_check_branch
      %162 = sbr.rel (%p159) target = $region32
    $region31: #{run.7} parent=5 // pred_region
      %s163 = ssub.s32 %s9, 1
      %s164 = smul.u32 3, %s19
      %p165 = scmp.lt.s32.totalorder %s18, 1
      %s166 = scalar_select %p165, %s18, 1
      %p167 = scmp.lt.s32.totalorder %s164, 5
      %s168 = scalar_select %p167, %s164, 5
      %s169 = smul.addr %s166, 6
      %s170 = sadd.s32 %s168, %s169
      %s171 = smul.addr %s170, 8
      %s172 = scalar_lea.vmem %s0, %s171
      %p173 = pneg %p49
      %p174 = pneg %p46
      %p175 = pneg %p70
      %p176 = pneg %p67
      %p177 = pneg %p91
      %p178 = pneg %p88
      %p179 = pneg %p119
      %p180 = pneg %p116
      %s181 = smul.u32 3, %s19
      %p182 = scmp.lt.s32.totalorder %s18, 1
      %s183 = scalar_select %p182, %s18, 1
      %p184 = scmp.lt.s32.totalorder %s181, 5
      %s185 = scalar_select %p184, %s181, 5
      %s186 = smul.addr %s185, 8
      %s187 = smul.addr %s183, 48
      %s188 = sadd.s32 %s186, %s187
      %s189 = smul.addr %s188, 8
      %s190 = scalar_lea.vmem %s3, %s189
      %s191 = smul.u32 3, %s19
      %p192 = scmp.lt.s32.totalorder %s18, 1
      %s193 = scalar_select %p192, %s18, 1
      %p194 = scmp.lt.s32.totalorder %s191, 5
      %s195 = scalar_select %p194, %s191, 5
      %s196 = smul.addr %s193, 6
      %s197 = sadd.s32 %s195, %s196
      %s198 = smul.addr %s197, 8
      %s199 = scalar_lea.vmem %s0, %s198
      %s200 = smul.u32 3, %s19
      %s201 = smul.u32 3, %s19
      %p202 = scmp.lt.s32.totalorder %s18, 1
      %s203 = scalar_select %p202, %s18, 1
      %p204 = scmp.lt.s32.totalorder %s201, 5
      %s205 = scalar_select %p204, %s201, 5
      %s206 = smul.addr %s205, 8
      %s207 = smul.addr %s203, 48
      %s208 = sadd.s32 %s206, %s207
      %s209 = smul.addr %s208, 8
      %s210 = scalar_lea.vmem %s3, %s209
      %s211 = smul.u32 3, %s19
      %v212 = vld [vmem:[%s1] sm:$0xff]
      %v213 = vld [vmem:[%s1 + $0x8] sm:$0xff]
      %v214 = vld [vmem:[%s1 + $0x10] sm:$0xff]
      %v215 = vld [vmem:[%s1 + $0x18] sm:$0xff]
      %v216 = vld [vmem:[%s1 + $0x20] sm:$0xff]
      %v217 = vld [vmem:[%s1 + $0x28] sm:$0xff]
      %v218 = vld [vmem:[%s1 + $0x30] sm:$0xff]
      %v219 = vld [vmem:[%s1 + $0x38] sm:$0xff]
      %v220 = vld [vmem:[%s2] sm:$0xff]
      %v221 = vld [vmem:[%s2 + $0x8] sm:$0xff]
      %v222 = vld [vmem:[%s2 + $0x10] sm:$0xff]
      %v223 = vld [vmem:[%s2 + $0x18] sm:$0xff]
      %v224 = vld [vmem:[%s2 + $0x20] sm:$0xff]
      %v225 = vld [vmem:[%s2 + $0x28] sm:$0xff]
      %v226 = vld [vmem:[%s2 + $0x30] sm:$0xff]
      %v227 = vld [vmem:[%s2 + $0x38] sm:$0xff]
      %v228 = vld [vmem:[%s199] sm:$0xff]
      %230 = vset.pattern.permute.xlu0 0
      %231 = vperm.xlu0 %230, %v220
      %v232 = vpop.permute.xlu0 %231
      %235 = vset.pattern.permute.xlu0 0
      %236 = vperm.xlu0 %235, %v221
      %v237 = vpop.permute.xlu0 %236
      %240 = vset.pattern.permute.xlu0 0
      %241 = vperm.xlu0 %240, %v222
      %v242 = vpop.permute.xlu0 %241
      %245 = vset.pattern.permute.xlu0 0
      %246 = vperm.xlu0 %245, %v223
      %v247 = vpop.permute.xlu0 %246
      %250 = vset.pattern.permute.xlu0 0
      %251 = vperm.xlu0 %250, %v224
      %v252 = vpop.permute.xlu0 %251
      %255 = vset.pattern.permute.xlu0 0
      %256 = vperm.xlu0 %255, %v225
      %v257 = vpop.permute.xlu0 %256
      %260 = vset.pattern.permute.xlu0 0
      %261 = vperm.xlu0 %260, %v226
      %v262 = vpop.permute.xlu0 %261
      %265 = vset.pattern.permute.xlu0 0
      %266 = vperm.xlu0 %265, %v227
      %v267 = vpop.permute.xlu0 %266
      %vm269 = vcmask 64512
      %v271 = vsel %vm269, %v212, 0
      %v274 = vsel %vm269, %v213, 0
      %v277 = vsel %vm269, %v214, 0
      %v280 = vsel %vm269, %v215, 0
      %v283 = vsel %vm269, %v216, 0
      %v286 = vsel %vm269, %v217, 0
      %v289 = vsel %vm269, %v218, 0
      %v292 = vsel %vm269, %v219, 0
      %294 = vmatprep.subr.mxu0 0.0
      %295 = vmatpush1.msra.mxu0 %v228
      %296 = vmatprep.subr.mxu0 0.0
      %297 = vmatpush1.msra.mxu0 0.0
      %298 = vmatprep.subr.mxu0 0.0
      %299 = vmatpush1.msra.mxu0 0.0
      %300 = vmatprep.subr.mxu0 0.0
      %301 = vmatpush1.msra.mxu0 0.0
      %302 = vmatprep.subr.mxu0 0.0
      %303 = vmatpush1.msra.mxu0 0.0
      %304 = vmatprep.subr.mxu0 0.0
      %305 = vmatpush1.msra.mxu0 0.0
      %306 = vmatprep.subr.mxu0 0.0
      %307 = vmatpush1.msra.mxu0 0.0
      %308 = vmatprep.subr.mxu0 0.0
      %309 = vmatpush1.msra.mxu0 0.0
      %310 = vmatprep.subr.mxu0 0.0
      %311 = vmatpush1.msra.mxu0 0.0
      %312 = vmatprep.subr.mxu0 0.0
      %313 = vmatpush1.msra.mxu0 0.0
      %314 = vmatprep.subr.mxu0 0.0
      %315 = vmatpush1.msra.mxu0 0.0
      %316 = vmatprep.subr.mxu0 0.0
      %317 = vmatpush1.msra.mxu0 0.0
      %318 = vmatprep.subr.mxu0 0.0
      %319 = vmatpush1.msra.mxu0 0.0
      %320 = vmatprep.subr.mxu0 0.0
      %321 = vmatpush1.msra.mxu0 0.0
      %322 = vmatprep.subr.mxu0 0.0
      %323 = vmatpush1.msra.mxu0 0.0
      %324 = vmatprep.subr.mxu0 0.0
      %325 = vmatpush1.msra.mxu0 0.0
      %326 = vmatprep.subr.mxu0 0.0
      %327 = vmatpush1.msra.mxu0 0.0
      %328 = vmatprep.subr.mxu0 0.0
      %329 = vmatpush1.msra.mxu0 0.0
      %330 = vmatprep.subr.mxu0 0.0
      %331 = vmatpush1.msra.mxu0 0.0
      %332 = vmatprep.subr.mxu0 0.0
      %333 = vmatpush1.msra.mxu0 0.0
      %334 = vmatprep.subr.mxu0 0.0
      %335 = vmatpush1.msra.mxu0 0.0
      %336 = vmatprep.subr.mxu0 0.0
      %337 = vmatpush1.msra.mxu0 0.0
      %338 = vmatprep.subr.mxu0 0.0
      %339 = vmatpush1.msra.mxu0 0.0
      %340 = vmatprep.subr.mxu0 0.0
      %341 = vmatpush1.msra.mxu0 0.0
      %342 = vmatprep.subr.mxu0 0.0
      %343 = vmatpush1.msra.mxu0 0.0
      %344 = vmatprep.subr.mxu0 0.0
      %345 = vmatpush1.msra.mxu0 0.0
      %346 = vmatprep.subr.mxu0 0.0
      %347 = vmatpush1.msra.mxu0 0.0
      %348 = vmatprep.subr.mxu0 0.0
      %349 = vmatpush1.msra.mxu0 0.0
      %350 = vmatprep.subr.mxu0 0.0
      %351 = vmatpush1.msra.mxu0 0.0
      %352 = vmatprep.subr.mxu0 0.0
      %353 = vmatpush1.msra.mxu0 0.0
      %354 = vmatprep.subr.mxu0 0.0
      %355 = vmatpush1.msra.mxu0 0.0
      %356 = vmatprep.subr.mxu0 0.0
      %357 = vmatpush1.msra.mxu0 0.0
      %358 = vmatprep.mubr.f32.mxu0 0.0
      %359 = vmatmul.mubr.f32.gmra.mrb[0].mxu0 %v271
      %v360 = vpop.f32.mrb[0].mxu0
      %v361 = vadd.f32 %v232, %v360
      %v362 = vpop.f32.mrb[0].mxu0
      %363 = vmatprep.mubr.f32.mxu0 0.0
      %364 = vmatmul.mubr.f32.gmra.mrb[0].mxu0 %v274
      %v365 = vpop.f32.mrb[0].mxu0
      %v366 = vadd.f32 %v237, %v365
      %v367 = vpop.f32.mrb[0].mxu0
      %368 = vmatprep.mubr.f32.mxu0 0.0
      %369 = vmatmul.mubr.f32.gmra.mrb[0].mxu0 %v277
      %v370 = vpop.f32.mrb[0].mxu0
      %v371 = vadd.f32 %v242, %v370
      %v372 = vpop.f32.mrb[0].mxu0
      %373 = vmatprep.mubr.f32.mxu0 0.0
      %374 = vmatmul.mubr.f32.gmra.mrb[0].mxu0 %v280
      %v375 = vpop.f32.mrb[0].mxu0
      %v376 = vadd.f32 %v247, %v375
      %v377 = vpop.f32.mrb[0].mxu0
      %378 = vmatprep.mubr.f32.mxu0 0.0
      %379 = vmatmul.mubr.f32.gmra.mrb[0].mxu0 %v283
      %v380 = vpop.f32.mrb[0].mxu0
      %v381 = vadd.f32 %v252, %v380
      %v382 = vpop.f32.mrb[0].mxu0
      %383 = vmatprep.mubr.f32.mxu0 0.0
      %384 = vmatmul.mubr.f32.gmra.mrb[0].mxu0 %v286
      %v385 = vpop.f32.mrb[0].mxu0
      %v386 = vadd.f32 %v257, %v385
      %v387 = vpop.f32.mrb[0].mxu0
      %388 = vmatprep.mubr.f32.mxu0 0.0
      %389 = vmatmul.mubr.f32.gmra.mrb[0].mxu0 %v289
      %v390 = vpop.f32.mrb[0].mxu0
      %v391 = vadd.f32 %v262, %v390
      %v392 = vpop.f32.mrb[0].mxu0
      %393 = vmatprep.mubr.f32.mxu0 0.0
      %394 = vmatmul.mubr.f32.gmra.mrb[0].mxu0 %v292
      %v395 = vpop.f32.mrb[0].mxu0
      %v396 = vadd.f32 %v267, %v395
      %v397 = vpop.f32.mrb[0].mxu0
      %398 = vdwg.mxu0
      %vm399 = vcmp.ge.f32.partialorder %v361, 0.0
      %vm400 = vcmp.ge.f32.partialorder %v366, 0.0
      %vm401 = vcmp.ge.f32.partialorder %v371, 0.0
      %vm402 = vcmp.ge.f32.partialorder %v376, 0.0
      %vm403 = vcmp.ge.f32.partialorder %v381, 0.0
      %vm404 = vcmp.ge.f32.partialorder %v386, 0.0
      %vm405 = vcmp.ge.f32.partialorder %v391, 0.0
      %vm406 = vcmp.ge.f32.partialorder %v396, 0.0
      %v407 = vmul.f32 %v361, 0.01
      %v408 = vmul.f32 %v366, 0.01
      %v409 = vmul.f32 %v371, 0.01
      %v410 = vmul.f32 %v376, 0.01
      %v411 = vmul.f32 %v381, 0.01
      %v412 = vmul.f32 %v386, 0.01
      %v413 = vmul.f32 %v391, 0.01
      %v414 = vmul.f32 %v396, 0.01
      %v415 = vsel %vm399, %v361, %v407
      %v416 = vsel %vm400, %v366, %v408
      %v417 = vsel %vm401, %v371, %v409
      %v418 = vsel %vm402, %v376, %v410
      %v419 = vsel %vm403, %v381, %v411
      %v420 = vsel %vm404, %v386, %v412
      %v421 = vsel %vm405, %v391, %v413
      %v422 = vsel %vm406, %v396, %v414
      %vm423 = vcmask 293888
      %424 = vst.msk [vmem:[%s210] sm:$0xff] %vm423, %v415
      %425 = vst.msk [vmem:[%s210 + $0x8] sm:$0xff] %vm423, %v416
      %426 = vst.msk [vmem:[%s210 + $0x10] sm:$0xff] %vm423, %v417
      %427 = vst.msk [vmem:[%s210 + $0x18] sm:$0xff] %vm423, %v418
      %428 = vst.msk [vmem:[%s210 + $0x20] sm:$0xff] %vm423, %v419
      %429 = vst.msk [vmem:[%s210 + $0x28] sm:$0xff] %vm423, %v420
      %430 = vst.msk [vmem:[%s210 + $0x30] sm:$0xff] %vm423, %v421
      %431 = vst.msk [vmem:[%s210 + $0x38] sm:$0xff] %vm423, %v422
      %s432 = scalar_lea.vmem %s199, 8
      %v433 = vld [vmem:[%s432] sm:$0xff]
      %434 = vmatprep.subr.mxu0 0.0
      %435 = vmatpush1.msra.mxu0 %v433
      %436 = vmatprep.subr.mxu0 0.0
      %437 = vmatpush1.msra.mxu0 0.0
      %438 = vmatprep.subr.mxu0 0.0
      %439 = vmatpush1.msra.mxu0 0.0
      %440 = vmatprep.subr.mxu0 0.0
      %441 = vmatpush1.msra.mxu0 0.0
      %442 = vmatprep.subr.mxu0 0.0
      %443 = vmatpush1.msra.mxu0 0.0
      %444 = vmatprep.subr.mxu0 0.0
      %445 = vmatpush1.msra.mxu0 0.0
      %446 = vmatprep.subr.mxu0 0.0
      %447 = vmatpush1.msra.mxu0 0.0
      %448 = vmatprep.subr.mxu0 0.0
      %449 = vmatpush1.msra.mxu0 0.0
      %450 = vmatprep.subr.mxu0 0.0
      %451 = vmatpush1.msra.mxu0 0.0
      %452 = vmatprep.subr.mxu0 0.0
      %453 = vmatpush1.msra.mxu0 0.0
      %454 = vmatprep.subr.mxu0 0.0
      %455 = vmatpush1.msra.mxu0 0.0
      %456 = vmatprep.subr.mxu0 0.0
      %457 = vmatpush1.msra.mxu0 0.0
      %458 = vmatprep.subr.mxu0 0.0
      %459 = vmatpush1.msra.mxu0 0.0
      %460 = vmatprep.subr.mxu0 0.0
      %461 = vmatpush1.msra.mxu0 0.0
      %462 = vmatprep.subr.mxu0 0.0
      %463 = vmatpush1.msra.mxu0 0.0
      %464 = vmatprep.subr.mxu0 0.0
      %465 = vmatpush1.msra.mxu0 0.0
      %466 = vmatprep.subr.mxu0 0.0
      %467 = vmatpush1.msra.mxu0 0.0
      %468 = vmatprep.subr.mxu0 0.0
      %469 = vmatpush1.msra.mxu0 0.0
      %470 = vmatprep.subr.mxu0 0.0
      %471 = vmatpush1.msra.mxu0 0.0
      %472 = vmatprep.subr.mxu0 0.0
      %473 = vmatpush1.msra.mxu0 0.0
      %474 = vmatprep.subr.mxu0 0.0
      %475 = vmatpush1.msra.mxu0 0.0
      %476 = vmatprep.subr.mxu0 0.0
      %477 = vmatpush1.msra.mxu0 0.0
      %478 = vmatprep.subr.mxu0 0.0
      %479 = vmatpush1.msra.mxu0 0.0
      %480 = vmatprep.subr.mxu0 0.0
      %481 = vmatpush1.msra.mxu0 0.0
      %482 = vmatprep.subr.mxu0 0.0
      %483 = vmatpush1.msra.mxu0 0.0
      %484 = vmatprep.subr.mxu0 0.0
      %485 = vmatpush1.msra.mxu0 0.0
      %486 = vmatprep.subr.mxu0 0.0
      %487 = vmatpush1.msra.mxu0 0.0
      %488 = vmatprep.subr.mxu0 0.0
      %489 = vmatpush1.msra.mxu0 0.0
      %490 = vmatprep.subr.mxu0 0.0
      %491 = vmatpush1.msra.mxu0 0.0
      %492 = vmatprep.subr.mxu0 0.0
      %493 = vmatpush1.msra.mxu0 0.0
      %494 = vmatprep.subr.mxu0 0.0
      %495 = vmatpush1.msra.mxu0 0.0
      %496 = vmatprep.subr.mxu0 0.0
      %497 = vmatpush1.msra.mxu0 0.0
      %498 = vmatprep.mubr.f32.mxu0 0.0
      %499 = vmatmul.mubr.f32.gmra.mrb[0].mxu0 %v271
      %v500 = vpop.f32.mrb[0].mxu0
      %v501 = vadd.f32 %v232, %v500
      %v502 = vpop.f32.mrb[0].mxu0
      %503 = vmatprep.mubr.f32.mxu0 0.0
      %504 = vmatmul.mubr.f32.gmra.mrb[0].mxu0 %v274
      %v505 = vpop.f32.mrb[0].mxu0
      %v506 = vadd.f32 %v237, %v505
      %v507 = vpop.f32.mrb[0].mxu0
      %508 = vmatprep.mubr.f32.mxu0 0.0
      %509 = vmatmul.mubr.f32.gmra.mrb[0].mxu0 %v277
      %v510 = vpop.f32.mrb[0].mxu0
      %v511 = vadd.f32 %v242, %v510
      %v512 = vpop.f32.mrb[0].mxu0
      %513 = vmatprep.mubr.f32.mxu0 0.0
      %514 = vmatmul.mubr.f32.gmra.mrb[0].mxu0 %v280
      %v515 = vpop.f32.mrb[0].mxu0
      %v516 = vadd.f32 %v247, %v515
      %v517 = vpop.f32.mrb[0].mxu0
      %518 = vmatprep.mubr.f32.mxu0 0.0
      %519 = vmatmul.mubr.f32.gmra.mrb[0].mxu0 %v283
      %v520 = vpop.f32.mrb[0].mxu0
      %v521 = vadd.f32 %v252, %v520
      %v522 = vpop.f32.mrb[0].mxu0
      %523 = vmatprep.mubr.f32.mxu0 0.0
      %524 = vmatmul.mubr.f32.gmra.mrb[0].mxu0 %v286
      %v525 = vpop.f32.mrb[0].mxu0
      %v526 = vadd.f32 %v257, %v525
      %v527 = vpop.f32.mrb[0].mxu0
      %528 = vmatprep.mubr.f32.mxu0 0.0
      %529 = vmatmul.mubr.f32.gmra.mrb[0].mxu0 %v289
      %v530 = vpop.f32.mrb[0].mxu0
      %v531 = vadd.f32 %v262, %v530
      %v532 = vpop.f32.mrb[0].mxu0
      %533 = vmatprep.mubr.f32.mxu0 0.0
      %534 = vmatmul.mubr.f32.gmra.mrb[0].mxu0 %v292
      %v535 = vpop.f32.mrb[0].mxu0
      %v536 = vadd.f32 %v267, %v535
      %v537 = vpop.f32.mrb[0].mxu0
      %538 = vdwg.mxu0
      %vm539 = vcmp.ge.f32.partialorder %v501, 0.0
      %vm540 = vcmp.ge.f32.partialorder %v506, 0.0
      %vm541 = vcmp.ge.f32.partialorder %v511, 0.0
      %vm542 = vcmp.ge.f32.partialorder %v516, 0.0
      %vm543 = vcmp.ge.f32.partialorder %v521, 0.0
      %vm544 = vcmp.ge.f32.partialorder %v526, 0.0
      %vm545 = vcmp.ge.f32.partialorder %v531, 0.0
      %vm546 = vcmp.ge.f32.partialorder %v536, 0.0
      %v547 = vmul.f32 %v501, 0.01
      %v548 = vmul.f32 %v506, 0.01
      %v549 = vmul.f32 %v511, 0.01
      %v550 = vmul.f32 %v516, 0.01
      %v551 = vmul.f32 %v521, 0.01
      %v552 = vmul.f32 %v526, 0.01
      %v553 = vmul.f32 %v531, 0.01
      %v554 = vmul.f32 %v536, 0.01
      %v555 = vsel %vm539, %v501, %v547
      %v556 = vsel %vm540, %v506, %v548
      %v557 = vsel %vm541, %v511, %v549
      %v558 = vsel %vm542, %v516, %v550
      %v559 = vsel %vm543, %v521, %v551
      %v560 = vsel %vm544, %v526, %v552
      %v561 = vsel %vm545, %v531, %v553
      %v562 = vsel %vm546, %v536, %v554
      %s563 = scalar_lea.vmem %s210, 64
      %564 = vst.msk [vmem:[%s563] sm:$0xff] %vm423, %v555
      %565 = vst.msk [vmem:[%s563 + $0x8] sm:$0xff] %vm423, %v556
      %566 = vst.msk [vmem:[%s563 + $0x10] sm:$0xff] %vm423, %v557
      %567 = vst.msk [vmem:[%s563 + $0x18] sm:$0xff] %vm423, %v558
      %568 = vst.msk [vmem:[%s563 + $0x20] sm:$0xff] %vm423, %v559
      %569 = vst.msk [vmem:[%s563 + $0x28] sm:$0xff] %vm423, %v560
      %570 = vst.msk [vmem:[%s563 + $0x30] sm:$0xff] %vm423, %v561
      %571 = vst.msk [vmem:[%s563 + $0x38] sm:$0xff] %vm423, %v562
      %s572 = scalar_lea.vmem %s199, 16
      %v573 = vld [vmem:[%s572] sm:$0xff]
      %574 = vmatprep.subr.mxu0 0.0
      %575 = vmatpush1.msra.mxu0 %v573
      %576 = vmatprep.subr.mxu0 0.0
      %577 = vmatpush1.msra.mxu0 0.0
      %578 = vmatprep.subr.mxu0 0.0
      %579 = vmatpush1.msra.mxu0 0.0
      %580 = vmatprep.subr.mxu0 0.0
      %581 = vmatpush1.msra.mxu0 0.0
      %582 = vmatprep.subr.mxu0 0.0
      %583 = vmatpush1.msra.mxu0 0.0
      %584 = vmatprep.subr.mxu0 0.0
      %585 = vmatpush1.msra.mxu0 0.0
      %586 = vmatprep.subr.mxu0 0.0
      %587 = vmatpush1.msra.mxu0 0.0
      %588 = vmatprep.subr.mxu0 0.0
      %589 = vmatpush1.msra.mxu0 0.0
      %590 = vmatprep.subr.mxu0 0.0
      %591 = vmatpush1.msra.mxu0 0.0
      %592 = vmatprep.subr.mxu0 0.0
      %593 = vmatpush1.msra.mxu0 0.0
      %594 = vmatprep.subr.mxu0 0.0
      %595 = vmatpush1.msra.mxu0 0.0
      %596 = vmatprep.subr.mxu0 0.0
      %597 = vmatpush1.msra.mxu0 0.0
      %598 = vmatprep.subr.mxu0 0.0
      %599 = vmatpush1.msra.mxu0 0.0
      %600 = vmatprep.subr.mxu0 0.0
      %601 = vmatpush1.msra.mxu0 0.0
      %602 = vmatprep.subr.mxu0 0.0
      %603 = vmatpush1.msra.mxu0 0.0
      %604 = vmatprep.subr.mxu0 0.0
      %605 = vmatpush1.msra.mxu0 0.0
      %606 = vmatprep.subr.mxu0 0.0
      %607 = vmatpush1.msra.mxu0 0.0
      %608 = vmatprep.subr.mxu0 0.0
      %609 = vmatpush1.msra.mxu0 0.0
      %610 = vmatprep.subr.mxu0 0.0
      %611 = vmatpush1.msra.mxu0 0.0
      %612 = vmatprep.subr.mxu0 0.0
      %613 = vmatpush1.msra.mxu0 0.0
      %614 = vmatprep.subr.mxu0 0.0
      %615 = vmatpush1.msra.mxu0 0.0
      %616 = vmatprep.subr.mxu0 0.0
      %617 = vmatpush1.msra.mxu0 0.0
      %618 = vmatprep.subr.mxu0 0.0
      %619 = vmatpush1.msra.mxu0 0.0
      %620 = vmatprep.subr.mxu0 0.0
      %621 = vmatpush1.msra.mxu0 0.0
      %622 = vmatprep.subr.mxu0 0.0
      %623 = vmatpush1.msra.mxu0 0.0
      %624 = vmatprep.subr.mxu0 0.0
      %625 = vmatpush1.msra.mxu0 0.0
      %626 = vmatprep.subr.mxu0 0.0
      %627 = vmatpush1.msra.mxu0 0.0
      %628 = vmatprep.subr.mxu0 0.0
      %629 = vmatpush1.msra.mxu0 0.0
      %630 = vmatprep.subr.mxu0 0.0
      %631 = vmatpush1.msra.mxu0 0.0
      %632 = vmatprep.subr.mxu0 0.0
      %633 = vmatpush1.msra.mxu0 0.0
      %634 = vmatprep.subr.mxu0 0.0
      %635 = vmatpush1.msra.mxu0 0.0
      %636 = vmatprep.subr.mxu0 0.0
      %637 = vmatpush1.msra.mxu0 0.0
      %638 = vmatprep.mubr.f32.mxu0 0.0
      %639 = vmatmul.mubr.f32.gmra.mrb[0].mxu0 %v271
      %v640 = vpop.f32.mrb[0].mxu0
      %v641 = vadd.f32 %v232, %v640
      %v642 = vpop.f32.mrb[0].mxu0
      %643 = vmatprep.mubr.f32.mxu0 0.0
      %644 = vmatmul.mubr.f32.gmra.mrb[0].mxu0 %v274
      %v645 = vpop.f32.mrb[0].mxu0
      %v646 = vadd.f32 %v237, %v645
      %v647 = vpop.f32.mrb[0].mxu0
      %648 = vmatprep.mubr.f32.mxu0 0.0
      %649 = vmatmul.mubr.f32.gmra.mrb[0].mxu0 %v277
      %v650 = vpop.f32.mrb[0].mxu0
      %v651 = vadd.f32 %v242, %v650
      %v652 = vpop.f32.mrb[0].mxu0
      %653 = vmatprep.mubr.f32.mxu0 0.0
      %654 = vmatmul.mubr.f32.gmra.mrb[0].mxu0 %v280
      %v655 = vpop.f32.mrb[0].mxu0
      %v656 = vadd.f32 %v247, %v655
      %v657 = vpop.f32.mrb[0].mxu0
      %658 = vmatprep.mubr.f32.mxu0 0.0
      %659 = vmatmul.mubr.f32.gmra.mrb[0].mxu0 %v283
      %v660 = vpop.f32.mrb[0].mxu0
      %v661 = vadd.f32 %v252, %v660
      %v662 = vpop.f32.mrb[0].mxu0
      %663 = vmatprep.mubr.f32.mxu0 0.0
      %664 = vmatmul.mubr.f32.gmra.mrb[0].mxu0 %v286
      %v665 = vpop.f32.mrb[0].mxu0
      %v666 = vadd.f32 %v257, %v665
      %v667 = vpop.f32.mrb[0].mxu0
      %668 = vmatprep.mubr.f32.mxu0 0.0
      %669 = vmatmul.mubr.f32.gmra.mrb[0].mxu0 %v289
      %v670 = vpop.f32.mrb[0].mxu0
      %v671 = vadd.f32 %v262, %v670
      %v672 = vpop.f32.mrb[0].mxu0
      %673 = vmatprep.mubr.f32.mxu0 0.0
      %674 = vmatmul.mubr.f32.gmra.mrb[0].mxu0 %v292
      %v675 = vpop.f32.mrb[0].mxu0
      %v676 = vadd.f32 %v267, %v675
      %v677 = vpop.f32.mrb[0].mxu0
      %678 = vdwg.mxu0
      %vm679 = vcmp.ge.f32.partialorder %v641, 0.0
      %vm680 = vcmp.ge.f32.partialorder %v646, 0.0
      %vm681 = vcmp.ge.f32.partialorder %v651, 0.0
      %vm682 = vcmp.ge.f32.partialorder %v656, 0.0
      %vm683 = vcmp.ge.f32.partialorder %v661, 0.0
      %vm684 = vcmp.ge.f32.partialorder %v666, 0.0
      %vm685 = vcmp.ge.f32.partialorder %v671, 0.0
      %vm686 = vcmp.ge.f32.partialorder %v676, 0.0
      %v687 = vmul.f32 %v641, 0.01
      %v688 = vmul.f32 %v646, 0.01
      %v689 = vmul.f32 %v651, 0.01
      %v690 = vmul.f32 %v656, 0.01
      %v691 = vmul.f32 %v661, 0.01
      %v692 = vmul.f32 %v666, 0.01
      %v693 = vmul.f32 %v671, 0.01
      %v694 = vmul.f32 %v676, 0.01
      %v695 = vsel %vm679, %v641, %v687
      %v696 = vsel %vm680, %v646, %v688
      %v697 = vsel %vm681, %v651, %v689
      %v698 = vsel %vm682, %v656, %v690
      %v699 = vsel %vm683, %v661, %v691
      %v700 = vsel %vm684, %v666, %v692
      %v701 = vsel %vm685, %v671, %v693
      %v702 = vsel %vm686, %v676, %v694
      %s703 = scalar_lea.vmem %s210, 128
      %704 = vst.msk [vmem:[%s703] sm:$0xff] %vm423, %v695
      %705 = vst.msk [vmem:[%s703 + $0x8] sm:$0xff] %vm423, %v696
      %706 = vst.msk [vmem:[%s703 + $0x10] sm:$0xff] %vm423, %v697
      %707 = vst.msk [vmem:[%s703 + $0x18] sm:$0xff] %vm423, %v698
      %708 = vst.msk [vmem:[%s703 + $0x20] sm:$0xff] %vm423, %v699
      %709 = vst.msk [vmem:[%s703 + $0x28] sm:$0xff] %vm423, %v700
      %710 = vst.msk [vmem:[%s703 + $0x30] sm:$0xff] %vm423, %v701
      %711 = vst.msk [vmem:[%s703 + $0x38] sm:$0xff] %vm423, %v702
      %s712 = smul.u32 3, %s19
      %p713 = scmp.lt.s32.totalorder %s18, 1
      %s714 = scalar_select %p713, %s18, 1
      %p715 = scmp.lt.s32.totalorder %s712, 5
      %s716 = scalar_select %p715, %s712, 5
      %s717 = smul.addr %s716, 8
      %s718 = smul.addr %s714, 48
      %s719 = sadd.s32 %s717, %s718
      %s720 = smul.addr %s719, 8
      %s721 = scalar_lea.vmem %s3, %s720
      // Predicated region
      $region33: #{run.7} parent=31 // pred_check
        %p722 = pneg %p116
      $region34: #{run.7} parent=31 // pred_check_branch
        %724 = sbr.rel (%p722) target = $region36
      $region35: #{run.7} parent=31 // pred_region
        %s725 = smul.u32 3, %s19
      $region36: #{run.7} parent=31 // pred_fallthru
        _
    $region32: #{run.7} parent=5 // pred_fallthru
      _
    %p726 = scmp.le.s32.totalorder 2, %s9
    // Predicated region
    $region37: #{run.7} parent=5 // pred_check
      %p727 = pneg %p726
    $region38: #{run.7} parent=5 // pred_check_branch
      %729 = sbr.rel (%p727) target = $region40
    $region39: #{run.7} parent=5 // pred_region
      %s730 = ssub.s32 %s9, 2
      // Predicated region
      $region41: #{run.7} parent=39 // pred_check
        %p731 = pneg %p122
      $region42: #{run.7} parent=39 // pred_check_branch
        %733 = sbr.rel (%p731) target = $region44
      $region43: #{run.7} parent=39 // pred_region
        %s734 = smul.u32 3, %s21
        %p735 = scmp.lt.s32.totalorder %s20, 1
        %s736 = scalar_select %p735, %s20, 1
        %p737 = scmp.lt.s32.totalorder %s734, 5
        %s738 = scalar_select %p737, %s734, 5
        %s739 = smul.addr %s738, 8
        %s740 = smul.addr %s736, 48
        %s741 = sadd.s32 %s739, %s740
        %s742 = smul.addr %s741, 8
        %s743 = scalar_lea.vmem %s3, %s742
      $region44: #{run.7} parent=39 // pred_fallthru
        _
    $region40: #{run.7} parent=5 // pred_fallthru
      _
  $region6: #{run.7} parent=0 // loop_footer
    %s13 = sadd.s32 1, %s9
  $region7: #{run.7} parent=0 // loop_footer_branch
    %8 = sbr.rel target = $region3
  $region8: #{run.7} parent=0 // loop_exit
    _

// kernel: run.5
$region0: #{run.5}
  #allocation0 [shape = 'u32[]', space=smem, size = 0x4, offset = 0x4, fixed_abs, tag = 'smem constant byte address 0x4 - core index']
  #allocation1 [shape = 'u32[144,128]{1,0:T(1,128)}', space=vmem, size = 0x12000, scoped, tag = 'internal scratch']
  %s0 = inlined_call_operand.vmem [shape: f32[2,6,8,36], index: 0, kind: input, shape index: {}, may-alias: {0,1,2}]
  %s1 = inlined_call_operand.vmem [shape: f32[2,6,8,36], index: 1, kind: input, shape index: {}, may-alias: {0,1,2}]
  %s2 = inlined_call_operand.vmem [shape: f32[2,6,8,36], index: 2, kind: input, shape index: {}, may-alias: {0,1,2}]
  %s3 = inlined_call_operand.vmem [shape: f32[1,22], index: 3, kind: input, shape index: {}]
  %s4 = inlined_call_operand.hbm [shape: f32[3,8,72], index: 4, kind: input, shape index: {}]
  %s5 = inlined_call_operand.hbm [shape: f32[8,1], index: 5, kind: input, shape index: {}]
  %s6 = inlined_call_operand.vmem [shape: f32[2,6,8,36], index: 6, kind: output, shape index: {}]
  %s7 = sld [smem:[#allocation0]]
  $region89: #{run.5} parent=0
    _
  %s9 = ssub.s32 1, %s7
  %s10 = scalar_select 0, %s9, %s7
  $region1: #{run.5} parent=0
    #allocation2 [shape = 'u8[12288]{0}', space=vmem, size = 0x3000, scoped, tag = 'input window, operand 4, single buffered']
    #allocation3 [shape = 's32[2]{0}', space=sflag, size = 0x8, scoped, tag = 'scoped memory for run.5']
    #allocation4 [shape = 'u8[4096]{0}', space=vmem, size = 0x1000, scoped, tag = 'input window, operand 5, single buffered']
    #allocation5 [shape = 's32[1]{0}', space=sflag, size = 0x4, scoped, tag = 'scoped memory for run.5']
    %11 = vsyncpa [#allocation3], 0
    %12 = vsyncpa [#allocation5], 0
    loop: start=0, step=1, limit=6
    $region2: #{run.5} parent=1 // loop_pre_header
      _
    $region3: #{run.5} parent=1 // loop_header
      %s14 = sphi 0, %s18
      %p15 = scmp.ge.s32.totalorder %s14, 6
      %s21 = sphi 0, %s33
      %s22 = sphi 0, %s29
      %s23 = sphi 0, %s21
      %s24 = sphi 0, %s22
      %s25 = sphi 0, %s23
      %s26 = sphi 0, %s24
      %s38 = sphi 0, %s40
      %s41 = sphi 0, %s38
      %s42 = sphi 0, %s41
      %s58 = sphi 0, %s42
      %s74 = sphi 0, %s76
      %s77 = sphi 0, %s74
      %s78 = sphi 0, %s77
      %s94 = sphi 0, %s78
      %s110 = sphi 0, %s112
      %s113 = sphi 0, %s110
      %s114 = sphi 0, %s113
      %s130 = sphi 0, %s114
      %s134 = sphi 0, %s134
      %s136 = sphi 0, %s134
      %s137 = sphi 0, %s136
      %s151 = sphi 0, %s137
      %s155 = sphi 0, %s155
      %s157 = sphi 0, %s155
      %s158 = sphi 0, %s157
      %s172 = sphi 0, %s158
      %s176 = sphi 0, %s176
      %s178 = sphi 0, %s176
      %s179 = sphi 0, %s178
      %s193 = sphi 0, %s179
      %s201 = sphi 0, %s203
      %s204 = sphi 0, %s201
      %s205 = sphi 0, %s204
      %s221 = sphi 0, %s205
    $region4: #{run.5} parent=1 // loop_header_branch
      %17 = sbr.rel (%p15) target = $region8
    $region5: #{run.5} parent=1 // loop_body
      %s19 = ssub.s32 %s14, 1
      %s20 = ssub.s32 %s14, 2
      %s27 = sadd.s32 1, %s22
      %p28 = scmp.ge.s32.totalorder %s27, 2
      %s29 = scalar_select %p28, 0, %s27
      %s30 = sadd.s32 1, %s21
      %s31 = scalar_select %p28, %s30, %s21
      %p32 = scmp.ge.s32.totalorder %s31, 2
      %s33 = scalar_select %p32, 0, %s31
      %s34 = ssub.s32 %s21, %s33
      %s35 = ssub.s32 %s22, %s29
      %s36 = sor.u32 %s34, %s35
      %p37 = scmp.eq.s32.totalorder %s36, 0
      %s39 = sadd.s32 %s38, 1
      %s40 = scalar_select %p37, %s38, %s39
      %p43 = pneg %p37
      %p44 = scmp.eq.s32.totalorder %s14, 3
      %p45 = por %p43, %p44
      %p46 = scmp.ne.s32.totalorder %s38, %s41
      %p47 = scmp.eq.s32.totalorder %s14, 0
      %p48 = por %p46, %p47
      %p49 = scmp.ne.s32.totalorder %s38, %s41
      %p50 = scmp.eq.s32.totalorder %s19, 3
      %p51 = por %p49, %p50
      %p52 = scmp.ne.s32.totalorder %s41, %s42
      %p53 = scmp.eq.s32.totalorder %s19, 0
      %p54 = por %p52, %p53
      %p55 = scmp.ne.s32.totalorder %s41, %s42
      %p56 = scmp.eq.s32.totalorder %s20, 3
      %p57 = por %p55, %p56
      %p59 = scmp.ne.s32.totalorder %s42, %s58
      %p60 = scmp.eq.s32.totalorder %s20, 0
      %p61 = por %p59, %p60
      %s62 = smul.u32 %s22, 3
      %s63 = ssub.s32 %s62, 1
      %p64 = scmp.gt.s32.totalorder %s63, 0
      %s65 = scalar_select %p64, %s63, 0
      %s66 = smul.u32 %s29, 3
      %s67 = ssub.s32 %s66, 1
      %p68 = scmp.gt.s32.totalorder %s67, 0
      %s69 = scalar_select %p68, %s67, 0
      %s70 = ssub.s32 %s21, %s33
      %s71 = ssub.s32 %s65, %s69
      %s72 = sor.u32 %s70, %s71
      %p73 = scmp.eq.s32.totalorder %s72, 0
      %s75 = sadd.s32 %s74, 1
      %s76 = scalar_select %p73, %s74, %s75
      %p79 = pneg %p73
      %p80 = scmp.eq.s32.totalorder %s14, 3
      %p81 = por %p79, %p80
      %p82 = scmp.ne.s32.totalorder %s74, %s77
      %p83 = scmp.eq.s32.totalorder %s14, 0
      %p84 = por %p82, %p83
      %p85 = scmp.ne.s32.totalorder %s74, %s77
      %p86 = scmp.eq.s32.totalorder %s19, 3
      %p87 = por %p85, %p86
      %p88 = scmp.ne.s32.totalorder %s77, %s78
      %p89 = scmp.eq.s32.totalorder %s19, 0
      %p90 = por %p88, %p89
      %p91 = scmp.ne.s32.totalorder %s77, %s78
      %p92 = scmp.eq.s32.totalorder %s20, 3
      %p93 = por %p91, %p92
      %p95 = scmp.ne.s32.totalorder %s78, %s94
      %p96 = scmp.eq.s32.totalorder %s20, 0
      %p97 = por %p95, %p96
      %s98 = smul.u32 %s22, 3
      %s99 = sadd.s32 %s98, 3
      %p100 = scmp.lt.s32.totalorder %s99, 5
      %s101 = scalar_select %p100, %s99, 5
      %s102 = smul.u32 %s29, 3
      %s103 = sadd.s32 %s102, 3
      %p104 = scmp.lt.s32.totalorder %s103, 5
      %s105 = scalar_select %p104, %s103, 5
      %s106 = ssub.s32 %s21, %s33
      %s107 = ssub.s32 %s101, %s105
      %s108 = sor.u32 %s106, %s107
      %p109 = scmp.eq.s32.totalorder %s108, 0
      %s111 = sadd.s32 %s110, 1
      %s112 = scalar_select %p109, %s110, %s111
      %p115 = pneg %p109
      %p116 = scmp.eq.s32.totalorder %s14, 3
      %p117 = por %p115, %p116
      %p118 = scmp.ne.s32.totalorder %s110, %s113
      %p119 = scmp.eq.s32.totalorder %s14, 0
      %p120 = por %p118, %p119
      %p121 = scmp.ne.s32.totalorder %s110, %s113
      %p122 = scmp.eq.s32.totalorder %s19, 3
      %p123 = por %p121, %p122
      %p124 = scmp.ne.s32.totalorder %s113, %s114
      %p125 = scmp.eq.s32.totalorder %s19, 0
      %p126 = por %p124, %p125
      %p127 = scmp.ne.s32.totalorder %s113, %s114
      %p128 = scmp.eq.s32.totalorder %s20, 3
      %p129 = por %p127, %p128
      %p131 = scmp.ne.s32.totalorder %s114, %s130
      %p132 = scmp.eq.s32.totalorder %s20, 0
      %p133 = por %p131, %p132
      %s135 = sadd.s32 %s134, 1
      %p138 = scmp.eq.s32.totalorder %s14, 3
      %p139 = scmp.ne.s32.totalorder %s134, %s136
      %p140 = scmp.eq.s32.totalorder %s14, 0
      %p141 = por %p139, %p140
      %p142 = scmp.ne.s32.totalorder %s134, %s136
      %p143 = scmp.eq.s32.totalorder %s19, 3
      %p144 = por %p142, %p143
      %p145 = scmp.ne.s32.totalorder %s136, %s137
      %p146 = scmp.eq.s32.totalorder %s19, 0
      %p147 = por %p145, %p146
      %p148 = scmp.ne.s32.totalorder %s136, %s137
      %p149 = scmp.eq.s32.totalorder %s20, 3
      %p150 = por %p148, %p149
      %p152 = scmp.ne.s32.totalorder %s137, %s151
      %p153 = scmp.eq.s32.totalorder %s20, 0
      %p154 = por %p152, %p153
      %s156 = sadd.s32 %s155, 1
      %p159 = scmp.eq.s32.totalorder %s14, 3
      %p160 = scmp.ne.s32.totalorder %s155, %s157
      %p161 = scmp.eq.s32.totalorder %s14, 0
      %p162 = por %p160, %p161
      %p163 = scmp.ne.s32.totalorder %s155, %s157
      %p164 = scmp.eq.s32.totalorder %s19, 3
      %p165 = por %p163, %p164
      %p166 = scmp.ne.s32.totalorder %s157, %s158
      %p167 = scmp.eq.s32.totalorder %s19, 0
      %p168 = por %p166, %p167
      %p169 = scmp.ne.s32.totalorder %s157, %s158
      %p170 = scmp.eq.s32.totalorder %s20, 3
      %p171 = por %p169, %p170
      %p173 = scmp.ne.s32.totalorder %s158, %s172
      %p174 = scmp.eq.s32.totalorder %s20, 0
      %p175 = por %p173, %p174
      %s177 = sadd.s32 %s176, 1
      %p180 = scmp.eq.s32.totalorder %s14, 3
      %p181 = scmp.ne.s32.totalorder %s176, %s178
      %p182 = scmp.eq.s32.totalorder %s14, 0
      %p183 = por %p181, %p182
      %p184 = scmp.ne.s32.totalorder %s176, %s178
      %p185 = scmp.eq.s32.totalorder %s19, 3
      %p186 = por %p184, %p185
      %p187 = scmp.ne.s32.totalorder %s178, %s179
      %p188 = scmp.eq.s32.totalorder %s19, 0
      %p189 = por %p187, %p188
      %p190 = scmp.ne.s32.totalorder %s178, %s179
      %p191 = scmp.eq.s32.totalorder %s20, 3
      %p192 = por %p190, %p191
      %p194 = scmp.ne.s32.totalorder %s179, %s193
      %p195 = scmp.eq.s32.totalorder %s20, 0
      %p196 = por %p194, %p195
      %s197 = ssub.s32 %s21, %s33
      %s198 = ssub.s32 %s22, %s29
      %s199 = sor.u32 %s197, %s198
      %p200 = scmp.eq.s32.totalorder %s199, 0
      %s202 = sadd.s32 %s201, 1
      %s203 = scalar_select %p200, %s201, %s202
      %p206 = pneg %p200
      %p207 = scmp.eq.s32.totalorder %s14, 3
      %p208 = por %p206, %p207
      %p209 = scmp.ne.s32.totalorder %s201, %s204
      %p210 = scmp.eq.s32.totalorder %s14, 0
      %p211 = por %p209, %p210
      %p212 = scmp.ne.s32.totalorder %s201, %s204
      %p213 = scmp.eq.s32.totalorder %s19, 3
      %p214 = por %p212, %p213
      %p215 = scmp.ne.s32.totalorder %s204, %s205
      %p216 = scmp.eq.s32.totalorder %s19, 0
      %p217 = por %p215, %p216
      %p218 = scmp.ne.s32.totalorder %s204, %s205
      %p219 = scmp.eq.s32.totalorder %s20, 3
      %p220 = por %p218, %p219
      %p222 = scmp.ne.s32.totalorder %s205, %s221
      %p223 = scmp.eq.s32.totalorder %s20, 0
      %p224 = por %p222, %p223
      %p225 = scmp.le.s32.totalorder 1, %s14
      %p226 = scmp.lt.s32.totalorder %s14, 5
      %p227 = pnand %p225, %p226
      %p228 = pneg %p227
      // Predicated region
      $region9: #{run.5} parent=5 // pred_check
        _
      $region10: #{run.5} parent=5 // pred_check_branch
        %230 = sbr.rel (%p227) target = $region12
      $region11: #{run.5} parent=5 // pred_region
        %s231 = ssub.s32 %s14, 1
        // Predicated region
        $region13: #{run.5} parent=11 // pred_check
          %p232 = pneg %p147
        $region14: #{run.5} parent=11 // pred_check_branch
          %234 = sbr.rel (%p232) target = $region16
        $region15: #{run.5} parent=11 // pred_region
          _
        $region16: #{run.5} parent=11 // pred_fallthru
          _
        // Predicated region
        $region17: #{run.5} parent=11 // pred_check
          %p235 = pneg %p168
        $region18: #{run.5} parent=11 // pred_check_branch
          %237 = sbr.rel (%p235) target = $region20
        $region19: #{run.5} parent=11 // pred_region
          %s239 = ssub.s32 384, 384
          %240 = vsyncadd [#allocation3], %s239
          %s241 = sshll.u32 [#allocation2], 4
          %s242 = int_to_ptr.vmem [resolvable:$true] %s241
          %247 = dma.hbm_to_vmem [thread:$0]  %s4, 384, %s242, [#allocation3], 128, 128, 8
        $region20: #{run.5} parent=11 // pred_fallthru
          _
        // Predicated region
        $region21: #{run.5} parent=11 // pred_check
          %p248 = pneg %p189
        $region22: #{run.5} parent=11 // pred_check_branch
          %250 = sbr.rel (%p248) target = $region24
        $region23: #{run.5} parent=11 // pred_region
          %s252 = ssub.s32 128, 128
          %253 = vsyncadd [#allocation5], %s252
          %s255 = sshll.u32 [#allocation4], 4
          %s256 = int_to_ptr.vmem [resolvable:$true] %s255
          %258 = dma.hbm_to_vmem [thread:$0]  %s5, 128, %s256, [#allocation5]
        $region24: #{run.5} parent=11 // pred_fallthru
          _
      $region12: #{run.5} parent=5 // pred_fallthru
        _
      %p259 = scmp.lt.s32.totalorder %s14, 4
      // Predicated region
      $region25: #{run.5} parent=5 // pred_check
        %p260 = pneg %p259
      $region26: #{run.5} parent=5 // pred_check_branch
        %262 = sbr.rel (%p260) target = $region28
      $region27: #{run.5} parent=5 // pred_region
        // Predicated region
        $region29: #{run.5} parent=27 // pred_check
          %p263 = pneg %p48
        $region30: #{run.5} parent=27 // pred_check_branch
          %265 = sbr.rel (%p263) target = $region32
        $region31: #{run.5} parent=27 // pred_region
          %s266 = smul.u32 3, %s22
          %p267 = scmp.lt.s32.totalorder %s21, 1
          %s268 = scalar_select %p267, %s21, 1
          %p269 = scmp.lt.s32.totalorder %s266, 5
          %s270 = scalar_select %p269, %s266, 5
          %s271 = smul.addr %s268, 6
          %s272 = sadd.s32 %s270, %s271
          %s273 = smul.addr %s272, 8
          %s274 = scalar_lea.vmem %s0, %s273
          %s275 = smul.u32 3, %s22
        $region32: #{run.5} parent=27 // pred_fallthru
          _
        // Predicated region
        $region33: #{run.5} parent=27 // pred_check
          %p276 = pneg %p84
        $region34: #{run.5} parent=27 // pred_check_branch
          %278 = sbr.rel (%p276) target = $region36
        $region35: #{run.5} parent=27 // pred_region
          %s279 = smul.u32 %s22, 3
          %s280 = ssub.s32 %s279, 1
          %p281 = scmp.gt.s32.totalorder %s280, 0
          %s282 = scalar_select %p281, %s280, 0
          %p283 = scmp.lt.s32.totalorder %s21, 1
          %s284 = scalar_select %p283, %s21, 1
          %p285 = scmp.lt.s32.totalorder %s282, 5
          %s286 = scalar_select %p285, %s282, 5
          %s287 = smul.addr %s284, 6
          %s288 = sadd.s32 %s286, %s287
          %s289 = smul.addr %s288, 8
          %s290 = scalar_lea.vmem %s1, %s289
          %s291 = smul.u32 %s22, 3
          %s292 = ssub.s32 %s291, 1
          %p293 = scmp.gt.s32.totalorder %s292, 0
          %s294 = scalar_select %p293, %s292, 0
        $region36: #{run.5} parent=27 // pred_fallthru
          _
        // Predicated region
        $region37: #{run.5} parent=27 // pred_check
          %p295 = pneg %p120
        $region38: #{run.5} parent=27 // pred_check_branch
          %297 = sbr.rel (%p295) target = $region40
        $region39: #{run.5} parent=27 // pred_region
          %s298 = smul.u32 %s22, 3
          %s299 = sadd.s32 %s298, 3
          %p300 = scmp.lt.s32.totalorder %s299, 5
          %s301 = scalar_select %p300, %s299, 5
          %p302 = scmp.lt.s32.totalorder %s21, 1
          %s303 = scalar_select %p302, %s21, 1
          %p304 = scmp.lt.s32.totalorder %s301, 5
          %s305 = scalar_select %p304, %s301, 5
          %s306 = smul.addr %s303, 6
          %s307 = sadd.s32 %s305, %s306
          %s308 = smul.addr %s307, 8
          %s309 = scalar_lea.vmem %s2, %s308
          %s310 = smul.u32 %s22, 3
          %s311 = sadd.s32 %s310, 3
          %p312 = scmp.lt.s32.totalorder %s311, 5
          %s313 = scalar_select %p312, %s311, 5
        $region40: #{run.5} parent=27 // pred_fallthru
          _
      $region28: #{run.5} parent=5 // pred_fallthru
        _
      %p314 = scmp.le.s32.totalorder 1, %s14
      %p315 = scmp.lt.s32.totalorder %s14, 5
      %p316 = pnand %p314, %p315
      %p317 = pneg %p316
      // Predicated region
      $region41: #{run.5} parent=5 // pred_check
        _
      $region42: #{run.5} parent=5 // pred_check_branch
        %319 = sbr.rel (%p316) target = $region44
      $region43: #{run.5} parent=5 // pred_region
        %s320 = ssub.s32 %s14, 1
        // Predicated region
        $region45: #{run.5} parent=43 // pred_check
          %p321 = pneg %p168
        $region46: #{run.5} parent=43 // pred_check_branch
          %323 = sbr.rel (%p321) target = $region48
        $region47: #{run.5} parent=43 // pred_region
          %324 = dma.done [#allocation3], 384
        $region48: #{run.5} parent=43 // pred_fallthru
          _
        // Predicated region
        $region49: #{run.5} parent=43 // pred_check
          %p325 = pneg %p189
        $region50: #{run.5} parent=43 // pred_check_branch
          %327 = sbr.rel (%p325) target = $region52
        $region51: #{run.5} parent=43 // pred_region
          %328 = dma.done [#allocation5], 128
        $region52: #{run.5} parent=43 // pred_fallthru
          _
        %s329 = smul.u32 3, %s24
        %p330 = scmp.lt.s32.totalorder %s23, 1
        %s331 = scalar_select %p330, %s23, 1
        %p332 = scmp.lt.s32.totalorder %s329, 5
        %s333 = scalar_select %p332, %s329, 5
        %s334 = smul.addr %s331, 6
        %s335 = sadd.s32 %s333, %s334
        %s336 = smul.addr %s335, 8
        %s337 = scalar_lea.vmem %s0, %s336
        %p338 = pneg %p54
        %p339 = pneg %p51
        %s340 = smul.u32 %s24, 3
        %s341 = ssub.s32 %s340, 1
        %p342 = scmp.gt.s32.totalorder %s341, 0
        %s343 = scalar_select %p342, %s341, 0
        %p344 = scmp.lt.s32.totalorder %s23, 1
        %s345 = scalar_select %p344, %s23, 1
        %p346 = scmp.lt.s32.totalorder %s343, 5
        %s347 = scalar_select %p346, %s343, 5
        %s348 = smul.addr %s345, 6
        %s349 = sadd.s32 %s347, %s348
        %s350 = smul.addr %s349, 8
        %s351 = scalar_lea.vmem %s1, %s350
        %p352 = pneg %p90
        %p353 = pneg %p87
        %s354 = smul.u32 %s24, 3
        %s355 = sadd.s32 %s354, 3
        %p356 = scmp.lt.s32.totalorder %s355, 5
        %s357 = scalar_select %p356, %s355, 5
        %p358 = scmp.lt.s32.totalorder %s23, 1
        %s359 = scalar_select %p358, %s23, 1
        %p360 = scmp.lt.s32.totalorder %s357, 5
        %s361 = scalar_select %p360, %s357, 5
        %s362 = smul.addr %s359, 6
        %s363 = sadd.s32 %s361, %s362
        %s364 = smul.addr %s363, 8
        %s365 = scalar_lea.vmem %s2, %s364
        %p366 = pneg %p126
        %p367 = pneg %p123
        %p368 = pneg %p147
        %p369 = pneg %p144
        %p370 = pneg %p168
        %p371 = pneg %p165
        %p372 = pneg %p189
        %p373 = pneg %p186
        %p374 = pneg %p217
        %p375 = pneg %p214
        %s376 = smul.u32 3, %s24
        %p377 = scmp.lt.s32.totalorder %s23, 1
        %s378 = scalar_select %p377, %s23, 1
        %p379 = scmp.lt.s32.totalorder %s376, 5
        %s380 = scalar_select %p379, %s376, 5
        %s381 = smul.addr %s378, 6
        %s382 = sadd.s32 %s380, %s381
        %s383 = smul.addr %s382, 8
        %s384 = scalar_lea.vmem %s6, %s383
        %s385 = smul.u32 3, %s24
        %p386 = scmp.lt.s32.totalorder %s23, 1
        %s387 = scalar_select %p386, %s23, 1
        %p388 = scmp.lt.s32.totalorder %s385, 5
        %s389 = scalar_select %p388, %s385, 5
        %s390 = smul.addr %s387, 6
        %s391 = sadd.s32 %s389, %s390
        %s392 = smul.addr %s391, 8
        %s393 = scalar_lea.vmem %s0, %s392
        %s394 = smul.u32 3, %s24
        %s395 = smul.u32 %s24, 3
        %s396 = ssub.s32 %s395, 1
        %p397 = scmp.gt.s32.totalorder %s396, 0
        %s398 = scalar_select %p397, %s396, 0
        %p399 = scmp.lt.s32.totalorder %s23, 1
        %s400 = scalar_select %p399, %s23, 1
        %p401 = scmp.lt.s32.totalorder %s398, 5
        %s402 = scalar_select %p401, %s398, 5
        %s403 = smul.addr %s400, 6
        %s404 = sadd.s32 %s402, %s403
        %s405 = smul.addr %s404, 8
        %s406 = scalar_lea.vmem %s1, %s405
        %s407 = smul.u32 %s24, 3
        %s408 = ssub.s32 %s407, 1
        %p409 = scmp.gt.s32.totalorder %s408, 0
        %s410 = scalar_select %p409, %s408, 0
        %s411 = smul.u32 %s24, 3
        %s412 = sadd.s32 %s411, 3
        %p413 = scmp.lt.s32.totalorder %s412, 5
        %s414 = scalar_select %p413, %s412, 5
        %p415 = scmp.lt.s32.totalorder %s23, 1
        %s416 = scalar_select %p415, %s23, 1
        %p417 = scmp.lt.s32.totalorder %s414, 5
        %s418 = scalar_select %p417, %s414, 5
        %s419 = smul.addr %s416, 6
        %s420 = sadd.s32 %s418, %s419
        %s421 = smul.addr %s420, 8
        %s422 = scalar_lea.vmem %s2, %s421
        %s423 = smul.u32 %s24, 3
        %s424 = sadd.s32 %s423, 3
        %p425 = scmp.lt.s32.totalorder %s424, 5
        %s426 = scalar_select %p425, %s424, 5
        %s427 = smul.u32 3, %s24
        %p428 = scmp.lt.s32.totalorder %s23, 1
        %s429 = scalar_select %p428, %s23, 1
        %p430 = scmp.lt.s32.totalorder %s427, 5
        %s431 = scalar_select %p430, %s427, 5
        %s432 = smul.addr %s429, 6
        %s433 = sadd.s32 %s431, %s432
        %s434 = smul.addr %s433, 8
        %s435 = scalar_lea.vmem %s6, %s434
        %s436 = smul.u32 3, %s24
        %v437 = vld [vmem:[#allocation4] sm:$0xff]
        %v438 = vld [vmem:[%s3] sm:$0x1]
        %v439 = vld [vmem:[#allocation2] sm:$0xff]
        %s440 = scalar_lea.vmem [#allocation2], 8
        %v441 = vld [vmem:[%s440] sm:$0xff]
        %s442 = scalar_lea.vmem [#allocation2], 16
        %v443 = vld [vmem:[%s442] sm:$0xff]
        %v444 = vld [vmem:[%s406] sm:$0xff]
        %446 = vrot.lane.b32.xlu0 %v444, 127
        %v447 = vpop.permute.xlu0 %446
        %449 = vrot.lane.b32.xlu0 %v444, 126
        %v450 = vpop.permute.xlu0 %449
        %452 = vrot.lane.b32.xlu0 %v444, 122
        %v453 = vpop.permute.xlu0 %452
        %455 = vrot.lane.b32.xlu0 %v444, 121
        %v456 = vpop.permute.xlu0 %455
        %458 = vrot.lane.b32.xlu0 %v444, 120
        %v459 = vpop.permute.xlu0 %458
        %461 = vrot.lane.b32.xlu0 %v444, 116
        %v462 = vpop.permute.xlu0 %461
        %464 = vrot.lane.b32.xlu0 %v444, 115
        %v465 = vpop.permute.xlu0 %464
        %467 = vrot.lane.b32.xlu0 %v444, 114
        %v468 = vpop.permute.xlu0 %467
        %v470 = vld [vmem:[%s393] sm:$0xff]
        %472 = vrot.lane.b32.xlu0 %v470, 127
        %v473 = vpop.permute.xlu0 %472
        %475 = vrot.lane.b32.xlu0 %v470, 126
        %v476 = vpop.permute.xlu0 %475
        %478 = vrot.lane.b32.xlu0 %v470, 122
        %v479 = vpop.permute.xlu0 %478
        %481 = vrot.lane.b32.xlu0 %v470, 121
        %v482 = vpop.permute.xlu0 %481
        %484 = vrot.lane.b32.xlu0 %v470, 120
        %v485 = vpop.permute.xlu0 %484
        %487 = vrot.lane.b32.xlu0 %v470, 116
        %v488 = vpop.permute.xlu0 %487
        %490 = vrot.lane.b32.xlu0 %v470, 115
        %v491 = vpop.permute.xlu0 %490
        %493 = vrot.lane.b32.xlu0 %v470, 114
        %v494 = vpop.permute.xlu0 %493
        %s496 = scalar_lea.vmem %s393, 8
        %v497 = vld [vmem:[%s496] sm:$0xff]
        %499 = vrot.lane.b32.xlu0 %v497, 127
        %v500 = vpop.permute.xlu0 %499
        %502 = vrot.lane.b32.xlu0 %v497, 126
        %v503 = vpop.permute.xlu0 %502
        %505 = vrot.lane.b32.xlu0 %v497, 122
        %v506 = vpop.permute.xlu0 %505
        %508 = vrot.lane.b32.xlu0 %v497, 121
        %v509 = vpop.permute.xlu0 %508
        %511 = vrot.lane.b32.xlu0 %v497, 120
        %v512 = vpop.permute.xlu0 %511
        %514 = vrot.lane.b32.xlu0 %v497, 116
        %v515 = vpop.permute.xlu0 %514
        %517 = vrot.lane.b32.xlu0 %v497, 115
        %v518 = vpop.permute.xlu0 %517
        %520 = vrot.lane.b32.xlu0 %v497, 114
        %v521 = vpop.permute.xlu0 %520
        %s523 = smul.u32 %s24, 3
        %p524 = scmp.ge.s32.totalorder %s523, 1
        %p525 = scmp.le.s32.totalorder %s523, 4
        %p526 = pnand %p524, %p525
        %p527 = pneg %p526
        // Predicated region
        $region53: #{run.5} parent=43 // pred_check
          _
        $region54: #{run.5} parent=43 // pred_check_branch
          %529 = sbr.rel (%p526) target = $region56
        $region55: #{run.5} parent=43 // pred_region
          %vm530 = vcmask 588800
          %v532 = vsel %vm530, %v441, 0
          %534 = vmatprep.subr.mxu0 0.0
          %535 = vmatpush1.msra.mxu0 %v470
          %536 = vmatprep.subr.mxu0 0.0
          %537 = vmatpush1.msra.mxu0 %v473
          %538 = vmatprep.subr.mxu0 0.0
          %539 = vmatpush1.msra.mxu0 %v476
          %540 = vmatprep.subr.mxu0 0.0
          %541 = vmatpush1.msra.mxu0 %v479
          %542 = vmatprep.subr.mxu0 0.0
          %543 = vmatpush1.msra.mxu0 %v482
          %544 = vmatprep.subr.mxu0 0.0
          %545 = vmatpush1.msra.mxu0 %v485
          %546 = vmatprep.subr.mxu0 0.0
          %547 = vmatpush1.msra.mxu0 %v488
          %548 = vmatprep.subr.mxu0 0.0
          %549 = vmatpush1.msra.mxu0 %v491
          %550 = vmatprep.subr.mxu0 0.0
          %551 = vmatpush1.msra.mxu0 %v494
          %552 = vmatprep.subr.mxu0 0.0
          %553 = vmatpush1.msra.mxu0 0.0
          %554 = vmatprep.subr.mxu0 0.0
          %555 = vmatpush1.msra.mxu0 0.0
          %556 = vmatprep.subr.mxu0 0.0
          %557 = vmatpush1.msra.mxu0 0.0
          %558 = vmatprep.subr.mxu0 0.0
          %559 = vmatpush1.msra.mxu0 0.0
          %560 = vmatprep.subr.mxu0 0.0
          %561 = vmatpush1.msra.mxu0 0.0
          %562 = vmatprep.subr.mxu0 0.0
          %563 = vmatpush1.msra.mxu0 0.0
          %564 = vmatprep.subr.mxu0 0.0
          %565 = vmatpush1.msra.mxu0 0.0
          %566 = vmatprep.subr.mxu0 0.0
          %567 = vmatpush1.msra.mxu0 0.0
          %568 = vmatprep.subr.mxu0 0.0
          %569 = vmatpush1.msra.mxu0 0.0
          %570 = vmatprep.subr.mxu0 0.0
          %571 = vmatpush1.msra.mxu0 0.0
          %572 = vmatprep.subr.mxu0 0.0
          %573 = vmatpush1.msra.mxu0 0.0
          %574 = vmatprep.subr.mxu0 0.0
          %575 = vmatpush1.msra.mxu0 0.0
          %576 = vmatprep.subr.mxu0 0.0
          %577 = vmatpush1.msra.mxu0 0.0
          %578 = vmatprep.subr.mxu0 0.0
          %579 = vmatpush1.msra.mxu0 0.0
          %580 = vmatprep.subr.mxu0 0.0
          %581 = vmatpush1.msra.mxu0 0.0
          %582 = vmatprep.subr.mxu0 0.0
          %583 = vmatpush1.msra.mxu0 0.0
          %584 = vmatprep.subr.mxu0 0.0
          %585 = vmatpush1.msra.mxu0 0.0
          %586 = vmatprep.subr.mxu0 0.0
          %587 = vmatpush1.msra.mxu0 0.0
          %588 = vmatprep.subr.mxu0 0.0
          %589 = vmatpush1.msra.mxu0 0.0
          %590 = vmatprep.subr.mxu0 0.0
          %591 = vmatpush1.msra.mxu0 0.0
          %592 = vmatprep.subr.mxu0 0.0
          %593 = vmatpush1.msra.mxu0 0.0
          %594 = vmatprep.subr.mxu0 0.0
          %595 = vmatpush1.msra.mxu0 0.0
          %596 = vmatprep.subr.mxu0 0.0
          %597 = vmatpush1.msra.mxu0 0.0
          %598 = vmatprep.mubr.f32.mxu0 0.0
          %599 = vmatmul.mubr.f32.gmra.mrb[0].mxu0 %v532
          %v600 = vpop.f32.mrb[0].mxu0
          %v601 = vadd.f32 0.0, %v600
          %v602 = vpop.f32.mrb[0].mxu0
          %603 = vdwg.mxu0
          %v605 = vsel %vm530, %v439, 0
          %607 = vmatprep.subr.mxu0 0.0
          %608 = vmatpush1.msra.mxu0 %v444
          %609 = vmatprep.subr.mxu0 0.0
          %610 = vmatpush1.msra.mxu0 %v447
          %611 = vmatprep.subr.mxu0 0.0
          %612 = vmatpush1.msra.mxu0 %v450
          %613 = vmatprep.subr.mxu0 0.0
          %614 = vmatpush1.msra.mxu0 %v453
          %615 = vmatprep.subr.mxu0 0.0
          %616 = vmatpush1.msra.mxu0 %v456
          %617 = vmatprep.subr.mxu0 0.0
          %618 = vmatpush1.msra.mxu0 %v459
          %619 = vmatprep.subr.mxu0 0.0
          %620 = vmatpush1.msra.mxu0 %v462
          %621 = vmatprep.subr.mxu0 0.0
          %622 = vmatpush1.msra.mxu0 %v465
          %623 = vmatprep.subr.mxu0 0.0
          %624 = vmatpush1.msra.mxu0 %v468
          %625 = vmatprep.subr.mxu0 0.0
          %626 = vmatpush1.msra.mxu0 0.0
          %627 = vmatprep.subr.mxu0 0.0
          %628 = vmatpush1.msra.mxu0 0.0
          %629 = vmatprep.subr.mxu0 0.0
          %630 = vmatpush1.msra.mxu0 0.0
          %631 = vmatprep.subr.mxu0 0.0
          %632 = vmatpush1.msra.mxu0 0.0
          %633 = vmatprep.subr.mxu0 0.0
          %634 = vmatpush1.msra.mxu0 0.0
          %635 = vmatprep.subr.mxu0 0.0
          %636 = vmatpush1.msra.mxu0 0.0
          %637 = vmatprep.subr.mxu0 0.0
          %638 = vmatpush1.msra.mxu0 0.0
          %639 = vmatprep.subr.mxu0 0.0
          %640 = vmatpush1.msra.mxu0 0.0
          %641 = vmatprep.subr.mxu0 0.0
          %642 = vmatpush1.msra.mxu0 0.0
          %643 = vmatprep.subr.mxu0 0.0
          %644 = vmatpush1.msra.mxu0 0.0
          %645 = vmatprep.subr.mxu0 0.0
          %646 = vmatpush1.msra.mxu0 0.0
          %647 = vmatprep.subr.mxu0 0.0
          %648 = vmatpush1.msra.mxu0 0.0
          %649 = vmatprep.subr.mxu0 0.0
          %650 = vmatpush1.msra.mxu0 0.0
          %651 = vmatprep.subr.mxu0 0.0
          %652 = vmatpush1.msra.mxu0 0.0
          %653 = vmatprep.subr.mxu0 0.0
          %654 = vmatpush1.msra.mxu0 0.0
          %655 = vmatprep.subr.mxu0 0.0
          %656 = vmatpush1.msra.mxu0 0.0
          %657 = vmatprep.subr.mxu0 0.0
          %658 = vmatpush1.msra.mxu0 0.0
          %659 = vmatprep.subr.mxu0 0.0
          %660 = vmatpush1.msra.mxu0 0.0
          %661 = vmatprep.subr.mxu0 0.0
          %662 = vmatpush1.msra.mxu0 0.0
          %663 = vmatprep.subr.mxu0 0.0
          %664 = vmatpush1.msra.mxu0 0.0
          %665 = vmatprep.subr.mxu0 0.0
          %666 = vmatpush1.msra.mxu0 0.0
          %667 = vmatprep.subr.mxu0 0.0
          %668 = vmatpush1.msra.mxu0 0.0
          %669 = vmatprep.subr.mxu0 0.0
          %670 = vmatpush1.msra.mxu0 0.0
          %671 = vmatprep.mubr.f32.mxu0 0.0
          %672 = vmatmul.mubr.f32.gmra.mrb[0].mxu0 %v605
          %v673 = vpop.f32.mrb[0].mxu0
          %v674 = vadd.f32 %v601, %v673
          %v675 = vpop.f32.mrb[0].mxu0
          %676 = vdwg.mxu0
          %v678 = vsel %vm530, %v443, 0
          %680 = vmatprep.subr.mxu0 0.0
          %681 = vmatpush1.msra.mxu0 %v497
          %682 = vmatprep.subr.mxu0 0.0
          %683 = vmatpush1.msra.mxu0 %v500
          %684 = vmatprep.subr.mxu0 0.0
          %685 = vmatpush1.msra.mxu0 %v503
          %686 = vmatprep.subr.mxu0 0.0
          %687 = vmatpush1.msra.mxu0 %v506
          %688 = vmatprep.subr.mxu0 0.0
          %689 = vmatpush1.msra.mxu0 %v509
          %690 = vmatprep.subr.mxu0 0.0
          %691 = vmatpush1.msra.mxu0 %v512
          %692 = vmatprep.subr.mxu0 0.0
          %693 = vmatpush1.msra.mxu0 %v515
          %694 = vmatprep.subr.mxu0 0.0
          %695 = vmatpush1.msra.mxu0 %v518
          %696 = vmatprep.subr.mxu0 0.0
          %697 = vmatpush1.msra.mxu0 %v521
          %698 = vmatprep.subr.mxu0 0.0
          %699 = vmatpush1.msra.mxu0 0.0
          %700 = vmatprep.subr.mxu0 0.0
          %701 = vmatpush1.msra.mxu0 0.0
          %702 = vmatprep.subr.mxu0 0.0
          %703 = vmatpush1.msra.mxu0 0.0
          %704 = vmatprep.subr.mxu0 0.0
          %705 = vmatpush1.msra.mxu0 0.0
          %706 = vmatprep.subr.mxu0 0.0
          %707 = vmatpush1.msra.mxu0 0.0
          %708 = vmatprep.subr.mxu0 0.0
          %709 = vmatpush1.msra.mxu0 0.0
          %710 = vmatprep.subr.mxu0 0.0
          %711 = vmatpush1.msra.mxu0 0.0
          %712 = vmatprep.subr.mxu0 0.0
          %713 = vmatpush1.msra.mxu0 0.0
          %714 = vmatprep.subr.mxu0 0.0
          %715 = vmatpush1.msra.mxu0 0.0
          %716 = vmatprep.subr.mxu0 0.0
          %717 = vmatpush1.msra.mxu0 0.0
          %718 = vmatprep.subr.mxu0 0.0
          %719 = vmatpush1.msra.mxu0 0.0
          %720 = vmatprep.subr.mxu0 0.0
          %721 = vmatpush1.msra.mxu0 0.0
          %722 = vmatprep.subr.mxu0 0.0
          %723 = vmatpush1.msra.mxu0 0.0
          %724 = vmatprep.subr.mxu0 0.0
          %725 = vmatpush1.msra.mxu0 0.0
          %726 = vmatprep.subr.mxu0 0.0
          %727 = vmatpush1.msra.mxu0 0.0
          %728 = vmatprep.subr.mxu0 0.0
          %729 = vmatpush1.msra.mxu0 0.0
          %730 = vmatprep.subr.mxu0 0.0
          %731 = vmatpush1.msra.mxu0 0.0
          %732 = vmatprep.subr.mxu0 0.0
          %733 = vmatpush1.msra.mxu0 0.0
          %734 = vmatprep.subr.mxu0 0.0
          %735 = vmatpush1.msra.mxu0 0.0
          %736 = vmatprep.subr.mxu0 0.0
          %737 = vmatpush1.msra.mxu0 0.0
          %738 = vmatprep.subr.mxu0 0.0
          %739 = vmatpush1.msra.mxu0 0.0
          %740 = vmatprep.subr.mxu0 0.0
          %741 = vmatpush1.msra.mxu0 0.0
          %742 = vmatprep.subr.mxu0 0.0
          %743 = vmatpush1.msra.mxu0 0.0
          %744 = vmatprep.mubr.f32.mxu0 0.0
          %745 = vmatmul.mubr.f32.gmra.mrb[0].mxu0 %v678
          %v746 = vpop.f32.mrb[0].mxu0
          %v747 = vadd.f32 0.0, %v746
          %v748 = vpop.f32.mrb[0].mxu0
          %749 = vdwg.mxu0
          %v750 = vadd.f32 %v674, %v747
          %752 = vset.pattern.permute.xlu0 0
          %753 = vperm.xlu0 %752, %v437
          %v754 = vpop.permute.xlu0 %753
          %v756 = vadd.f32 %v750, %v754
          %v758 = vlaneseq
          %v759 = vshrl.u32 %v758, 7
          %v760 = vsub.s32 0, %v759
          %v761 = vrot.slane %v438, %v760
          %v763 = vmul.f32 %v756, %v761
          %765 = vrot.lane.b32.xlu0 %v763, 7
          %v766 = vpop.permute.xlu0 %765
          %vm768 = vcmask 56320
          %v769 = vsel %vm768, 0.0, %v766
          %vm770 = vcmask 236544
          %v771 = vsel %vm770, %v769, 0.0
          %vm772 = vcmask 293888
          %773 = vst.msk [vmem:[%s435] sm:$0xff] %vm772, %v771
        $region56: #{run.5} parent=43 // pred_fallthru
          _
        %p774 = pneg %p527
        // Predicated region
        $region57: #{run.5} parent=43 // pred_check
          _
        $region58: #{run.5} parent=43 // pred_check_branch
          %776 = sbr.rel (%p527) target = $region60
        $region59: #{run.5} parent=43 // pred_region
          %vm777 = vcmask 293888
          %778 = vst.msk [vmem:[%s435] sm:$0xff] %vm777, 0.0
        $region60: #{run.5} parent=43 // pred_fallthru
          _
        %s779 = scalar_lea.vmem %s393, 16
        %v780 = vld [vmem:[%s779] sm:$0xff]
        %782 = vrot.lane.b32.xlu0 %v780, 127
        %v783 = vpop.permute.xlu0 %782
        %785 = vrot.lane.b32.xlu0 %v780, 126
        %v786 = vpop.permute.xlu0 %785
        %788 = vrot.lane.b32.xlu0 %v780, 122
        %v789 = vpop.permute.xlu0 %788
        %791 = vrot.lane.b32.xlu0 %v780, 121
        %v792 = vpop.permute.xlu0 %791
        %794 = vrot.lane.b32.xlu0 %v780, 120
        %v795 = vpop.permute.xlu0 %794
        %797 = vrot.lane.b32.xlu0 %v780, 116
        %v798 = vpop.permute.xlu0 %797
        %800 = vrot.lane.b32.xlu0 %v780, 115
        %v801 = vpop.permute.xlu0 %800
        %803 = vrot.lane.b32.xlu0 %v780, 114
        %v804 = vpop.permute.xlu0 %803
        %s806 = sadd.s32 %s523, 1
        %p807 = scmp.ge.s32.totalorder %s806, 1
        %p808 = scmp.le.s32.totalorder %s806, 4
        %p809 = pnand %p807, %p808
        %p810 = pneg %p809
        // Predicated region
        $region61: #{run.5} parent=43 // pred_check
          _
        $region62: #{run.5} parent=43 // pred_check_branch
          %812 = sbr.rel (%p809) target = $region64
        $region63: #{run.5} parent=43 // pred_region
          %vm813 = vcmask 588800
          %v815 = vsel %vm813, %v441, 0
          %817 = vmatprep.subr.mxu0 0.0
          %818 = vmatpush1.msra.mxu0 %v497
          %819 = vmatprep.subr.mxu0 0.0
          %820 = vmatpush1.msra.mxu0 %v500
          %821 = vmatprep.subr.mxu0 0.0
          %822 = vmatpush1.msra.mxu0 %v503
          %823 = vmatprep.subr.mxu0 0.0
          %824 = vmatpush1.msra.mxu0 %v506
          %825 = vmatprep.subr.mxu0 0.0
          %826 = vmatpush1.msra.mxu0 %v509
          %827 = vmatprep.subr.mxu0 0.0
          %828 = vmatpush1.msra.mxu0 %v512
          %829 = vmatprep.subr.mxu0 0.0
          %830 = vmatpush1.msra.mxu0 %v515
          %831 = vmatprep.subr.mxu0 0.0
          %832 = vmatpush1.msra.mxu0 %v518
          %833 = vmatprep.subr.mxu0 0.0
          %834 = vmatpush1.msra.mxu0 %v521
          %835 = vmatprep.subr.mxu0 0.0
          %836 = vmatpush1.msra.mxu0 0.0
          %837 = vmatprep.subr.mxu0 0.0
          %838 = vmatpush1.msra.mxu0 0.0
          %839 = vmatprep.subr.mxu0 0.0
          %840 = vmatpush1.msra.mxu0 0.0
          %841 = vmatprep.subr.mxu0 0.0
          %842 = vmatpush1.msra.mxu0 0.0
          %843 = vmatprep.subr.mxu0 0.0
          %844 = vmatpush1.msra.mxu0 0.0
          %845 = vmatprep.subr.mxu0 0.0
          %846 = vmatpush1.msra.mxu0 0.0
          %847 = vmatprep.subr.mxu0 0.0
          %848 = vmatpush1.msra.mxu0 0.0
          %849 = vmatprep.subr.mxu0 0.0
          %850 = vmatpush1.msra.mxu0 0.0
          %851 = vmatprep.subr.mxu0 0.0
          %852 = vmatpush1.msra.mxu0 0.0
          %853 = vmatprep.subr.mxu0 0.0
          %854 = vmatpush1.msra.mxu0 0.0
          %855 = vmatprep.subr.mxu0 0.0
          %856 = vmatpush1.msra.mxu0 0.0
          %857 = vmatprep.subr.mxu0 0.0
          %858 = vmatpush1.msra.mxu0 0.0
          %859 = vmatprep.subr.mxu0 0.0
          %860 = vmatpush1.msra.mxu0 0.0
          %861 = vmatprep.subr.mxu0 0.0
          %862 = vmatpush1.msra.mxu0 0.0
          %863 = vmatprep.subr.mxu0 0.0
          %864 = vmatpush1.msra.mxu0 0.0
          %865 = vmatprep.subr.mxu0 0.0
          %866 = vmatpush1.msra.mxu0 0.0
          %867 = vmatprep.subr.mxu0 0.0
          %868 = vmatpush1.msra.mxu0 0.0
          %869 = vmatprep.subr.mxu0 0.0
          %870 = vmatpush1.msra.mxu0 0.0
          %871 = vmatprep.subr.mxu0 0.0
          %872 = vmatpush1.msra.mxu0 0.0
          %873 = vmatprep.subr.mxu0 0.0
          %874 = vmatpush1.msra.mxu0 0.0
          %875 = vmatprep.subr.mxu0 0.0
          %876 = vmatpush1.msra.mxu0 0.0
          %877 = vmatprep.subr.mxu0 0.0
          %878 = vmatpush1.msra.mxu0 0.0
          %879 = vmatprep.subr.mxu0 0.0
          %880 = vmatpush1.msra.mxu0 0.0
          %881 = vmatprep.mubr.f32.mxu0 0.0
          %882 = vmatmul.mubr.f32.gmra.mrb[0].mxu0 %v815
          %v883 = vpop.f32.mrb[0].mxu0
          %v884 = vadd.f32 0.0, %v883
          %v885 = vpop.f32.mrb[0].mxu0
          %886 = vdwg.mxu0
          %v888 = vsel %vm813, %v439, 0
          %890 = vmatprep.subr.mxu0 0.0
          %891 = vmatpush1.msra.mxu0 %v470
          %892 = vmatprep.subr.mxu0 0.0
          %893 = vmatpush1.msra.mxu0 %v473
          %894 = vmatprep.subr.mxu0 0.0
          %895 = vmatpush1.msra.mxu0 %v476
          %896 = vmatprep.subr.mxu0 0.0
          %897 = vmatpush1.msra.mxu0 %v479
          %898 = vmatprep.subr.mxu0 0.0
          %899 = vmatpush1.msra.mxu0 %v482
          %900 = vmatprep.subr.mxu0 0.0
          %901 = vmatpush1.msra.mxu0 %v485
          %902 = vmatprep.subr.mxu0 0.0
          %903 = vmatpush1.msra.mxu0 %v488
          %904 = vmatprep.subr.mxu0 0.0
          %905 = vmatpush1.msra.mxu0 %v491
          %906 = vmatprep.subr.mxu0 0.0
          %907 = vmatpush1.msra.mxu0 %v494
          %908 = vmatprep.subr.mxu0 0.0
          %909 = vmatpush1.msra.mxu0 0.0
          %910 = vmatprep.subr.mxu0 0.0
          %911 = vmatpush1.msra.mxu0 0.0
          %912 = vmatprep.subr.mxu0 0.0
          %913 = vmatpush1.msra.mxu0 0.0
          %914 = vmatprep.subr.mxu0 0.0
          %915 = vmatpush1.msra.mxu0 0.0
          %916 = vmatprep.subr.mxu0 0.0
          %917 = vmatpush1.msra.mxu0 0.0
          %918 = vmatprep.subr.mxu0 0.0
          %919 = vmatpush1.msra.mxu0 0.0
          %920 = vmatprep.subr.mxu0 0.0
          %921 = vmatpush1.msra.mxu0 0.0
          %922 = vmatprep.subr.mxu0 0.0
          %923 = vmatpush1.msra.mxu0 0.0
          %924 = vmatprep.subr.mxu0 0.0
          %925 = vmatpush1.msra.mxu0 0.0
          %926 = vmatprep.subr.mxu0 0.0
          %927 = vmatpush1.msra.mxu0 0.0
          %928 = vmatprep.subr.mxu0 0.0
          %929 = vmatpush1.msra.mxu0 0.0
          %930 = vmatprep.subr.mxu0 0.0
          %931 = vmatpush1.msra.mxu0 0.0
          %932 = vmatprep.subr.mxu0 0.0
          %933 = vmatpush1.msra.mxu0 0.0
          %934 = vmatprep.subr.mxu0 0.0
          %935 = vmatpush1.msra.mxu0 0.0
          %936 = vmatprep.subr.mxu0 0.0
          %937 = vmatpush1.msra.mxu0 0.0
          %938 = vmatprep.subr.mxu0 0.0
          %939 = vmatpush1.msra.mxu0 0.0
          %940 = vmatprep.subr.mxu0 0.0
          %941 = vmatpush1.msra.mxu0 0.0
          %942 = vmatprep.subr.mxu0 0.0
          %943 = vmatpush1.msra.mxu0 0.0
          %944 = vmatprep.subr.mxu0 0.0
          %945 = vmatpush1.msra.mxu0 0.0
          %946 = vmatprep.subr.mxu0 0.0
          %947 = vmatpush1.msra.mxu0 0.0
          %948 = vmatprep.subr.mxu0 0.0
          %949 = vmatpush1.msra.mxu0 0.0
          %950 = vmatprep.subr.mxu0 0.0
          %951 = vmatpush1.msra.mxu0 0.0
          %952 = vmatprep.subr.mxu0 0.0
          %953 = vmatpush1.msra.mxu0 0.0
          %954 = vmatprep.mubr.f32.mxu0 0.0
          %955 = vmatmul.mubr.f32.gmra.mrb[0].mxu0 %v888
          %v956 = vpop.f32.mrb[0].mxu0
          %v957 = vadd.f32 %v884, %v956
          %v958 = vpop.f32.mrb[0].mxu0
          %959 = vdwg.mxu0
          %v961 = vsel %vm813, %v443, 0
          %963 = vmatprep.subr.mxu0 0.0
          %964 = vmatpush1.msra.mxu0 %v780
          %965 = vmatprep.subr.mxu0 0.0
          %966 = vmatpush1.msra.mxu0 %v783
          %967 = vmatprep.subr.mxu0 0.0
          %968 = vmatpush1.msra.mxu0 %v786
          %969 = vmatprep.subr.mxu0 0.0
          %970 = vmatpush1.msra.mxu0 %v789
          %971 = vmatprep.subr.mxu0 0.0
          %972 = vmatpush1.msra.mxu0 %v792
          %973 = vmatprep.subr.mxu0 0.0
          %974 = vmatpush1.msra.mxu0 %v795
          %975 = vmatprep.subr.mxu0 0.0
          %976 = vmatpush1.msra.mxu0 %v798
          %977 = vmatprep.subr.mxu0 0.0
          %978 = vmatpush1.msra.mxu0 %v801
          %979 = vmatprep.subr.mxu0 0.0
          %980 = vmatpush1.msra.mxu0 %v804
          %981 = vmatprep.subr.mxu0 0.0
          %982 = vmatpush1.msra.mxu0 0.0
          %983 = vmatprep.subr.mxu0 0.0
          %984 = vmatpush1.msra.mxu0 0.0
          %985 = vmatprep.subr.mxu0 0.0
          %986 = vmatpush1.msra.mxu0 0.0
          %987 = vmatprep.subr.mxu0 0.0
          %988 = vmatpush1.msra.mxu0 0.0
          %989 = vmatprep.subr.mxu0 0.0
          %990 = vmatpush1.msra.mxu0 0.0
          %991 = vmatprep.subr.mxu0 0.0
          %992 = vmatpush1.msra.mxu0 0.0
          %993 = vmatprep.subr.mxu0 0.0
          %994 = vmatpush1.msra.mxu0 0.0
          %995 = vmatprep.subr.mxu0 0.0
          %996 = vmatpush1.msra.mxu0 0.0
          %997 = vmatprep.subr.mxu0 0.0
          %998 = vmatpush1.msra.mxu0 0.0
          %999 = vmatprep.subr.mxu0 0.0
          %1000 = vmatpush1.msra.mxu0 0.0
          %1001 = vmatprep.subr.mxu0 0.0
          %1002 = vmatpush1.msra.mxu0 0.0
          %1003 = vmatprep.subr.mxu0 0.0
          %1004 = vmatpush1.msra.mxu0 0.0
          %1005 = vmatprep.subr.mxu0 0.0
          %1006 = vmatpush1.msra.mxu0 0.0
          %1007 = vmatprep.subr.mxu0 0.0
          %1008 = vmatpush1.msra.mxu0 0.0
          %1009 = vmatprep.subr.mxu0 0.0
          %1010 = vmatpush1.msra.mxu0 0.0
          %1011 = vmatprep.subr.mxu0 0.0
          %1012 = vmatpush1.msra.mxu0 0.0
          %1013 = vmatprep.subr.mxu0 0.0
          %1014 = vmatpush1.msra.mxu0 0.0
          %1015 = vmatprep.subr.mxu0 0.0
          %1016 = vmatpush1.msra.mxu0 0.0
          %1017 = vmatprep.subr.mxu0 0.0
          %1018 = vmatpush1.msra.mxu0 0.0
          %1019 = vmatprep.subr.mxu0 0.0
          %1020 = vmatpush1.msra.mxu0 0.0
          %1021 = vmatprep.subr.mxu0 0.0
          %1022 = vmatpush1.msra.mxu0 0.0
          %1023 = vmatprep.subr.mxu0 0.0
          %1024 = vmatpush1.msra.mxu0 0.0
          %1025 = vmatprep.subr.mxu0 0.0
          %1026 = vmatpush1.msra.mxu0 0.0
          %1027 = vmatprep.mubr.f32.mxu0 0.0
          %1028 = vmatmul.mubr.f32.gmra.mrb[0].mxu0 %v961
          %v1029 = vpop.f32.mrb[0].mxu0
          %v1030 = vadd.f32 0.0, %v1029
          %v1031 = vpop.f32.mrb[0].mxu0
          %1032 = vdwg.mxu0
          %v1033 = vadd.f32 %v957, %v1030
          %1035 = vset.pattern.permute.xlu0 0
          %1036 = vperm.xlu0 %1035, %v437
          %v1037 = vpop.permute.xlu0 %1036
          %v1039 = vadd.f32 %v1033, %v1037
          %v1041 = vlaneseq
          %v1042 = vshrl.u32 %v1041, 7
          %v1043 = vsub.s32 0, %v1042
          %v1044 = vrot.slane %v438, %v1043
          %v1046 = vmul.f32 %v1039, %v1044
          %1048 = vrot.lane.b32.xlu0 %v1046, 7
          %v1049 = vpop.permute.xlu0 %1048
          %vm1051 = vcmask 56320
          %v1052 = vsel %vm1051, 0.0, %v1049
          %vm1053 = vcmask 236544
          %v1054 = vsel %vm1053, %v1052, 0.0
          %s1055 = scalar_lea.vmem %s435, 8
          %vm1056 = vcmask 293888
          %1057 = vst.msk [vmem:[%s1055] sm:$0xff] %vm1056, %v1054
        $region64: #{run.5} parent=43 // pred_fallthru
          _
        %p1058 = pneg %p810
        // Predicated region
        $region65: #{run.5} parent=43 // pred_check
          _
        $region66: #{run.5} parent=43 // pred_check_branch
          %1060 = sbr.rel (%p810) target = $region68
        $region67: #{run.5} parent=43 // pred_region
          %s1061 = scalar_lea.vmem %s435, 8
          %vm1062 = vcmask 293888
          %1063 = vst.msk [vmem:[%s1061] sm:$0xff] %vm1062, 0.0
        $region68: #{run.5} parent=43 // pred_fallthru
          _
        %v1064 = vld [vmem:[%s422] sm:$0xff]
        %1066 = vrot.lane.b32.xlu0 %v1064, 127
        %v1067 = vpop.permute.xlu0 %1066
        %1069 = vrot.lane.b32.xlu0 %v1064, 126
        %v1070 = vpop.permute.xlu0 %1069
        %1072 = vrot.lane.b32.xlu0 %v1064, 122
        %v1073 = vpop.permute.xlu0 %1072
        %1075 = vrot.lane.b32.xlu0 %v1064, 121
        %v1076 = vpop.permute.xlu0 %1075
        %1078 = vrot.lane.b32.xlu0 %v1064, 120
        %v1079 = vpop.permute.xlu0 %1078
        %1081 = vrot.lane.b32.xlu0 %v1064, 116
        %v1082 = vpop.permute.xlu0 %1081
        %1084 = vrot.lane.b32.xlu0 %v1064, 115
        %v1085 = vpop.permute.xlu0 %1084
        %1087 = vrot.lane.b32.xlu0 %v1064, 114
        %v1088 = vpop.permute.xlu0 %1087
        %s1090 = sadd.s32 %s523, 2
        %p1091 = scmp.ge.s32.totalorder %s1090, 1
        %p1092 = scmp.le.s32.totalorder %s1090, 4
        %p1093 = pnand %p1091, %p1092
        %p1094 = pneg %p1093
        // Predicated region
        $region69: #{run.5} parent=43 // pred_check
          _
        $region70: #{run.5} parent=43 // pred_check_branch
          %1096 = sbr.rel (%p1093) target = $region72
        $region71: #{run.5} parent=43 // pred_region
          %vm1097 = vcmask 588800
          %v1099 = vsel %vm1097, %v441, 0
          %1101 = vmatprep.subr.mxu0 0.0
          %1102 = vmatpush1.msra.mxu0 %v780
          %1103 = vmatprep.subr.mxu0 0.0
          %1104 = vmatpush1.msra.mxu0 %v783
          %1105 = vmatprep.subr.mxu0 0.0
          %1106 = vmatpush1.msra.mxu0 %v786
          %1107 = vmatprep.subr.mxu0 0.0
          %1108 = vmatpush1.msra.mxu0 %v789
          %1109 = vmatprep.subr.mxu0 0.0
          %1110 = vmatpush1.msra.mxu0 %v792
          %1111 = vmatprep.subr.mxu0 0.0
          %1112 = vmatpush1.msra.mxu0 %v795
          %1113 = vmatprep.subr.mxu0 0.0
          %1114 = vmatpush1.msra.mxu0 %v798
          %1115 = vmatprep.subr.mxu0 0.0
          %1116 = vmatpush1.msra.mxu0 %v801
          %1117 = vmatprep.subr.mxu0 0.0
          %1118 = vmatpush1.msra.mxu0 %v804
          %1119 = vmatprep.subr.mxu0 0.0
          %1120 = vmatpush1.msra.mxu0 0.0
          %1121 = vmatprep.subr.mxu0 0.0
          %1122 = vmatpush1.msra.mxu0 0.0
          %1123 = vmatprep.subr.mxu0 0.0
          %1124 = vmatpush1.msra.mxu0 0.0
          %1125 = vmatprep.subr.mxu0 0.0
          %1126 = vmatpush1.msra.mxu0 0.0
          %1127 = vmatprep.subr.mxu0 0.0
          %1128 = vmatpush1.msra.mxu0 0.0
          %1129 = vmatprep.subr.mxu0 0.0
          %1130 = vmatpush1.msra.mxu0 0.0
          %1131 = vmatprep.subr.mxu0 0.0
          %1132 = vmatpush1.msra.mxu0 0.0
          %1133 = vmatprep.subr.mxu0 0.0
          %1134 = vmatpush1.msra.mxu0 0.0
          %1135 = vmatprep.subr.mxu0 0.0
          %1136 = vmatpush1.msra.mxu0 0.0
          %1137 = vmatprep.subr.mxu0 0.0
          %1138 = vmatpush1.msra.mxu0 0.0
          %1139 = vmatprep.subr.mxu0 0.0
          %1140 = vmatpush1.msra.mxu0 0.0
          %1141 = vmatprep.subr.mxu0 0.0
          %1142 = vmatpush1.msra.mxu0 0.0
          %1143 = vmatprep.subr.mxu0 0.0
          %1144 = vmatpush1.msra.mxu0 0.0
          %1145 = vmatprep.subr.mxu0 0.0
          %1146 = vmatpush1.msra.mxu0 0.0
          %1147 = vmatprep.subr.mxu0 0.0
          %1148 = vmatpush1.msra.mxu0 0.0
          %1149 = vmatprep.subr.mxu0 0.0
          %1150 = vmatpush1.msra.mxu0 0.0
          %1151 = vmatprep.subr.mxu0 0.0
          %1152 = vmatpush1.msra.mxu0 0.0
          %1153 = vmatprep.subr.mxu0 0.0
          %1154 = vmatpush1.msra.mxu0 0.0
          %1155 = vmatprep.subr.mxu0 0.0
          %1156 = vmatpush1.msra.mxu0 0.0
          %1157 = vmatprep.subr.mxu0 0.0
          %1158 = vmatpush1.msra.mxu0 0.0
          %1159 = vmatprep.subr.mxu0 0.0
          %1160 = vmatpush1.msra.mxu0 0.0
          %1161 = vmatprep.subr.mxu0 0.0
          %1162 = vmatpush1.msra.mxu0 0.0
          %1163 = vmatprep.subr.mxu0 0.0
          %1164 = vmatpush1.msra.mxu0 0.0
          %1165 = vmatprep.mubr.f32.mxu0 0.0
          %1166 = vmatmul.mubr.f32.gmra.mrb[0].mxu0 %v1099
          %v1167 = vpop.f32.mrb[0].mxu0
          %v1168 = vadd.f32 0.0, %v1167
          %v1169 = vpop.f32.mrb[0].mxu0
          %1170 = vdwg.mxu0
          %v1172 = vsel %vm1097, %v439, 0
          %1174 = vmatprep.subr.mxu0 0.0
          %1175 = vmatpush1.msra.mxu0 %v497
          %1176 = vmatprep.subr.mxu0 0.0
          %1177 = vmatpush1.msra.mxu0 %v500
          %1178 = vmatprep.subr.mxu0 0.0
          %1179 = vmatpush1.msra.mxu0 %v503
          %1180 = vmatprep.subr.mxu0 0.0
          %1181 = vmatpush1.msra.mxu0 %v506
          %1182 = vmatprep.subr.mxu0 0.0
          %1183 = vmatpush1.msra.mxu0 %v509
          %1184 = vmatprep.subr.mxu0 0.0
          %1185 = vmatpush1.msra.mxu0 %v512
          %1186 = vmatprep.subr.mxu0 0.0
          %1187 = vmatpush1.msra.mxu0 %v515
          %1188 = vmatprep.subr.mxu0 0.0
          %1189 = vmatpush1.msra.mxu0 %v518
          %1190 = vmatprep.subr.mxu0 0.0
          %1191 = vmatpush1.msra.mxu0 %v521
          %1192 = vmatprep.subr.mxu0 0.0
          %1193 = vmatpush1.msra.mxu0 0.0
          %1194 = vmatprep.subr.mxu0 0.0
          %1195 = vmatpush1.msra.mxu0 0.0
          %1196 = vmatprep.subr.mxu0 0.0
          %1197 = vmatpush1.msra.mxu0 0.0
          %1198 = vmatprep.subr.mxu0 0.0
          %1199 = vmatpush1.msra.mxu0 0.0
          %1200 = vmatprep.subr.mxu0 0.0
          %1201 = vmatpush1.msra.mxu0 0.0
          %1202 = vmatprep.subr.mxu0 0.0
          %1203 = vmatpush1.msra.mxu0 0.0
          %1204 = vmatprep.subr.mxu0 0.0
          %1205 = vmatpush1.msra.mxu0 0.0
          %1206 = vmatprep.subr.mxu0 0.0
          %1207 = vmatpush1.msra.mxu0 0.0
          %1208 = vmatprep.subr.mxu0 0.0
          %1209 = vmatpush1.msra.mxu0 0.0
          %1210 = vmatprep.subr.mxu0 0.0
          %1211 = vmatpush1.msra.mxu0 0.0
          %1212 = vmatprep.subr.mxu0 0.0
          %1213 = vmatpush1.msra.mxu0 0.0
          %1214 = vmatprep.subr.mxu0 0.0
          %1215 = vmatpush1.msra.mxu0 0.0
          %1216 = vmatprep.subr.mxu0 0.0
          %1217 = vmatpush1.msra.mxu0 0.0
          %1218 = vmatprep.subr.mxu0 0.0
          %1219 = vmatpush1.msra.mxu0 0.0
          %1220 = vmatprep.subr.mxu0 0.0
          %1221 = vmatpush1.msra.mxu0 0.0
          %1222 = vmatprep.subr.mxu0 0.0
          %1223 = vmatpush1.msra.mxu0 0.0
          %1224 = vmatprep.subr.mxu0 0.0
          %1225 = vmatpush1.msra.mxu0 0.0
          %1226 = vmatprep.subr.mxu0 0.0
          %1227 = vmatpush1.msra.mxu0 0.0
          %1228 = vmatprep.subr.mxu0 0.0
          %1229 = vmatpush1.msra.mxu0 0.0
          %1230 = vmatprep.subr.mxu0 0.0
          %1231 = vmatpush1.msra.mxu0 0.0
          %1232 = vmatprep.subr.mxu0 0.0
          %1233 = vmatpush1.msra.mxu0 0.0
          %1234 = vmatprep.subr.mxu0 0.0
          %1235 = vmatpush1.msra.mxu0 0.0
          %1236 = vmatprep.subr.mxu0 0.0
          %1237 = vmatpush1.msra.mxu0 0.0
          %1238 = vmatprep.mubr.f32.mxu0 0.0
          %1239 = vmatmul.mubr.f32.gmra.mrb[0].mxu0 %v1172
          %v1240 = vpop.f32.mrb[0].mxu0
          %v1241 = vadd.f32 %v1168, %v1240
          %v1242 = vpop.f32.mrb[0].mxu0
          %1243 = vdwg.mxu0
          %v1245 = vsel %vm1097, %v443, 0
          %1247 = vmatprep.subr.mxu0 0.0
          %1248 = vmatpush1.msra.mxu0 %v1064
          %1249 = vmatprep.subr.mxu0 0.0
          %1250 = vmatpush1.msra.mxu0 %v1067
          %1251 = vmatprep.subr.mxu0 0.0
          %1252 = vmatpush1.msra.mxu0 %v1070
          %1253 = vmatprep.subr.mxu0 0.0
          %1254 = vmatpush1.msra.mxu0 %v1073
          %1255 = vmatprep.subr.mxu0 0.0
          %1256 = vmatpush1.msra.mxu0 %v1076
          %1257 = vmatprep.subr.mxu0 0.0
          %1258 = vmatpush1.msra.mxu0 %v1079
          %1259 = vmatprep.subr.mxu0 0.0
          %1260 = vmatpush1.msra.mxu0 %v1082
          %1261 = vmatprep.subr.mxu0 0.0
          %1262 = vmatpush1.msra.mxu0 %v1085
          %1263 = vmatprep.subr.mxu0 0.0
          %1264 = vmatpush1.msra.mxu0 %v1088
          %1265 = vmatprep.subr.mxu0 0.0
          %1266 = vmatpush1.msra.mxu0 0.0
          %1267 = vmatprep.subr.mxu0 0.0
          %1268 = vmatpush1.msra.mxu0 0.0
          %1269 = vmatprep.subr.mxu0 0.0
          %1270 = vmatpush1.msra.mxu0 0.0
          %1271 = vmatprep.subr.mxu0 0.0
          %1272 = vmatpush1.msra.mxu0 0.0
          %1273 = vmatprep.subr.mxu0 0.0
          %1274 = vmatpush1.msra.mxu0 0.0
          %1275 = vmatprep.subr.mxu0 0.0
          %1276 = vmatpush1.msra.mxu0 0.0
          %1277 = vmatprep.subr.mxu0 0.0
          %1278 = vmatpush1.msra.mxu0 0.0
          %1279 = vmatprep.subr.mxu0 0.0
          %1280 = vmatpush1.msra.mxu0 0.0
          %1281 = vmatprep.subr.mxu0 0.0
          %1282 = vmatpush1.msra.mxu0 0.0
          %1283 = vmatprep.subr.mxu0 0.0
          %1284 = vmatpush1.msra.mxu0 0.0
          %1285 = vmatprep.subr.mxu0 0.0
          %1286 = vmatpush1.msra.mxu0 0.0
          %1287 = vmatprep.subr.mxu0 0.0
          %1288 = vmatpush1.msra.mxu0 0.0
          %1289 = vmatprep.subr.mxu0 0.0
          %1290 = vmatpush1.msra.mxu0 0.0
          %1291 = vmatprep.subr.mxu0 0.0
          %1292 = vmatpush1.msra.mxu0 0.0
          %1293 = vmatprep.subr.mxu0 0.0
          %1294 = vmatpush1.msra.mxu0 0.0
          %1295 = vmatprep.subr.mxu0 0.0
          %1296 = vmatpush1.msra.mxu0 0.0
          %1297 = vmatprep.subr.mxu0 0.0
          %1298 = vmatpush1.msra.mxu0 0.0
          %1299 = vmatprep.subr.mxu0 0.0
          %1300 = vmatpush1.msra.mxu0 0.0
          %1301 = vmatprep.subr.mxu0 0.0
          %1302 = vmatpush1.msra.mxu0 0.0
          %1303 = vmatprep.subr.mxu0 0.0
          %1304 = vmatpush1.msra.mxu0 0.0
          %1305 = vmatprep.subr.mxu0 0.0
          %1306 = vmatpush1.msra.mxu0 0.0
          %1307 = vmatprep.subr.mxu0 0.0
          %1308 = vmatpush1.msra.mxu0 0.0
          %1309 = vmatprep.subr.mxu0 0.0
          %1310 = vmatpush1.msra.mxu0 0.0
          %1311 = vmatprep.mubr.f32.mxu0 0.0
          %1312 = vmatmul.mubr.f32.gmra.mrb[0].mxu0 %v1245
          %v1313 = vpop.f32.mrb[0].mxu0
          %v1314 = vadd.f32 0.0, %v1313
          %v1315 = vpop.f32.mrb[0].mxu0
          %1316 = vdwg.mxu0
          %v1317 = vadd.f32 %v1241, %v1314
          %1319 = vset.pattern.permute.xlu0 0
          %1320 = vperm.xlu0 %1319, %v437
          %v1321 = vpop.permute.xlu0 %1320
          %v1323 = vadd.f32 %v1317, %v1321
          %v1325 = vlaneseq
          %v1326 = vshrl.u32 %v1325, 7
          %v1327 = vsub.s32 0, %v1326
          %v1328 = vrot.slane %v438, %v1327
          %v1330 = vmul.f32 %v1323, %v1328
          %1332 = vrot.lane.b32.xlu0 %v1330, 7
          %v1333 = vpop.permute.xlu0 %1332
          %vm1335 = vcmask 56320
          %v1336 = vsel %vm1335, 0.0, %v1333
          %vm1337 = vcmask 236544
          %v1338 = vsel %vm1337, %v1336, 0.0
          %s1339 = scalar_lea.vmem %s435, 16
          %vm1340 = vcmask 293888
          %1341 = vst.msk [vmem:[%s1339] sm:$0xff] %vm1340, %v1338
        $region72: #{run.5} parent=43 // pred_fallthru
          _
        %p1342 = pneg %p1094
        // Predicated region
        $region73: #{run.5} parent=43 // pred_check
          _
        $region74: #{run.5} parent=43 // pred_check_branch
          %1344 = sbr.rel (%p1094) target = $region76
        $region75: #{run.5} parent=43 // pred_region
          %s1345 = scalar_lea.vmem %s435, 16
          %vm1346 = vcmask 293888
          %1347 = vst.msk [vmem:[%s1345] sm:$0xff] %vm1346, 0.0
        $region76: #{run.5} parent=43 // pred_fallthru
          _
        %s1348 = smul.u32 3, %s24
        %p1349 = scmp.lt.s32.totalorder %s23, 1
        %s1350 = scalar_select %p1349, %s23, 1
        %p1351 = scmp.lt.s32.totalorder %s1348, 5
        %s1352 = scalar_select %p1351, %s1348, 5
        %s1353 = smul.addr %s1350, 6
        %s1354 = sadd.s32 %s1352, %s1353
        %s1355 = smul.addr %s1354, 8
        %s1356 = scalar_lea.vmem %s6, %s1355
        // Predicated region
        $region77: #{run.5} parent=43 // pred_check
          %p1357 = pneg %p214
        $region78: #{run.5} parent=43 // pred_check_branch
          %1359 = sbr.rel (%p1357) target = $region80
        $region79: #{run.5} parent=43 // pred_region
          %s1360 = smul.u32 3, %s24
        $region80: #{run.5} parent=43 // pred_fallthru
          _
      $region44: #{run.5} parent=5 // pred_fallthru
        _
      %p1361 = scmp.le.s32.totalorder 2, %s14
      // Predicated region
      $region81: #{run.5} parent=5 // pred_check
        %p1362 = pneg %p1361
      $region82: #{run.5} parent=5 // pred_check_branch
        %1364 = sbr.rel (%p1362) target = $region84
      $region83: #{run.5} parent=5 // pred_region
        %s1365 = ssub.s32 %s14, 2
        // Predicated region
        $region85: #{run.5} parent=83 // pred_check
          %p1366 = pneg %p220
        $region86: #{run.5} parent=83 // pred_check_branch
          %1368 = sbr.rel (%p1366) target = $region88
        $region87: #{run.5} parent=83 // pred_region
          %s1369 = smul.u32 3, %s26
          %p1370 = scmp.lt.s32.totalorder %s25, 1
          %s1371 = scalar_select %p1370, %s25, 1
          %p1372 = scmp.lt.s32.totalorder %s1369, 5
          %s1373 = scalar_select %p1372, %s1369, 5
          %s1374 = smul.addr %s1371, 6
          %s1375 = sadd.s32 %s1373, %s1374
          %s1376 = smul.addr %s1375, 8
          %s1377 = scalar_lea.vmem %s6, %s1376
        $region88: #{run.5} parent=83 // pred_fallthru
          _
      $region84: #{run.5} parent=5 // pred_fallthru
        _
    $region6: #{run.5} parent=1 // loop_footer
      %s18 = sadd.s32 1, %s14
    $region7: #{run.5} parent=1 // loop_footer_branch
      %13 = sbr.rel target = $region3
    $region8: #{run.5} parent=1 // loop_exit
      _
    %1378 = vsyncpa [#allocation3], 1
    %s1379 = scalar_lea.sflag [#allocation3], 1
    %1380 = vsyncpa %s1379, 1
    %1381 = vsyncpa [#allocation5], 1

// kernel: run.8
$region0: #{run.8}
  #allocation0 [shape = 'u32[]', space=smem, size = 0x4, offset = 0x4, fixed_abs, tag = 'smem constant byte address 0x4 - core index']
  #allocation1 [shape = 'u32[144,128]{1,0:T(1,128)}', space=vmem, size = 0x12000, scoped, tag = 'internal scratch']
  %s0 = inlined_call_operand.vmem [shape: f32[2,10,8,100], index: 0, kind: input, shape index: {}, may-alias: {0,1,2}]
  %s1 = inlined_call_operand.vmem [shape: f32[2,10,8,100], index: 1, kind: input, shape index: {}, may-alias: {0,1,2}]
  %s2 = inlined_call_operand.vmem [shape: f32[2,10,8,100], index: 2, kind: input, shape index: {}, may-alias: {0,1,2}]
  %s3 = inlined_call_operand.vmem [shape: f32[2,10,8,100], index: 3, kind: input, shape index: {}, may-alias: {3,4,5}]
  %s4 = inlined_call_operand.vmem [shape: f32[2,10,8,100], index: 4, kind: input, shape index: {}, may-alias: {3,4,5}]
  %s5 = inlined_call_operand.vmem [shape: f32[2,10,8,100], index: 5, kind: input, shape index: {}, may-alias: {3,4,5}]
  %s6 = inlined_call_operand.vmem [shape: f32[1,78], index: 6, kind: input, shape index: {}]
  %s7 = inlined_call_operand.vmem [shape: f32[3,8,144], index: 7, kind: input, shape index: {}]
  %s8 = inlined_call_operand.vmem [shape: f32[8,1], index: 8, kind: input, shape index: {}]
  %s9 = inlined_call_operand.vmem [shape: f32[2,10,8,100], index: 9, kind: output, shape index: {}]
  %s10 = sld [smem:[#allocation0]]
  $region85: #{run.8} parent=0
    _
  %s12 = ssub.s32 1, %s10
  %s13 = scalar_select 0, %s12, %s10
  loop: start=0, step=1, limit=12
  $region2: #{run.8} parent=0 // loop_pre_header
    _
  $region3: #{run.8} parent=0 // loop_header
    %s15 = sphi 0, %s19
    %p16 = scmp.ge.s32.totalorder %s15, 12
    %s22 = sphi 0, %s34
    %s23 = sphi 0, %s30
    %s24 = sphi 0, %s22
    %s25 = sphi 0, %s23
    %s26 = sphi 0, %s24
    %s27 = sphi 0, %s25
    %s39 = sphi 0, %s41
    %s42 = sphi 0, %s39
    %s43 = sphi 0, %s42
    %s59 = sphi 0, %s43
    %s75 = sphi 0, %s77
    %s78 = sphi 0, %s75
    %s79 = sphi 0, %s78
    %s95 = sphi 0, %s79
    %s111 = sphi 0, %s113
    %s114 = sphi 0, %s111
    %s115 = sphi 0, %s114
    %s131 = sphi 0, %s115
    %s139 = sphi 0, %s141
    %s142 = sphi 0, %s139
    %s143 = sphi 0, %s142
    %s159 = sphi 0, %s143
    %s175 = sphi 0, %s177
    %s178 = sphi 0, %s175
    %s179 = sphi 0, %s178
    %s195 = sphi 0, %s179
    %s211 = sphi 0, %s213
    %s214 = sphi 0, %s211
    %s215 = sphi 0, %s214
    %s231 = sphi 0, %s215
    %s235 = sphi 0, %s235
    %s237 = sphi 0, %s235
    %s238 = sphi 0, %s237
    %s252 = sphi 0, %s238
    %s256 = sphi 0, %s256
    %s258 = sphi 0, %s256
    %s259 = sphi 0, %s258
    %s273 = sphi 0, %s259
    %s277 = sphi 0, %s277
    %s279 = sphi 0, %s277
    %s280 = sphi 0, %s279
    %s294 = sphi 0, %s280
    %s302 = sphi 0, %s304
    %s305 = sphi 0, %s302
    %s306 = sphi 0, %s305
    %s322 = sphi 0, %s306
  $region4: #{run.8} parent=0 // loop_header_branch
    %18 = sbr.rel (%p16) target = $region8
  $region5: #{run.8} parent=0 // loop_body
    %s20 = ssub.s32 %s15, 1
    %s21 = ssub.s32 %s15, 2
    %s28 = sadd.s32 1, %s23
    %p29 = scmp.ge.s32.totalorder %s28, 5
    %s30 = scalar_select %p29, 0, %s28
    %s31 = sadd.s32 1, %s22
    %s32 = scalar_select %p29, %s31, %s22
    %p33 = scmp.ge.s32.totalorder %s32, 2
    %s34 = scalar_select %p33, 0, %s32
    %s35 = ssub.s32 %s22, %s34
    %s36 = ssub.s32 %s23, %s30
    %s37 = sor.u32 %s35, %s36
    %p38 = scmp.eq.s32.totalorder %s37, 0
    %s40 = sadd.s32 %s39, 1
    %s41 = scalar_select %p38, %s39, %s40
    %p44 = pneg %p38
    %p45 = scmp.eq.s32.totalorder %s15, 9
    %p46 = por %p44, %p45
    %p47 = scmp.ne.s32.totalorder %s39, %s42
    %p48 = scmp.eq.s32.totalorder %s15, 0
    %p49 = por %p47, %p48
    %p50 = scmp.ne.s32.totalorder %s39, %s42
    %p51 = scmp.eq.s32.totalorder %s20, 9
    %p52 = por %p50, %p51
    %p53 = scmp.ne.s32.totalorder %s42, %s43
    %p54 = scmp.eq.s32.totalorder %s20, 0
    %p55 = por %p53, %p54
    %p56 = scmp.ne.s32.totalorder %s42, %s43
    %p57 = scmp.eq.s32.totalorder %s21, 9
    %p58 = por %p56, %p57
    %p60 = scmp.ne.s32.totalorder %s43, %s59
    %p61 = scmp.eq.s32.totalorder %s21, 0
    %p62 = por %p60, %p61
    %s63 = smul.u32 %s23, 2
    %s64 = ssub.s32 %s63, 1
    %p65 = scmp.gt.s32.totalorder %s64, 0
    %s66 = scalar_select %p65, %s64, 0
    %s67 = smul.u32 %s30, 2
    %s68 = ssub.s32 %s67, 1
    %p69 = scmp.gt.s32.totalorder %s68, 0
    %s70 = scalar_select %p69, %s68, 0
    %s71 = ssub.s32 %s22, %s34
    %s72 = ssub.s32 %s66, %s70
    %s73 = sor.u32 %s71, %s72
    %p74 = scmp.eq.s32.totalorder %s73, 0
    %s76 = sadd.s32 %s75, 1
    %s77 = scalar_select %p74, %s75, %s76
    %p80 = pneg %p74
    %p81 = scmp.eq.s32.totalorder %s15, 9
    %p82 = por %p80, %p81
    %p83 = scmp.ne.s32.totalorder %s75, %s78
    %p84 = scmp.eq.s32.totalorder %s15, 0
    %p85 = por %p83, %p84
    %p86 = scmp.ne.s32.totalorder %s75, %s78
    %p87 = scmp.eq.s32.totalorder %s20, 9
    %p88 = por %p86, %p87
    %p89 = scmp.ne.s32.totalorder %s78, %s79
    %p90 = scmp.eq.s32.totalorder %s20, 0
    %p91 = por %p89, %p90
    %p92 = scmp.ne.s32.totalorder %s78, %s79
    %p93 = scmp.eq.s32.totalorder %s21, 9
    %p94 = por %p92, %p93
    %p96 = scmp.ne.s32.totalorder %s79, %s95
    %p97 = scmp.eq.s32.totalorder %s21, 0
    %p98 = por %p96, %p97
    %s99 = smul.u32 %s23, 2
    %s100 = sadd.s32 %s99, 2
    %p101 = scmp.lt.s32.totalorder %s100, 9
    %s102 = scalar_select %p101, %s100, 9
    %s103 = smul.u32 %s30, 2
    %s104 = sadd.s32 %s103, 2
    %p105 = scmp.lt.s32.totalorder %s104, 9
    %s106 = scalar_select %p105, %s104, 9
    %s107 = ssub.s32 %s22, %s34
    %s108 = ssub.s32 %s102, %s106
    %s109 = sor.u32 %s107, %s108
    %p110 = scmp.eq.s32.totalorder %s109, 0
    %s112 = sadd.s32 %s111, 1
    %s113 = scalar_select %p110, %s111, %s112
    %p116 = pneg %p110
    %p117 = scmp.eq.s32.totalorder %s15, 9
    %p118 = por %p116, %p117
    %p119 = scmp.ne.s32.totalorder %s111, %s114
    %p120 = scmp.eq.s32.totalorder %s15, 0
    %p121 = por %p119, %p120
    %p122 = scmp.ne.s32.totalorder %s111, %s114
    %p123 = scmp.eq.s32.totalorder %s20, 9
    %p124 = por %p122, %p123
    %p125 = scmp.ne.s32.totalorder %s114, %s115
    %p126 = scmp.eq.s32.totalorder %s20, 0
    %p127 = por %p125, %p126
    %p128 = scmp.ne.s32.totalorder %s114, %s115
    %p129 = scmp.eq.s32.totalorder %s21, 9
    %p130 = por %p128, %p129
    %p132 = scmp.ne.s32.totalorder %s115, %s131
    %p133 = scmp.eq.s32.totalorder %s21, 0
    %p134 = por %p132, %p133
    %s135 = ssub.s32 %s22, %s34
    %s136 = ssub.s32 %s23, %s30
    %s137 = sor.u32 %s135, %s136
    %p138 = scmp.eq.s32.totalorder %s137, 0
    %s140 = sadd.s32 %s139, 1
    %s141 = scalar_select %p138, %s139, %s140
    %p144 = pneg %p138
    %p145 = scmp.eq.s32.totalorder %s15, 9
    %p146 = por %p144, %p145
    %p147 = scmp.ne.s32.totalorder %s139, %s142
    %p148 = scmp.eq.s32.totalorder %s15, 0
    %p149 = por %p147, %p148
    %p150 = scmp.ne.s32.totalorder %s139, %s142
    %p151 = scmp.eq.s32.totalorder %s20, 9
    %p152 = por %p150, %p151
    %p153 = scmp.ne.s32.totalorder %s142, %s143
    %p154 = scmp.eq.s32.totalorder %s20, 0
    %p155 = por %p153, %p154
    %p156 = scmp.ne.s32.totalorder %s142, %s143
    %p157 = scmp.eq.s32.totalorder %s21, 9
    %p158 = por %p156, %p157
    %p160 = scmp.ne.s32.totalorder %s143, %s159
    %p161 = scmp.eq.s32.totalorder %s21, 0
    %p162 = por %p160, %p161
    %s163 = smul.u32 %s23, 2
    %s164 = ssub.s32 %s163, 1
    %p165 = scmp.gt.s32.totalorder %s164, 0
    %s166 = scalar_select %p165, %s164, 0
    %s167 = smul.u32 %s30, 2
    %s168 = ssub.s32 %s167, 1
    %p169 = scmp.gt.s32.totalorder %s168, 0
    %s170 = scalar_select %p169, %s168, 0
    %s171 = ssub.s32 %s22, %s34
    %s172 = ssub.s32 %s166, %s170
    %s173 = sor.u32 %s171, %s172
    %p174 = scmp.eq.s32.totalorder %s173, 0
    %s176 = sadd.s32 %s175, 1
    %s177 = scalar_select %p174, %s175, %s176
    %p180 = pneg %p174
    %p181 = scmp.eq.s32.totalorder %s15, 9
    %p182 = por %p180, %p181
    %p183 = scmp.ne.s32.totalorder %s175, %s178
    %p184 = scmp.eq.s32.totalorder %s15, 0
    %p185 = por %p183, %p184
    %p186 = scmp.ne.s32.totalorder %s175, %s178
    %p187 = scmp.eq.s32.totalorder %s20, 9
    %p188 = por %p186, %p187
    %p189 = scmp.ne.s32.totalorder %s178, %s179
    %p190 = scmp.eq.s32.totalorder %s20, 0
    %p191 = por %p189, %p190
    %p192 = scmp.ne.s32.totalorder %s178, %s179
    %p193 = scmp.eq.s32.totalorder %s21, 9
    %p194 = por %p192, %p193
    %p196 = scmp.ne.s32.totalorder %s179, %s195
    %p197 = scmp.eq.s32.totalorder %s21, 0
    %p198 = por %p196, %p197
    %s199 = smul.u32 %s23, 2
    %s200 = sadd.s32 %s199, 2
    %p201 = scmp.lt.s32.totalorder %s200, 9
    %s202 = scalar_select %p201, %s200, 9
    %s203 = smul.u32 %s30, 2
    %s204 = sadd.s32 %s203, 2
    %p205 = scmp.lt.s32.totalorder %s204, 9
    %s206 = scalar_select %p205, %s204, 9
    %s207 = ssub.s32 %s22, %s34
    %s208 = ssub.s32 %s202, %s206
    %s209 = sor.u32 %s207, %s208
    %p210 = scmp.eq.s32.totalorder %s209, 0
    %s212 = sadd.s32 %s211, 1
    %s213 = scalar_select %p210, %s211, %s212
    %p216 = pneg %p210
    %p217 = scmp.eq.s32.totalorder %s15, 9
    %p218 = por %p216, %p217
    %p219 = scmp.ne.s32.totalorder %s211, %s214
    %p220 = scmp.eq.s32.totalorder %s15, 0
    %p221 = por %p219, %p220
    %p222 = scmp.ne.s32.totalorder %s211, %s214
    %p223 = scmp.eq.s32.totalorder %s20, 9
    %p224 = por %p222, %p223
    %p225 = scmp.ne.s32.totalorder %s214, %s215
    %p226 = scmp.eq.s32.totalorder %s20, 0
    %p227 = por %p225, %p226
    %p228 = scmp.ne.s32.totalorder %s214, %s215
    %p229 = scmp.eq.s32.totalorder %s21, 9
    %p230 = por %p228, %p229
    %p232 = scmp.ne.s32.totalorder %s215, %s231
    %p233 = scmp.eq.s32.totalorder %s21, 0
    %p234 = por %p232, %p233
    %s236 = sadd.s32 %s235, 1
    %p239 = scmp.eq.s32.totalorder %s15, 9
    %p240 = scmp.ne.s32.totalorder %s235, %s237
    %p241 = scmp.eq.s32.totalorder %s15, 0
    %p242 = por %p240, %p241
    %p243 = scmp.ne.s32.totalorder %s235, %s237
    %p244 = scmp.eq.s32.totalorder %s20, 9
    %p245 = por %p243, %p244
    %p246 = scmp.ne.s32.totalorder %s237, %s238
    %p247 = scmp.eq.s32.totalorder %s20, 0
    %p248 = por %p246, %p247
    %p249 = scmp.ne.s32.totalorder %s237, %s238
    %p250 = scmp.eq.s32.totalorder %s21, 9
    %p251 = por %p249, %p250
    %p253 = scmp.ne.s32.totalorder %s238, %s252
    %p254 = scmp.eq.s32.totalorder %s21, 0
    %p255 = por %p253, %p254
    %s257 = sadd.s32 %s256, 1
    %p260 = scmp.eq.s32.totalorder %s15, 9
    %p261 = scmp.ne.s32.totalorder %s256, %s258
    %p262 = scmp.eq.s32.totalorder %s15, 0
    %p263 = por %p261, %p262
    %p264 = scmp.ne.s32.totalorder %s256, %s258
    %p265 = scmp.eq.s32.totalorder %s20, 9
    %p266 = por %p264, %p265
    %p267 = scmp.ne.s32.totalorder %s258, %s259
    %p268 = scmp.eq.s32.totalorder %s20, 0
    %p269 = por %p267, %p268
    %p270 = scmp.ne.s32.totalorder %s258, %s259
    %p271 = scmp.eq.s32.totalorder %s21, 9
    %p272 = por %p270, %p271
    %p274 = scmp.ne.s32.totalorder %s259, %s273
    %p275 = scmp.eq.s32.totalorder %s21, 0
    %p276 = por %p274, %p275
    %s278 = sadd.s32 %s277, 1
    %p281 = scmp.eq.s32.totalorder %s15, 9
    %p282 = scmp.ne.s32.totalorder %s277, %s279
    %p283 = scmp.eq.s32.totalorder %s15, 0
    %p284 = por %p282, %p283
    %p285 = scmp.ne.s32.totalorder %s277, %s279
    %p286 = scmp.eq.s32.totalorder %s20, 9
    %p287 = por %p285, %p286
    %p288 = scmp.ne.s32.totalorder %s279, %s280
    %p289 = scmp.eq.s32.totalorder %s20, 0
    %p290 = por %p288, %p289
    %p291 = scmp.ne.s32.totalorder %s279, %s280
    %p292 = scmp.eq.s32.totalorder %s21, 9
    %p293 = por %p291, %p292
    %p295 = scmp.ne.s32.totalorder %s280, %s294
    %p296 = scmp.eq.s32.totalorder %s21, 0
    %p297 = por %p295, %p296
    %s298 = ssub.s32 %s22, %s34
    %s299 = ssub.s32 %s23, %s30
    %s300 = sor.u32 %s298, %s299
    %p301 = scmp.eq.s32.totalorder %s300, 0
    %s303 = sadd.s32 %s302, 1
    %s304 = scalar_select %p301, %s302, %s303
    %p307 = pneg %p301
    %p308 = scmp.eq.s32.totalorder %s15, 9
    %p309 = por %p307, %p308
    %p310 = scmp.ne.s32.totalorder %s302, %s305
    %p311 = scmp.eq.s32.totalorder %s15, 0
    %p312 = por %p310, %p311
    %p313 = scmp.ne.s32.totalorder %s302, %s305
    %p314 = scmp.eq.s32.totalorder %s20, 9
    %p315 = por %p313, %p314
    %p316 = scmp.ne.s32.totalorder %s305, %s306
    %p317 = scmp.eq.s32.totalorder %s20, 0
    %p318 = por %p316, %p317
    %p319 = scmp.ne.s32.totalorder %s305, %s306
    %p320 = scmp.eq.s32.totalorder %s21, 9
    %p321 = por %p319, %p320
    %p323 = scmp.ne.s32.totalorder %s306, %s322
    %p324 = scmp.eq.s32.totalorder %s21, 0
    %p325 = por %p323, %p324
    %p326 = scmp.le.s32.totalorder 1, %s15
    %p327 = scmp.lt.s32.totalorder %s15, 11
    %p328 = pnand %p326, %p327
    %p329 = pneg %p328
    // Predicated region
    $region9: #{run.8} parent=5 // pred_check
      _
    $region10: #{run.8} parent=5 // pred_check_branch
      %331 = sbr.rel (%p328) target = $region12
    $region11: #{run.8} parent=5 // pred_region
      %s332 = ssub.s32 %s15, 1
      // Predicated region
      $region13: #{run.8} parent=11 // pred_check
        %p333 = pneg %p248
      $region14: #{run.8} parent=11 // pred_check_branch
        %335 = sbr.rel (%p333) target = $region16
      $region15: #{run.8} parent=11 // pred_region
        _
      $region16: #{run.8} parent=11 // pred_fallthru
        _
      // Predicated region
      $region17: #{run.8} parent=11 // pred_check
        %p336 = pneg %p269
      $region18: #{run.8} parent=11 // pred_check_branch
        %338 = sbr.rel (%p336) target = $region20
      $region19: #{run.8} parent=11 // pred_region
        _
      $region20: #{run.8} parent=11 // pred_fallthru
        _
      // Predicated region
      $region21: #{run.8} parent=11 // pred_check
        %p339 = pneg %p290
      $region22: #{run.8} parent=11 // pred_check_branch
        %341 = sbr.rel (%p339) target = $region24
      $region23: #{run.8} parent=11 // pred_region
        _
      $region24: #{run.8} parent=11 // pred_fallthru
        _
    $region12: #{run.8} parent=5 // pred_fallthru
      _
    %p342 = scmp.lt.s32.totalorder %s15, 10
    // Predicated region
    $region25: #{run.8} parent=5 // pred_check
      %p343 = pneg %p342
    $region26: #{run.8} parent=5 // pred_check_branch
      %345 = sbr.rel (%p343) target = $region28
    $region27: #{run.8} parent=5 // pred_region
      // Predicated region
      $region29: #{run.8} parent=27 // pred_check
        %p346 = pneg %p49
      $region30: #{run.8} parent=27 // pred_check_branch
        %348 = sbr.rel (%p346) target = $region32
      $region31: #{run.8} parent=27 // pred_region
        %s349 = smul.u32 2, %s23
        %p350 = scmp.lt.s32.totalorder %s22, 1
        %s351 = scalar_select %p350, %s22, 1
        %p352 = scmp.lt.s32.totalorder %s349, 9
        %s353 = scalar_select %p352, %s349, 9
        %s354 = smul.addr %s351, 10
        %s355 = sadd.s32 %s353, %s354
        %s356 = smul.addr %s355, 8
        %s357 = scalar_lea.vmem %s0, %s356
        %s358 = smul.u32 2, %s23
      $region32: #{run.8} parent=27 // pred_fallthru
        _
      // Predicated region
      $region33: #{run.8} parent=27 // pred_check
        %p359 = pneg %p85
      $region34: #{run.8} parent=27 // pred_check_branch
        %361 = sbr.rel (%p359) target = $region36
      $region35: #{run.8} parent=27 // pred_region
        %s362 = smul.u32 %s23, 2
        %s363 = ssub.s32 %s362, 1
        %p364 = scmp.gt.s32.totalorder %s363, 0
        %s365 = scalar_select %p364, %s363, 0
        %p366 = scmp.lt.s32.totalorder %s22, 1
        %s367 = scalar_select %p366, %s22, 1
        %p368 = scmp.lt.s32.totalorder %s365, 9
        %s369 = scalar_select %p368, %s365, 9
        %s370 = smul.addr %s367, 10
        %s371 = sadd.s32 %s369, %s370
        %s372 = smul.addr %s371, 8
        %s373 = scalar_lea.vmem %s1, %s372
        %s374 = smul.u32 %s23, 2
        %s375 = ssub.s32 %s374, 1
        %p376 = scmp.gt.s32.totalorder %s375, 0
        %s377 = scalar_select %p376, %s375, 0
      $region36: #{run.8} parent=27 // pred_fallthru
        _
      // Predicated region
      $region37: #{run.8} parent=27 // pred_check
        %p378 = pneg %p121
      $region38: #{run.8} parent=27 // pred_check_branch
        %380 = sbr.rel (%p378) target = $region40
      $region39: #{run.8} parent=27 // pred_region
        %s381 = smul.u32 %s23, 2
        %s382 = sadd.s32 %s381, 2
        %p383 = scmp.lt.s32.totalorder %s382, 9
        %s384 = scalar_select %p383, %s382, 9
        %p385 = scmp.lt.s32.totalorder %s22, 1
        %s386 = scalar_select %p385, %s22, 1
        %p387 = scmp.lt.s32.totalorder %s384, 9
        %s388 = scalar_select %p387, %s384, 9
        %s389 = smul.addr %s386, 10
        %s390 = sadd.s32 %s388, %s389
        %s391 = smul.addr %s390, 8
        %s392 = scalar_lea.vmem %s2, %s391
        %s393 = smul.u32 %s23, 2
        %s394 = sadd.s32 %s393, 2
        %p395 = scmp.lt.s32.totalorder %s394, 9
        %s396 = scalar_select %p395, %s394, 9
      $region40: #{run.8} parent=27 // pred_fallthru
        _
      // Predicated region
      $region41: #{run.8} parent=27 // pred_check
        %p397 = pneg %p149
      $region42: #{run.8} parent=27 // pred_check_branch
        %399 = sbr.rel (%p397) target = $region44
      $region43: #{run.8} parent=27 // pred_region
        %s400 = smul.u32 2, %s23
        %p401 = scmp.lt.s32.totalorder %s22, 1
        %s402 = scalar_select %p401, %s22, 1
        %p403 = scmp.lt.s32.totalorder %s400, 9
        %s404 = scalar_select %p403, %s400, 9
        %s405 = smul.addr %s402, 10
        %s406 = sadd.s32 %s404, %s405
        %s407 = smul.addr %s406, 8
        %s408 = scalar_lea.vmem %s3, %s407
        %s409 = smul.u32 2, %s23
      $region44: #{run.8} parent=27 // pred_fallthru
        _
      // Predicated region
      $region45: #{run.8} parent=27 // pred_check
        %p410 = pneg %p185
      $region46: #{run.8} parent=27 // pred_check_branch
        %412 = sbr.rel (%p410) target = $region48
      $region47: #{run.8} parent=27 // pred_region
        %s413 = smul.u32 %s23, 2
        %s414 = ssub.s32 %s413, 1
        %p415 = scmp.gt.s32.totalorder %s414, 0
        %s416 = scalar_select %p415, %s414, 0
        %p417 = scmp.lt.s32.totalorder %s22, 1
        %s418 = scalar_select %p417, %s22, 1
        %p419 = scmp.lt.s32.totalorder %s416, 9
        %s420 = scalar_select %p419, %s416, 9
        %s421 = smul.addr %s418, 10
        %s422 = sadd.s32 %s420, %s421
        %s423 = smul.addr %s422, 8
        %s424 = scalar_lea.vmem %s4, %s423
        %s425 = smul.u32 %s23, 2
        %s426 = ssub.s32 %s425, 1
        %p427 = scmp.gt.s32.totalorder %s426, 0
        %s428 = scalar_select %p427, %s426, 0
      $region48: #{run.8} parent=27 // pred_fallthru
        _
      // Predicated region
      $region49: #{run.8} parent=27 // pred_check
        %p429 = pneg %p221
      $region50: #{run.8} parent=27 // pred_check_branch
        %431 = sbr.rel (%p429) target = $region52
      $region51: #{run.8} parent=27 // pred_region
        %s432 = smul.u32 %s23, 2
        %s433 = sadd.s32 %s432, 2
        %p434 = scmp.lt.s32.totalorder %s433, 9
        %s435 = scalar_select %p434, %s433, 9
        %p436 = scmp.lt.s32.totalorder %s22, 1
        %s437 = scalar_select %p436, %s22, 1
        %p438 = scmp.lt.s32.totalorder %s435, 9
        %s439 = scalar_select %p438, %s435, 9
        %s440 = smul.addr %s437, 10
        %s441 = sadd.s32 %s439, %s440
        %s442 = smul.addr %s441, 8
        %s443 = scalar_lea.vmem %s5, %s442
        %s444 = smul.u32 %s23, 2
        %s445 = sadd.s32 %s444, 2
        %p446 = scmp.lt.s32.totalorder %s445, 9
        %s447 = scalar_select %p446, %s445, 9
      $region52: #{run.8} parent=27 // pred_fallthru
        _
    $region28: #{run.8} parent=5 // pred_fallthru
      _
    %p448 = scmp.le.s32.totalorder 1, %s15
    %p449 = scmp.lt.s32.totalorder %s15, 11
    %p450 = pnand %p448, %p449
    %p451 = pneg %p450
    // Predicated region
    $region53: #{run.8} parent=5 // pred_check
      _
    $region54: #{run.8} parent=5 // pred_check_branch
      %453 = sbr.rel (%p450) target = $region56
    $region55: #{run.8} parent=5 // pred_region
      %s454 = ssub.s32 %s15, 1
      %s455 = smul.u32 2, %s25
      %p456 = scmp.lt.s32.totalorder %s24, 1
      %s457 = scalar_select %p456, %s24, 1
      %p458 = scmp.lt.s32.totalorder %s455, 9
      %s459 = scalar_select %p458, %s455, 9
      %s460 = smul.addr %s457, 10
      %s461 = sadd.s32 %s459, %s460
      %s462 = smul.addr %s461, 8
      %s463 = scalar_lea.vmem %s0, %s462
      %p464 = pneg %p55
      %p465 = pneg %p52
      %s466 = smul.u32 %s25, 2
      %s467 = ssub.s32 %s466, 1
      %p468 = scmp.gt.s32.totalorder %s467, 0
      %s469 = scalar_select %p468, %s467, 0
      %p470 = scmp.lt.s32.totalorder %s24, 1
      %s471 = scalar_select %p470, %s24, 1
      %p472 = scmp.lt.s32.totalorder %s469, 9
      %s473 = scalar_select %p472, %s469, 9
      %s474 = smul.addr %s471, 10
      %s475 = sadd.s32 %s473, %s474
      %s476 = smul.addr %s475, 8
      %s477 = scalar_lea.vmem %s1, %s476
      %p478 = pneg %p91
      %p479 = pneg %p88
      %s480 = smul.u32 %s25, 2
      %s481 = sadd.s32 %s480, 2
      %p482 = scmp.lt.s32.totalorder %s481, 9
      %s483 = scalar_select %p482, %s481, 9
      %p484 = scmp.lt.s32.totalorder %s24, 1
      %s485 = scalar_select %p484, %s24, 1
      %p486 = scmp.lt.s32.totalorder %s483, 9
      %s487 = scalar_select %p486, %s483, 9
      %s488 = smul.addr %s485, 10
      %s489 = sadd.s32 %s487, %s488
      %s490 = smul.addr %s489, 8
      %s491 = scalar_lea.vmem %s2, %s490
      %p492 = pneg %p127
      %p493 = pneg %p124
      %s494 = smul.u32 2, %s25
      %p495 = scmp.lt.s32.totalorder %s24, 1
      %s496 = scalar_select %p495, %s24, 1
      %p497 = scmp.lt.s32.totalorder %s494, 9
      %s498 = scalar_select %p497, %s494, 9
      %s499 = smul.addr %s496, 10
      %s500 = sadd.s32 %s498, %s499
      %s501 = smul.addr %s500, 8
      %s502 = scalar_lea.vmem %s3, %s501
      %p503 = pneg %p155
      %p504 = pneg %p152
      %s505 = smul.u32 %s25, 2
      %s506 = ssub.s32 %s505, 1
      %p507 = scmp.gt.s32.totalorder %s506, 0
      %s508 = scalar_select %p507, %s506, 0
      %p509 = scmp.lt.s32.totalorder %s24, 1
      %s510 = scalar_select %p509, %s24, 1
      %p511 = scmp.lt.s32.totalorder %s508, 9
      %s512 = scalar_select %p511, %s508, 9
      %s513 = smul.addr %s510, 10
      %s514 = sadd.s32 %s512, %s513
      %s515 = smul.addr %s514, 8
      %s516 = scalar_lea.vmem %s4, %s515
      %p517 = pneg %p191
      %p518 = pneg %p188
      %s519 = smul.u32 %s25, 2
      %s520 = sadd.s32 %s519, 2
      %p521 = scmp.lt.s32.totalorder %s520, 9
      %s522 = scalar_select %p521, %s520, 9
      %p523 = scmp.lt.s32.totalorder %s24, 1
      %s524 = scalar_select %p523, %s24, 1
      %p525 = scmp.lt.s32.totalorder %s522, 9
      %s526 = scalar_select %p525, %s522, 9
      %s527 = smul.addr %s524, 10
      %s528 = sadd.s32 %s526, %s527
      %s529 = smul.addr %s528, 8
      %s530 = scalar_lea.vmem %s5, %s529
      %p531 = pneg %p227
      %p532 = pneg %p224
      %p533 = pneg %p248
      %p534 = pneg %p245
      %p535 = pneg %p269
      %p536 = pneg %p266
      %p537 = pneg %p290
      %p538 = pneg %p287
      %p539 = pneg %p318
      %p540 = pneg %p315
      %s541 = smul.u32 2, %s25
      %p542 = scmp.lt.s32.totalorder %s24, 1
      %s543 = scalar_select %p542, %s24, 1
      %p544 = scmp.lt.s32.totalorder %s541, 9
      %s545 = scalar_select %p544, %s541, 9
      %s546 = smul.addr %s543, 10
      %s547 = sadd.s32 %s545, %s546
      %s548 = smul.addr %s547, 8
      %s549 = scalar_lea.vmem %s9, %s548
      %s550 = smul.u32 2, %s25
      %p551 = scmp.lt.s32.totalorder %s24, 1
      %s552 = scalar_select %p551, %s24, 1
      %p553 = scmp.lt.s32.totalorder %s550, 9
      %s554 = scalar_select %p553, %s550, 9
      %s555 = smul.addr %s552, 10
      %s556 = sadd.s32 %s554, %s555
      %s557 = smul.addr %s556, 8
      %s558 = scalar_lea.vmem %s0, %s557
      %s559 = smul.u32 2, %s25
      %s560 = smul.u32 %s25, 2
      %s561 = ssub.s32 %s560, 1
      %p562 = scmp.gt.s32.totalorder %s561, 0
      %s563 = scalar_select %p562, %s561, 0
      %p564 = scmp.lt.s32.totalorder %s24, 1
      %s565 = scalar_select %p564, %s24, 1
      %p566 = scmp.lt.s32.totalorder %s563, 9
      %s567 = scalar_select %p566, %s563, 9
      %s568 = smul.addr %s565, 10
      %s569 = sadd.s32 %s567, %s568
      %s570 = smul.addr %s569, 8
      %s571 = scalar_lea.vmem %s1, %s570
      %s572 = smul.u32 %s25, 2
      %s573 = ssub.s32 %s572, 1
      %p574 = scmp.gt.s32.totalorder %s573, 0
      %s575 = scalar_select %p574, %s573, 0
      %s576 = smul.u32 %s25, 2
      %s577 = sadd.s32 %s576, 2
      %p578 = scmp.lt.s32.totalorder %s577, 9
      %s579 = scalar_select %p578, %s577, 9
      %p580 = scmp.lt.s32.totalorder %s24, 1
      %s581 = scalar_select %p580, %s24, 1
      %p582 = scmp.lt.s32.totalorder %s579, 9
      %s583 = scalar_select %p582, %s579, 9
      %s584 = smul.addr %s581, 10
      %s585 = sadd.s32 %s583, %s584
      %s586 = smul.addr %s585, 8
      %s587 = scalar_lea.vmem %s2, %s586
      %s588 = smul.u32 %s25, 2
      %s589 = sadd.s32 %s588, 2
      %p590 = scmp.lt.s32.totalorder %s589, 9
      %s591 = scalar_select %p590, %s589, 9
      %s592 = smul.u32 2, %s25
      %p593 = scmp.lt.s32.totalorder %s24, 1
      %s594 = scalar_select %p593, %s24, 1
      %p595 = scmp.lt.s32.totalorder %s592, 9
      %s596 = scalar_select %p595, %s592, 9
      %s597 = smul.addr %s594, 10
      %s598 = sadd.s32 %s596, %s597
      %s599 = smul.addr %s598, 8
      %s600 = scalar_lea.vmem %s3, %s599
      %s601 = smul.u32 2, %s25
      %s602 = smul.u32 %s25, 2
      %s603 = ssub.s32 %s602, 1
      %p604 = scmp.gt.s32.totalorder %s603, 0
      %s605 = scalar_select %p604, %s603, 0
      %p606 = scmp.lt.s32.totalorder %s24, 1
      %s607 = scalar_select %p606, %s24, 1
      %p608 = scmp.lt.s32.totalorder %s605, 9
      %s609 = scalar_select %p608, %s605, 9
      %s610 = smul.addr %s607, 10
      %s611 = sadd.s32 %s609, %s610
      %s612 = smul.addr %s611, 8
      %s613 = scalar_lea.vmem %s4, %s612
      %s614 = smul.u32 %s25, 2
      %s615 = ssub.s32 %s614, 1
      %p616 = scmp.gt.s32.totalorder %s615, 0
      %s617 = scalar_select %p616, %s615, 0
      %s618 = smul.u32 %s25, 2
      %s619 = sadd.s32 %s618, 2
      %p620 = scmp.lt.s32.totalorder %s619, 9
      %s621 = scalar_select %p620, %s619, 9
      %p622 = scmp.lt.s32.totalorder %s24, 1
      %s623 = scalar_select %p622, %s24, 1
      %p624 = scmp.lt.s32.totalorder %s621, 9
      %s625 = scalar_select %p624, %s621, 9
      %s626 = smul.addr %s623, 10
      %s627 = sadd.s32 %s625, %s626
      %s628 = smul.addr %s627, 8
      %s629 = scalar_lea.vmem %s5, %s628
      %s630 = smul.u32 %s25, 2
      %s631 = sadd.s32 %s630, 2
      %p632 = scmp.lt.s32.totalorder %s631, 9
      %s633 = scalar_select %p632, %s631, 9
      %s634 = smul.u32 2, %s25
      %p635 = scmp.lt.s32.totalorder %s24, 1
      %s636 = scalar_select %p635, %s24, 1
      %p637 = scmp.lt.s32.totalorder %s634, 9
      %s638 = scalar_select %p637, %s634, 9
      %s639 = smul.addr %s636, 10
      %s640 = sadd.s32 %s638, %s639
      %s641 = smul.addr %s640, 8
      %s642 = scalar_lea.vmem %s9, %s641
      %s643 = smul.u32 2, %s25
      %v644 = vld [vmem:[%s8] sm:$0xff]
      %v645 = vld [vmem:[%s6] sm:$0x1]
      %v646 = vld [vmem:[%s7] sm:$0xff]
      %v647 = vld [vmem:[%s7 + $0x8] sm:$0xff]
      %s648 = scalar_lea.vmem %s7, 16
      %v649 = vld [vmem:[%s648] sm:$0xff]
      %v650 = vld [vmem:[%s648 + $0x8] sm:$0xff]
      %s651 = scalar_lea.vmem %s7, 32
      %v652 = vld [vmem:[%s651] sm:$0xff]
      %v653 = vld [vmem:[%s651 + $0x8] sm:$0xff]
      %v654 = vld [vmem:[%s571] sm:$0xff]
      %v655 = vld [vmem:[%s613] sm:$0xff]
      %657 = vrot.lane.b32.xlu0 %v654, 127
      %v658 = vpop.permute.xlu0 %657
      %661 = vrot.lane.b32.xlu0 %v655, 127
      %v662 = vpop.permute.xlu0 %661
      %664 = vrot.lane.b32.xlu0 %v654, 126
      %v665 = vpop.permute.xlu0 %664
      %667 = vrot.lane.b32.xlu0 %v655, 126
      %v668 = vpop.permute.xlu0 %667
      %670 = vrot.lane.b32.xlu0 %v654, 118
      %v671 = vpop.permute.xlu0 %670
      %673 = vrot.lane.b32.xlu0 %v655, 118
      %v674 = vpop.permute.xlu0 %673
      %676 = vrot.lane.b32.xlu0 %v654, 117
      %v677 = vpop.permute.xlu0 %676
      %679 = vrot.lane.b32.xlu0 %v655, 117
      %v680 = vpop.permute.xlu0 %679
      %682 = vrot.lane.b32.xlu0 %v654, 116
      %v683 = vpop.permute.xlu0 %682
      %685 = vrot.lane.b32.xlu0 %v655, 116
      %v686 = vpop.permute.xlu0 %685
      %688 = vrot.lane.b32.xlu0 %v654, 108
      %v689 = vpop.permute.xlu0 %688
      %691 = vrot.lane.b32.xlu0 %v655, 108
      %v692 = vpop.permute.xlu0 %691
      %694 = vrot.lane.b32.xlu0 %v654, 107
      %v695 = vpop.permute.xlu0 %694
      %697 = vrot.lane.b32.xlu0 %v655, 107
      %v698 = vpop.permute.xlu0 %697
      %700 = vrot.lane.b32.xlu0 %v654, 106
      %v701 = vpop.permute.xlu0 %700
      %702 = vrot.lane.b32.xlu0 %v655, 106
      %v703 = vpop.permute.xlu0 %702
      %v706 = vld [vmem:[%s558] sm:$0xff]
      %v707 = vld [vmem:[%s600] sm:$0xff]
      %709 = vrot.lane.b32.xlu0 %v706, 127
      %v710 = vpop.permute.xlu0 %709
      %713 = vrot.lane.b32.xlu0 %v707, 127
      %v714 = vpop.permute.xlu0 %713
      %716 = vrot.lane.b32.xlu0 %v706, 126
      %v717 = vpop.permute.xlu0 %716
      %719 = vrot.lane.b32.xlu0 %v707, 126
      %v720 = vpop.permute.xlu0 %719
      %722 = vrot.lane.b32.xlu0 %v706, 118
      %v723 = vpop.permute.xlu0 %722
      %725 = vrot.lane.b32.xlu0 %v707, 118
      %v726 = vpop.permute.xlu0 %725
      %728 = vrot.lane.b32.xlu0 %v706, 117
      %v729 = vpop.permute.xlu0 %728
      %731 = vrot.lane.b32.xlu0 %v707, 117
      %v732 = vpop.permute.xlu0 %731
      %734 = vrot.lane.b32.xlu0 %v706, 116
      %v735 = vpop.permute.xlu0 %734
      %737 = vrot.lane.b32.xlu0 %v707, 116
      %v738 = vpop.permute.xlu0 %737
      %740 = vrot.lane.b32.xlu0 %v706, 108
      %v741 = vpop.permute.xlu0 %740
      %743 = vrot.lane.b32.xlu0 %v707, 108
      %v744 = vpop.permute.xlu0 %743
      %746 = vrot.lane.b32.xlu0 %v706, 107
      %v747 = vpop.permute.xlu0 %746
      %749 = vrot.lane.b32.xlu0 %v707, 107
      %v750 = vpop.permute.xlu0 %749
      %752 = vrot.lane.b32.xlu0 %v706, 106
      %v753 = vpop.permute.xlu0 %752
      %754 = vrot.lane.b32.xlu0 %v707, 106
      %v755 = vpop.permute.xlu0 %754
      %s758 = scalar_lea.vmem %s558, 8
      %v759 = vld [vmem:[%s758] sm:$0xff]
      %s760 = scalar_lea.vmem %s600, 8
      %v761 = vld [vmem:[%s760] sm:$0xff]
      %763 = vrot.lane.b32.xlu0 %v759, 127
      %v764 = vpop.permute.xlu0 %763
      %767 = vrot.lane.b32.xlu0 %v761, 127
      %v768 = vpop.permute.xlu0 %767
      %770 = vrot.lane.b32.xlu0 %v759, 126
      %v771 = vpop.permute.xlu0 %770
      %773 = vrot.lane.b32.xlu0 %v761, 126
      %v774 = vpop.permute.xlu0 %773
      %776 = vrot.lane.b32.xlu0 %v759, 118
      %v777 = vpop.permute.xlu0 %776
      %779 = vrot.lane.b32.xlu0 %v761, 118
      %v780 = vpop.permute.xlu0 %779
      %782 = vrot.lane.b32.xlu0 %v759, 117
      %v783 = vpop.permute.xlu0 %782
      %785 = vrot.lane.b32.xlu0 %v761, 117
      %v786 = vpop.permute.xlu0 %785
      %788 = vrot.lane.b32.xlu0 %v759, 116
      %v789 = vpop.permute.xlu0 %788
      %791 = vrot.lane.b32.xlu0 %v761, 116
      %v792 = vpop.permute.xlu0 %791
      %794 = vrot.lane.b32.xlu0 %v759, 108
      %v795 = vpop.permute.xlu0 %794
      %797 = vrot.lane.b32.xlu0 %v761, 108
      %v798 = vpop.permute.xlu0 %797
      %800 = vrot.lane.b32.xlu0 %v759, 107
      %v801 = vpop.permute.xlu0 %800
      %803 = vrot.lane.b32.xlu0 %v761, 107
      %v804 = vpop.permute.xlu0 %803
      %806 = vrot.lane.b32.xlu0 %v759, 106
      %v807 = vpop.permute.xlu0 %806
      %808 = vrot.lane.b32.xlu0 %v761, 106
      %v809 = vpop.permute.xlu0 %808
      %s812 = smul.u32 %s25, 2
      %p813 = scmp.ge.s32.totalorder %s812, 1
      %p814 = scmp.le.s32.totalorder %s812, 8
      %p815 = pnand %p813, %p814
      %p816 = pneg %p815
      // Predicated region
      $region57: #{run.8} parent=55 // pred_check
        _
      $region58: #{run.8} parent=55 // pred_check_branch
        %818 = sbr.rel (%p815) target = $region60
      $region59: #{run.8} parent=55 // pred_region
        %vm819 = vcmask 130048
        %v821 = vsel %vm819, %v650, 0
        %823 = vmatprep.subr.mxu0 0.0
        %824 = vmatpush1.msra.mxu0 %v706
        %825 = vmatprep.subr.mxu0 0.0
        %826 = vmatpush1.msra.mxu0 %v707
        %827 = vmatprep.subr.mxu0 0.0
        %828 = vmatpush1.msra.mxu0 %v710
        %829 = vmatprep.subr.mxu0 0.0
        %830 = vmatpush1.msra.mxu0 %v714
        %831 = vmatprep.subr.mxu0 0.0
        %832 = vmatpush1.msra.mxu0 %v717
        %833 = vmatprep.subr.mxu0 0.0
        %834 = vmatpush1.msra.mxu0 %v720
        %835 = vmatprep.subr.mxu0 0.0
        %836 = vmatpush1.msra.mxu0 %v723
        %837 = vmatprep.subr.mxu0 0.0
        %838 = vmatpush1.msra.mxu0 %v726
        %839 = vmatprep.subr.mxu0 0.0
        %840 = vmatpush1.msra.mxu0 %v729
        %841 = vmatprep.subr.mxu0 0.0
        %842 = vmatpush1.msra.mxu0 %v732
        %843 = vmatprep.subr.mxu0 0.0
        %844 = vmatpush1.msra.mxu0 %v735
        %845 = vmatprep.subr.mxu0 0.0
        %846 = vmatpush1.msra.mxu0 %v738
        %847 = vmatprep.subr.mxu0 0.0
        %848 = vmatpush1.msra.mxu0 %v741
        %849 = vmatprep.subr.mxu0 0.0
        %850 = vmatpush1.msra.mxu0 %v744
        %851 = vmatprep.subr.mxu0 0.0
        %852 = vmatpush1.msra.mxu0 %v747
        %853 = vmatprep.subr.mxu0 0.0
        %854 = vmatpush1.msra.mxu0 %v750
        %855 = vmatprep.subr.mxu0 0.0
        %856 = vmatpush1.msra.mxu0 %v753
        %857 = vmatprep.subr.mxu0 0.0
        %858 = vmatpush1.msra.mxu0 %v755
        %859 = vmatprep.subr.mxu0 0.0
        %860 = vmatpush1.msra.mxu0 0.0
        %861 = vmatprep.subr.mxu0 0.0
        %862 = vmatpush1.msra.mxu0 0.0
        %863 = vmatprep.subr.mxu0 0.0
        %864 = vmatpush1.msra.mxu0 0.0
        %865 = vmatprep.subr.mxu0 0.0
        %866 = vmatpush1.msra.mxu0 0.0
        %867 = vmatprep.subr.mxu0 0.0
        %868 = vmatpush1.msra.mxu0 0.0
        %869 = vmatprep.subr.mxu0 0.0
        %870 = vmatpush1.msra.mxu0 0.0
        %871 = vmatprep.subr.mxu0 0.0
        %872 = vmatpush1.msra.mxu0 0.0
        %873 = vmatprep.subr.mxu0 0.0
        %874 = vmatpush1.msra.mxu0 0.0
        %875 = vmatprep.subr.mxu0 0.0
        %876 = vmatpush1.msra.mxu0 0.0
        %877 = vmatprep.subr.mxu0 0.0
        %878 = vmatpush1.msra.mxu0 0.0
        %879 = vmatprep.subr.mxu0 0.0
        %880 = vmatpush1.msra.mxu0 0.0
        %881 = vmatprep.subr.mxu0 0.0
        %882 = vmatpush1.msra.mxu0 0.0
        %883 = vmatprep.subr.mxu0 0.0
        %884 = vmatpush1.msra.mxu0 0.0
        %885 = vmatprep.subr.mxu0 0.0
        %886 = vmatpush1.msra.mxu0 0.0
        %887 = vmatprep.mubr.f32.mxu0 %v821
        %888 = vmatmul.mubr.f32.gmra.mrb[0].mxu0 %v649
        %v889 = vpop.f32.mrb[0].mxu0
        %v890 = vadd.f32 0.0, %v889
        %v891 = vpop.f32.mrb[0].mxu0
        %892 = vdwg.mxu0
        %v894 = vsel %vm819, %v647, 0
        %896 = vmatprep.subr.mxu0 0.0
        %897 = vmatpush1.msra.mxu0 %v654
        %898 = vmatprep.subr.mxu0 0.0
        %899 = vmatpush1.msra.mxu0 %v655
        %900 = vmatprep.subr.mxu0 0.0
        %901 = vmatpush1.msra.mxu0 %v658
        %902 = vmatprep.subr.mxu0 0.0
        %903 = vmatpush1.msra.mxu0 %v662
        %904 = vmatprep.subr.mxu0 0.0
        %905 = vmatpush1.msra.mxu0 %v665
        %906 = vmatprep.subr.mxu0 0.0
        %907 = vmatpush1.msra.mxu0 %v668
        %908 = vmatprep.subr.mxu0 0.0
        %909 = vmatpush1.msra.mxu0 %v671
        %910 = vmatprep.subr.mxu0 0.0
        %911 = vmatpush1.msra.mxu0 %v674
        %912 = vmatprep.subr.mxu0 0.0
        %913 = vmatpush1.msra.mxu0 %v677
        %914 = vmatprep.subr.mxu0 0.0
        %915 = vmatpush1.msra.mxu0 %v680
        %916 = vmatprep.subr.mxu0 0.0
        %917 = vmatpush1.msra.mxu0 %v683
        %918 = vmatprep.subr.mxu0 0.0
        %919 = vmatpush1.msra.mxu0 %v686
        %920 = vmatprep.subr.mxu0 0.0
        %921 = vmatpush1.msra.mxu0 %v689
        %922 = vmatprep.subr.mxu0 0.0
        %923 = vmatpush1.msra.mxu0 %v692
        %924 = vmatprep.subr.mxu0 0.0
        %925 = vmatpush1.msra.mxu0 %v695
        %926 = vmatprep.subr.mxu0 0.0
        %927 = vmatpush1.msra.mxu0 %v698
        %928 = vmatprep.subr.mxu0 0.0
        %929 = vmatpush1.msra.mxu0 %v701
        %930 = vmatprep.subr.mxu0 0.0
        %931 = vmatpush1.msra.mxu0 %v703
        %932 = vmatprep.subr.mxu0 0.0
        %933 = vmatpush1.msra.mxu0 0.0
        %934 = vmatprep.subr.mxu0 0.0
        %935 = vmatpush1.msra.mxu0 0.0
        %936 = vmatprep.subr.mxu0 0.0
        %937 = vmatpush1.msra.mxu0 0.0
        %938 = vmatprep.subr.mxu0 0.0
        %939 = vmatpush1.msra.mxu0 0.0
        %940 = vmatprep.subr.mxu0 0.0
        %941 = vmatpush1.msra.mxu0 0.0
        %942 = vmatprep.subr.mxu0 0.0
        %943 = vmatpush1.msra.mxu0 0.0
        %944 = vmatprep.subr.mxu0 0.0
        %945 = vmatpush1.msra.mxu0 0.0
        %946 = vmatprep.subr.mxu0 0.0
        %947 = vmatpush1.msra.mxu0 0.0
        %948 = vmatprep.subr.mxu0 0.0
        %949 = vmatpush1.msra.mxu0 0.0
        %950 = vmatprep.subr.mxu0 0.0
        %951 = vmatpush1.msra.mxu0 0.0
        %952 = vmatprep.subr.mxu0 0.0
        %953 = vmatpush1.msra.mxu0 0.0
        %954 = vmatprep.subr.mxu0 0.0
        %955 = vmatpush1.msra.mxu0 0.0
        %956 = vmatprep.subr.mxu0 0.0
        %957 = vmatpush1.msra.mxu0 0.0
        %958 = vmatprep.subr.mxu0 0.0
        %959 = vmatpush1.msra.mxu0 0.0
        %960 = vmatprep.mubr.f32.mxu0 %v894
        %961 = vmatmul.mubr.f32.gmra.mrb[0].mxu0 %v646
        %v962 = vpop.f32.mrb[0].mxu0
        %v963 = vadd.f32 %v890, %v962
        %v964 = vpop.f32.mrb[0].mxu0
        %965 = vdwg.mxu0
        %v967 = vsel %vm819, %v653, 0
        %969 = vmatprep.subr.mxu0 0.0
        %970 = vmatpush1.msra.mxu0 %v759
        %971 = vmatprep.subr.mxu0 0.0
        %972 = vmatpush1.msra.mxu0 %v761
        %973 = vmatprep.subr.mxu0 0.0
        %974 = vmatpush1.msra.mxu0 %v764
        %975 = vmatprep.subr.mxu0 0.0
        %976 = vmatpush1.msra.mxu0 %v768
        %977 = vmatprep.subr.mxu0 0.0
        %978 = vmatpush1.msra.mxu0 %v771
        %979 = vmatprep.subr.mxu0 0.0
        %980 = vmatpush1.msra.mxu0 %v774
        %981 = vmatprep.subr.mxu0 0.0
        %982 = vmatpush1.msra.mxu0 %v777
        %983 = vmatprep.subr.mxu0 0.0
        %984 = vmatpush1.msra.mxu0 %v780
        %985 = vmatprep.subr.mxu0 0.0
        %986 = vmatpush1.msra.mxu0 %v783
        %987 = vmatprep.subr.mxu0 0.0
        %988 = vmatpush1.msra.mxu0 %v786
        %989 = vmatprep.subr.mxu0 0.0
        %990 = vmatpush1.msra.mxu0 %v789
        %991 = vmatprep.subr.mxu0 0.0
        %992 = vmatpush1.msra.mxu0 %v792
        %993 = vmatprep.subr.mxu0 0.0
        %994 = vmatpush1.msra.mxu0 %v795
        %995 = vmatprep.subr.mxu0 0.0
        %996 = vmatpush1.msra.mxu0 %v798
        %997 = vmatprep.subr.mxu0 0.0
        %998 = vmatpush1.msra.mxu0 %v801
        %999 = vmatprep.subr.mxu0 0.0
        %1000 = vmatpush1.msra.mxu0 %v804
        %1001 = vmatprep.subr.mxu0 0.0
        %1002 = vmatpush1.msra.mxu0 %v807
        %1003 = vmatprep.subr.mxu0 0.0
        %1004 = vmatpush1.msra.mxu0 %v809
        %1005 = vmatprep.subr.mxu0 0.0
        %1006 = vmatpush1.msra.mxu0 0.0
        %1007 = vmatprep.subr.mxu0 0.0
        %1008 = vmatpush1.msra.mxu0 0.0
        %1009 = vmatprep.subr.mxu0 0.0
        %1010 = vmatpush1.msra.mxu0 0.0
        %1011 = vmatprep.subr.mxu0 0.0
        %1012 = vmatpush1.msra.mxu0 0.0
        %1013 = vmatprep.subr.mxu0 0.0
        %1014 = vmatpush1.msra.mxu0 0.0
        %1015 = vmatprep.subr.mxu0 0.0
        %1016 = vmatpush1.msra.mxu0 0.0
        %1017 = vmatprep.subr.mxu0 0.0
        %1018 = vmatpush1.msra.mxu0 0.0
        %1019 = vmatprep.subr.mxu0 0.0
        %1020 = vmatpush1.msra.mxu0 0.0
        %1021 = vmatprep.subr.mxu0 0.0
        %1022 = vmatpush1.msra.mxu0 0.0
        %1023 = vmatprep.subr.mxu0 0.0
        %1024 = vmatpush1.msra.mxu0 0.0
        %1025 = vmatprep.subr.mxu0 0.0
        %1026 = vmatpush1.msra.mxu0 0.0
        %1027 = vmatprep.subr.mxu0 0.0
        %1028 = vmatpush1.msra.mxu0 0.0
        %1029 = vmatprep.subr.mxu0 0.0
        %1030 = vmatpush1.msra.mxu0 0.0
        %1031 = vmatprep.subr.mxu0 0.0
        %1032 = vmatpush1.msra.mxu0 0.0
        %1033 = vmatprep.mubr.f32.mxu0 %v967
        %1034 = vmatmul.mubr.f32.gmra.mrb[0].mxu0 %v652
        %v1035 = vpop.f32.mrb[0].mxu0
        %v1036 = vadd.f32 0.0, %v1035
        %v1037 = vpop.f32.mrb[0].mxu0
        %1038 = vdwg.mxu0
        %v1039 = vadd.f32 %v963, %v1036
        %1041 = vset.pattern.permute.xlu0 0
        %1042 = vperm.xlu0 %1041, %v644
        %v1043 = vpop.permute.xlu0 %1042
        %v1045 = vadd.f32 %v1039, %v1043
        %v1047 = vlaneseq
        %v1048 = vshrl.u32 %v1047, 7
        %v1049 = vsub.s32 0, %v1048
        %v1050 = vrot.slane %v645, %v1049
        %v1052 = vmul.f32 %v1045, %v1050
        %1054 = vrot.lane.b32.xlu0 %v1052, 11
        %v1055 = vpop.permute.xlu0 %1054
        %vm1057 = vcmask 89088
        %v1058 = vsel %vm1057, 0.0, %v1055
        %vm1059 = vcmask 728064
        %v1060 = vsel %vm1059, %v1058, 0.0
        %vm1061 = vcmask 818176
        %1062 = vst.msk [vmem:[%s642] sm:$0xff] %vm1061, %v1060
      $region60: #{run.8} parent=55 // pred_fallthru
        _
      %p1063 = pneg %p816
      // Predicated region
      $region61: #{run.8} parent=55 // pred_check
        _
      $region62: #{run.8} parent=55 // pred_check_branch
        %1065 = sbr.rel (%p816) target = $region64
      $region63: #{run.8} parent=55 // pred_region
        %vm1066 = vcmask 818176
        %1067 = vst.msk [vmem:[%s642] sm:$0xff] %vm1066, 0.0
      $region64: #{run.8} parent=55 // pred_fallthru
        _
      %v1068 = vld [vmem:[%s587] sm:$0xff]
      %v1069 = vld [vmem:[%s629] sm:$0xff]
      %1071 = vrot.lane.b32.xlu0 %v1068, 127
      %v1072 = vpop.permute.xlu0 %1071
      %1075 = vrot.lane.b32.xlu0 %v1069, 127
      %v1076 = vpop.permute.xlu0 %1075
      %1078 = vrot.lane.b32.xlu0 %v1068, 126
      %v1079 = vpop.permute.xlu0 %1078
      %1081 = vrot.lane.b32.xlu0 %v1069, 126
      %v1082 = vpop.permute.xlu0 %1081
      %1084 = vrot.lane.b32.xlu0 %v1068, 118
      %v1085 = vpop.permute.xlu0 %1084
      %1087 = vrot.lane.b32.xlu0 %v1069, 118
      %v1088 = vpop.permute.xlu0 %1087
      %1090 = vrot.lane.b32.xlu0 %v1068, 117
      %v1091 = vpop.permute.xlu0 %1090
      %1093 = vrot.lane.b32.xlu0 %v1069, 117
      %v1094 = vpop.permute.xlu0 %1093
      %1096 = vrot.lane.b32.xlu0 %v1068, 116
      %v1097 = vpop.permute.xlu0 %1096
      %1099 = vrot.lane.b32.xlu0 %v1069, 116
      %v1100 = vpop.permute.xlu0 %1099
      %1102 = vrot.lane.b32.xlu0 %v1068, 108
      %v1103 = vpop.permute.xlu0 %1102
      %1105 = vrot.lane.b32.xlu0 %v1069, 108
      %v1106 = vpop.permute.xlu0 %1105
      %1108 = vrot.lane.b32.xlu0 %v1068, 107
      %v1109 = vpop.permute.xlu0 %1108
      %1111 = vrot.lane.b32.xlu0 %v1069, 107
      %v1112 = vpop.permute.xlu0 %1111
      %1114 = vrot.lane.b32.xlu0 %v1068, 106
      %v1115 = vpop.permute.xlu0 %1114
      %1116 = vrot.lane.b32.xlu0 %v1069, 106
      %v1117 = vpop.permute.xlu0 %1116
      %s1120 = sadd.s32 %s812, 1
      %p1121 = scmp.ge.s32.totalorder %s1120, 1
      %p1122 = scmp.le.s32.totalorder %s1120, 8
      %p1123 = pnand %p1121, %p1122
      %p1124 = pneg %p1123
      // Predicated region
      $region65: #{run.8} parent=55 // pred_check
        _
      $region66: #{run.8} parent=55 // pred_check_branch
        %1126 = sbr.rel (%p1123) target = $region68
      $region67: #{run.8} parent=55 // pred_region
        %vm1127 = vcmask 130048
        %v1129 = vsel %vm1127, %v650, 0
        %1131 = vmatprep.subr.mxu0 0.0
        %1132 = vmatpush1.msra.mxu0 %v759
        %1133 = vmatprep.subr.mxu0 0.0
        %1134 = vmatpush1.msra.mxu0 %v761
        %1135 = vmatprep.subr.mxu0 0.0
        %1136 = vmatpush1.msra.mxu0 %v764
        %1137 = vmatprep.subr.mxu0 0.0
        %1138 = vmatpush1.msra.mxu0 %v768
        %1139 = vmatprep.subr.mxu0 0.0
        %1140 = vmatpush1.msra.mxu0 %v771
        %1141 = vmatprep.subr.mxu0 0.0
        %1142 = vmatpush1.msra.mxu0 %v774
        %1143 = vmatprep.subr.mxu0 0.0
        %1144 = vmatpush1.msra.mxu0 %v777
        %1145 = vmatprep.subr.mxu0 0.0
        %1146 = vmatpush1.msra.mxu0 %v780
        %1147 = vmatprep.subr.mxu0 0.0
        %1148 = vmatpush1.msra.mxu0 %v783
        %1149 = vmatprep.subr.mxu0 0.0
        %1150 = vmatpush1.msra.mxu0 %v786
        %1151 = vmatprep.subr.mxu0 0.0
        %1152 = vmatpush1.msra.mxu0 %v789
        %1153 = vmatprep.subr.mxu0 0.0
        %1154 = vmatpush1.msra.mxu0 %v792
        %1155 = vmatprep.subr.mxu0 0.0
        %1156 = vmatpush1.msra.mxu0 %v795
        %1157 = vmatprep.subr.mxu0 0.0
        %1158 = vmatpush1.msra.mxu0 %v798
        %1159 = vmatprep.subr.mxu0 0.0
        %1160 = vmatpush1.msra.mxu0 %v801
        %1161 = vmatprep.subr.mxu0 0.0
        %1162 = vmatpush1.msra.mxu0 %v804
        %1163 = vmatprep.subr.mxu0 0.0
        %1164 = vmatpush1.msra.mxu0 %v807
        %1165 = vmatprep.subr.mxu0 0.0
        %1166 = vmatpush1.msra.mxu0 %v809
        %1167 = vmatprep.subr.mxu0 0.0
        %1168 = vmatpush1.msra.mxu0 0.0
        %1169 = vmatprep.subr.mxu0 0.0
        %1170 = vmatpush1.msra.mxu0 0.0
        %1171 = vmatprep.subr.mxu0 0.0
        %1172 = vmatpush1.msra.mxu0 0.0
        %1173 = vmatprep.subr.mxu0 0.0
        %1174 = vmatpush1.msra.mxu0 0.0
        %1175 = vmatprep.subr.mxu0 0.0
        %1176 = vmatpush1.msra.mxu0 0.0
        %1177 = vmatprep.subr.mxu0 0.0
        %1178 = vmatpush1.msra.mxu0 0.0
        %1179 = vmatprep.subr.mxu0 0.0
        %1180 = vmatpush1.msra.mxu0 0.0
        %1181 = vmatprep.subr.mxu0 0.0
        %1182 = vmatpush1.msra.mxu0 0.0
        %1183 = vmatprep.subr.mxu0 0.0
        %1184 = vmatpush1.msra.mxu0 0.0
        %1185 = vmatprep.subr.mxu0 0.0
        %1186 = vmatpush1.msra.mxu0 0.0
        %1187 = vmatprep.subr.mxu0 0.0
        %1188 = vmatpush1.msra.mxu0 0.0
        %1189 = vmatprep.subr.mxu0 0.0
        %1190 = vmatpush1.msra.mxu0 0.0
        %1191 = vmatprep.subr.mxu0 0.0
        %1192 = vmatpush1.msra.mxu0 0.0
        %1193 = vmatprep.subr.mxu0 0.0
        %1194 = vmatpush1.msra.mxu0 0.0
        %1195 = vmatprep.mubr.f32.mxu0 %v1129
        %1196 = vmatmul.mubr.f32.gmra.mrb[0].mxu0 %v649
        %v1197 = vpop.f32.mrb[0].mxu0
        %v1198 = vadd.f32 0.0, %v1197
        %v1199 = vpop.f32.mrb[0].mxu0
        %1200 = vdwg.mxu0
        %v1202 = vsel %vm1127, %v647, 0
        %1204 = vmatprep.subr.mxu0 0.0
        %1205 = vmatpush1.msra.mxu0 %v706
        %1206 = vmatprep.subr.mxu0 0.0
        %1207 = vmatpush1.msra.mxu0 %v707
        %1208 = vmatprep.subr.mxu0 0.0
        %1209 = vmatpush1.msra.mxu0 %v710
        %1210 = vmatprep.subr.mxu0 0.0
        %1211 = vmatpush1.msra.mxu0 %v714
        %1212 = vmatprep.subr.mxu0 0.0
        %1213 = vmatpush1.msra.mxu0 %v717
        %1214 = vmatprep.subr.mxu0 0.0
        %1215 = vmatpush1.msra.mxu0 %v720
        %1216 = vmatprep.subr.mxu0 0.0
        %1217 = vmatpush1.msra.mxu0 %v723
        %1218 = vmatprep.subr.mxu0 0.0
        %1219 = vmatpush1.msra.mxu0 %v726
        %1220 = vmatprep.subr.mxu0 0.0
        %1221 = vmatpush1.msra.mxu0 %v729
        %1222 = vmatprep.subr.mxu0 0.0
        %1223 = vmatpush1.msra.mxu0 %v732
        %1224 = vmatprep.subr.mxu0 0.0
        %1225 = vmatpush1.msra.mxu0 %v735
        %1226 = vmatprep.subr.mxu0 0.0
        %1227 = vmatpush1.msra.mxu0 %v738
        %1228 = vmatprep.subr.mxu0 0.0
        %1229 = vmatpush1.msra.mxu0 %v741
        %1230 = vmatprep.subr.mxu0 0.0
        %1231 = vmatpush1.msra.mxu0 %v744
        %1232 = vmatprep.subr.mxu0 0.0
        %1233 = vmatpush1.msra.mxu0 %v747
        %1234 = vmatprep.subr.mxu0 0.0
        %1235 = vmatpush1.msra.mxu0 %v750
        %1236 = vmatprep.subr.mxu0 0.0
        %1237 = vmatpush1.msra.mxu0 %v753
        %1238 = vmatprep.subr.mxu0 0.0
        %1239 = vmatpush1.msra.mxu0 %v755
        %1240 = vmatprep.subr.mxu0 0.0
        %1241 = vmatpush1.msra.mxu0 0.0
        %1242 = vmatprep.subr.mxu0 0.0
        %1243 = vmatpush1.msra.mxu0 0.0
        %1244 = vmatprep.subr.mxu0 0.0
        %1245 = vmatpush1.msra.mxu0 0.0
        %1246 = vmatprep.subr.mxu0 0.0
        %1247 = vmatpush1.msra.mxu0 0.0
        %1248 = vmatprep.subr.mxu0 0.0
        %1249 = vmatpush1.msra.mxu0 0.0
        %1250 = vmatprep.subr.mxu0 0.0
        %1251 = vmatpush1.msra.mxu0 0.0
        %1252 = vmatprep.subr.mxu0 0.0
        %1253 = vmatpush1.msra.mxu0 0.0
        %1254 = vmatprep.subr.mxu0 0.0
        %1255 = vmatpush1.msra.mxu0 0.0
        %1256 = vmatprep.subr.mxu0 0.0
        %1257 = vmatpush1.msra.mxu0 0.0
        %1258 = vmatprep.subr.mxu0 0.0
        %1259 = vmatpush1.msra.mxu0 0.0
        %1260 = vmatprep.subr.mxu0 0.0
        %1261 = vmatpush1.msra.mxu0 0.0
        %1262 = vmatprep.subr.mxu0 0.0
        %1263 = vmatpush1.msra.mxu0 0.0
        %1264 = vmatprep.subr.mxu0 0.0
        %1265 = vmatpush1.msra.mxu0 0.0
        %1266 = vmatprep.subr.mxu0 0.0
        %1267 = vmatpush1.msra.mxu0 0.0
        %1268 = vmatprep.mubr.f32.mxu0 %v1202
        %1269 = vmatmul.mubr.f32.gmra.mrb[0].mxu0 %v646
        %v1270 = vpop.f32.mrb[0].mxu0
        %v1271 = vadd.f32 %v1198, %v1270
        %v1272 = vpop.f32.mrb[0].mxu0
        %1273 = vdwg.mxu0
        %v1275 = vsel %vm1127, %v653, 0
        %1277 = vmatprep.subr.mxu0 0.0
        %1278 = vmatpush1.msra.mxu0 %v1068
        %1279 = vmatprep.subr.mxu0 0.0
        %1280 = vmatpush1.msra.mxu0 %v1069
        %1281 = vmatprep.subr.mxu0 0.0
        %1282 = vmatpush1.msra.mxu0 %v1072
        %1283 = vmatprep.subr.mxu0 0.0
        %1284 = vmatpush1.msra.mxu0 %v1076
        %1285 = vmatprep.subr.mxu0 0.0
        %1286 = vmatpush1.msra.mxu0 %v1079
        %1287 = vmatprep.subr.mxu0 0.0
        %1288 = vmatpush1.msra.mxu0 %v1082
        %1289 = vmatprep.subr.mxu0 0.0
        %1290 = vmatpush1.msra.mxu0 %v1085
        %1291 = vmatprep.subr.mxu0 0.0
        %1292 = vmatpush1.msra.mxu0 %v1088
        %1293 = vmatprep.subr.mxu0 0.0
        %1294 = vmatpush1.msra.mxu0 %v1091
        %1295 = vmatprep.subr.mxu0 0.0
        %1296 = vmatpush1.msra.mxu0 %v1094
        %1297 = vmatprep.subr.mxu0 0.0
        %1298 = vmatpush1.msra.mxu0 %v1097
        %1299 = vmatprep.subr.mxu0 0.0
        %1300 = vmatpush1.msra.mxu0 %v1100
        %1301 = vmatprep.subr.mxu0 0.0
        %1302 = vmatpush1.msra.mxu0 %v1103
        %1303 = vmatprep.subr.mxu0 0.0
        %1304 = vmatpush1.msra.mxu0 %v1106
        %1305 = vmatprep.subr.mxu0 0.0
        %1306 = vmatpush1.msra.mxu0 %v1109
        %1307 = vmatprep.subr.mxu0 0.0
        %1308 = vmatpush1.msra.mxu0 %v1112
        %1309 = vmatprep.subr.mxu0 0.0
        %1310 = vmatpush1.msra.mxu0 %v1115
        %1311 = vmatprep.subr.mxu0 0.0
        %1312 = vmatpush1.msra.mxu0 %v1117
        %1313 = vmatprep.subr.mxu0 0.0
        %1314 = vmatpush1.msra.mxu0 0.0
        %1315 = vmatprep.subr.mxu0 0.0
        %1316 = vmatpush1.msra.mxu0 0.0
        %1317 = vmatprep.subr.mxu0 0.0
        %1318 = vmatpush1.msra.mxu0 0.0
        %1319 = vmatprep.subr.mxu0 0.0
        %1320 = vmatpush1.msra.mxu0 0.0
        %1321 = vmatprep.subr.mxu0 0.0
        %1322 = vmatpush1.msra.mxu0 0.0
        %1323 = vmatprep.subr.mxu0 0.0
        %1324 = vmatpush1.msra.mxu0 0.0
        %1325 = vmatprep.subr.mxu0 0.0
        %1326 = vmatpush1.msra.mxu0 0.0
        %1327 = vmatprep.subr.mxu0 0.0
        %1328 = vmatpush1.msra.mxu0 0.0
        %1329 = vmatprep.subr.mxu0 0.0
        %1330 = vmatpush1.msra.mxu0 0.0
        %1331 = vmatprep.subr.mxu0 0.0
        %1332 = vmatpush1.msra.mxu0 0.0
        %1333 = vmatprep.subr.mxu0 0.0
        %1334 = vmatpush1.msra.mxu0 0.0
        %1335 = vmatprep.subr.mxu0 0.0
        %1336 = vmatpush1.msra.mxu0 0.0
        %1337 = vmatprep.subr.mxu0 0.0
        %1338 = vmatpush1.msra.mxu0 0.0
        %1339 = vmatprep.subr.mxu0 0.0
        %1340 = vmatpush1.msra.mxu0 0.0
        %1341 = vmatprep.mubr.f32.mxu0 %v1275
        %1342 = vmatmul.mubr.f32.gmra.mrb[0].mxu0 %v652
        %v1343 = vpop.f32.mrb[0].mxu0
        %v1344 = vadd.f32 0.0, %v1343
        %v1345 = vpop.f32.mrb[0].mxu0
        %1346 = vdwg.mxu0
        %v1347 = vadd.f32 %v1271, %v1344
        %1349 = vset.pattern.permute.xlu0 0
        %1350 = vperm.xlu0 %1349, %v644
        %v1351 = vpop.permute.xlu0 %1350
        %v1353 = vadd.f32 %v1347, %v1351
        %v1355 = vlaneseq
        %v1356 = vshrl.u32 %v1355, 7
        %v1357 = vsub.s32 0, %v1356
        %v1358 = vrot.slane %v645, %v1357
        %v1360 = vmul.f32 %v1353, %v1358
        %1362 = vrot.lane.b32.xlu0 %v1360, 11
        %v1363 = vpop.permute.xlu0 %1362
        %vm1365 = vcmask 89088
        %v1366 = vsel %vm1365, 0.0, %v1363
        %vm1367 = vcmask 728064
        %v1368 = vsel %vm1367, %v1366, 0.0
        %s1369 = scalar_lea.vmem %s642, 8
        %vm1370 = vcmask 818176
        %1371 = vst.msk [vmem:[%s1369] sm:$0xff] %vm1370, %v1368
      $region68: #{run.8} parent=55 // pred_fallthru
        _
      %p1372 = pneg %p1124
      // Predicated region
      $region69: #{run.8} parent=55 // pred_check
        _
      $region70: #{run.8} parent=55 // pred_check_branch
        %1374 = sbr.rel (%p1124) target = $region72
      $region71: #{run.8} parent=55 // pred_region
        %s1375 = scalar_lea.vmem %s642, 8
        %vm1376 = vcmask 818176
        %1377 = vst.msk [vmem:[%s1375] sm:$0xff] %vm1376, 0.0
      $region72: #{run.8} parent=55 // pred_fallthru
        _
      %s1378 = smul.u32 2, %s25
      %p1379 = scmp.lt.s32.totalorder %s24, 1
      %s1380 = scalar_select %p1379, %s24, 1
      %p1381 = scmp.lt.s32.totalorder %s1378, 9
      %s1382 = scalar_select %p1381, %s1378, 9
      %s1383 = smul.addr %s1380, 10
      %s1384 = sadd.s32 %s1382, %s1383
      %s1385 = smul.addr %s1384, 8
      %s1386 = scalar_lea.vmem %s9, %s1385
      // Predicated region
      $region73: #{run.8} parent=55 // pred_check
        %p1387 = pneg %p315
      $region74: #{run.8} parent=55 // pred_check_branch
        %1389 = sbr.rel (%p1387) target = $region76
      $region75: #{run.8} parent=55 // pred_region
        %s1390 = smul.u32 2, %s25
      $region76: #{run.8} parent=55 // pred_fallthru
        _
    $region56: #{run.8} parent=5 // pred_fallthru
      _
    %p1391 = scmp.le.s32.totalorder 2, %s15
    // Predicated region
    $region77: #{run.8} parent=5 // pred_check
      %p1392 = pneg %p1391
    $region78: #{run.8} parent=5 // pred_check_branch
      %1394 = sbr.rel (%p1392) target = $region80
    $region79: #{run.8} parent=5 // pred_region
      %s1395 = ssub.s32 %s15, 2
      // Predicated region
      $region81: #{run.8} parent=79 // pred_check
        %p1396 = pneg %p321
      $region82: #{run.8} parent=79 // pred_check_branch
        %1398 = sbr.rel (%p1396) target = $region84
      $region83: #{run.8} parent=79 // pred_region
        %s1399 = smul.u32 2, %s27
        %p1400 = scmp.lt.s32.totalorder %s26, 1
        %s1401 = scalar_select %p1400, %s26, 1
        %p1402 = scmp.lt.s32.totalorder %s1399, 9
        %s1403 = scalar_select %p1402, %s1399, 9
        %s1404 = smul.addr %s1401, 10
        %s1405 = sadd.s32 %s1403, %s1404
        %s1406 = smul.addr %s1405, 8
        %s1407 = scalar_lea.vmem %s9, %s1406
      $region84: #{run.8} parent=79 // pred_fallthru
        _
    $region80: #{run.8} parent=5 // pred_fallthru
      _
  $region6: #{run.8} parent=0 // loop_footer
    %s19 = sadd.s32 1, %s15
  $region7: #{run.8} parent=0 // loop_footer_branch
    %14 = sbr.rel target = $region3
  $region8: #{run.8} parent=0 // loop_exit
    _

// kernel: run.9
$region0: #{run.9}
  #allocation0 [shape = 'u32[]', space=smem, size = 0x4, offset = 0x4, fixed_abs, tag = 'smem constant byte address 0x4 - core index']
  #allocation1 [shape = 'u32[144,128]{1,0:T(1,128)}', space=vmem, size = 0x12000, scoped, tag = 'internal scratch']
  %s0 = inlined_call_operand.vmem [shape: f32[2,10,8,100], index: 0, kind: input, shape index: {}, may-alias: {0,1,2}]
  %s1 = inlined_call_operand.vmem [shape: f32[2,10,8,100], index: 1, kind: input, shape index: {}, may-alias: {0,1,2}]
  %s2 = inlined_call_operand.vmem [shape: f32[2,10,8,100], index: 2, kind: input, shape index: {}, may-alias: {0,1,2}]
  %s3 = inlined_call_operand.vmem [shape: f32[1,78], index: 3, kind: input, shape index: {}]
  %s4 = inlined_call_operand.vmem [shape: f32[3,8,72], index: 4, kind: input, shape index: {}]
  %s5 = inlined_call_operand.vmem [shape: f32[8,1], index: 5, kind: input, shape index: {}]
  %s6 = inlined_call_operand.vmem [shape: f32[2,10,8,100], index: 6, kind: output, shape index: {}]
  %s7 = sld [smem:[#allocation0]]
  $region73: #{run.9} parent=0
    _
  %s9 = ssub.s32 1, %s7
  %s10 = scalar_select 0, %s9, %s7
  loop: start=0, step=1, limit=12
  $region2: #{run.9} parent=0 // loop_pre_header
    _
  $region3: #{run.9} parent=0 // loop_header
    %s12 = sphi 0, %s16
    %p13 = scmp.ge.s32.totalorder %s12, 12
    %s19 = sphi 0, %s31
    %s20 = sphi 0, %s27
    %s21 = sphi 0, %s19
    %s22 = sphi 0, %s20
    %s23 = sphi 0, %s21
    %s24 = sphi 0, %s22
    %s36 = sphi 0, %s38
    %s39 = sphi 0, %s36
    %s40 = sphi 0, %s39
    %s56 = sphi 0, %s40
    %s72 = sphi 0, %s74
    %s75 = sphi 0, %s72
    %s76 = sphi 0, %s75
    %s92 = sphi 0, %s76
    %s108 = sphi 0, %s110
    %s111 = sphi 0, %s108
    %s112 = sphi 0, %s111
    %s128 = sphi 0, %s112
    %s132 = sphi 0, %s132
    %s134 = sphi 0, %s132
    %s135 = sphi 0, %s134
    %s149 = sphi 0, %s135
    %s153 = sphi 0, %s153
    %s155 = sphi 0, %s153
    %s156 = sphi 0, %s155
    %s170 = sphi 0, %s156
    %s174 = sphi 0, %s174
    %s176 = sphi 0, %s174
    %s177 = sphi 0, %s176
    %s191 = sphi 0, %s177
    %s199 = sphi 0, %s201
    %s202 = sphi 0, %s199
    %s203 = sphi 0, %s202
    %s219 = sphi 0, %s203
  $region4: #{run.9} parent=0 // loop_header_branch
    %15 = sbr.rel (%p13) target = $region8
  $region5: #{run.9} parent=0 // loop_body
    %s17 = ssub.s32 %s12, 1
    %s18 = ssub.s32 %s12, 2
    %s25 = sadd.s32 1, %s20
    %p26 = scmp.ge.s32.totalorder %s25, 5
    %s27 = scalar_select %p26, 0, %s25
    %s28 = sadd.s32 1, %s19
    %s29 = scalar_select %p26, %s28, %s19
    %p30 = scmp.ge.s32.totalorder %s29, 2
    %s31 = scalar_select %p30, 0, %s29
    %s32 = ssub.s32 %s19, %s31
    %s33 = ssub.s32 %s20, %s27
    %s34 = sor.u32 %s32, %s33
    %p35 = scmp.eq.s32.totalorder %s34, 0
    %s37 = sadd.s32 %s36, 1
    %s38 = scalar_select %p35, %s36, %s37
    %p41 = pneg %p35
    %p42 = scmp.eq.s32.totalorder %s12, 9
    %p43 = por %p41, %p42
    %p44 = scmp.ne.s32.totalorder %s36, %s39
    %p45 = scmp.eq.s32.totalorder %s12, 0
    %p46 = por %p44, %p45
    %p47 = scmp.ne.s32.totalorder %s36, %s39
    %p48 = scmp.eq.s32.totalorder %s17, 9
    %p49 = por %p47, %p48
    %p50 = scmp.ne.s32.totalorder %s39, %s40
    %p51 = scmp.eq.s32.totalorder %s17, 0
    %p52 = por %p50, %p51
    %p53 = scmp.ne.s32.totalorder %s39, %s40
    %p54 = scmp.eq.s32.totalorder %s18, 9
    %p55 = por %p53, %p54
    %p57 = scmp.ne.s32.totalorder %s40, %s56
    %p58 = scmp.eq.s32.totalorder %s18, 0
    %p59 = por %p57, %p58
    %s60 = smul.u32 %s20, 2
    %s61 = ssub.s32 %s60, 1
    %p62 = scmp.gt.s32.totalorder %s61, 0
    %s63 = scalar_select %p62, %s61, 0
    %s64 = smul.u32 %s27, 2
    %s65 = ssub.s32 %s64, 1
    %p66 = scmp.gt.s32.totalorder %s65, 0
    %s67 = scalar_select %p66, %s65, 0
    %s68 = ssub.s32 %s19, %s31
    %s69 = ssub.s32 %s63, %s67
    %s70 = sor.u32 %s68, %s69
    %p71 = scmp.eq.s32.totalorder %s70, 0
    %s73 = sadd.s32 %s72, 1
    %s74 = scalar_select %p71, %s72, %s73
    %p77 = pneg %p71
    %p78 = scmp.eq.s32.totalorder %s12, 9
    %p79 = por %p77, %p78
    %p80 = scmp.ne.s32.totalorder %s72, %s75
    %p81 = scmp.eq.s32.totalorder %s12, 0
    %p82 = por %p80, %p81
    %p83 = scmp.ne.s32.totalorder %s72, %s75
    %p84 = scmp.eq.s32.totalorder %s17, 9
    %p85 = por %p83, %p84
    %p86 = scmp.ne.s32.totalorder %s75, %s76
    %p87 = scmp.eq.s32.totalorder %s17, 0
    %p88 = por %p86, %p87
    %p89 = scmp.ne.s32.totalorder %s75, %s76
    %p90 = scmp.eq.s32.totalorder %s18, 9
    %p91 = por %p89, %p90
    %p93 = scmp.ne.s32.totalorder %s76, %s92
    %p94 = scmp.eq.s32.totalorder %s18, 0
    %p95 = por %p93, %p94
    %s96 = smul.u32 %s20, 2
    %s97 = sadd.s32 %s96, 2
    %p98 = scmp.lt.s32.totalorder %s97, 9
    %s99 = scalar_select %p98, %s97, 9
    %s100 = smul.u32 %s27, 2
    %s101 = sadd.s32 %s100, 2
    %p102 = scmp.lt.s32.totalorder %s101, 9
    %s103 = scalar_select %p102, %s101, 9
    %s104 = ssub.s32 %s19, %s31
    %s105 = ssub.s32 %s99, %s103
    %s106 = sor.u32 %s104, %s105
    %p107 = scmp.eq.s32.totalorder %s106, 0
    %s109 = sadd.s32 %s108, 1
    %s110 = scalar_select %p107, %s108, %s109
    %p113 = pneg %p107
    %p114 = scmp.eq.s32.totalorder %s12, 9
    %p115 = por %p113, %p114
    %p116 = scmp.ne.s32.totalorder %s108, %s111
    %p117 = scmp.eq.s32.totalorder %s12, 0
    %p118 = por %p116, %p117
    %p119 = scmp.ne.s32.totalorder %s108, %s111
    %p120 = scmp.eq.s32.totalorder %s17, 9
    %p121 = por %p119, %p120
    %p122 = scmp.ne.s32.totalorder %s111, %s112
    %p123 = scmp.eq.s32.totalorder %s17, 0
    %p124 = por %p122, %p123
    %p125 = scmp.ne.s32.totalorder %s111, %s112
    %p126 = scmp.eq.s32.totalorder %s18, 9
    %p127 = por %p125, %p126
    %p129 = scmp.ne.s32.totalorder %s112, %s128
    %p130 = scmp.eq.s32.totalorder %s18, 0
    %p131 = por %p129, %p130
    %s133 = sadd.s32 %s132, 1
    %p136 = scmp.eq.s32.totalorder %s12, 9
    %p137 = scmp.ne.s32.totalorder %s132, %s134
    %p138 = scmp.eq.s32.totalorder %s12, 0
    %p139 = por %p137, %p138
    %p140 = scmp.ne.s32.totalorder %s132, %s134
    %p141 = scmp.eq.s32.totalorder %s17, 9
    %p142 = por %p140, %p141
    %p143 = scmp.ne.s32.totalorder %s134, %s135
    %p144 = scmp.eq.s32.totalorder %s17, 0
    %p145 = por %p143, %p144
    %p146 = scmp.ne.s32.totalorder %s134, %s135
    %p147 = scmp.eq.s32.totalorder %s18, 9
    %p148 = por %p146, %p147
    %p150 = scmp.ne.s32.totalorder %s135, %s149
    %p151 = scmp.eq.s32.totalorder %s18, 0
    %p152 = por %p150, %p151
    %s154 = sadd.s32 %s153, 1
    %p157 = scmp.eq.s32.totalorder %s12, 9
    %p158 = scmp.ne.s32.totalorder %s153, %s155
    %p159 = scmp.eq.s32.totalorder %s12, 0
    %p160 = por %p158, %p159
    %p161 = scmp.ne.s32.totalorder %s153, %s155
    %p162 = scmp.eq.s32.totalorder %s17, 9
    %p163 = por %p161, %p162
    %p164 = scmp.ne.s32.totalorder %s155, %s156
    %p165 = scmp.eq.s32.totalorder %s17, 0
    %p166 = por %p164, %p165
    %p167 = scmp.ne.s32.totalorder %s155, %s156
    %p168 = scmp.eq.s32.totalorder %s18, 9
    %p169 = por %p167, %p168
    %p171 = scmp.ne.s32.totalorder %s156, %s170
    %p172 = scmp.eq.s32.totalorder %s18, 0
    %p173 = por %p171, %p172
    %s175 = sadd.s32 %s174, 1
    %p178 = scmp.eq.s32.totalorder %s12, 9
    %p179 = scmp.ne.s32.totalorder %s174, %s176
    %p180 = scmp.eq.s32.totalorder %s12, 0
    %p181 = por %p179, %p180
    %p182 = scmp.ne.s32.totalorder %s174, %s176
    %p183 = scmp.eq.s32.totalorder %s17, 9
    %p184 = por %p182, %p183
    %p185 = scmp.ne.s32.totalorder %s176, %s177
    %p186 = scmp.eq.s32.totalorder %s17, 0
    %p187 = por %p185, %p186
    %p188 = scmp.ne.s32.totalorder %s176, %s177
    %p189 = scmp.eq.s32.totalorder %s18, 9
    %p190 = por %p188, %p189
    %p192 = scmp.ne.s32.totalorder %s177, %s191
    %p193 = scmp.eq.s32.totalorder %s18, 0
    %p194 = por %p192, %p193
    %s195 = ssub.s32 %s19, %s31
    %s196 = ssub.s32 %s20, %s27
    %s197 = sor.u32 %s195, %s196
    %p198 = scmp.eq.s32.totalorder %s197, 0
    %s200 = sadd.s32 %s199, 1
    %s201 = scalar_select %p198, %s199, %s200
    %p204 = pneg %p198
    %p205 = scmp.eq.s32.totalorder %s12, 9
    %p206 = por %p204, %p205
    %p207 = scmp.ne.s32.totalorder %s199, %s202
    %p208 = scmp.eq.s32.totalorder %s12, 0
    %p209 = por %p207, %p208
    %p210 = scmp.ne.s32.totalorder %s199, %s202
    %p211 = scmp.eq.s32.totalorder %s17, 9
    %p212 = por %p210, %p211
    %p213 = scmp.ne.s32.totalorder %s202, %s203
    %p214 = scmp.eq.s32.totalorder %s17, 0
    %p215 = por %p213, %p214
    %p216 = scmp.ne.s32.totalorder %s202, %s203
    %p217 = scmp.eq.s32.totalorder %s18, 9
    %p218 = por %p216, %p217
    %p220 = scmp.ne.s32.totalorder %s203, %s219
    %p221 = scmp.eq.s32.totalorder %s18, 0
    %p222 = por %p220, %p221
    %p223 = scmp.le.s32.totalorder 1, %s12
    %p224 = scmp.lt.s32.totalorder %s12, 11
    %p225 = pnand %p223, %p224
    %p226 = pneg %p225
    // Predicated region
    $region9: #{run.9} parent=5 // pred_check
      _
    $region10: #{run.9} parent=5 // pred_check_branch
      %228 = sbr.rel (%p225) target = $region12
    $region11: #{run.9} parent=5 // pred_region
      %s229 = ssub.s32 %s12, 1
      // Predicated region
      $region13: #{run.9} parent=11 // pred_check
        %p230 = pneg %p145
      $region14: #{run.9} parent=11 // pred_check_branch
        %232 = sbr.rel (%p230) target = $region16
      $region15: #{run.9} parent=11 // pred_region
        _
      $region16: #{run.9} parent=11 // pred_fallthru
        _
      // Predicated region
      $region17: #{run.9} parent=11 // pred_check
        %p233 = pneg %p166
      $region18: #{run.9} parent=11 // pred_check_branch
        %235 = sbr.rel (%p233) target = $region20
      $region19: #{run.9} parent=11 // pred_region
        _
      $region20: #{run.9} parent=11 // pred_fallthru
        _
      // Predicated region
      $region21: #{run.9} parent=11 // pred_check
        %p236 = pneg %p187
      $region22: #{run.9} parent=11 // pred_check_branch
        %238 = sbr.rel (%p236) target = $region24
      $region23: #{run.9} parent=11 // pred_region
        _
      $region24: #{run.9} parent=11 // pred_fallthru
        _
    $region12: #{run.9} parent=5 // pred_fallthru
      _
    %p239 = scmp.lt.s32.totalorder %s12, 10
    // Predicated region
    $region25: #{run.9} parent=5 // pred_check
      %p240 = pneg %p239
    $region26: #{run.9} parent=5 // pred_check_branch
      %242 = sbr.rel (%p240) target = $region28
    $region27: #{run.9} parent=5 // pred_region
      // Predicated region
      $region29: #{run.9} parent=27 // pred_check
        %p243 = pneg %p46
      $region30: #{run.9} parent=27 // pred_check_branch
        %245 = sbr.rel (%p243) target = $region32
      $region31: #{run.9} parent=27 // pred_region
        %s246 = smul.u32 2, %s20
        %p247 = scmp.lt.s32.totalorder %s19, 1
        %s248 = scalar_select %p247, %s19, 1
        %p249 = scmp.lt.s32.totalorder %s246, 9
        %s250 = scalar_select %p249, %s246, 9
        %s251 = smul.addr %s248, 10
        %s252 = sadd.s32 %s250, %s251
        %s253 = smul.addr %s252, 8
        %s254 = scalar_lea.vmem %s0, %s253
        %s255 = smul.u32 2, %s20
      $region32: #{run.9} parent=27 // pred_fallthru
        _
      // Predicated region
      $region33: #{run.9} parent=27 // pred_check
        %p256 = pneg %p82
      $region34: #{run.9} parent=27 // pred_check_branch
        %258 = sbr.rel (%p256) target = $region36
      $region35: #{run.9} parent=27 // pred_region
        %s259 = smul.u32 %s20, 2
        %s260 = ssub.s32 %s259, 1
        %p261 = scmp.gt.s32.totalorder %s260, 0
        %s262 = scalar_select %p261, %s260, 0
        %p263 = scmp.lt.s32.totalorder %s19, 1
        %s264 = scalar_select %p263, %s19, 1
        %p265 = scmp.lt.s32.totalorder %s262, 9
        %s266 = scalar_select %p265, %s262, 9
        %s267 = smul.addr %s264, 10
        %s268 = sadd.s32 %s266, %s267
        %s269 = smul.addr %s268, 8
        %s270 = scalar_lea.vmem %s1, %s269
        %s271 = smul.u32 %s20, 2
        %s272 = ssub.s32 %s271, 1
        %p273 = scmp.gt.s32.totalorder %s272, 0
        %s274 = scalar_select %p273, %s272, 0
      $region36: #{run.9} parent=27 // pred_fallthru
        _
      // Predicated region
      $region37: #{run.9} parent=27 // pred_check
        %p275 = pneg %p118
      $region38: #{run.9} parent=27 // pred_check_branch
        %277 = sbr.rel (%p275) target = $region40
      $region39: #{run.9} parent=27 // pred_region
        %s278 = smul.u32 %s20, 2
        %s279 = sadd.s32 %s278, 2
        %p280 = scmp.lt.s32.totalorder %s279, 9
        %s281 = scalar_select %p280, %s279, 9
        %p282 = scmp.lt.s32.totalorder %s19, 1
        %s283 = scalar_select %p282, %s19, 1
        %p284 = scmp.lt.s32.totalorder %s281, 9
        %s285 = scalar_select %p284, %s281, 9
        %s286 = smul.addr %s283, 10
        %s287 = sadd.s32 %s285, %s286
        %s288 = smul.addr %s287, 8
        %s289 = scalar_lea.vmem %s2, %s288
        %s290 = smul.u32 %s20, 2
        %s291 = sadd.s32 %s290, 2
        %p292 = scmp.lt.s32.totalorder %s291, 9
        %s293 = scalar_select %p292, %s291, 9
      $region40: #{run.9} parent=27 // pred_fallthru
        _
    $region28: #{run.9} parent=5 // pred_fallthru
      _
    %p294 = scmp.le.s32.totalorder 1, %s12
    %p295 = scmp.lt.s32.totalorder %s12, 11
    %p296 = pnand %p294, %p295
    %p297 = pneg %p296
    // Predicated region
    $region41: #{run.9} parent=5 // pred_check
      _
    $region42: #{run.9} parent=5 // pred_check_branch
      %299 = sbr.rel (%p296) target = $region44
    $region43: #{run.9} parent=5 // pred_region
      %s300 = ssub.s32 %s12, 1
      %s301 = smul.u32 2, %s22
      %p302 = scmp.lt.s32.totalorder %s21, 1
      %s303 = scalar_select %p302, %s21, 1
      %p304 = scmp.lt.s32.totalorder %s301, 9
      %s305 = scalar_select %p304, %s301, 9
      %s306 = smul.addr %s303, 10
      %s307 = sadd.s32 %s305, %s306
      %s308 = smul.addr %s307, 8
      %s309 = scalar_lea.vmem %s0, %s308
      %p310 = pneg %p52
      %p311 = pneg %p49
      %s312 = smul.u32 %s22, 2
      %s313 = ssub.s32 %s312, 1
      %p314 = scmp.gt.s32.totalorder %s313, 0
      %s315 = scalar_select %p314, %s313, 0
      %p316 = scmp.lt.s32.totalorder %s21, 1
      %s317 = scalar_select %p316, %s21, 1
      %p318 = scmp.lt.s32.totalorder %s315, 9
      %s319 = scalar_select %p318, %s315, 9
      %s320 = smul.addr %s317, 10
      %s321 = sadd.s32 %s319, %s320
      %s322 = smul.addr %s321, 8
      %s323 = scalar_lea.vmem %s1, %s322
      %p324 = pneg %p88
      %p325 = pneg %p85
      %s326 = smul.u32 %s22, 2
      %s327 = sadd.s32 %s326, 2
      %p328 = scmp.lt.s32.totalorder %s327, 9
      %s329 = scalar_select %p328, %s327, 9
      %p330 = scmp.lt.s32.totalorder %s21, 1
      %s331 = scalar_select %p330, %s21, 1
      %p332 = scmp.lt.s32.totalorder %s329, 9
      %s333 = scalar_select %p332, %s329, 9
      %s334 = smul.addr %s331, 10
      %s335 = sadd.s32 %s333, %s334
      %s336 = smul.addr %s335, 8
      %s337 = scalar_lea.vmem %s2, %s336
      %p338 = pneg %p124
      %p339 = pneg %p121
      %p340 = pneg %p145
      %p341 = pneg %p142
      %p342 = pneg %p166
      %p343 = pneg %p163
      %p344 = pneg %p187
      %p345 = pneg %p184
      %p346 = pneg %p215
      %p347 = pneg %p212
      %s348 = smul.u32 2, %s22
      %p349 = scmp.lt.s32.totalorder %s21, 1
      %s350 = scalar_select %p349, %s21, 1
      %p351 = scmp.lt.s32.totalorder %s348, 9
      %s352 = scalar_select %p351, %s348, 9
      %s353 = smul.addr %s350, 10
      %s354 = sadd.s32 %s352, %s353
      %s355 = smul.addr %s354, 8
      %s356 = scalar_lea.vmem %s6, %s355
      %s357 = smul.u32 2, %s22
      %p358 = scmp.lt.s32.totalorder %s21, 1
      %s359 = scalar_select %p358, %s21, 1
      %p360 = scmp.lt.s32.totalorder %s357, 9
      %s361 = scalar_select %p360, %s357, 9
      %s362 = smul.addr %s359, 10
      %s363 = sadd.s32 %s361, %s362
      %s364 = smul.addr %s363, 8
      %s365 = scalar_lea.vmem %s0, %s364
      %s366 = smul.u32 2, %s22
      %s367 = smul.u32 %s22, 2
      %s368 = ssub.s32 %s367, 1
      %p369 = scmp.gt.s32.totalorder %s368, 0
      %s370 = scalar_select %p369, %s368, 0
      %p371 = scmp.lt.s32.totalorder %s21, 1
      %s372 = scalar_select %p371, %s21, 1
      %p373 = scmp.lt.s32.totalorder %s370, 9
      %s374 = scalar_select %p373, %s370, 9
      %s375 = smul.addr %s372, 10
      %s376 = sadd.s32 %s374, %s375
      %s377 = smul.addr %s376, 8
      %s378 = scalar_lea.vmem %s1, %s377
      %s379 = smul.u32 %s22, 2
      %s380 = ssub.s32 %s379, 1
      %p381 = scmp.gt.s32.totalorder %s380, 0
      %s382 = scalar_select %p381, %s380, 0
      %s383 = smul.u32 %s22, 2
      %s384 = sadd.s32 %s383, 2
      %p385 = scmp.lt.s32.totalorder %s384, 9
      %s386 = scalar_select %p385, %s384, 9
      %p387 = scmp.lt.s32.totalorder %s21, 1
      %s388 = scalar_select %p387, %s21, 1
      %p389 = scmp.lt.s32.totalorder %s386, 9
      %s390 = scalar_select %p389, %s386, 9
      %s391 = smul.addr %s388, 10
      %s392 = sadd.s32 %s390, %s391
      %s393 = smul.addr %s392, 8
      %s394 = scalar_lea.vmem %s2, %s393
      %s395 = smul.u32 %s22, 2
      %s396 = sadd.s32 %s395, 2
      %p397 = scmp.lt.s32.totalorder %s396, 9
      %s398 = scalar_select %p397, %s396, 9
      %s399 = smul.u32 2, %s22
      %p400 = scmp.lt.s32.totalorder %s21, 1
      %s401 = scalar_select %p400, %s21, 1
      %p402 = scmp.lt.s32.totalorder %s399, 9
      %s403 = scalar_select %p402, %s399, 9
      %s404 = smul.addr %s401, 10
      %s405 = sadd.s32 %s403, %s404
      %s406 = smul.addr %s405, 8
      %s407 = scalar_lea.vmem %s6, %s406
      %s408 = smul.u32 2, %s22
      %v409 = vld [vmem:[%s5] sm:$0xff]
      %v410 = vld [vmem:[%s3] sm:$0x1]
      %v411 = vld [vmem:[%s4] sm:$0xff]
      %s412 = scalar_lea.vmem %s4, 8
      %v413 = vld [vmem:[%s412] sm:$0xff]
      %s414 = scalar_lea.vmem %s4, 16
      %v415 = vld [vmem:[%s414] sm:$0xff]
      %v416 = vld [vmem:[%s378] sm:$0xff]
      %418 = vrot.lane.b32.xlu0 %v416, 127
      %v419 = vpop.permute.xlu0 %418
      %421 = vrot.lane.b32.xlu0 %v416, 126
      %v422 = vpop.permute.xlu0 %421
      %424 = vrot.lane.b32.xlu0 %v416, 118
      %v425 = vpop.permute.xlu0 %424
      %427 = vrot.lane.b32.xlu0 %v416, 117
      %v428 = vpop.permute.xlu0 %427
      %430 = vrot.lane.b32.xlu0 %v416, 116
      %v431 = vpop.permute.xlu0 %430
      %433 = vrot.lane.b32.xlu0 %v416, 108
      %v434 = vpop.permute.xlu0 %433
      %436 = vrot.lane.b32.xlu0 %v416, 107
      %v437 = vpop.permute.xlu0 %436
      %439 = vrot.lane.b32.xlu0 %v416, 106
      %v440 = vpop.permute.xlu0 %439
      %v442 = vld [vmem:[%s365] sm:$0xff]
      %444 = vrot.lane.b32.xlu0 %v442, 127
      %v445 = vpop.permute.xlu0 %444
      %447 = vrot.lane.b32.xlu0 %v442, 126
      %v448 = vpop.permute.xlu0 %447
      %450 = vrot.lane.b32.xlu0 %v442, 118
      %v451 = vpop.permute.xlu0 %450
      %453 = vrot.lane.b32.xlu0 %v442, 117
      %v454 = vpop.permute.xlu0 %453
      %456 = vrot.lane.b32.xlu0 %v442, 116
      %v457 = vpop.permute.xlu0 %456
      %459 = vrot.lane.b32.xlu0 %v442, 108
      %v460 = vpop.permute.xlu0 %459
      %462 = vrot.lane.b32.xlu0 %v442, 107
      %v463 = vpop.permute.xlu0 %462
      %465 = vrot.lane.b32.xlu0 %v442, 106
      %v466 = vpop.permute.xlu0 %465
      %s468 = scalar_lea.vmem %s365, 8
      %v469 = vld [vmem:[%s468] sm:$0xff]
      %471 = vrot.lane.b32.xlu0 %v469, 127
      %v472 = vpop.permute.xlu0 %471
      %474 = vrot.lane.b32.xlu0 %v469, 126
      %v475 = vpop.permute.xlu0 %474
      %477 = vrot.lane.b32.xlu0 %v469, 118
      %v478 = vpop.permute.xlu0 %477
      %480 = vrot.lane.b32.xlu0 %v469, 117
      %v481 = vpop.permute.xlu0 %480
      %483 = vrot.lane.b32.xlu0 %v469, 116
      %v484 = vpop.permute.xlu0 %483
      %486 = vrot.lane.b32.xlu0 %v469, 108
      %v487 = vpop.permute.xlu0 %486
      %489 = vrot.lane.b32.xlu0 %v469, 107
      %v490 = vpop.permute.xlu0 %489
      %492 = vrot.lane.b32.xlu0 %v469, 106
      %v493 = vpop.permute.xlu0 %492
      %s495 = smul.u32 %s22, 2
      %p496 = scmp.ge.s32.totalorder %s495, 1
      %p497 = scmp.le.s32.totalorder %s495, 8
      %p498 = pnand %p496, %p497
      %p499 = pneg %p498
      // Predicated region
      $region45: #{run.9} parent=43 // pred_check
        _
      $region46: #{run.9} parent=43 // pred_check_branch
        %501 = sbr.rel (%p498) target = $region48
      $region47: #{run.9} parent=43 // pred_region
        %vm502 = vcmask 588800
        %v504 = vsel %vm502, %v413, 0
        %506 = vmatprep.subr.mxu0 0.0
        %507 = vmatpush1.msra.mxu0 %v442
        %508 = vmatprep.subr.mxu0 0.0
        %509 = vmatpush1.msra.mxu0 %v445
        %510 = vmatprep.subr.mxu0 0.0
        %511 = vmatpush1.msra.mxu0 %v448
        %512 = vmatprep.subr.mxu0 0.0
        %513 = vmatpush1.msra.mxu0 %v451
        %514 = vmatprep.subr.mxu0 0.0
        %515 = vmatpush1.msra.mxu0 %v454
        %516 = vmatprep.subr.mxu0 0.0
        %517 = vmatpush1.msra.mxu0 %v457
        %518 = vmatprep.subr.mxu0 0.0
        %519 = vmatpush1.msra.mxu0 %v460
        %520 = vmatprep.subr.mxu0 0.0
        %521 = vmatpush1.msra.mxu0 %v463
        %522 = vmatprep.subr.mxu0 0.0
        %523 = vmatpush1.msra.mxu0 %v466
        %524 = vmatprep.subr.mxu0 0.0
        %525 = vmatpush1.msra.mxu0 0.0
        %526 = vmatprep.subr.mxu0 0.0
        %527 = vmatpush1.msra.mxu0 0.0
        %528 = vmatprep.subr.mxu0 0.0
        %529 = vmatpush1.msra.mxu0 0.0
        %530 = vmatprep.subr.mxu0 0.0
        %531 = vmatpush1.msra.mxu0 0.0
        %532 = vmatprep.subr.mxu0 0.0
        %533 = vmatpush1.msra.mxu0 0.0
        %534 = vmatprep.subr.mxu0 0.0
        %535 = vmatpush1.msra.mxu0 0.0
        %536 = vmatprep.subr.mxu0 0.0
        %537 = vmatpush1.msra.mxu0 0.0
        %538 = vmatprep.subr.mxu0 0.0
        %539 = vmatpush1.msra.mxu0 0.0
        %540 = vmatprep.subr.mxu0 0.0
        %541 = vmatpush1.msra.mxu0 0.0
        %542 = vmatprep.subr.mxu0 0.0
        %543 = vmatpush1.msra.mxu0 0.0
        %544 = vmatprep.subr.mxu0 0.0
        %545 = vmatpush1.msra.mxu0 0.0
        %546 = vmatprep.subr.mxu0 0.0
        %547 = vmatpush1.msra.mxu0 0.0
        %548 = vmatprep.subr.mxu0 0.0
        %549 = vmatpush1.msra.mxu0 0.0
        %550 = vmatprep.subr.mxu0 0.0
        %551 = vmatpush1.msra.mxu0 0.0
        %552 = vmatprep.subr.mxu0 0.0
        %553 = vmatpush1.msra.mxu0 0.0
        %554 = vmatprep.subr.mxu0 0.0
        %555 = vmatpush1.msra.mxu0 0.0
        %556 = vmatprep.subr.mxu0 0.0
        %557 = vmatpush1.msra.mxu0 0.0
        %558 = vmatprep.subr.mxu0 0.0
        %559 = vmatpush1.msra.mxu0 0.0
        %560 = vmatprep.subr.mxu0 0.0
        %561 = vmatpush1.msra.mxu0 0.0
        %562 = vmatprep.subr.mxu0 0.0
        %563 = vmatpush1.msra.mxu0 0.0
        %564 = vmatprep.subr.mxu0 0.0
        %565 = vmatpush1.msra.mxu0 0.0
        %566 = vmatprep.subr.mxu0 0.0
        %567 = vmatpush1.msra.mxu0 0.0
        %568 = vmatprep.subr.mxu0 0.0
        %569 = vmatpush1.msra.mxu0 0.0
        %570 = vmatprep.mubr.f32.mxu0 0.0
        %571 = vmatmul.mubr.f32.gmra.mrb[0].mxu0 %v504
        %v572 = vpop.f32.mrb[0].mxu0
        %v573 = vadd.f32 0.0, %v572
        %v574 = vpop.f32.mrb[0].mxu0
        %575 = vdwg.mxu0
        %v577 = vsel %vm502, %v411, 0
        %579 = vmatprep.subr.mxu0 0.0
        %580 = vmatpush1.msra.mxu0 %v416
        %581 = vmatprep.subr.mxu0 0.0
        %582 = vmatpush1.msra.mxu0 %v419
        %583 = vmatprep.subr.mxu0 0.0
        %584 = vmatpush1.msra.mxu0 %v422
        %585 = vmatprep.subr.mxu0 0.0
        %586 = vmatpush1.msra.mxu0 %v425
        %587 = vmatprep.subr.mxu0 0.0
        %588 = vmatpush1.msra.mxu0 %v428
        %589 = vmatprep.subr.mxu0 0.0
        %590 = vmatpush1.msra.mxu0 %v431
        %591 = vmatprep.subr.mxu0 0.0
        %592 = vmatpush1.msra.mxu0 %v434
        %593 = vmatprep.subr.mxu0 0.0
        %594 = vmatpush1.msra.mxu0 %v437
        %595 = vmatprep.subr.mxu0 0.0
        %596 = vmatpush1.msra.mxu0 %v440
        %597 = vmatprep.subr.mxu0 0.0
        %598 = vmatpush1.msra.mxu0 0.0
        %599 = vmatprep.subr.mxu0 0.0
        %600 = vmatpush1.msra.mxu0 0.0
        %601 = vmatprep.subr.mxu0 0.0
        %602 = vmatpush1.msra.mxu0 0.0
        %603 = vmatprep.subr.mxu0 0.0
        %604 = vmatpush1.msra.mxu0 0.0
        %605 = vmatprep.subr.mxu0 0.0
        %606 = vmatpush1.msra.mxu0 0.0
        %607 = vmatprep.subr.mxu0 0.0
        %608 = vmatpush1.msra.mxu0 0.0
        %609 = vmatprep.subr.mxu0 0.0
        %610 = vmatpush1.msra.mxu0 0.0
        %611 = vmatprep.subr.mxu0 0.0
        %612 = vmatpush1.msra.mxu0 0.0
        %613 = vmatprep.subr.mxu0 0.0
        %614 = vmatpush1.msra.mxu0 0.0
        %615 = vmatprep.subr.mxu0 0.0
        %616 = vmatpush1.msra.mxu0 0.0
        %617 = vmatprep.subr.mxu0 0.0
        %618 = vmatpush1.msra.mxu0 0.0
        %619 = vmatprep.subr.mxu0 0.0
        %620 = vmatpush1.msra.mxu0 0.0
        %621 = vmatprep.subr.mxu0 0.0
        %622 = vmatpush1.msra.mxu0 0.0
        %623 = vmatprep.subr.mxu0 0.0
        %624 = vmatpush1.msra.mxu0 0.0
        %625 = vmatprep.subr.mxu0 0.0
        %626 = vmatpush1.msra.mxu0 0.0
        %627 = vmatprep.subr.mxu0 0.0
        %628 = vmatpush1.msra.mxu0 0.0
        %629 = vmatprep.subr.mxu0 0.0
        %630 = vmatpush1.msra.mxu0 0.0
        %631 = vmatprep.subr.mxu0 0.0
        %632 = vmatpush1.msra.mxu0 0.0
        %633 = vmatprep.subr.mxu0 0.0
        %634 = vmatpush1.msra.mxu0 0.0
        %635 = vmatprep.subr.mxu0 0.0
        %636 = vmatpush1.msra.mxu0 0.0
        %637 = vmatprep.subr.mxu0 0.0
        %638 = vmatpush1.msra.mxu0 0.0
        %639 = vmatprep.subr.mxu0 0.0
        %640 = vmatpush1.msra.mxu0 0.0
        %641 = vmatprep.subr.mxu0 0.0
        %642 = vmatpush1.msra.mxu0 0.0
        %643 = vmatprep.mubr.f32.mxu0 0.0
        %644 = vmatmul.mubr.f32.gmra.mrb[0].mxu0 %v577
        %v645 = vpop.f32.mrb[0].mxu0
        %v646 = vadd.f32 %v573, %v645
        %v647 = vpop.f32.mrb[0].mxu0
        %648 = vdwg.mxu0
        %v650 = vsel %vm502, %v415, 0
        %652 = vmatprep.subr.mxu0 0.0
        %653 = vmatpush1.msra.mxu0 %v469
        %654 = vmatprep.subr.mxu0 0.0
        %655 = vmatpush1.msra.mxu0 %v472
        %656 = vmatprep.subr.mxu0 0.0
        %657 = vmatpush1.msra.mxu0 %v475
        %658 = vmatprep.subr.mxu0 0.0
        %659 = vmatpush1.msra.mxu0 %v478
        %660 = vmatprep.subr.mxu0 0.0
        %661 = vmatpush1.msra.mxu0 %v481
        %662 = vmatprep.subr.mxu0 0.0
        %663 = vmatpush1.msra.mxu0 %v484
        %664 = vmatprep.subr.mxu0 0.0
        %665 = vmatpush1.msra.mxu0 %v487
        %666 = vmatprep.subr.mxu0 0.0
        %667 = vmatpush1.msra.mxu0 %v490
        %668 = vmatprep.subr.mxu0 0.0
        %669 = vmatpush1.msra.mxu0 %v493
        %670 = vmatprep.subr.mxu0 0.0
        %671 = vmatpush1.msra.mxu0 0.0
        %672 = vmatprep.subr.mxu0 0.0
        %673 = vmatpush1.msra.mxu0 0.0
        %674 = vmatprep.subr.mxu0 0.0
        %675 = vmatpush1.msra.mxu0 0.0
        %676 = vmatprep.subr.mxu0 0.0
        %677 = vmatpush1.msra.mxu0 0.0
        %678 = vmatprep.subr.mxu0 0.0
        %679 = vmatpush1.msra.mxu0 0.0
        %680 = vmatprep.subr.mxu0 0.0
        %681 = vmatpush1.msra.mxu0 0.0
        %682 = vmatprep.subr.mxu0 0.0
        %683 = vmatpush1.msra.mxu0 0.0
        %684 = vmatprep.subr.mxu0 0.0
        %685 = vmatpush1.msra.mxu0 0.0
        %686 = vmatprep.subr.mxu0 0.0
        %687 = vmatpush1.msra.mxu0 0.0
        %688 = vmatprep.subr.mxu0 0.0
        %689 = vmatpush1.msra.mxu0 0.0
        %690 = vmatprep.subr.mxu0 0.0
        %691 = vmatpush1.msra.mxu0 0.0
        %692 = vmatprep.subr.mxu0 0.0
        %693 = vmatpush1.msra.mxu0 0.0
        %694 = vmatprep.subr.mxu0 0.0
        %695 = vmatpush1.msra.mxu0 0.0
        %696 = vmatprep.subr.mxu0 0.0
        %697 = vmatpush1.msra.mxu0 0.0
        %698 = vmatprep.subr.mxu0 0.0
        %699 = vmatpush1.msra.mxu0 0.0
        %700 = vmatprep.subr.mxu0 0.0
        %701 = vmatpush1.msra.mxu0 0.0
        %702 = vmatprep.subr.mxu0 0.0
        %703 = vmatpush1.msra.mxu0 0.0
        %704 = vmatprep.subr.mxu0 0.0
        %705 = vmatpush1.msra.mxu0 0.0
        %706 = vmatprep.subr.mxu0 0.0
        %707 = vmatpush1.msra.mxu0 0.0
        %708 = vmatprep.subr.mxu0 0.0
        %709 = vmatpush1.msra.mxu0 0.0
        %710 = vmatprep.subr.mxu0 0.0
        %711 = vmatpush1.msra.mxu0 0.0
        %712 = vmatprep.subr.mxu0 0.0
        %713 = vmatpush1.msra.mxu0 0.0
        %714 = vmatprep.subr.mxu0 0.0
        %715 = vmatpush1.msra.mxu0 0.0
        %716 = vmatprep.mubr.f32.mxu0 0.0
        %717 = vmatmul.mubr.f32.gmra.mrb[0].mxu0 %v650
        %v718 = vpop.f32.mrb[0].mxu0
        %v719 = vadd.f32 0.0, %v718
        %v720 = vpop.f32.mrb[0].mxu0
        %721 = vdwg.mxu0
        %v722 = vadd.f32 %v646, %v719
        %724 = vset.pattern.permute.xlu0 0
        %725 = vperm.xlu0 %724, %v409
        %v726 = vpop.permute.xlu0 %725
        %v728 = vadd.f32 %v722, %v726
        %v730 = vlaneseq
        %v731 = vshrl.u32 %v730, 7
        %v732 = vsub.s32 0, %v731
        %v733 = vrot.slane %v410, %v732
        %v735 = vmul.f32 %v728, %v733
        %737 = vrot.lane.b32.xlu0 %v735, 11
        %v738 = vpop.permute.xlu0 %737
        %vm740 = vcmask 89088
        %v741 = vsel %vm740, 0.0, %v738
        %vm742 = vcmask 728064
        %v743 = vsel %vm742, %v741, 0.0
        %vm744 = vcmask 818176
        %745 = vst.msk [vmem:[%s407] sm:$0xff] %vm744, %v743
      $region48: #{run.9} parent=43 // pred_fallthru
        _
      %p746 = pneg %p499
      // Predicated region
      $region49: #{run.9} parent=43 // pred_check
        _
      $region50: #{run.9} parent=43 // pred_check_branch
        %748 = sbr.rel (%p499) target = $region52
      $region51: #{run.9} parent=43 // pred_region
        %vm749 = vcmask 818176
        %750 = vst.msk [vmem:[%s407] sm:$0xff] %vm749, 0.0
      $region52: #{run.9} parent=43 // pred_fallthru
        _
      %v751 = vld [vmem:[%s394] sm:$0xff]
      %753 = vrot.lane.b32.xlu0 %v751, 127
      %v754 = vpop.permute.xlu0 %753
      %756 = vrot.lane.b32.xlu0 %v751, 126
      %v757 = vpop.permute.xlu0 %756
      %759 = vrot.lane.b32.xlu0 %v751, 118
      %v760 = vpop.permute.xlu0 %759
      %762 = vrot.lane.b32.xlu0 %v751, 117
      %v763 = vpop.permute.xlu0 %762
      %765 = vrot.lane.b32.xlu0 %v751, 116
      %v766 = vpop.permute.xlu0 %765
      %768 = vrot.lane.b32.xlu0 %v751, 108
      %v769 = vpop.permute.xlu0 %768
      %771 = vrot.lane.b32.xlu0 %v751, 107
      %v772 = vpop.permute.xlu0 %771
      %774 = vrot.lane.b32.xlu0 %v751, 106
      %v775 = vpop.permute.xlu0 %774
      %s777 = sadd.s32 %s495, 1
      %p778 = scmp.ge.s32.totalorder %s777, 1
      %p779 = scmp.le.s32.totalorder %s777, 8
      %p780 = pnand %p778, %p779
      %p781 = pneg %p780
      // Predicated region
      $region53: #{run.9} parent=43 // pred_check
        _
      $region54: #{run.9} parent=43 // pred_check_branch
        %783 = sbr.rel (%p780) target = $region56
      $region55: #{run.9} parent=43 // pred_region
        %vm784 = vcmask 588800
        %v786 = vsel %vm784, %v413, 0
        %788 = vmatprep.subr.mxu0 0.0
        %789 = vmatpush1.msra.mxu0 %v469
        %790 = vmatprep.subr.mxu0 0.0
        %791 = vmatpush1.msra.mxu0 %v472
        %792 = vmatprep.subr.mxu0 0.0
        %793 = vmatpush1.msra.mxu0 %v475
        %794 = vmatprep.subr.mxu0 0.0
        %795 = vmatpush1.msra.mxu0 %v478
        %796 = vmatprep.subr.mxu0 0.0
        %797 = vmatpush1.msra.mxu0 %v481
        %798 = vmatprep.subr.mxu0 0.0
        %799 = vmatpush1.msra.mxu0 %v484
        %800 = vmatprep.subr.mxu0 0.0
        %801 = vmatpush1.msra.mxu0 %v487
        %802 = vmatprep.subr.mxu0 0.0
        %803 = vmatpush1.msra.mxu0 %v490
        %804 = vmatprep.subr.mxu0 0.0
        %805 = vmatpush1.msra.mxu0 %v493
        %806 = vmatprep.subr.mxu0 0.0
        %807 = vmatpush1.msra.mxu0 0.0
        %808 = vmatprep.subr.mxu0 0.0
        %809 = vmatpush1.msra.mxu0 0.0
        %810 = vmatprep.subr.mxu0 0.0
        %811 = vmatpush1.msra.mxu0 0.0
        %812 = vmatprep.subr.mxu0 0.0
        %813 = vmatpush1.msra.mxu0 0.0
        %814 = vmatprep.subr.mxu0 0.0
        %815 = vmatpush1.msra.mxu0 0.0
        %816 = vmatprep.subr.mxu0 0.0
        %817 = vmatpush1.msra.mxu0 0.0
        %818 = vmatprep.subr.mxu0 0.0
        %819 = vmatpush1.msra.mxu0 0.0
        %820 = vmatprep.subr.mxu0 0.0
        %821 = vmatpush1.msra.mxu0 0.0
        %822 = vmatprep.subr.mxu0 0.0
        %823 = vmatpush1.msra.mxu0 0.0
        %824 = vmatprep.subr.mxu0 0.0
        %825 = vmatpush1.msra.mxu0 0.0
        %826 = vmatprep.subr.mxu0 0.0
        %827 = vmatpush1.msra.mxu0 0.0
        %828 = vmatprep.subr.mxu0 0.0
        %829 = vmatpush1.msra.mxu0 0.0
        %830 = vmatprep.subr.mxu0 0.0
        %831 = vmatpush1.msra.mxu0 0.0
        %832 = vmatprep.subr.mxu0 0.0
        %833 = vmatpush1.msra.mxu0 0.0
        %834 = vmatprep.subr.mxu0 0.0
        %835 = vmatpush1.msra.mxu0 0.0
        %836 = vmatprep.subr.mxu0 0.0
        %837 = vmatpush1.msra.mxu0 0.0
        %838 = vmatprep.subr.mxu0 0.0
        %839 = vmatpush1.msra.mxu0 0.0
        %840 = vmatprep.subr.mxu0 0.0
        %841 = vmatpush1.msra.mxu0 0.0
        %842 = vmatprep.subr.mxu0 0.0
        %843 = vmatpush1.msra.mxu0 0.0
        %844 = vmatprep.subr.mxu0 0.0
        %845 = vmatpush1.msra.mxu0 0.0
        %846 = vmatprep.subr.mxu0 0.0
        %847 = vmatpush1.msra.mxu0 0.0
        %848 = vmatprep.subr.mxu0 0.0
        %849 = vmatpush1.msra.mxu0 0.0
        %850 = vmatprep.subr.mxu0 0.0
        %851 = vmatpush1.msra.mxu0 0.0
        %852 = vmatprep.mubr.f32.mxu0 0.0
        %853 = vmatmul.mubr.f32.gmra.mrb[0].mxu0 %v786
        %v854 = vpop.f32.mrb[0].mxu0
        %v855 = vadd.f32 0.0, %v854
        %v856 = vpop.f32.mrb[0].mxu0
        %857 = vdwg.mxu0
        %v859 = vsel %vm784, %v411, 0
        %861 = vmatprep.subr.mxu0 0.0
        %862 = vmatpush1.msra.mxu0 %v442
        %863 = vmatprep.subr.mxu0 0.0
        %864 = vmatpush1.msra.mxu0 %v445
        %865 = vmatprep.subr.mxu0 0.0
        %866 = vmatpush1.msra.mxu0 %v448
        %867 = vmatprep.subr.mxu0 0.0
        %868 = vmatpush1.msra.mxu0 %v451
        %869 = vmatprep.subr.mxu0 0.0
        %870 = vmatpush1.msra.mxu0 %v454
        %871 = vmatprep.subr.mxu0 0.0
        %872 = vmatpush1.msra.mxu0 %v457
        %873 = vmatprep.subr.mxu0 0.0
        %874 = vmatpush1.msra.mxu0 %v460
        %875 = vmatprep.subr.mxu0 0.0
        %876 = vmatpush1.msra.mxu0 %v463
        %877 = vmatprep.subr.mxu0 0.0
        %878 = vmatpush1.msra.mxu0 %v466
        %879 = vmatprep.subr.mxu0 0.0
        %880 = vmatpush1.msra.mxu0 0.0
        %881 = vmatprep.subr.mxu0 0.0
        %882 = vmatpush1.msra.mxu0 0.0
        %883 = vmatprep.subr.mxu0 0.0
        %884 = vmatpush1.msra.mxu0 0.0
        %885 = vmatprep.subr.mxu0 0.0
        %886 = vmatpush1.msra.mxu0 0.0
        %887 = vmatprep.subr.mxu0 0.0
        %888 = vmatpush1.msra.mxu0 0.0
        %889 = vmatprep.subr.mxu0 0.0
        %890 = vmatpush1.msra.mxu0 0.0
        %891 = vmatprep.subr.mxu0 0.0
        %892 = vmatpush1.msra.mxu0 0.0
        %893 = vmatprep.subr.mxu0 0.0
        %894 = vmatpush1.msra.mxu0 0.0
        %895 = vmatprep.subr.mxu0 0.0
        %896 = vmatpush1.msra.mxu0 0.0
        %897 = vmatprep.subr.mxu0 0.0
        %898 = vmatpush1.msra.mxu0 0.0
        %899 = vmatprep.subr.mxu0 0.0
        %900 = vmatpush1.msra.mxu0 0.0
        %901 = vmatprep.subr.mxu0 0.0
        %902 = vmatpush1.msra.mxu0 0.0
        %903 = vmatprep.subr.mxu0 0.0
        %904 = vmatpush1.msra.mxu0 0.0
        %905 = vmatprep.subr.mxu0 0.0
        %906 = vmatpush1.msra.mxu0 0.0
        %907 = vmatprep.subr.mxu0 0.0
        %908 = vmatpush1.msra.mxu0 0.0
        %909 = vmatprep.subr.mxu0 0.0
        %910 = vmatpush1.msra.mxu0 0.0
        %911 = vmatprep.subr.mxu0 0.0
        %912 = vmatpush1.msra.mxu0 0.0
        %913 = vmatprep.subr.mxu0 0.0
        %914 = vmatpush1.msra.mxu0 0.0
        %915 = vmatprep.subr.mxu0 0.0
        %916 = vmatpush1.msra.mxu0 0.0
        %917 = vmatprep.subr.mxu0 0.0
        %918 = vmatpush1.msra.mxu0 0.0
        %919 = vmatprep.subr.mxu0 0.0
        %920 = vmatpush1.msra.mxu0 0.0
        %921 = vmatprep.subr.mxu0 0.0
        %922 = vmatpush1.msra.mxu0 0.0
        %923 = vmatprep.subr.mxu0 0.0
        %924 = vmatpush1.msra.mxu0 0.0
        %925 = vmatprep.mubr.f32.mxu0 0.0
        %926 = vmatmul.mubr.f32.gmra.mrb[0].mxu0 %v859
        %v927 = vpop.f32.mrb[0].mxu0
        %v928 = vadd.f32 %v855, %v927
        %v929 = vpop.f32.mrb[0].mxu0
        %930 = vdwg.mxu0
        %v932 = vsel %vm784, %v415, 0
        %934 = vmatprep.subr.mxu0 0.0
        %935 = vmatpush1.msra.mxu0 %v751
        %936 = vmatprep.subr.mxu0 0.0
        %937 = vmatpush1.msra.mxu0 %v754
        %938 = vmatprep.subr.mxu0 0.0
        %939 = vmatpush1.msra.mxu0 %v757
        %940 = vmatprep.subr.mxu0 0.0
        %941 = vmatpush1.msra.mxu0 %v760
        %942 = vmatprep.subr.mxu0 0.0
        %943 = vmatpush1.msra.mxu0 %v763
        %944 = vmatprep.subr.mxu0 0.0
        %945 = vmatpush1.msra.mxu0 %v766
        %946 = vmatprep.subr.mxu0 0.0
        %947 = vmatpush1.msra.mxu0 %v769
        %948 = vmatprep.subr.mxu0 0.0
        %949 = vmatpush1.msra.mxu0 %v772
        %950 = vmatprep.subr.mxu0 0.0
        %951 = vmatpush1.msra.mxu0 %v775
        %952 = vmatprep.subr.mxu0 0.0
        %953 = vmatpush1.msra.mxu0 0.0
        %954 = vmatprep.subr.mxu0 0.0
        %955 = vmatpush1.msra.mxu0 0.0
        %956 = vmatprep.subr.mxu0 0.0
        %957 = vmatpush1.msra.mxu0 0.0
        %958 = vmatprep.subr.mxu0 0.0
        %959 = vmatpush1.msra.mxu0 0.0
        %960 = vmatprep.subr.mxu0 0.0
        %961 = vmatpush1.msra.mxu0 0.0
        %962 = vmatprep.subr.mxu0 0.0
        %963 = vmatpush1.msra.mxu0 0.0
        %964 = vmatprep.subr.mxu0 0.0
        %965 = vmatpush1.msra.mxu0 0.0
        %966 = vmatprep.subr.mxu0 0.0
        %967 = vmatpush1.msra.mxu0 0.0
        %968 = vmatprep.subr.mxu0 0.0
        %969 = vmatpush1.msra.mxu0 0.0
        %970 = vmatprep.subr.mxu0 0.0
        %971 = vmatpush1.msra.mxu0 0.0
        %972 = vmatprep.subr.mxu0 0.0
        %973 = vmatpush1.msra.mxu0 0.0
        %974 = vmatprep.subr.mxu0 0.0
        %975 = vmatpush1.msra.mxu0 0.0
        %976 = vmatprep.subr.mxu0 0.0
        %977 = vmatpush1.msra.mxu0 0.0
        %978 = vmatprep.subr.mxu0 0.0
        %979 = vmatpush1.msra.mxu0 0.0
        %980 = vmatprep.subr.mxu0 0.0
        %981 = vmatpush1.msra.mxu0 0.0
        %982 = vmatprep.subr.mxu0 0.0
        %983 = vmatpush1.msra.mxu0 0.0
        %984 = vmatprep.subr.mxu0 0.0
        %985 = vmatpush1.msra.mxu0 0.0
        %986 = vmatprep.subr.mxu0 0.0
        %987 = vmatpush1.msra.mxu0 0.0
        %988 = vmatprep.subr.mxu0 0.0
        %989 = vmatpush1.msra.mxu0 0.0
        %990 = vmatprep.subr.mxu0 0.0
        %991 = vmatpush1.msra.mxu0 0.0
        %992 = vmatprep.subr.mxu0 0.0
        %993 = vmatpush1.msra.mxu0 0.0
        %994 = vmatprep.subr.mxu0 0.0
        %995 = vmatpush1.msra.mxu0 0.0
        %996 = vmatprep.subr.mxu0 0.0
        %997 = vmatpush1.msra.mxu0 0.0
        %998 = vmatprep.mubr.f32.mxu0 0.0
        %999 = vmatmul.mubr.f32.gmra.mrb[0].mxu0 %v932
        %v1000 = vpop.f32.mrb[0].mxu0
        %v1001 = vadd.f32 0.0, %v1000
        %v1002 = vpop.f32.mrb[0].mxu0
        %1003 = vdwg.mxu0
        %v1004 = vadd.f32 %v928, %v1001
        %1006 = vset.pattern.permute.xlu0 0
        %1007 = vperm.xlu0 %1006, %v409
        %v1008 = vpop.permute.xlu0 %1007
        %v1010 = vadd.f32 %v1004, %v1008
        %v1012 = vlaneseq
        %v1013 = vshrl.u32 %v1012, 7
        %v1014 = vsub.s32 0, %v1013
        %v1015 = vrot.slane %v410, %v1014
        %v1017 = vmul.f32 %v1010, %v1015
        %1019 = vrot.lane.b32.xlu0 %v1017, 11
        %v1020 = vpop.permute.xlu0 %1019
        %vm1022 = vcmask 89088
        %v1023 = vsel %vm1022, 0.0, %v1020
        %vm1024 = vcmask 728064
        %v1025 = vsel %vm1024, %v1023, 0.0
        %s1026 = scalar_lea.vmem %s407, 8
        %vm1027 = vcmask 818176
        %1028 = vst.msk [vmem:[%s1026] sm:$0xff] %vm1027, %v1025
      $region56: #{run.9} parent=43 // pred_fallthru
        _
      %p1029 = pneg %p781
      // Predicated region
      $region57: #{run.9} parent=43 // pred_check
        _
      $region58: #{run.9} parent=43 // pred_check_branch
        %1031 = sbr.rel (%p781) target = $region60
      $region59: #{run.9} parent=43 // pred_region
        %s1032 = scalar_lea.vmem %s407, 8
        %vm1033 = vcmask 818176
        %1034 = vst.msk [vmem:[%s1032] sm:$0xff] %vm1033, 0.0
      $region60: #{run.9} parent=43 // pred_fallthru
        _
      %s1035 = smul.u32 2, %s22
      %p1036 = scmp.lt.s32.totalorder %s21, 1
      %s1037 = scalar_select %p1036, %s21, 1
      %p1038 = scmp.lt.s32.totalorder %s1035, 9
      %s1039 = scalar_select %p1038, %s1035, 9
      %s1040 = smul.addr %s1037, 10
      %s1041 = sadd.s32 %s1039, %s1040
      %s1042 = smul.addr %s1041, 8
      %s1043 = scalar_lea.vmem %s6, %s1042
      // Predicated region
      $region61: #{run.9} parent=43 // pred_check
        %p1044 = pneg %p212
      $region62: #{run.9} parent=43 // pred_check_branch
        %1046 = sbr.rel (%p1044) target = $region64
      $region63: #{run.9} parent=43 // pred_region
        %s1047 = smul.u32 2, %s22
      $region64: #{run.9} parent=43 // pred_fallthru
        _
    $region44: #{run.9} parent=5 // pred_fallthru
      _
    %p1048 = scmp.le.s32.totalorder 2, %s12
    // Predicated region
    $region65: #{run.9} parent=5 // pred_check
      %p1049 = pneg %p1048
    $region66: #{run.9} parent=5 // pred_check_branch
      %1051 = sbr.rel (%p1049) target = $region68
    $region67: #{run.9} parent=5 // pred_region
      %s1052 = ssub.s32 %s12, 2
      // Predicated region
      $region69: #{run.9} parent=67 // pred_check
        %p1053 = pneg %p218
      $region70: #{run.9} parent=67 // pred_check_branch
        %1055 = sbr.rel (%p1053) target = $region72
      $region71: #{run.9} parent=67 // pred_region
        %s1056 = smul.u32 2, %s24
        %p1057 = scmp.lt.s32.totalorder %s23, 1
        %s1058 = scalar_select %p1057, %s23, 1
        %p1059 = scmp.lt.s32.totalorder %s1056, 9
        %s1060 = scalar_select %p1059, %s1056, 9
        %s1061 = smul.addr %s1058, 10
        %s1062 = sadd.s32 %s1060, %s1061
        %s1063 = smul.addr %s1062, 8
        %s1064 = scalar_lea.vmem %s6, %s1063
      $region72: #{run.9} parent=67 // pred_fallthru
        _
    $region68: #{run.9} parent=5 // pred_fallthru
      _
  $region6: #{run.9} parent=0 // loop_footer
    %s16 = sadd.s32 1, %s12
  $region7: #{run.9} parent=0 // loop_footer_branch
    %11 = sbr.rel target = $region3
  $region8: #{run.9} parent=0 // loop_exit
    _

// kernel: run.6
$region0: #{run.6}
  #allocation0 [shape = 'u32[]', space=smem, size = 0x4, offset = 0x4, fixed_abs, tag = 'smem constant byte address 0x4 - core index']
  #allocation1 [shape = 'u32[144,128]{1,0:T(1,128)}', space=vmem, size = 0x12000, scoped, tag = 'internal scratch']
  %s0 = inlined_call_operand.vmem [shape: f32[2,6,8,36], index: 0, kind: input, shape index: {}, may-alias: {0,1,2}]
  %s1 = inlined_call_operand.vmem [shape: f32[2,6,8,36], index: 1, kind: input, shape index: {}, may-alias: {0,1,2}]
  %s2 = inlined_call_operand.vmem [shape: f32[2,6,8,36], index: 2, kind: input, shape index: {}, may-alias: {0,1,2}]
  %s3 = inlined_call_operand.vmem [shape: f32[1,22], index: 3, kind: input, shape index: {}]
  %s4 = inlined_call_operand.vmem [shape: f32[3,8,72], index: 4, kind: input, shape index: {}]
  %s5 = inlined_call_operand.vmem [shape: f32[8,1], index: 5, kind: input, shape index: {}]
  %s6 = inlined_call_operand.vmem [shape: f32[2,6,8,36], index: 6, kind: output, shape index: {}]
  %s7 = sld [smem:[#allocation0]]
  $region81: #{run.6} parent=0
    _
  %s9 = ssub.s32 1, %s7
  %s10 = scalar_select 0, %s9, %s7
  loop: start=0, step=1, limit=6
  $region2: #{run.6} parent=0 // loop_pre_header
    _
  $region3: #{run.6} parent=0 // loop_header
    %s12 = sphi 0, %s16
    %p13 = scmp.ge.s32.totalorder %s12, 6
    %s19 = sphi 0, %s31
    %s20 = sphi 0, %s27
    %s21 = sphi 0, %s19
    %s22 = sphi 0, %s20
    %s23 = sphi 0, %s21
    %s24 = sphi 0, %s22
    %s36 = sphi 0, %s38
    %s39 = sphi 0, %s36
    %s40 = sphi 0, %s39
    %s56 = sphi 0, %s40
    %s72 = sphi 0, %s74
    %s75 = sphi 0, %s72
    %s76 = sphi 0, %s75
    %s92 = sphi 0, %s76
    %s108 = sphi 0, %s110
    %s111 = sphi 0, %s108
    %s112 = sphi 0, %s111
    %s128 = sphi 0, %s112
    %s132 = sphi 0, %s132
    %s134 = sphi 0, %s132
    %s135 = sphi 0, %s134
    %s149 = sphi 0, %s135
    %s153 = sphi 0, %s153
    %s155 = sphi 0, %s153
    %s156 = sphi 0, %s155
    %s170 = sphi 0, %s156
    %s174 = sphi 0, %s174
    %s176 = sphi 0, %s174
    %s177 = sphi 0, %s176
    %s191 = sphi 0, %s177
    %s199 = sphi 0, %s201
    %s202 = sphi 0, %s199
    %s203 = sphi 0, %s202
    %s219 = sphi 0, %s203
  $region4: #{run.6} parent=0 // loop_header_branch
    %15 = sbr.rel (%p13) target = $region8
  $region5: #{run.6} parent=0 // loop_body
    %s17 = ssub.s32 %s12, 1
    %s18 = ssub.s32 %s12, 2
    %s25 = sadd.s32 1, %s20
    %p26 = scmp.ge.s32.totalorder %s25, 2
    %s27 = scalar_select %p26, 0, %s25
    %s28 = sadd.s32 1, %s19
    %s29 = scalar_select %p26, %s28, %s19
    %p30 = scmp.ge.s32.totalorder %s29, 2
    %s31 = scalar_select %p30, 0, %s29
    %s32 = ssub.s32 %s19, %s31
    %s33 = ssub.s32 %s20, %s27
    %s34 = sor.u32 %s32, %s33
    %p35 = scmp.eq.s32.totalorder %s34, 0
    %s37 = sadd.s32 %s36, 1
    %s38 = scalar_select %p35, %s36, %s37
    %p41 = pneg %p35
    %p42 = scmp.eq.s32.totalorder %s12, 3
    %p43 = por %p41, %p42
    %p44 = scmp.ne.s32.totalorder %s36, %s39
    %p45 = scmp.eq.s32.totalorder %s12, 0
    %p46 = por %p44, %p45
    %p47 = scmp.ne.s32.totalorder %s36, %s39
    %p48 = scmp.eq.s32.totalorder %s17, 3
    %p49 = por %p47, %p48
    %p50 = scmp.ne.s32.totalorder %s39, %s40
    %p51 = scmp.eq.s32.totalorder %s17, 0
    %p52 = por %p50, %p51
    %p53 = scmp.ne.s32.totalorder %s39, %s40
    %p54 = scmp.eq.s32.totalorder %s18, 3
    %p55 = por %p53, %p54
    %p57 = scmp.ne.s32.totalorder %s40, %s56
    %p58 = scmp.eq.s32.totalorder %s18, 0
    %p59 = por %p57, %p58
    %s60 = smul.u32 %s20, 3
    %s61 = ssub.s32 %s60, 1
    %p62 = scmp.gt.s32.totalorder %s61, 0
    %s63 = scalar_select %p62, %s61, 0
    %s64 = smul.u32 %s27, 3
    %s65 = ssub.s32 %s64, 1
    %p66 = scmp.gt.s32.totalorder %s65, 0
    %s67 = scalar_select %p66, %s65, 0
    %s68 = ssub.s32 %s19, %s31
    %s69 = ssub.s32 %s63, %s67
    %s70 = sor.u32 %s68, %s69
    %p71 = scmp.eq.s32.totalorder %s70, 0
    %s73 = sadd.s32 %s72, 1
    %s74 = scalar_select %p71, %s72, %s73
    %p77 = pneg %p71
    %p78 = scmp.eq.s32.totalorder %s12, 3
    %p79 = por %p77, %p78
    %p80 = scmp.ne.s32.totalorder %s72, %s75
    %p81 = scmp.eq.s32.totalorder %s12, 0
    %p82 = por %p80, %p81
    %p83 = scmp.ne.s32.totalorder %s72, %s75
    %p84 = scmp.eq.s32.totalorder %s17, 3
    %p85 = por %p83, %p84
    %p86 = scmp.ne.s32.totalorder %s75, %s76
    %p87 = scmp.eq.s32.totalorder %s17, 0
    %p88 = por %p86, %p87
    %p89 = scmp.ne.s32.totalorder %s75, %s76
    %p90 = scmp.eq.s32.totalorder %s18, 3
    %p91 = por %p89, %p90
    %p93 = scmp.ne.s32.totalorder %s76, %s92
    %p94 = scmp.eq.s32.totalorder %s18, 0
    %p95 = por %p93, %p94
    %s96 = smul.u32 %s20, 3
    %s97 = sadd.s32 %s96, 3
    %p98 = scmp.lt.s32.totalorder %s97, 5
    %s99 = scalar_select %p98, %s97, 5
    %s100 = smul.u32 %s27, 3
    %s101 = sadd.s32 %s100, 3
    %p102 = scmp.lt.s32.totalorder %s101, 5
    %s103 = scalar_select %p102, %s101, 5
    %s104 = ssub.s32 %s19, %s31
    %s105 = ssub.s32 %s99, %s103
    %s106 = sor.u32 %s104, %s105
    %p107 = scmp.eq.s32.totalorder %s106, 0
    %s109 = sadd.s32 %s108, 1
    %s110 = scalar_select %p107, %s108, %s109
    %p113 = pneg %p107
    %p114 = scmp.eq.s32.totalorder %s12, 3
    %p115 = por %p113, %p114
    %p116 = scmp.ne.s32.totalorder %s108, %s111
    %p117 = scmp.eq.s32.totalorder %s12, 0
    %p118 = por %p116, %p117
    %p119 = scmp.ne.s32.totalorder %s108, %s111
    %p120 = scmp.eq.s32.totalorder %s17, 3
    %p121 = por %p119, %p120
    %p122 = scmp.ne.s32.totalorder %s111, %s112
    %p123 = scmp.eq.s32.totalorder %s17, 0
    %p124 = por %p122, %p123
    %p125 = scmp.ne.s32.totalorder %s111, %s112
    %p126 = scmp.eq.s32.totalorder %s18, 3
    %p127 = por %p125, %p126
    %p129 = scmp.ne.s32.totalorder %s112, %s128
    %p130 = scmp.eq.s32.totalorder %s18, 0
    %p131 = por %p129, %p130
    %s133 = sadd.s32 %s132, 1
    %p136 = scmp.eq.s32.totalorder %s12, 3
    %p137 = scmp.ne.s32.totalorder %s132, %s134
    %p138 = scmp.eq.s32.totalorder %s12, 0
    %p139 = por %p137, %p138
    %p140 = scmp.ne.s32.totalorder %s132, %s134
    %p141 = scmp.eq.s32.totalorder %s17, 3
    %p142 = por %p140, %p141
    %p143 = scmp.ne.s32.totalorder %s134, %s135
    %p144 = scmp.eq.s32.totalorder %s17, 0
    %p145 = por %p143, %p144
    %p146 = scmp.ne.s32.totalorder %s134, %s135
    %p147 = scmp.eq.s32.totalorder %s18, 3
    %p148 = por %p146, %p147
    %p150 = scmp.ne.s32.totalorder %s135, %s149
    %p151 = scmp.eq.s32.totalorder %s18, 0
    %p152 = por %p150, %p151
    %s154 = sadd.s32 %s153, 1
    %p157 = scmp.eq.s32.totalorder %s12, 3
    %p158 = scmp.ne.s32.totalorder %s153, %s155
    %p159 = scmp.eq.s32.totalorder %s12, 0
    %p160 = por %p158, %p159
    %p161 = scmp.ne.s32.totalorder %s153, %s155
    %p162 = scmp.eq.s32.totalorder %s17, 3
    %p163 = por %p161, %p162
    %p164 = scmp.ne.s32.totalorder %s155, %s156
    %p165 = scmp.eq.s32.totalorder %s17, 0
    %p166 = por %p164, %p165
    %p167 = scmp.ne.s32.totalorder %s155, %s156
    %p168 = scmp.eq.s32.totalorder %s18, 3
    %p169 = por %p167, %p168
    %p171 = scmp.ne.s32.totalorder %s156, %s170
    %p172 = scmp.eq.s32.totalorder %s18, 0
    %p173 = por %p171, %p172
    %s175 = sadd.s32 %s174, 1
    %p178 = scmp.eq.s32.totalorder %s12, 3
    %p179 = scmp.ne.s32.totalorder %s174, %s176
    %p180 = scmp.eq.s32.totalorder %s12, 0
    %p181 = por %p179, %p180
    %p182 = scmp.ne.s32.totalorder %s174, %s176
    %p183 = scmp.eq.s32.totalorder %s17, 3
    %p184 = por %p182, %p183
    %p185 = scmp.ne.s32.totalorder %s176, %s177
    %p186 = scmp.eq.s32.totalorder %s17, 0
    %p187 = por %p185, %p186
    %p188 = scmp.ne.s32.totalorder %s176, %s177
    %p189 = scmp.eq.s32.totalorder %s18, 3
    %p190 = por %p188, %p189
    %p192 = scmp.ne.s32.totalorder %s177, %s191
    %p193 = scmp.eq.s32.totalorder %s18, 0
    %p194 = por %p192, %p193
    %s195 = ssub.s32 %s19, %s31
    %s196 = ssub.s32 %s20, %s27
    %s197 = sor.u32 %s195, %s196
    %p198 = scmp.eq.s32.totalorder %s197, 0
    %s200 = sadd.s32 %s199, 1
    %s201 = scalar_select %p198, %s199, %s200
    %p204 = pneg %p198
    %p205 = scmp.eq.s32.totalorder %s12, 3
    %p206 = por %p204, %p205
    %p207 = scmp.ne.s32.totalorder %s199, %s202
    %p208 = scmp.eq.s32.totalorder %s12, 0
    %p209 = por %p207, %p208
    %p210 = scmp.ne.s32.totalorder %s199, %s202
    %p211 = scmp.eq.s32.totalorder %s17, 3
    %p212 = por %p210, %p211
    %p213 = scmp.ne.s32.totalorder %s202, %s203
    %p214 = scmp.eq.s32.totalorder %s17, 0
    %p215 = por %p213, %p214
    %p216 = scmp.ne.s32.totalorder %s202, %s203
    %p217 = scmp.eq.s32.totalorder %s18, 3
    %p218 = por %p216, %p217
    %p220 = scmp.ne.s32.totalorder %s203, %s219
    %p221 = scmp.eq.s32.totalorder %s18, 0
    %p222 = por %p220, %p221
    %p223 = scmp.le.s32.totalorder 1, %s12
    %p224 = scmp.lt.s32.totalorder %s12, 5
    %p225 = pnand %p223, %p224
    %p226 = pneg %p225
    // Predicated region
    $region9: #{run.6} parent=5 // pred_check
      _
    $region10: #{run.6} parent=5 // pred_check_branch
      %228 = sbr.rel (%p225) target = $region12
    $region11: #{run.6} parent=5 // pred_region
      %s229 = ssub.s32 %s12, 1
      // Predicated region
      $region13: #{run.6} parent=11 // pred_check
        %p230 = pneg %p145
      $region14: #{run.6} parent=11 // pred_check_branch
        %232 = sbr.rel (%p230) target = $region16
      $region15: #{run.6} parent=11 // pred_region
        _
      $region16: #{run.6} parent=11 // pred_fallthru
        _
      // Predicated region
      $region17: #{run.6} parent=11 // pred_check
        %p233 = pneg %p166
      $region18: #{run.6} parent=11 // pred_check_branch
        %235 = sbr.rel (%p233) target = $region20
      $region19: #{run.6} parent=11 // pred_region
        _
      $region20: #{run.6} parent=11 // pred_fallthru
        _
      // Predicated region
      $region21: #{run.6} parent=11 // pred_check
        %p236 = pneg %p187
      $region22: #{run.6} parent=11 // pred_check_branch
        %238 = sbr.rel (%p236) target = $region24
      $region23: #{run.6} parent=11 // pred_region
        _
      $region24: #{run.6} parent=11 // pred_fallthru
        _
    $region12: #{run.6} parent=5 // pred_fallthru
      _
    %p239 = scmp.lt.s32.totalorder %s12, 4
    // Predicated region
    $region25: #{run.6} parent=5 // pred_check
      %p240 = pneg %p239
    $region26: #{run.6} parent=5 // pred_check_branch
      %242 = sbr.rel (%p240) target = $region28
    $region27: #{run.6} parent=5 // pred_region
      // Predicated region
      $region29: #{run.6} parent=27 // pred_check
        %p243 = pneg %p46
      $region30: #{run.6} parent=27 // pred_check_branch
        %245 = sbr.rel (%p243) target = $region32
      $region31: #{run.6} parent=27 // pred_region
        %s246 = smul.u32 3, %s20
        %p247 = scmp.lt.s32.totalorder %s19, 1
        %s248 = scalar_select %p247, %s19, 1
        %p249 = scmp.lt.s32.totalorder %s246, 5
        %s250 = scalar_select %p249, %s246, 5
        %s251 = smul.addr %s248, 6
        %s252 = sadd.s32 %s250, %s251
        %s253 = smul.addr %s252, 8
        %s254 = scalar_lea.vmem %s0, %s253
        %s255 = smul.u32 3, %s20
      $region32: #{run.6} parent=27 // pred_fallthru
        _
      // Predicated region
      $region33: #{run.6} parent=27 // pred_check
        %p256 = pneg %p82
      $region34: #{run.6} parent=27 // pred_check_branch
        %258 = sbr.rel (%p256) target = $region36
      $region35: #{run.6} parent=27 // pred_region
        %s259 = smul.u32 %s20, 3
        %s260 = ssub.s32 %s259, 1
        %p261 = scmp.gt.s32.totalorder %s260, 0
        %s262 = scalar_select %p261, %s260, 0
        %p263 = scmp.lt.s32.totalorder %s19, 1
        %s264 = scalar_select %p263, %s19, 1
        %p265 = scmp.lt.s32.totalorder %s262, 5
        %s266 = scalar_select %p265, %s262, 5
        %s267 = smul.addr %s264, 6
        %s268 = sadd.s32 %s266, %s267
        %s269 = smul.addr %s268, 8
        %s270 = scalar_lea.vmem %s1, %s269
        %s271 = smul.u32 %s20, 3
        %s272 = ssub.s32 %s271, 1
        %p273 = scmp.gt.s32.totalorder %s272, 0
        %s274 = scalar_select %p273, %s272, 0
      $region36: #{run.6} parent=27 // pred_fallthru
        _
      // Predicated region
      $region37: #{run.6} parent=27 // pred_check
        %p275 = pneg %p118
      $region38: #{run.6} parent=27 // pred_check_branch
        %277 = sbr.rel (%p275) target = $region40
      $region39: #{run.6} parent=27 // pred_region
        %s278 = smul.u32 %s20, 3
        %s279 = sadd.s32 %s278, 3
        %p280 = scmp.lt.s32.totalorder %s279, 5
        %s281 = scalar_select %p280, %s279, 5
        %p282 = scmp.lt.s32.totalorder %s19, 1
        %s283 = scalar_select %p282, %s19, 1
        %p284 = scmp.lt.s32.totalorder %s281, 5
        %s285 = scalar_select %p284, %s281, 5
        %s286 = smul.addr %s283, 6
        %s287 = sadd.s32 %s285, %s286
        %s288 = smul.addr %s287, 8
        %s289 = scalar_lea.vmem %s2, %s288
        %s290 = smul.u32 %s20, 3
        %s291 = sadd.s32 %s290, 3
        %p292 = scmp.lt.s32.totalorder %s291, 5
        %s293 = scalar_select %p292, %s291, 5
      $region40: #{run.6} parent=27 // pred_fallthru
        _
    $region28: #{run.6} parent=5 // pred_fallthru
      _
    %p294 = scmp.le.s32.totalorder 1, %s12
    %p295 = scmp.lt.s32.totalorder %s12, 5
    %p296 = pnand %p294, %p295
    %p297 = pneg %p296
    // Predicated region
    $region41: #{run.6} parent=5 // pred_check
      _
    $region42: #{run.6} parent=5 // pred_check_branch
      %299 = sbr.rel (%p296) target = $region44
    $region43: #{run.6} parent=5 // pred_region
      %s300 = ssub.s32 %s12, 1
      %s301 = smul.u32 3, %s22
      %p302 = scmp.lt.s32.totalorder %s21, 1
      %s303 = scalar_select %p302, %s21, 1
      %p304 = scmp.lt.s32.totalorder %s301, 5
      %s305 = scalar_select %p304, %s301, 5
      %s306 = smul.addr %s303, 6
      %s307 = sadd.s32 %s305, %s306
      %s308 = smul.addr %s307, 8
      %s309 = scalar_lea.vmem %s0, %s308
      %p310 = pneg %p52
      %p311 = pneg %p49
      %s312 = smul.u32 %s22, 3
      %s313 = ssub.s32 %s312, 1
      %p314 = scmp.gt.s32.totalorder %s313, 0
      %s315 = scalar_select %p314, %s313, 0
      %p316 = scmp.lt.s32.totalorder %s21, 1
      %s317 = scalar_select %p316, %s21, 1
      %p318 = scmp.lt.s32.totalorder %s315, 5
      %s319 = scalar_select %p318, %s315, 5
      %s320 = smul.addr %s317, 6
      %s321 = sadd.s32 %s319, %s320
      %s322 = smul.addr %s321, 8
      %s323 = scalar_lea.vmem %s1, %s322
      %p324 = pneg %p88
      %p325 = pneg %p85
      %s326 = smul.u32 %s22, 3
      %s327 = sadd.s32 %s326, 3
      %p328 = scmp.lt.s32.totalorder %s327, 5
      %s329 = scalar_select %p328, %s327, 5
      %p330 = scmp.lt.s32.totalorder %s21, 1
      %s331 = scalar_select %p330, %s21, 1
      %p332 = scmp.lt.s32.totalorder %s329, 5
      %s333 = scalar_select %p332, %s329, 5
      %s334 = smul.addr %s331, 6
      %s335 = sadd.s32 %s333, %s334
      %s336 = smul.addr %s335, 8
      %s337 = scalar_lea.vmem %s2, %s336
      %p338 = pneg %p124
      %p339 = pneg %p121
      %p340 = pneg %p145
      %p341 = pneg %p142
      %p342 = pneg %p166
      %p343 = pneg %p163
      %p344 = pneg %p187
      %p345 = pneg %p184
      %p346 = pneg %p215
      %p347 = pneg %p212
      %s348 = smul.u32 3, %s22
      %p349 = scmp.lt.s32.totalorder %s21, 1
      %s350 = scalar_select %p349, %s21, 1
      %p351 = scmp.lt.s32.totalorder %s348, 5
      %s352 = scalar_select %p351, %s348, 5
      %s353 = smul.addr %s350, 6
      %s354 = sadd.s32 %s352, %s353
      %s355 = smul.addr %s354, 8
      %s356 = scalar_lea.vmem %s6, %s355
      %s357 = smul.u32 3, %s22
      %p358 = scmp.lt.s32.totalorder %s21, 1
      %s359 = scalar_select %p358, %s21, 1
      %p360 = scmp.lt.s32.totalorder %s357, 5
      %s361 = scalar_select %p360, %s357, 5
      %s362 = smul.addr %s359, 6
      %s363 = sadd.s32 %s361, %s362
      %s364 = smul.addr %s363, 8
      %s365 = scalar_lea.vmem %s0, %s364
      %s366 = smul.u32 3, %s22
      %s367 = smul.u32 %s22, 3
      %s368 = ssub.s32 %s367, 1
      %p369 = scmp.gt.s32.totalorder %s368, 0
      %s370 = scalar_select %p369, %s368, 0
      %p371 = scmp.lt.s32.totalorder %s21, 1
      %s372 = scalar_select %p371, %s21, 1
      %p373 = scmp.lt.s32.totalorder %s370, 5
      %s374 = scalar_select %p373, %s370, 5
      %s375 = smul.addr %s372, 6
      %s376 = sadd.s32 %s374, %s375
      %s377 = smul.addr %s376, 8
      %s378 = scalar_lea.vmem %s1, %s377
      %s379 = smul.u32 %s22, 3
      %s380 = ssub.s32 %s379, 1
      %p381 = scmp.gt.s32.totalorder %s380, 0
      %s382 = scalar_select %p381, %s380, 0
      %s383 = smul.u32 %s22, 3
      %s384 = sadd.s32 %s383, 3
      %p385 = scmp.lt.s32.totalorder %s384, 5
      %s386 = scalar_select %p385, %s384, 5
      %p387 = scmp.lt.s32.totalorder %s21, 1
      %s388 = scalar_select %p387, %s21, 1
      %p389 = scmp.lt.s32.totalorder %s386, 5
      %s390 = scalar_select %p389, %s386, 5
      %s391 = smul.addr %s388, 6
      %s392 = sadd.s32 %s390, %s391
      %s393 = smul.addr %s392, 8
      %s394 = scalar_lea.vmem %s2, %s393
      %s395 = smul.u32 %s22, 3
      %s396 = sadd.s32 %s395, 3
      %p397 = scmp.lt.s32.totalorder %s396, 5
      %s398 = scalar_select %p397, %s396, 5
      %s399 = smul.u32 3, %s22
      %p400 = scmp.lt.s32.totalorder %s21, 1
      %s401 = scalar_select %p400, %s21, 1
      %p402 = scmp.lt.s32.totalorder %s399, 5
      %s403 = scalar_select %p402, %s399, 5
      %s404 = smul.addr %s401, 6
      %s405 = sadd.s32 %s403, %s404
      %s406 = smul.addr %s405, 8
      %s407 = scalar_lea.vmem %s6, %s406
      %s408 = smul.u32 3, %s22
      %v409 = vld [vmem:[%s5] sm:$0xff]
      %v410 = vld [vmem:[%s3] sm:$0x1]
      %v411 = vld [vmem:[%s4] sm:$0xff]
      %s412 = scalar_lea.vmem %s4, 8
      %v413 = vld [vmem:[%s412] sm:$0xff]
      %s414 = scalar_lea.vmem %s4, 16
      %v415 = vld [vmem:[%s414] sm:$0xff]
      %v416 = vld [vmem:[%s378] sm:$0xff]
      %418 = vrot.lane.b32.xlu0 %v416, 127
      %v419 = vpop.permute.xlu0 %418
      %421 = vrot.lane.b32.xlu0 %v416, 126
      %v422 = vpop.permute.xlu0 %421
      %424 = vrot.lane.b32.xlu0 %v416, 122
      %v425 = vpop.permute.xlu0 %424
      %427 = vrot.lane.b32.xlu0 %v416, 121
      %v428 = vpop.permute.xlu0 %427
      %430 = vrot.lane.b32.xlu0 %v416, 120
      %v431 = vpop.permute.xlu0 %430
      %433 = vrot.lane.b32.xlu0 %v416, 116
      %v434 = vpop.permute.xlu0 %433
      %436 = vrot.lane.b32.xlu0 %v416, 115
      %v437 = vpop.permute.xlu0 %436
      %439 = vrot.lane.b32.xlu0 %v416, 114
      %v440 = vpop.permute.xlu0 %439
      %v442 = vld [vmem:[%s365] sm:$0xff]
      %444 = vrot.lane.b32.xlu0 %v442, 127
      %v445 = vpop.permute.xlu0 %444
      %447 = vrot.lane.b32.xlu0 %v442, 126
      %v448 = vpop.permute.xlu0 %447
      %450 = vrot.lane.b32.xlu0 %v442, 122
      %v451 = vpop.permute.xlu0 %450
      %453 = vrot.lane.b32.xlu0 %v442, 121
      %v454 = vpop.permute.xlu0 %453
      %456 = vrot.lane.b32.xlu0 %v442, 120
      %v457 = vpop.permute.xlu0 %456
      %459 = vrot.lane.b32.xlu0 %v442, 116
      %v460 = vpop.permute.xlu0 %459
      %462 = vrot.lane.b32.xlu0 %v442, 115
      %v463 = vpop.permute.xlu0 %462
      %465 = vrot.lane.b32.xlu0 %v442, 114
      %v466 = vpop.permute.xlu0 %465
      %s468 = scalar_lea.vmem %s365, 8
      %v469 = vld [vmem:[%s468] sm:$0xff]
      %471 = vrot.lane.b32.xlu0 %v469, 127
      %v472 = vpop.permute.xlu0 %471
      %474 = vrot.lane.b32.xlu0 %v469, 126
      %v475 = vpop.permute.xlu0 %474
      %477 = vrot.lane.b32.xlu0 %v469, 122
      %v478 = vpop.permute.xlu0 %477
      %480 = vrot.lane.b32.xlu0 %v469, 121
      %v481 = vpop.permute.xlu0 %480
      %483 = vrot.lane.b32.xlu0 %v469, 120
      %v484 = vpop.permute.xlu0 %483
      %486 = vrot.lane.b32.xlu0 %v469, 116
      %v487 = vpop.permute.xlu0 %486
      %489 = vrot.lane.b32.xlu0 %v469, 115
      %v490 = vpop.permute.xlu0 %489
      %492 = vrot.lane.b32.xlu0 %v469, 114
      %v493 = vpop.permute.xlu0 %492
      %s495 = smul.u32 %s22, 3
      %p496 = scmp.ge.s32.totalorder %s495, 1
      %p497 = scmp.le.s32.totalorder %s495, 4
      %p498 = pnand %p496, %p497
      %p499 = pneg %p498
      // Predicated region
      $region45: #{run.6} parent=43 // pred_check
        _
      $region46: #{run.6} parent=43 // pred_check_branch
        %501 = sbr.rel (%p498) target = $region48
      $region47: #{run.6} parent=43 // pred_region
        %vm502 = vcmask 588800
        %v504 = vsel %vm502, %v413, 0
        %506 = vmatprep.subr.mxu0 0.0
        %507 = vmatpush1.msra.mxu0 %v442
        %508 = vmatprep.subr.mxu0 0.0
        %509 = vmatpush1.msra.mxu0 %v445
        %510 = vmatprep.subr.mxu0 0.0
        %511 = vmatpush1.msra.mxu0 %v448
        %512 = vmatprep.subr.mxu0 0.0
        %513 = vmatpush1.msra.mxu0 %v451
        %514 = vmatprep.subr.mxu0 0.0
        %515 = vmatpush1.msra.mxu0 %v454
        %516 = vmatprep.subr.mxu0 0.0
        %517 = vmatpush1.msra.mxu0 %v457
        %518 = vmatprep.subr.mxu0 0.0
        %519 = vmatpush1.msra.mxu0 %v460
        %520 = vmatprep.subr.mxu0 0.0
        %521 = vmatpush1.msra.mxu0 %v463
        %522 = vmatprep.subr.mxu0 0.0
        %523 = vmatpush1.msra.mxu0 %v466
        %524 = vmatprep.subr.mxu0 0.0
        %525 = vmatpush1.msra.mxu0 0.0
        %526 = vmatprep.subr.mxu0 0.0
        %527 = vmatpush1.msra.mxu0 0.0
        %528 = vmatprep.subr.mxu0 0.0
        %529 = vmatpush1.msra.mxu0 0.0
        %530 = vmatprep.subr.mxu0 0.0
        %531 = vmatpush1.msra.mxu0 0.0
        %532 = vmatprep.subr.mxu0 0.0
        %533 = vmatpush1.msra.mxu0 0.0
        %534 = vmatprep.subr.mxu0 0.0
        %535 = vmatpush1.msra.mxu0 0.0
        %536 = vmatprep.subr.mxu0 0.0
        %537 = vmatpush1.msra.mxu0 0.0
        %538 = vmatprep.subr.mxu0 0.0
        %539 = vmatpush1.msra.mxu0 0.0
        %540 = vmatprep.subr.mxu0 0.0
        %541 = vmatpush1.msra.mxu0 0.0
        %542 = vmatprep.subr.mxu0 0.0
        %543 = vmatpush1.msra.mxu0 0.0
        %544 = vmatprep.subr.mxu0 0.0
        %545 = vmatpush1.msra.mxu0 0.0
        %546 = vmatprep.subr.mxu0 0.0
        %547 = vmatpush1.msra.mxu0 0.0
        %548 = vmatprep.subr.mxu0 0.0
        %549 = vmatpush1.msra.mxu0 0.0
        %550 = vmatprep.subr.mxu0 0.0
        %551 = vmatpush1.msra.mxu0 0.0
        %552 = vmatprep.subr.mxu0 0.0
        %553 = vmatpush1.msra.mxu0 0.0
        %554 = vmatprep.subr.mxu0 0.0
        %555 = vmatpush1.msra.mxu0 0.0
        %556 = vmatprep.subr.mxu0 0.0
        %557 = vmatpush1.msra.mxu0 0.0
        %558 = vmatprep.subr.mxu0 0.0
        %559 = vmatpush1.msra.mxu0 0.0
        %560 = vmatprep.subr.mxu0 0.0
        %561 = vmatpush1.msra.mxu0 0.0
        %562 = vmatprep.subr.mxu0 0.0
        %563 = vmatpush1.msra.mxu0 0.0
        %564 = vmatprep.subr.mxu0 0.0
        %565 = vmatpush1.msra.mxu0 0.0
        %566 = vmatprep.subr.mxu0 0.0
        %567 = vmatpush1.msra.mxu0 0.0
        %568 = vmatprep.subr.mxu0 0.0
        %569 = vmatpush1.msra.mxu0 0.0
        %570 = vmatprep.mubr.f32.mxu0 0.0
        %571 = vmatmul.mubr.f32.gmra.mrb[0].mxu0 %v504
        %v572 = vpop.f32.mrb[0].mxu0
        %v573 = vadd.f32 0.0, %v572
        %v574 = vpop.f32.mrb[0].mxu0
        %575 = vdwg.mxu0
        %v577 = vsel %vm502, %v411, 0
        %579 = vmatprep.subr.mxu0 0.0
        %580 = vmatpush1.msra.mxu0 %v416
        %581 = vmatprep.subr.mxu0 0.0
        %582 = vmatpush1.msra.mxu0 %v419
        %583 = vmatprep.subr.mxu0 0.0
        %584 = vmatpush1.msra.mxu0 %v422
        %585 = vmatprep.subr.mxu0 0.0
        %586 = vmatpush1.msra.mxu0 %v425
        %587 = vmatprep.subr.mxu0 0.0
        %588 = vmatpush1.msra.mxu0 %v428
        %589 = vmatprep.subr.mxu0 0.0
        %590 = vmatpush1.msra.mxu0 %v431
        %591 = vmatprep.subr.mxu0 0.0
        %592 = vmatpush1.msra.mxu0 %v434
        %593 = vmatprep.subr.mxu0 0.0
        %594 = vmatpush1.msra.mxu0 %v437
        %595 = vmatprep.subr.mxu0 0.0
        %596 = vmatpush1.msra.mxu0 %v440
        %597 = vmatprep.subr.mxu0 0.0
        %598 = vmatpush1.msra.mxu0 0.0
        %599 = vmatprep.subr.mxu0 0.0
        %600 = vmatpush1.msra.mxu0 0.0
        %601 = vmatprep.subr.mxu0 0.0
        %602 = vmatpush1.msra.mxu0 0.0
        %603 = vmatprep.subr.mxu0 0.0
        %604 = vmatpush1.msra.mxu0 0.0
        %605 = vmatprep.subr.mxu0 0.0
        %606 = vmatpush1.msra.mxu0 0.0
        %607 = vmatprep.subr.mxu0 0.0
        %608 = vmatpush1.msra.mxu0 0.0
        %609 = vmatprep.subr.mxu0 0.0
        %610 = vmatpush1.msra.mxu0 0.0
        %611 = vmatprep.subr.mxu0 0.0
        %612 = vmatpush1.msra.mxu0 0.0
        %613 = vmatprep.subr.mxu0 0.0
        %614 = vmatpush1.msra.mxu0 0.0
        %615 = vmatprep.subr.mxu0 0.0
        %616 = vmatpush1.msra.mxu0 0.0
        %617 = vmatprep.subr.mxu0 0.0
        %618 = vmatpush1.msra.mxu0 0.0
        %619 = vmatprep.subr.mxu0 0.0
        %620 = vmatpush1.msra.mxu0 0.0
        %621 = vmatprep.subr.mxu0 0.0
        %622 = vmatpush1.msra.mxu0 0.0
        %623 = vmatprep.subr.mxu0 0.0
        %624 = vmatpush1.msra.mxu0 0.0
        %625 = vmatprep.subr.mxu0 0.0
        %626 = vmatpush1.msra.mxu0 0.0
        %627 = vmatprep.subr.mxu0 0.0
        %628 = vmatpush1.msra.mxu0 0.0
        %629 = vmatprep.subr.mxu0 0.0
        %630 = vmatpush1.msra.mxu0 0.0
        %631 = vmatprep.subr.mxu0 0.0
        %632 = vmatpush1.msra.mxu0 0.0
        %633 = vmatprep.subr.mxu0 0.0
        %634 = vmatpush1.msra.mxu0 0.0
        %635 = vmatprep.subr.mxu0 0.0
        %636 = vmatpush1.msra.mxu0 0.0
        %637 = vmatprep.subr.mxu0 0.0
        %638 = vmatpush1.msra.mxu0 0.0
        %639 = vmatprep.subr.mxu0 0.0
        %640 = vmatpush1.msra.mxu0 0.0
        %641 = vmatprep.subr.mxu0 0.0
        %642 = vmatpush1.msra.mxu0 0.0
        %643 = vmatprep.mubr.f32.mxu0 0.0
        %644 = vmatmul.mubr.f32.gmra.mrb[0].mxu0 %v577
        %v645 = vpop.f32.mrb[0].mxu0
        %v646 = vadd.f32 %v573, %v645
        %v647 = vpop.f32.mrb[0].mxu0
        %648 = vdwg.mxu0
        %v650 = vsel %vm502, %v415, 0
        %652 = vmatprep.subr.mxu0 0.0
        %653 = vmatpush1.msra.mxu0 %v469
        %654 = vmatprep.subr.mxu0 0.0
        %655 = vmatpush1.msra.mxu0 %v472
        %656 = vmatprep.subr.mxu0 0.0
        %657 = vmatpush1.msra.mxu0 %v475
        %658 = vmatprep.subr.mxu0 0.0
        %659 = vmatpush1.msra.mxu0 %v478
        %660 = vmatprep.subr.mxu0 0.0
        %661 = vmatpush1.msra.mxu0 %v481
        %662 = vmatprep.subr.mxu0 0.0
        %663 = vmatpush1.msra.mxu0 %v484
        %664 = vmatprep.subr.mxu0 0.0
        %665 = vmatpush1.msra.mxu0 %v487
        %666 = vmatprep.subr.mxu0 0.0
        %667 = vmatpush1.msra.mxu0 %v490
        %668 = vmatprep.subr.mxu0 0.0
        %669 = vmatpush1.msra.mxu0 %v493
        %670 = vmatprep.subr.mxu0 0.0
        %671 = vmatpush1.msra.mxu0 0.0
        %672 = vmatprep.subr.mxu0 0.0
        %673 = vmatpush1.msra.mxu0 0.0
        %674 = vmatprep.subr.mxu0 0.0
        %675 = vmatpush1.msra.mxu0 0.0
        %676 = vmatprep.subr.mxu0 0.0
        %677 = vmatpush1.msra.mxu0 0.0
        %678 = vmatprep.subr.mxu0 0.0
        %679 = vmatpush1.msra.mxu0 0.0
        %680 = vmatprep.subr.mxu0 0.0
        %681 = vmatpush1.msra.mxu0 0.0
        %682 = vmatprep.subr.mxu0 0.0
        %683 = vmatpush1.msra.mxu0 0.0
        %684 = vmatprep.subr.mxu0 0.0
        %685 = vmatpush1.msra.mxu0 0.0
        %686 = vmatprep.subr.mxu0 0.0
        %687 = vmatpush1.msra.mxu0 0.0
        %688 = vmatprep.subr.mxu0 0.0
        %689 = vmatpush1.msra.mxu0 0.0
        %690 = vmatprep.subr.mxu0 0.0
        %691 = vmatpush1.msra.mxu0 0.0
        %692 = vmatprep.subr.mxu0 0.0
        %693 = vmatpush1.msra.mxu0 0.0
        %694 = vmatprep.subr.mxu0 0.0
        %695 = vmatpush1.msra.mxu0 0.0
        %696 = vmatprep.subr.mxu0 0.0
        %697 = vmatpush1.msra.mxu0 0.0
        %698 = vmatprep.subr.mxu0 0.0
        %699 = vmatpush1.msra.mxu0 0.0
        %700 = vmatprep.subr.mxu0 0.0
        %701 = vmatpush1.msra.mxu0 0.0
        %702 = vmatprep.subr.mxu0 0.0
        %703 = vmatpush1.msra.mxu0 0.0
        %704 = vmatprep.subr.mxu0 0.0
        %705 = vmatpush1.msra.mxu0 0.0
        %706 = vmatprep.subr.mxu0 0.0
        %707 = vmatpush1.msra.mxu0 0.0
        %708 = vmatprep.subr.mxu0 0.0
        %709 = vmatpush1.msra.mxu0 0.0
        %710 = vmatprep.subr.mxu0 0.0
        %711 = vmatpush1.msra.mxu0 0.0
        %712 = vmatprep.subr.mxu0 0.0
        %713 = vmatpush1.msra.mxu0 0.0
        %714 = vmatprep.subr.mxu0 0.0
        %715 = vmatpush1.msra.mxu0 0.0
        %716 = vmatprep.mubr.f32.mxu0 0.0
        %717 = vmatmul.mubr.f32.gmra.mrb[0].mxu0 %v650
        %v718 = vpop.f32.mrb[0].mxu0
        %v719 = vadd.f32 0.0, %v718
        %v720 = vpop.f32.mrb[0].mxu0
        %721 = vdwg.mxu0
        %v722 = vadd.f32 %v646, %v719
        %724 = vset.pattern.permute.xlu0 0
        %725 = vperm.xlu0 %724, %v409
        %v726 = vpop.permute.xlu0 %725
        %v728 = vadd.f32 %v722, %v726
        %v730 = vlaneseq
        %v731 = vshrl.u32 %v730, 7
        %v732 = vsub.s32 0, %v731
        %v733 = vrot.slane %v410, %v732
        %v735 = vmul.f32 %v728, %v733
        %737 = vrot.lane.b32.xlu0 %v735, 7
        %v738 = vpop.permute.xlu0 %737
        %vm740 = vcmask 56320
        %v741 = vsel %vm740, 0.0, %v738
        %vm742 = vcmask 236544
        %v743 = vsel %vm742, %v741, 0.0
        %vm744 = vcmask 293888
        %745 = vst.msk [vmem:[%s407] sm:$0xff] %vm744, %v743
      $region48: #{run.6} parent=43 // pred_fallthru
        _
      %p746 = pneg %p499
      // Predicated region
      $region49: #{run.6} parent=43 // pred_check
        _
      $region50: #{run.6} parent=43 // pred_check_branch
        %748 = sbr.rel (%p499) target = $region52
      $region51: #{run.6} parent=43 // pred_region
        %vm749 = vcmask 293888
        %750 = vst.msk [vmem:[%s407] sm:$0xff] %vm749, 0.0
      $region52: #{run.6} parent=43 // pred_fallthru
        _
      %s751 = scalar_lea.vmem %s365, 16
      %v752 = vld [vmem:[%s751] sm:$0xff]
      %754 = vrot.lane.b32.xlu0 %v752, 127
      %v755 = vpop.permute.xlu0 %754
      %757 = vrot.lane.b32.xlu0 %v752, 126
      %v758 = vpop.permute.xlu0 %757
      %760 = vrot.lane.b32.xlu0 %v752, 122
      %v761 = vpop.permute.xlu0 %760
      %763 = vrot.lane.b32.xlu0 %v752, 121
      %v764 = vpop.permute.xlu0 %763
      %766 = vrot.lane.b32.xlu0 %v752, 120
      %v767 = vpop.permute.xlu0 %766
      %769 = vrot.lane.b32.xlu0 %v752, 116
      %v770 = vpop.permute.xlu0 %769
      %772 = vrot.lane.b32.xlu0 %v752, 115
      %v773 = vpop.permute.xlu0 %772
      %775 = vrot.lane.b32.xlu0 %v752, 114
      %v776 = vpop.permute.xlu0 %775
      %s778 = sadd.s32 %s495, 1
      %p779 = scmp.ge.s32.totalorder %s778, 1
      %p780 = scmp.le.s32.totalorder %s778, 4
      %p781 = pnand %p779, %p780
      %p782 = pneg %p781
      // Predicated region
      $region53: #{run.6} parent=43 // pred_check
        _
      $region54: #{run.6} parent=43 // pred_check_branch
        %784 = sbr.rel (%p781) target = $region56
      $region55: #{run.6} parent=43 // pred_region
        %vm785 = vcmask 588800
        %v787 = vsel %vm785, %v413, 0
        %789 = vmatprep.subr.mxu0 0.0
        %790 = vmatpush1.msra.mxu0 %v469
        %791 = vmatprep.subr.mxu0 0.0
        %792 = vmatpush1.msra.mxu0 %v472
        %793 = vmatprep.subr.mxu0 0.0
        %794 = vmatpush1.msra.mxu0 %v475
        %795 = vmatprep.subr.mxu0 0.0
        %796 = vmatpush1.msra.mxu0 %v478
        %797 = vmatprep.subr.mxu0 0.0
        %798 = vmatpush1.msra.mxu0 %v481
        %799 = vmatprep.subr.mxu0 0.0
        %800 = vmatpush1.msra.mxu0 %v484
        %801 = vmatprep.subr.mxu0 0.0
        %802 = vmatpush1.msra.mxu0 %v487
        %803 = vmatprep.subr.mxu0 0.0
        %804 = vmatpush1.msra.mxu0 %v490
        %805 = vmatprep.subr.mxu0 0.0
        %806 = vmatpush1.msra.mxu0 %v493
        %807 = vmatprep.subr.mxu0 0.0
        %808 = vmatpush1.msra.mxu0 0.0
        %809 = vmatprep.subr.mxu0 0.0
        %810 = vmatpush1.msra.mxu0 0.0
        %811 = vmatprep.subr.mxu0 0.0
        %812 = vmatpush1.msra.mxu0 0.0
        %813 = vmatprep.subr.mxu0 0.0
        %814 = vmatpush1.msra.mxu0 0.0
        %815 = vmatprep.subr.mxu0 0.0
        %816 = vmatpush1.msra.mxu0 0.0
        %817 = vmatprep.subr.mxu0 0.0
        %818 = vmatpush1.msra.mxu0 0.0
        %819 = vmatprep.subr.mxu0 0.0
        %820 = vmatpush1.msra.mxu0 0.0
        %821 = vmatprep.subr.mxu0 0.0
        %822 = vmatpush1.msra.mxu0 0.0
        %823 = vmatprep.subr.mxu0 0.0
        %824 = vmatpush1.msra.mxu0 0.0
        %825 = vmatprep.subr.mxu0 0.0
        %826 = vmatpush1.msra.mxu0 0.0
        %827 = vmatprep.subr.mxu0 0.0
        %828 = vmatpush1.msra.mxu0 0.0
        %829 = vmatprep.subr.mxu0 0.0
        %830 = vmatpush1.msra.mxu0 0.0
        %831 = vmatprep.subr.mxu0 0.0
        %832 = vmatpush1.msra.mxu0 0.0
        %833 = vmatprep.subr.mxu0 0.0
        %834 = vmatpush1.msra.mxu0 0.0
        %835 = vmatprep.subr.mxu0 0.0
        %836 = vmatpush1.msra.mxu0 0.0
        %837 = vmatprep.subr.mxu0 0.0
        %838 = vmatpush1.msra.mxu0 0.0
        %839 = vmatprep.subr.mxu0 0.0
        %840 = vmatpush1.msra.mxu0 0.0
        %841 = vmatprep.subr.mxu0 0.0
        %842 = vmatpush1.msra.mxu0 0.0
        %843 = vmatprep.subr.mxu0 0.0
        %844 = vmatpush1.msra.mxu0 0.0
        %845 = vmatprep.subr.mxu0 0.0
        %846 = vmatpush1.msra.mxu0 0.0
        %847 = vmatprep.subr.mxu0 0.0
        %848 = vmatpush1.msra.mxu0 0.0
        %849 = vmatprep.subr.mxu0 0.0
        %850 = vmatpush1.msra.mxu0 0.0
        %851 = vmatprep.subr.mxu0 0.0
        %852 = vmatpush1.msra.mxu0 0.0
        %853 = vmatprep.mubr.f32.mxu0 0.0
        %854 = vmatmul.mubr.f32.gmra.mrb[0].mxu0 %v787
        %v855 = vpop.f32.mrb[0].mxu0
        %v856 = vadd.f32 0.0, %v855
        %v857 = vpop.f32.mrb[0].mxu0
        %858 = vdwg.mxu0
        %v860 = vsel %vm785, %v411, 0
        %862 = vmatprep.subr.mxu0 0.0
        %863 = vmatpush1.msra.mxu0 %v442
        %864 = vmatprep.subr.mxu0 0.0
        %865 = vmatpush1.msra.mxu0 %v445
        %866 = vmatprep.subr.mxu0 0.0
        %867 = vmatpush1.msra.mxu0 %v448
        %868 = vmatprep.subr.mxu0 0.0
        %869 = vmatpush1.msra.mxu0 %v451
        %870 = vmatprep.subr.mxu0 0.0
        %871 = vmatpush1.msra.mxu0 %v454
        %872 = vmatprep.subr.mxu0 0.0
        %873 = vmatpush1.msra.mxu0 %v457
        %874 = vmatprep.subr.mxu0 0.0
        %875 = vmatpush1.msra.mxu0 %v460
        %876 = vmatprep.subr.mxu0 0.0
        %877 = vmatpush1.msra.mxu0 %v463
        %878 = vmatprep.subr.mxu0 0.0
        %879 = vmatpush1.msra.mxu0 %v466
        %880 = vmatprep.subr.mxu0 0.0
        %881 = vmatpush1.msra.mxu0 0.0
        %882 = vmatprep.subr.mxu0 0.0
        %883 = vmatpush1.msra.mxu0 0.0
        %884 = vmatprep.subr.mxu0 0.0
        %885 = vmatpush1.msra.mxu0 0.0
        %886 = vmatprep.subr.mxu0 0.0
        %887 = vmatpush1.msra.mxu0 0.0
        %888 = vmatprep.subr.mxu0 0.0
        %889 = vmatpush1.msra.mxu0 0.0
        %890 = vmatprep.subr.mxu0 0.0
        %891 = vmatpush1.msra.mxu0 0.0
        %892 = vmatprep.subr.mxu0 0.0
        %893 = vmatpush1.msra.mxu0 0.0
        %894 = vmatprep.subr.mxu0 0.0
        %895 = vmatpush1.msra.mxu0 0.0
        %896 = vmatprep.subr.mxu0 0.0
        %897 = vmatpush1.msra.mxu0 0.0
        %898 = vmatprep.subr.mxu0 0.0
        %899 = vmatpush1.msra.mxu0 0.0
        %900 = vmatprep.subr.mxu0 0.0
        %901 = vmatpush1.msra.mxu0 0.0
        %902 = vmatprep.subr.mxu0 0.0
        %903 = vmatpush1.msra.mxu0 0.0
        %904 = vmatprep.subr.mxu0 0.0
        %905 = vmatpush1.msra.mxu0 0.0
        %906 = vmatprep.subr.mxu0 0.0
        %907 = vmatpush1.msra.mxu0 0.0
        %908 = vmatprep.subr.mxu0 0.0
        %909 = vmatpush1.msra.mxu0 0.0
        %910 = vmatprep.subr.mxu0 0.0
        %911 = vmatpush1.msra.mxu0 0.0
        %912 = vmatprep.subr.mxu0 0.0
        %913 = vmatpush1.msra.mxu0 0.0
        %914 = vmatprep.subr.mxu0 0.0
        %915 = vmatpush1.msra.mxu0 0.0
        %916 = vmatprep.subr.mxu0 0.0
        %917 = vmatpush1.msra.mxu0 0.0
        %918 = vmatprep.subr.mxu0 0.0
        %919 = vmatpush1.msra.mxu0 0.0
        %920 = vmatprep.subr.mxu0 0.0
        %921 = vmatpush1.msra.mxu0 0.0
        %922 = vmatprep.subr.mxu0 0.0
        %923 = vmatpush1.msra.mxu0 0.0
        %924 = vmatprep.subr.mxu0 0.0
        %925 = vmatpush1.msra.mxu0 0.0
        %926 = vmatprep.mubr.f32.mxu0 0.0
        %927 = vmatmul.mubr.f32.gmra.mrb[0].mxu0 %v860
        %v928 = vpop.f32.mrb[0].mxu0
        %v929 = vadd.f32 %v856, %v928
        %v930 = vpop.f32.mrb[0].mxu0
        %931 = vdwg.mxu0
        %v933 = vsel %vm785, %v415, 0
        %935 = vmatprep.subr.mxu0 0.0
        %936 = vmatpush1.msra.mxu0 %v752
        %937 = vmatprep.subr.mxu0 0.0
        %938 = vmatpush1.msra.mxu0 %v755
        %939 = vmatprep.subr.mxu0 0.0
        %940 = vmatpush1.msra.mxu0 %v758
        %941 = vmatprep.subr.mxu0 0.0
        %942 = vmatpush1.msra.mxu0 %v761
        %943 = vmatprep.subr.mxu0 0.0
        %944 = vmatpush1.msra.mxu0 %v764
        %945 = vmatprep.subr.mxu0 0.0
        %946 = vmatpush1.msra.mxu0 %v767
        %947 = vmatprep.subr.mxu0 0.0
        %948 = vmatpush1.msra.mxu0 %v770
        %949 = vmatprep.subr.mxu0 0.0
        %950 = vmatpush1.msra.mxu0 %v773
        %951 = vmatprep.subr.mxu0 0.0
        %952 = vmatpush1.msra.mxu0 %v776
        %953 = vmatprep.subr.mxu0 0.0
        %954 = vmatpush1.msra.mxu0 0.0
        %955 = vmatprep.subr.mxu0 0.0
        %956 = vmatpush1.msra.mxu0 0.0
        %957 = vmatprep.subr.mxu0 0.0
        %958 = vmatpush1.msra.mxu0 0.0
        %959 = vmatprep.subr.mxu0 0.0
        %960 = vmatpush1.msra.mxu0 0.0
        %961 = vmatprep.subr.mxu0 0.0
        %962 = vmatpush1.msra.mxu0 0.0
        %963 = vmatprep.subr.mxu0 0.0
        %964 = vmatpush1.msra.mxu0 0.0
        %965 = vmatprep.subr.mxu0 0.0
        %966 = vmatpush1.msra.mxu0 0.0
        %967 = vmatprep.subr.mxu0 0.0
        %968 = vmatpush1.msra.mxu0 0.0
        %969 = vmatprep.subr.mxu0 0.0
        %970 = vmatpush1.msra.mxu0 0.0
        %971 = vmatprep.subr.mxu0 0.0
        %972 = vmatpush1.msra.mxu0 0.0
        %973 = vmatprep.subr.mxu0 0.0
        %974 = vmatpush1.msra.mxu0 0.0
        %975 = vmatprep.subr.mxu0 0.0
        %976 = vmatpush1.msra.mxu0 0.0
        %977 = vmatprep.subr.mxu0 0.0
        %978 = vmatpush1.msra.mxu0 0.0
        %979 = vmatprep.subr.mxu0 0.0
        %980 = vmatpush1.msra.mxu0 0.0
        %981 = vmatprep.subr.mxu0 0.0
        %982 = vmatpush1.msra.mxu0 0.0
        %983 = vmatprep.subr.mxu0 0.0
        %984 = vmatpush1.msra.mxu0 0.0
        %985 = vmatprep.subr.mxu0 0.0
        %986 = vmatpush1.msra.mxu0 0.0
        %987 = vmatprep.subr.mxu0 0.0
        %988 = vmatpush1.msra.mxu0 0.0
        %989 = vmatprep.subr.mxu0 0.0
        %990 = vmatpush1.msra.mxu0 0.0
        %991 = vmatprep.subr.mxu0 0.0
        %992 = vmatpush1.msra.mxu0 0.0
        %993 = vmatprep.subr.mxu0 0.0
        %994 = vmatpush1.msra.mxu0 0.0
        %995 = vmatprep.subr.mxu0 0.0
        %996 = vmatpush1.msra.mxu0 0.0
        %997 = vmatprep.subr.mxu0 0.0
        %998 = vmatpush1.msra.mxu0 0.0
        %999 = vmatprep.mubr.f32.mxu0 0.0
        %1000 = vmatmul.mubr.f32.gmra.mrb[0].mxu0 %v933
        %v1001 = vpop.f32.mrb[0].mxu0
        %v1002 = vadd.f32 0.0, %v1001
        %v1003 = vpop.f32.mrb[0].mxu0
        %1004 = vdwg.mxu0
        %v1005 = vadd.f32 %v929, %v1002
        %1007 = vset.pattern.permute.xlu0 0
        %1008 = vperm.xlu0 %1007, %v409
        %v1009 = vpop.permute.xlu0 %1008
        %v1011 = vadd.f32 %v1005, %v1009
        %v1013 = vlaneseq
        %v1014 = vshrl.u32 %v1013, 7
        %v1015 = vsub.s32 0, %v1014
        %v1016 = vrot.slane %v410, %v1015
        %v1018 = vmul.f32 %v1011, %v1016
        %1020 = vrot.lane.b32.xlu0 %v1018, 7
        %v1021 = vpop.permute.xlu0 %1020
        %vm1023 = vcmask 56320
        %v1024 = vsel %vm1023, 0.0, %v1021
        %vm1025 = vcmask 236544
        %v1026 = vsel %vm1025, %v1024, 0.0
        %s1027 = scalar_lea.vmem %s407, 8
        %vm1028 = vcmask 293888
        %1029 = vst.msk [vmem:[%s1027] sm:$0xff] %vm1028, %v1026
      $region56: #{run.6} parent=43 // pred_fallthru
        _
      %p1030 = pneg %p782
      // Predicated region
      $region57: #{run.6} parent=43 // pred_check
        _
      $region58: #{run.6} parent=43 // pred_check_branch
        %1032 = sbr.rel (%p782) target = $region60
      $region59: #{run.6} parent=43 // pred_region
        %s1033 = scalar_lea.vmem %s407, 8
        %vm1034 = vcmask 293888
        %1035 = vst.msk [vmem:[%s1033] sm:$0xff] %vm1034, 0.0
      $region60: #{run.6} parent=43 // pred_fallthru
        _
      %v1036 = vld [vmem:[%s394] sm:$0xff]
      %1038 = vrot.lane.b32.xlu0 %v1036, 127
      %v1039 = vpop.permute.xlu0 %1038
      %1041 = vrot.lane.b32.xlu0 %v1036, 126
      %v1042 = vpop.permute.xlu0 %1041
      %1044 = vrot.lane.b32.xlu0 %v1036, 122
      %v1045 = vpop.permute.xlu0 %1044
      %1047 = vrot.lane.b32.xlu0 %v1036, 121
      %v1048 = vpop.permute.xlu0 %1047
      %1050 = vrot.lane.b32.xlu0 %v1036, 120
      %v1051 = vpop.permute.xlu0 %1050
      %1053 = vrot.lane.b32.xlu0 %v1036, 116
      %v1054 = vpop.permute.xlu0 %1053
      %1056 = vrot.lane.b32.xlu0 %v1036, 115
      %v1057 = vpop.permute.xlu0 %1056
      %1059 = vrot.lane.b32.xlu0 %v1036, 114
      %v1060 = vpop.permute.xlu0 %1059
      %s1062 = sadd.s32 %s495, 2
      %p1063 = scmp.ge.s32.totalorder %s1062, 1
      %p1064 = scmp.le.s32.totalorder %s1062, 4
      %p1065 = pnand %p1063, %p1064
      %p1066 = pneg %p1065
      // Predicated region
      $region61: #{run.6} parent=43 // pred_check
        _
      $region62: #{run.6} parent=43 // pred_check_branch
        %1068 = sbr.rel (%p1065) target = $region64
      $region63: #{run.6} parent=43 // pred_region
        %vm1069 = vcmask 588800
        %v1071 = vsel %vm1069, %v413, 0
        %1073 = vmatprep.subr.mxu0 0.0
        %1074 = vmatpush1.msra.mxu0 %v752
        %1075 = vmatprep.subr.mxu0 0.0
        %1076 = vmatpush1.msra.mxu0 %v755
        %1077 = vmatprep.subr.mxu0 0.0
        %1078 = vmatpush1.msra.mxu0 %v758
        %1079 = vmatprep.subr.mxu0 0.0
        %1080 = vmatpush1.msra.mxu0 %v761
        %1081 = vmatprep.subr.mxu0 0.0
        %1082 = vmatpush1.msra.mxu0 %v764
        %1083 = vmatprep.subr.mxu0 0.0
        %1084 = vmatpush1.msra.mxu0 %v767
        %1085 = vmatprep.subr.mxu0 0.0
        %1086 = vmatpush1.msra.mxu0 %v770
        %1087 = vmatprep.subr.mxu0 0.0
        %1088 = vmatpush1.msra.mxu0 %v773
        %1089 = vmatprep.subr.mxu0 0.0
        %1090 = vmatpush1.msra.mxu0 %v776
        %1091 = vmatprep.subr.mxu0 0.0
        %1092 = vmatpush1.msra.mxu0 0.0
        %1093 = vmatprep.subr.mxu0 0.0
        %1094 = vmatpush1.msra.mxu0 0.0
        %1095 = vmatprep.subr.mxu0 0.0
        %1096 = vmatpush1.msra.mxu0 0.0
        %1097 = vmatprep.subr.mxu0 0.0
        %1098 = vmatpush1.msra.mxu0 0.0
        %1099 = vmatprep.subr.mxu0 0.0
        %1100 = vmatpush1.msra.mxu0 0.0
        %1101 = vmatprep.subr.mxu0 0.0
        %1102 = vmatpush1.msra.mxu0 0.0
        %1103 = vmatprep.subr.mxu0 0.0
        %1104 = vmatpush1.msra.mxu0 0.0
        %1105 = vmatprep.subr.mxu0 0.0
        %1106 = vmatpush1.msra.mxu0 0.0
        %1107 = vmatprep.subr.mxu0 0.0
        %1108 = vmatpush1.msra.mxu0 0.0
        %1109 = vmatprep.subr.mxu0 0.0
        %1110 = vmatpush1.msra.mxu0 0.0
        %1111 = vmatprep.subr.mxu0 0.0
        %1112 = vmatpush1.msra.mxu0 0.0
        %1113 = vmatprep.subr.mxu0 0.0
        %1114 = vmatpush1.msra.mxu0 0.0
        %1115 = vmatprep.subr.mxu0 0.0
        %1116 = vmatpush1.msra.mxu0 0.0
        %1117 = vmatprep.subr.mxu0 0.0
        %1118 = vmatpush1.msra.mxu0 0.0
        %1119 = vmatprep.subr.mxu0 0.0
        %1120 = vmatpush1.msra.mxu0 0.0
        %1121 = vmatprep.subr.mxu0 0.0
        %1122 = vmatpush1.msra.mxu0 0.0
        %1123 = vmatprep.subr.mxu0 0.0
        %1124 = vmatpush1.msra.mxu0 0.0
        %1125 = vmatprep.subr.mxu0 0.0
        %1126 = vmatpush1.msra.mxu0 0.0
        %1127 = vmatprep.subr.mxu0 0.0
        %1128 = vmatpush1.msra.mxu0 0.0
        %1129 = vmatprep.subr.mxu0 0.0
        %1130 = vmatpush1.msra.mxu0 0.0
        %1131 = vmatprep.subr.mxu0 0.0
        %1132 = vmatpush1.msra.mxu0 0.0
        %1133 = vmatprep.subr.mxu0 0.0
        %1134 = vmatpush1.msra.mxu0 0.0
        %1135 = vmatprep.subr.mxu0 0.0
        %1136 = vmatpush1.msra.mxu0 0.0
        %1137 = vmatprep.mubr.f32.mxu0 0.0
        %1138 = vmatmul.mubr.f32.gmra.mrb[0].mxu0 %v1071
        %v1139 = vpop.f32.mrb[0].mxu0
        %v1140 = vadd.f32 0.0, %v1139
        %v1141 = vpop.f32.mrb[0].mxu0
        %1142 = vdwg.mxu0
        %v1144 = vsel %vm1069, %v411, 0
        %1146 = vmatprep.subr.mxu0 0.0
        %1147 = vmatpush1.msra.mxu0 %v469
        %1148 = vmatprep.subr.mxu0 0.0
        %1149 = vmatpush1.msra.mxu0 %v472
        %1150 = vmatprep.subr.mxu0 0.0
        %1151 = vmatpush1.msra.mxu0 %v475
        %1152 = vmatprep.subr.mxu0 0.0
        %1153 = vmatpush1.msra.mxu0 %v478
        %1154 = vmatprep.subr.mxu0 0.0
        %1155 = vmatpush1.msra.mxu0 %v481
        %1156 = vmatprep.subr.mxu0 0.0
        %1157 = vmatpush1.msra.mxu0 %v484
        %1158 = vmatprep.subr.mxu0 0.0
        %1159 = vmatpush1.msra.mxu0 %v487
        %1160 = vmatprep.subr.mxu0 0.0
        %1161 = vmatpush1.msra.mxu0 %v490
        %1162 = vmatprep.subr.mxu0 0.0
        %1163 = vmatpush1.msra.mxu0 %v493
        %1164 = vmatprep.subr.mxu0 0.0
        %1165 = vmatpush1.msra.mxu0 0.0
        %1166 = vmatprep.subr.mxu0 0.0
        %1167 = vmatpush1.msra.mxu0 0.0
        %1168 = vmatprep.subr.mxu0 0.0
        %1169 = vmatpush1.msra.mxu0 0.0
        %1170 = vmatprep.subr.mxu0 0.0
        %1171 = vmatpush1.msra.mxu0 0.0
        %1172 = vmatprep.subr.mxu0 0.0
        %1173 = vmatpush1.msra.mxu0 0.0
        %1174 = vmatprep.subr.mxu0 0.0
        %1175 = vmatpush1.msra.mxu0 0.0
        %1176 = vmatprep.subr.mxu0 0.0
        %1177 = vmatpush1.msra.mxu0 0.0
        %1178 = vmatprep.subr.mxu0 0.0
        %1179 = vmatpush1.msra.mxu0 0.0
        %1180 = vmatprep.subr.mxu0 0.0
        %1181 = vmatpush1.msra.mxu0 0.0
        %1182 = vmatprep.subr.mxu0 0.0
        %1183 = vmatpush1.msra.mxu0 0.0
        %1184 = vmatprep.subr.mxu0 0.0
        %1185 = vmatpush1.msra.mxu0 0.0
        %1186 = vmatprep.subr.mxu0 0.0
        %1187 = vmatpush1.msra.mxu0 0.0
        %1188 = vmatprep.subr.mxu0 0.0
        %1189 = vmatpush1.msra.mxu0 0.0
        %1190 = vmatprep.subr.mxu0 0.0
        %1191 = vmatpush1.msra.mxu0 0.0
        %1192 = vmatprep.subr.mxu0 0.0
        %1193 = vmatpush1.msra.mxu0 0.0
        %1194 = vmatprep.subr.mxu0 0.0
        %1195 = vmatpush1.msra.mxu0 0.0
        %1196 = vmatprep.subr.mxu0 0.0
        %1197 = vmatpush1.msra.mxu0 0.0
        %1198 = vmatprep.subr.mxu0 0.0
        %1199 = vmatpush1.msra.mxu0 0.0
        %1200 = vmatprep.subr.mxu0 0.0
        %1201 = vmatpush1.msra.mxu0 0.0
        %1202 = vmatprep.subr.mxu0 0.0
        %1203 = vmatpush1.msra.mxu0 0.0
        %1204 = vmatprep.subr.mxu0 0.0
        %1205 = vmatpush1.msra.mxu0 0.0
        %1206 = vmatprep.subr.mxu0 0.0
        %1207 = vmatpush1.msra.mxu0 0.0
        %1208 = vmatprep.subr.mxu0 0.0
        %1209 = vmatpush1.msra.mxu0 0.0
        %1210 = vmatprep.mubr.f32.mxu0 0.0
        %1211 = vmatmul.mubr.f32.gmra.mrb[0].mxu0 %v1144
        %v1212 = vpop.f32.mrb[0].mxu0
        %v1213 = vadd.f32 %v1140, %v1212
        %v1214 = vpop.f32.mrb[0].mxu0
        %1215 = vdwg.mxu0
        %v1217 = vsel %vm1069, %v415, 0
        %1219 = vmatprep.subr.mxu0 0.0
        %1220 = vmatpush1.msra.mxu0 %v1036
        %1221 = vmatprep.subr.mxu0 0.0
        %1222 = vmatpush1.msra.mxu0 %v1039
        %1223 = vmatprep.subr.mxu0 0.0
        %1224 = vmatpush1.msra.mxu0 %v1042
        %1225 = vmatprep.subr.mxu0 0.0
        %1226 = vmatpush1.msra.mxu0 %v1045
        %1227 = vmatprep.subr.mxu0 0.0
        %1228 = vmatpush1.msra.mxu0 %v1048
        %1229 = vmatprep.subr.mxu0 0.0
        %1230 = vmatpush1.msra.mxu0 %v1051
        %1231 = vmatprep.subr.mxu0 0.0
        %1232 = vmatpush1.msra.mxu0 %v1054
        %1233 = vmatprep.subr.mxu0 0.0
        %1234 = vmatpush1.msra.mxu0 %v1057
        %1235 = vmatprep.subr.mxu0 0.0
        %1236 = vmatpush1.msra.mxu0 %v1060
        %1237 = vmatprep.subr.mxu0 0.0
        %1238 = vmatpush1.msra.mxu0 0.0
        %1239 = vmatprep.subr.mxu0 0.0
        %1240 = vmatpush1.msra.mxu0 0.0
        %1241 = vmatprep.subr.mxu0 0.0
        %1242 = vmatpush1.msra.mxu0 0.0
        %1243 = vmatprep.subr.mxu0 0.0
        %1244 = vmatpush1.msra.mxu0 0.0
        %1245 = vmatprep.subr.mxu0 0.0
        %1246 = vmatpush1.msra.mxu0 0.0
        %1247 = vmatprep.subr.mxu0 0.0
        %1248 = vmatpush1.msra.mxu0 0.0
        %1249 = vmatprep.subr.mxu0 0.0
        %1250 = vmatpush1.msra.mxu0 0.0
        %1251 = vmatprep.subr.mxu0 0.0
        %1252 = vmatpush1.msra.mxu0 0.0
        %1253 = vmatprep.subr.mxu0 0.0
        %1254 = vmatpush1.msra.mxu0 0.0
        %1255 = vmatprep.subr.mxu0 0.0
        %1256 = vmatpush1.msra.mxu0 0.0
        %1257 = vmatprep.subr.mxu0 0.0
        %1258 = vmatpush1.msra.mxu0 0.0
        %1259 = vmatprep.subr.mxu0 0.0
        %1260 = vmatpush1.msra.mxu0 0.0
        %1261 = vmatprep.subr.mxu0 0.0
        %1262 = vmatpush1.msra.mxu0 0.0
        %1263 = vmatprep.subr.mxu0 0.0
        %1264 = vmatpush1.msra.mxu0 0.0
        %1265 = vmatprep.subr.mxu0 0.0
        %1266 = vmatpush1.msra.mxu0 0.0
        %1267 = vmatprep.subr.mxu0 0.0
        %1268 = vmatpush1.msra.mxu0 0.0
        %1269 = vmatprep.subr.mxu0 0.0
        %1270 = vmatpush1.msra.mxu0 0.0
        %1271 = vmatprep.subr.mxu0 0.0
        %1272 = vmatpush1.msra.mxu0 0.0
        %1273 = vmatprep.subr.mxu0 0.0
        %1274 = vmatpush1.msra.mxu0 0.0
        %1275 = vmatprep.subr.mxu0 0.0
        %1276 = vmatpush1.msra.mxu0 0.0
        %1277 = vmatprep.subr.mxu0 0.0
        %1278 = vmatpush1.msra.mxu0 0.0
        %1279 = vmatprep.subr.mxu0 0.0
        %1280 = vmatpush1.msra.mxu0 0.0
        %1281 = vmatprep.subr.mxu0 0.0
        %1282 = vmatpush1.msra.mxu0 0.0
        %1283 = vmatprep.mubr.f32.mxu0 0.0
        %1284 = vmatmul.mubr.f32.gmra.mrb[0].mxu0 %v1217
        %v1285 = vpop.f32.mrb[0].mxu0
        %v1286 = vadd.f32 0.0, %v1285
        %v1287 = vpop.f32.mrb[0].mxu0
        %1288 = vdwg.mxu0
        %v1289 = vadd.f32 %v1213, %v1286
        %1291 = vset.pattern.permute.xlu0 0
        %1292 = vperm.xlu0 %1291, %v409
        %v1293 = vpop.permute.xlu0 %1292
        %v1295 = vadd.f32 %v1289, %v1293
        %v1297 = vlaneseq
        %v1298 = vshrl.u32 %v1297, 7
        %v1299 = vsub.s32 0, %v1298
        %v1300 = vrot.slane %v410, %v1299
        %v1302 = vmul.f32 %v1295, %v1300
        %1304 = vrot.lane.b32.xlu0 %v1302, 7
        %v1305 = vpop.permute.xlu0 %1304
        %vm1307 = vcmask 56320
        %v1308 = vsel %vm1307, 0.0, %v1305
        %vm1309 = vcmask 236544
        %v1310 = vsel %vm1309, %v1308, 0.0
        %s1311 = scalar_lea.vmem %s407, 16
        %vm1312 = vcmask 293888
        %1313 = vst.msk [vmem:[%s1311] sm:$0xff] %vm1312, %v1310
      $region64: #{run.6} parent=43 // pred_fallthru
        _
      %p1314 = pneg %p1066
      // Predicated region
      $region65: #{run.6} parent=43 // pred_check
        _
      $region66: #{run.6} parent=43 // pred_check_branch
        %1316 = sbr.rel (%p1066) target = $region68
      $region67: #{run.6} parent=43 // pred_region
        %s1317 = scalar_lea.vmem %s407, 16
        %vm1318 = vcmask 293888
        %1319 = vst.msk [vmem:[%s1317] sm:$0xff] %vm1318, 0.0
      $region68: #{run.6} parent=43 // pred_fallthru
        _
      %s1320 = smul.u32 3, %s22
      %p1321 = scmp.lt.s32.totalorder %s21, 1
      %s1322 = scalar_select %p1321, %s21, 1
      %p1323 = scmp.lt.s32.totalorder %s1320, 5
      %s1324 = scalar_select %p1323, %s1320, 5
      %s1325 = smul.addr %s1322, 6
      %s1326 = sadd.s32 %s1324, %s1325
      %s1327 = smul.addr %s1326, 8
      %s1328 = scalar_lea.vmem %s6, %s1327
      // Predicated region
      $region69: #{run.6} parent=43 // pred_check
        %p1329 = pneg %p212
      $region70: #{run.6} parent=43 // pred_check_branch
        %1331 = sbr.rel (%p1329) target = $region72
      $region71: #{run.6} parent=43 // pred_region
        %s1332 = smul.u32 3, %s22
      $region72: #{run.6} parent=43 // pred_fallthru
        _
    $region44: #{run.6} parent=5 // pred_fallthru
      _
    %p1333 = scmp.le.s32.totalorder 2, %s12
    // Predicated region
    $region73: #{run.6} parent=5 // pred_check
      %p1334 = pneg %p1333
    $region74: #{run.6} parent=5 // pred_check_branch
      %1336 = sbr.rel (%p1334) target = $region76
    $region75: #{run.6} parent=5 // pred_region
      %s1337 = ssub.s32 %s12, 2
      // Predicated region
      $region77: #{run.6} parent=75 // pred_check
        %p1338 = pneg %p218
      $region78: #{run.6} parent=75 // pred_check_branch
        %1340 = sbr.rel (%p1338) target = $region80
      $region79: #{run.6} parent=75 // pred_region
        %s1341 = smul.u32 3, %s24
        %p1342 = scmp.lt.s32.totalorder %s23, 1
        %s1343 = scalar_select %p1342, %s23, 1
        %p1344 = scmp.lt.s32.totalorder %s1341, 5
        %s1345 = scalar_select %p1344, %s1341, 5
        %s1346 = smul.addr %s1343, 6
        %s1347 = sadd.s32 %s1345, %s1346
        %s1348 = smul.addr %s1347, 8
        %s1349 = scalar_lea.vmem %s6, %s1348
      $region80: #{run.6} parent=75 // pred_fallthru
        _
    $region76: #{run.6} parent=5 // pred_fallthru
      _
  $region6: #{run.6} parent=0 // loop_footer
    %s16 = sadd.s32 1, %s12
  $region7: #{run.6} parent=0 // loop_footer_branch
    %11 = sbr.rel target = $region3
  $region8: #{run.6} parent=0 // loop_exit
    _

</llo_original>
